<compile_context>
chip_gen: v6e
topology: v6e:2x2x1
jax: 0.10.0
libtpu: 0.0.40
codegen_flags: <defaults>
</compile_context>

<pallas_src>
import functools
import numpy as np

import jax
import jax.numpy as jnp
from jax.experimental import pallas as pl
from jax.experimental.pallas import tpu as pltpu

_LN_EPS = 1e-6
_NEG_INF = -1e9


# ----------------------------- in-kernel helpers ------------------------------

def _layer_norm(x, g, b):
    mu = jnp.mean(x, axis=-1, keepdims=True)
    var = jnp.mean((x - mu) ** 2, axis=-1, keepdims=True)
    return (x - mu) * jax.lax.rsqrt(var + _LN_EPS) * g + b


def _mha(x_q, kv_b16, bias, ln_g, ln_b, wq, wk, wv, fc, ctx_ref, *, n_head, d_k, d_v):
    """One multi-head attention sublayer on a single batch element (all in VMEM).

    x_q: (Lq, D) f32   kv_b16: (Lk, D) bf16   bias: (Lq or 1, Lk) f32 additive mask.
    Weights wq/wk/wv/fc are bf16; 1/sqrt(d_k) is pre-folded into wq.
    """
    residual = x_q
    xn = _layer_norm(x_q, ln_g, ln_b)                    # LN on q only (as in reference)

    qp = jnp.dot(xn.astype(jnp.bfloat16), wq, preferred_element_type=jnp.float32)  # (Lq,H*dk)
    kp = jnp.dot(kv_b16, wk, preferred_element_type=jnp.float32)                   # (Lk,H*dk)
    vp = jnp.dot(kv_b16, wv, preferred_element_type=jnp.float32)                   # (Lk,H*dv)

    # Static unrolled head loop; head contexts land in one (Lq, H*dv) VMEM buffer so the
    # output projection is a single K = H*dv matmul instead of n_head K = d_v matmuls.
    for h in range(n_head):
        qh = qp[:, h * d_k:(h + 1) * d_k]
        kh = kp[:, h * d_k:(h + 1) * d_k]
        vh = vp[:, h * d_v:(h + 1) * d_v]
        # scores: contract last dims (q @ k^T). If vxpose-per-head ever shows up in the
        # lowered MLIR, pre-transpose kp once per call instead.
        s = jax.lax.dot_general(qh, kh, (((1,), (1,)), ((), ())),
                                preferred_element_type=jnp.float32)     # (Lq, Lk)
        s = s + bias                                     # additive mask (0 / -1e9)
        s = s - jnp.max(s, axis=-1, keepdims=True)
        p = jnp.exp(s)
        inv = pl.reciprocal(jnp.sum(p, axis=-1, keepdims=True), approx=True)
        ctx_ref[:, h * d_v:(h + 1) * d_v] = jnp.dot(p * inv, vh,
                                                    preferred_element_type=jnp.float32)

    ctx = ctx_ref[...]                                   # (Lq, H*dv)
    out = jnp.dot(ctx.astype(jnp.bfloat16), fc, preferred_element_type=jnp.float32)
    return out + residual


def _ffn(x, ln_g, ln_b, w1, b1, w2, b2):
    residual = x
    xn = _layer_norm(x, ln_g, ln_b)
    h = jnp.dot(xn.astype(jnp.bfloat16), w1, preferred_element_type=jnp.float32) + b1
    h = jnp.maximum(h, 0.0)                              # ReLU
    o = jnp.dot(h.astype(jnp.bfloat16), w2, preferred_element_type=jnp.float32) + b2
    return o + residual


# ------------------------- fused whole-stack decoder kernel ---------------------

def _decoder_kernel(x_ref, enc_ref, sbias_ref, ebias_ref,
                    s_lng, s_lnb, s_wq, s_wk, s_wv, s_fc,
                    e_lng, e_lnb, e_wq, e_wk, e_wv, e_fc,
                    f_lng, f_lnb, f_w1, f_b1, f_w2, f_b2,
                    o_lng, o_lnb,
                    o_ref, ctx_ref, *, n_layers, n_head, d_k, d_v):
    x = x_ref[0]                                         # (L, D) f32
    enc_b16 = enc_ref[0].astype(jnp.bfloat16)            # (Ls, D) — cast once, reused
    sbias = sbias_ref[0]                                 # (L, L)
    ebias = ebias_ref[0]                                 # (1, Ls)

    # Static unrolled layer loop — everything stays in VMEM/vregs for the whole stack.
    for l in range(n_layers):
        x = _mha(x, x.astype(jnp.bfloat16), sbias,
                 s_lng[l], s_lnb[l], s_wq[l], s_wk[l], s_wv[l], s_fc[l],
                 ctx_ref, n_head=n_head, d_k=d_k, d_v=d_v)
        x = _mha(x, enc_b16, ebias,
                 e_lng[l], e_lnb[l], e_wq[l], e_wk[l], e_wv[l], e_fc[l],
                 ctx_ref, n_head=n_head, d_k=d_k, d_v=d_v)
        x = _ffn(x, f_lng[l], f_lnb[l], f_w1[l], f_b1[l], f_w2[l], f_b2[l])

    o_ref[0] = _layer_norm(x, o_lng[...], o_lnb[...])    # final decoder LayerNorm


# ----------------------------- Decoder forward ----------------------------------

def decoder_forward(params, trg_seq, trg_mask, enc_output, src_mask,
                    *, n_layers, n_head, d_k, d_v):
    B, L = trg_seq.shape
    Ls = enc_output.shape[1]
    D = params["emb"].shape[1]
    w = params["stacked"]
    d_inner = w["f_w1"].shape[-1]
    hdk, hdv = n_head * d_k, n_head * d_v

    # TODO(synk): the vocab-table gather (nn.Embedding) stays in plain JAX — it is a
    # data-dependent gather over the embedding table and not worth a Pallas kernel here.
    x = jnp.take(params["emb"], trg_seq, axis=0) + params["pos_table"][None, :L, :]
    # dropout == identity (eval)

    # Compact additive masks computed once per forward (no per-head broadcast in HBM).
    slf_bias = jnp.where(trg_mask, 0.0, _NEG_INF).astype(jnp.float32)   # (B, L, L)
    enc_bias = jnp.where(src_mask, 0.0, _NEG_INF).astype(jnp.float32)   # (B, 1, Ls)

    kern = functools.partial(_decoder_kernel, n_layers=n_layers,
                             n_head=n_head, d_k=d_k, d_v=d_v)

    def rep(shape):                      # replicated (weight) block: full array, fixed index
        n = len(shape)
        return pl.BlockSpec(shape, lambda b, _n=n: (0,) * _n)

    return pl.pallas_call(
        kern,
        grid=(B,),
        out_shape=jax.ShapeDtypeStruct((B, L, D), jnp.float32),
        in_specs=[
            pl.BlockSpec((1, L, D), lambda b: (b, 0, 0)),        # x (emb + pos)
            pl.BlockSpec((1, Ls, D), lambda b: (b, 0, 0)),       # enc_output
            pl.BlockSpec((1, L, L), lambda b: (b, 0, 0)),        # self-attn bias
            pl.BlockSpec((1, 1, Ls), lambda b: (b, 0, 0)),       # cross-attn bias
            rep((n_layers, 1, D)), rep((n_layers, 1, D)),                          # slf LN
            rep((n_layers, D, hdk)), rep((n_layers, D, hdk)),                      # slf wq,wk
            rep((n_layers, D, hdv)), rep((n_layers, hdv, D)),                      # slf wv,fc
            rep((n_layers, 1, D)), rep((n_layers, 1, D)),                          # enc LN
            rep((n_layers, D, hdk)), rep((n_layers, D, hdk)),                      # enc wq,wk
            rep((n_layers, D, hdv)), rep((n_layers, hdv, D)),                      # enc wv,fc
            rep((n_layers, 1, D)), rep((n_layers, 1, D)),                          # ffn LN
            rep((n_layers, D, d_inner)), rep((n_layers, 1, d_inner)),              # ffn w1,b1
            rep((n_layers, d_inner, D)), rep((n_layers, 1, D)),                    # ffn w2,b2
            rep((1, D)), rep((1, D)),                                              # final LN
        ],
        out_specs=pl.BlockSpec((1, L, D), lambda b: (b, 0, 0)),
        scratch_shapes=[pltpu.VMEM((L, hdv), jnp.float32)],       # per-call head-context buffer
        compiler_params=pltpu.CompilerParams(dimension_semantics=("parallel",)),
    )(x, enc_output, slf_bias, enc_bias,
      w["s_lng"], w["s_lnb"], w["s_wq"], w["s_wk"], w["s_wv"], w["s_fc"],
      w["e_lng"], w["e_lnb"], w["e_wq"], w["e_wk"], w["e_wv"], w["e_fc"],
      w["f_lng"], w["f_lnb"], w["f_w1"], w["f_b1"], w["f_w2"], w["f_b2"],
      w["o_lng"], w["o_lnb"])


# ----------------------------- Param construction -------------------------------

def sinusoid_table(n_position, d_hid):
    pos = np.arange(n_position)[:, None].astype(np.float64)
    hid = np.arange(d_hid)[None, :]
    angle = pos / np.power(10000, 2 * (hid // 2) / d_hid)
    table = np.zeros((n_position, d_hid), dtype=np.float64)
    table[:, 0::2] = np.sin(angle[:, 0::2])
    table[:, 1::2] = np.cos(angle[:, 1::2])
    return jnp.asarray(table, jnp.float32)


def make_params(key, n_trg_vocab, d_model, n_layers, n_head, d_k, d_v, d_inner,
                pad_idx, n_position):
    def nrm(k, shape, scale=0.05):
        return scale * jax.random.normal(k, shape, dtype=jnp.float32)

    keys = jax.random.split(key, 1 + n_layers)
    emb = nrm(keys[0], (n_trg_vocab, d_model)).at[pad_idx].set(0.0)   # padding_idx row zeroed

    hdk, hdv = n_head * d_k, n_head * d_v
    qscale = 1.0 / float(d_k) ** 0.5      # folded into w_qs (mathematically identical)

    s_wq, s_wk, s_wv, s_fc = [], [], [], []
    e_wq, e_wk, e_wv, e_fc = [], [], [], []
    f_w1, f_b1, f_w2, f_b2 = [], [], [], []
    for li in range(n_layers):
        lk = jax.random.split(keys[1 + li], 12)
        s_wq.append(nrm(lk[0], (d_model, hdk)) * qscale)
        s_wk.append(nrm(lk[1], (d_model, hdk)))
        s_wv.append(nrm(lk[2], (d_model, hdv)))
        s_fc.append(nrm(lk[3], (hdv, d_model)))
        e_wq.append(nrm(lk[4], (d_model, hdk)) * qscale)
        e_wk.append(nrm(lk[5], (d_model, hdk)))
        e_wv.append(nrm(lk[6], (d_model, hdv)))
        e_fc.append(nrm(lk[7], (hdv, d_model)))
        f_w1.append(nrm(lk[8], (d_model, d_inner)))
        f_b1.append(nrm(lk[9], (d_inner,)))
        f_w2.append(nrm(lk[10], (d_inner, d_model)))
        f_b2.append(nrm(lk[11], (d_model,)))

    bf = jnp.bfloat16
    ln_ones = jnp.ones((n_layers, 1, d_model), jnp.float32)
    ln_zeros = jnp.zeros((n_layers, 1, d_model), jnp.float32)
    stacked = {
        "s_lng": ln_ones, "s_lnb": ln_zeros,
        "s_wq": jnp.stack(s_wq).astype(bf), "s_wk": jnp.stack(s_wk).astype(bf),
        "s_wv": jnp.stack(s_wv).astype(bf), "s_fc": jnp.stack(s_fc).astype(bf),
        "e_lng": ln_ones, "e_lnb": ln_zeros,
        "e_wq": jnp.stack(e_wq).astype(bf), "e_wk": jnp.stack(e_wk).astype(bf),
        "e_wv": jnp.stack(e_wv).astype(bf), "e_fc": jnp.stack(e_fc).astype(bf),
        "f_lng": ln_ones, "f_lnb": ln_zeros,
        "f_w1": jnp.stack(f_w1).astype(bf),
        "f_b1": jnp.stack(f_b1).reshape(n_layers, 1, d_inner),
        "f_w2": jnp.stack(f_w2).astype(bf),
        "f_b2": jnp.stack(f_b2).reshape(n_layers, 1, d_model),
        "o_lng": jnp.ones((1, d_model), jnp.float32),
        "o_lnb": jnp.zeros((1, d_model), jnp.float32),
    }
    return {"emb": emb, "pos_table": sinusoid_table(n_position, d_model),
            "stacked": stacked}


# ----------------------------------- Main ---------------------------------------

if __name__ == "__main__":
    # small config consistent with Decoder.__init__
    n_trg_vocab, d_model, d_inner = 50, 32, 64
    n_layers, n_head, d_k, d_v = 2, 4, 8, 8
    pad_idx, n_position = 0, 200
    B, L_trg, L_src = 2, 8, 8

    key = jax.random.PRNGKey(0)
    k_seq, k_enc, k_par = jax.random.split(key, 3)

    trg_seq = jax.random.randint(k_seq, (B, L_trg), 1, n_trg_vocab, dtype=jnp.int32)
    trg_seq = trg_seq.at[1, -2:].set(pad_idx)      # some padding to exercise the mask

    # trg_mask = pad mask & causal mask  -> (B, L_trg, L_trg)
    pad_mask = (trg_seq != pad_idx)[:, None, :]                    # (B,1,L)
    causal = jnp.tril(jnp.ones((L_trg, L_trg), jnp.bool_))[None]   # (1,L,L)
    trg_mask = jnp.logical_and(pad_mask, causal)

    enc_output = jax.random.normal(k_enc, (B, L_src, d_model), dtype=jnp.float32)
    src_mask = jnp.ones((B, 1, L_src), jnp.bool_)

    params = make_params(k_par, n_trg_vocab, d_model, n_layers, n_head, d_k, d_v,
                         d_inner, pad_idx, n_position)

    fwd = jax.jit(functools.partial(decoder_forward, n_layers=n_layers,
                                    n_head=n_head, d_k=d_k, d_v=d_v))
    dec_out = fwd(params, trg_seq, trg_mask, enc_output, src_mask)
    jax.block_until_ready(dec_out)
    assert dec_out.shape == (B, L_trg, d_model)
    assert bool(jnp.all(jnp.isfinite(dec_out)))
    print("KERNEL_OK")
</pallas_src>

<mosaic_0001>
module attributes {stable_mosaic.version = 11 : i64} {
  func.func @_decoder_kernel(%arg0: i32, %arg1: memref<1x8x32xf32, #tpu.memory_space<vmem>>, %arg2: memref<1x8x32xf32, #tpu.memory_space<vmem>>, %arg3: memref<1x8x8xf32, #tpu.memory_space<vmem>>, %arg4: memref<1x1x8xf32, #tpu.memory_space<vmem>>, %arg5: memref<2x1x32xf32, #tpu.memory_space<vmem>>, %arg6: memref<2x1x32xf32, #tpu.memory_space<vmem>>, %arg7: memref<2x32x32xbf16, #tpu.memory_space<vmem>>, %arg8: memref<2x32x32xbf16, #tpu.memory_space<vmem>>, %arg9: memref<2x32x32xbf16, #tpu.memory_space<vmem>>, %arg10: memref<2x32x32xbf16, #tpu.memory_space<vmem>>, %arg11: memref<2x1x32xf32, #tpu.memory_space<vmem>>, %arg12: memref<2x1x32xf32, #tpu.memory_space<vmem>>, %arg13: memref<2x32x32xbf16, #tpu.memory_space<vmem>>, %arg14: memref<2x32x32xbf16, #tpu.memory_space<vmem>>, %arg15: memref<2x32x32xbf16, #tpu.memory_space<vmem>>, %arg16: memref<2x32x32xbf16, #tpu.memory_space<vmem>>, %arg17: memref<2x1x32xf32, #tpu.memory_space<vmem>>, %arg18: memref<2x1x32xf32, #tpu.memory_space<vmem>>, %arg19: memref<2x32x64xbf16, #tpu.memory_space<vmem>>, %arg20: memref<2x1x64xf32, #tpu.memory_space<vmem>>, %arg21: memref<2x64x32xbf16, #tpu.memory_space<vmem>>, %arg22: memref<2x1x32xf32, #tpu.memory_space<vmem>>, %arg23: memref<1x32xf32, #tpu.memory_space<vmem>>, %arg24: memref<1x32xf32, #tpu.memory_space<vmem>>, %arg25: memref<1x8x32xf32, #tpu.memory_space<vmem>>, %arg26: memref<8x32xf32, #tpu.memory_space<vmem>>) attributes {dimension_semantics = [#tpu.dimension_semantics<parallel>], iteration_bounds = array<i64: 2>, scalar_prefetch = 0 : i64, scratch_operands = 1 : i64, tpu.core_type = #tpu.core_type<tc>, window_params = [{transform_indices = @transform_0, window_bounds = array<i64: 1, 8, 32>}, {transform_indices = @transform_1, window_bounds = array<i64: 1, 8, 32>}, {transform_indices = @transform_2, window_bounds = array<i64: 1, 8, 8>}, {transform_indices = @transform_3, window_bounds = array<i64: 1, 1, 8>}, {pipeline_mode = #tpu.pipeline_mode<synchronous>, transform_indices = @transform_4, window_bounds = array<i64: 2, 1, 32>}, {pipeline_mode = #tpu.pipeline_mode<synchronous>, transform_indices = @transform_5, window_bounds = array<i64: 2, 1, 32>}, {pipeline_mode = #tpu.pipeline_mode<synchronous>, transform_indices = @transform_6, window_bounds = array<i64: 2, 32, 32>}, {pipeline_mode = #tpu.pipeline_mode<synchronous>, transform_indices = @transform_7, window_bounds = array<i64: 2, 32, 32>}, {pipeline_mode = #tpu.pipeline_mode<synchronous>, transform_indices = @transform_8, window_bounds = array<i64: 2, 32, 32>}, {pipeline_mode = #tpu.pipeline_mode<synchronous>, transform_indices = @transform_9, window_bounds = array<i64: 2, 32, 32>}, {pipeline_mode = #tpu.pipeline_mode<synchronous>, transform_indices = @transform_10, window_bounds = array<i64: 2, 1, 32>}, {pipeline_mode = #tpu.pipeline_mode<synchronous>, transform_indices = @transform_11, window_bounds = array<i64: 2, 1, 32>}, {pipeline_mode = #tpu.pipeline_mode<synchronous>, transform_indices = @transform_12, window_bounds = array<i64: 2, 32, 32>}, {pipeline_mode = #tpu.pipeline_mode<synchronous>, transform_indices = @transform_13, window_bounds = array<i64: 2, 32, 32>}, {pipeline_mode = #tpu.pipeline_mode<synchronous>, transform_indices = @transform_14, window_bounds = array<i64: 2, 32, 32>}, {pipeline_mode = #tpu.pipeline_mode<synchronous>, transform_indices = @transform_15, window_bounds = array<i64: 2, 32, 32>}, {pipeline_mode = #tpu.pipeline_mode<synchronous>, transform_indices = @transform_16, window_bounds = array<i64: 2, 1, 32>}, {pipeline_mode = #tpu.pipeline_mode<synchronous>, transform_indices = @transform_17, window_bounds = array<i64: 2, 1, 32>}, {pipeline_mode = #tpu.pipeline_mode<synchronous>, transform_indices = @transform_18, window_bounds = array<i64: 2, 32, 64>}, {pipeline_mode = #tpu.pipeline_mode<synchronous>, transform_indices = @transform_19, window_bounds = array<i64: 2, 1, 64>}, {pipeline_mode = #tpu.pipeline_mode<synchronous>, transform_indices = @transform_20, window_bounds = array<i64: 2, 64, 32>}, {pipeline_mode = #tpu.pipeline_mode<synchronous>, transform_indices = @transform_21, window_bounds = array<i64: 2, 1, 32>}, {pipeline_mode = #tpu.pipeline_mode<synchronous>, transform_indices = @transform_22, window_bounds = array<i64: 1, 32>}, {pipeline_mode = #tpu.pipeline_mode<synchronous>, transform_indices = @transform_23, window_bounds = array<i64: 1, 32>}, {transform_indices = @transform_24, window_bounds = array<i64: 1, 8, 32>}]} {
    %c0 = arith.constant 0 : index
    %c0_0 = arith.constant 0 : index
    %c0_1 = arith.constant 0 : index
    %0 = vector.load %arg1[%c0, %c0_0, %c0_1] : memref<1x8x32xf32, #tpu.memory_space<vmem>>, vector<1x8x32xf32>
    %1 = vector.shape_cast %0 : vector<1x8x32xf32> to vector<8x32xf32>
    %c0_2 = arith.constant 0 : index
    %c0_3 = arith.constant 0 : index
    %c0_4 = arith.constant 0 : index
    %2 = vector.load %arg2[%c0_2, %c0_3, %c0_4] : memref<1x8x32xf32, #tpu.memory_space<vmem>>, vector<1x8x32xf32>
    %3 = vector.shape_cast %2 : vector<1x8x32xf32> to vector<8x32xf32>
    %4 = arith.truncf %3 : vector<8x32xf32> to vector<8x32xbf16>
    %c0_5 = arith.constant 0 : index
    %c0_6 = arith.constant 0 : index
    %c0_7 = arith.constant 0 : index
    %5 = vector.load %arg3[%c0_5, %c0_6, %c0_7] : memref<1x8x8xf32, #tpu.memory_space<vmem>>, vector<1x8x8xf32>
    %6 = vector.shape_cast %5 : vector<1x8x8xf32> to vector<8x8xf32>
    %c0_8 = arith.constant 0 : index
    %c0_9 = arith.constant 0 : index
    %c0_10 = arith.constant 0 : index
    %7 = vector.load %arg4[%c0_8, %c0_9, %c0_10] : memref<1x1x8xf32, #tpu.memory_space<vmem>>, vector<1x1x8xf32>
    %8 = vector.shape_cast %7 : vector<1x1x8xf32> to vector<1x8xf32>
    %9 = arith.truncf %1 : vector<8x32xf32> to vector<8x32xbf16>
    %c0_11 = arith.constant 0 : index
    %c0_12 = arith.constant 0 : index
    %c0_13 = arith.constant 0 : index
    %10 = vector.load %arg5[%c0_11, %c0_12, %c0_13] : memref<2x1x32xf32, #tpu.memory_space<vmem>>, vector<1x1x32xf32>
    %11 = vector.shape_cast %10 : vector<1x1x32xf32> to vector<1x32xf32>
    %c0_14 = arith.constant 0 : index
    %c0_15 = arith.constant 0 : index
    %c0_16 = arith.constant 0 : index
    %12 = vector.load %arg6[%c0_14, %c0_15, %c0_16] : memref<2x1x32xf32, #tpu.memory_space<vmem>>, vector<1x1x32xf32>
    %13 = vector.shape_cast %12 : vector<1x1x32xf32> to vector<1x32xf32>
    %c0_17 = arith.constant 0 : index
    %c0_18 = arith.constant 0 : index
    %c0_19 = arith.constant 0 : index
    %14 = vector.load %arg7[%c0_17, %c0_18, %c0_19] : memref<2x32x32xbf16, #tpu.memory_space<vmem>>, vector<1x32x32xbf16>
    %15 = vector.shape_cast %14 : vector<1x32x32xbf16> to vector<32x32xbf16>
    %c0_20 = arith.constant 0 : index
    %c0_21 = arith.constant 0 : index
    %c0_22 = arith.constant 0 : index
    %16 = vector.load %arg8[%c0_20, %c0_21, %c0_22] : memref<2x32x32xbf16, #tpu.memory_space<vmem>>, vector<1x32x32xbf16>
    %17 = vector.shape_cast %16 : vector<1x32x32xbf16> to vector<32x32xbf16>
    %c0_23 = arith.constant 0 : index
    %c0_24 = arith.constant 0 : index
    %c0_25 = arith.constant 0 : index
    %18 = vector.load %arg9[%c0_23, %c0_24, %c0_25] : memref<2x32x32xbf16, #tpu.memory_space<vmem>>, vector<1x32x32xbf16>
    %19 = vector.shape_cast %18 : vector<1x32x32xbf16> to vector<32x32xbf16>
    %c0_26 = arith.constant 0 : index
    %c0_27 = arith.constant 0 : index
    %c0_28 = arith.constant 0 : index
    %20 = vector.load %arg10[%c0_26, %c0_27, %c0_28] : memref<2x32x32xbf16, #tpu.memory_space<vmem>>, vector<1x32x32xbf16>
    %21 = vector.shape_cast %20 : vector<1x32x32xbf16> to vector<32x32xbf16>
    %cst = arith.constant dense<0.000000e+00> : vector<8xf32>
    %22 = vector.multi_reduction <add>, %1, %cst [1] : vector<8x32xf32> to vector<8xf32>
    %23 = vector.shape_cast %22 : vector<8xf32> to vector<8x1xf32>
    %cst_29 = arith.constant 3.200000e+01 : f32
    %24 = vector.broadcast %cst_29 : f32 to vector<8x1xf32>
    %25 = arith.divf %23, %24 : vector<8x1xf32>
    %26 = vector.broadcast %25 : vector<8x1xf32> to vector<8x32xf32>
    %27 = arith.subf %1, %26 : vector<8x32xf32>
    %28 = arith.mulf %27, %27 : vector<8x32xf32>
    %cst_30 = arith.constant dense<0.000000e+00> : vector<8xf32>
    %29 = vector.multi_reduction <add>, %28, %cst_30 [1] : vector<8x32xf32> to vector<8xf32>
    %30 = vector.shape_cast %29 : vector<8xf32> to vector<8x1xf32>
    %cst_31 = arith.constant 3.200000e+01 : f32
    %31 = vector.broadcast %cst_31 : f32 to vector<8x1xf32>
    %32 = arith.divf %30, %31 : vector<8x1xf32>
    %33 = vector.broadcast %25 : vector<8x1xf32> to vector<8x32xf32>
    %34 = arith.subf %1, %33 : vector<8x32xf32>
    %cst_32 = arith.constant 9.99999997E-7 : f32
    %35 = vector.broadcast %cst_32 : f32 to vector<8x1xf32>
    %36 = arith.addf %32, %35 : vector<8x1xf32>
    %37 = math.rsqrt %36 : vector<8x1xf32>
    %38 = vector.broadcast %37 : vector<8x1xf32> to vector<8x32xf32>
    %39 = arith.mulf %34, %38 : vector<8x32xf32>
    %40 = vector.broadcast %11 : vector<1x32xf32> to vector<8x32xf32>
    %41 = arith.mulf %39, %40 : vector<8x32xf32>
    %42 = vector.broadcast %13 : vector<1x32xf32> to vector<8x32xf32>
    %43 = arith.addf %41, %42 : vector<8x32xf32>
    %44 = arith.truncf %43 : vector<8x32xf32> to vector<8x32xbf16>
    %cst_33 = arith.constant dense<0.000000e+00> : vector<8x32xf32>
    %45 = tpu.matmul %44, %15, %cst_33 {dimension_numbers = #tpu.dot_dimension_numbers<[1], [0], [0], [1], [0, 0, 1, 1], [], []>} : vector<8x32xbf16>, vector<32x32xbf16>, vector<8x32xf32> -> vector<8x32xf32>
    %cst_34 = arith.constant dense<0.000000e+00> : vector<8x32xf32>
    %46 = tpu.matmul %9, %17, %cst_34 {dimension_numbers = #tpu.dot_dimension_numbers<[1], [0], [0], [1], [0, 0, 1, 1], [], []>} : vector<8x32xbf16>, vector<32x32xbf16>, vector<8x32xf32> -> vector<8x32xf32>
    %cst_35 = arith.constant dense<0.000000e+00> : vector<8x32xf32>
    %47 = tpu.matmul %9, %19, %cst_35 {dimension_numbers = #tpu.dot_dimension_numbers<[1], [0], [0], [1], [0, 0, 1, 1], [], []>} : vector<8x32xbf16>, vector<32x32xbf16>, vector<8x32xf32> -> vector<8x32xf32>
    %48 = vector.extract_strided_slice %45 {offsets = [0, 0], sizes = [8, 8], strides = [1, 1]} : vector<8x32xf32> to vector<8x8xf32>
    %49 = vector.extract_strided_slice %46 {offsets = [0, 0], sizes = [8, 8], strides = [1, 1]} : vector<8x32xf32> to vector<8x8xf32>
    %50 = vector.extract_strided_slice %47 {offsets = [0, 0], sizes = [8, 8], strides = [1, 1]} : vector<8x32xf32> to vector<8x8xf32>
    %cst_36 = arith.constant dense<0.000000e+00> : vector<8x8xf32>
    %51 = tpu.matmul %48, %49, %cst_36 {dimension_numbers = #tpu.dot_dimension_numbers<[1], [1], [0], [0], [0, 0, 1, 0], [], []>} : vector<8x8xf32>, vector<8x8xf32>, vector<8x8xf32> -> vector<8x8xf32>
    %52 = arith.addf %51, %6 : vector<8x8xf32>
    %cst_37 = arith.constant dense<0xFF800000> : vector<8xf32>
    %53 = vector.multi_reduction <maximumf>, %52, %cst_37 [1] : vector<8x8xf32> to vector<8xf32>
    %54 = vector.shape_cast %53 : vector<8xf32> to vector<8x1xf32>
    %55 = vector.broadcast %54 : vector<8x1xf32> to vector<8x8xf32>
    %56 = arith.subf %52, %55 : vector<8x8xf32>
    %57 = math.exp %56 : vector<8x8xf32>
    %cst_38 = arith.constant dense<0.000000e+00> : vector<8xf32>
    %58 = vector.multi_reduction <add>, %57, %cst_38 [1] : vector<8x8xf32> to vector<8xf32>
    %59 = vector.shape_cast %58 : vector<8xf32> to vector<8x1xf32>
    %60 = tpu.reciprocal %59 {approx = true} : vector<8x1xf32> -> vector<8x1xf32>
    %61 = vector.broadcast %60 : vector<8x1xf32> to vector<8x8xf32>
    %62 = arith.mulf %57, %61 : vector<8x8xf32>
    %cst_39 = arith.constant dense<0.000000e+00> : vector<8x8xf32>
    %63 = tpu.matmul %62, %50, %cst_39 {dimension_numbers = #tpu.dot_dimension_numbers<[1], [0], [0], [1], [0, 0, 1, 1], [], []>} : vector<8x8xf32>, vector<8x8xf32>, vector<8x8xf32> -> vector<8x8xf32>
    %c0_40 = arith.constant 0 : index
    %c0_41 = arith.constant 0 : index
    %64 = vector.load %arg26[%c0_40, %c0_41] : memref<8x32xf32, #tpu.memory_space<vmem>>, vector<8x8xf32>
    tpu.vector_store %arg26[%c0_40, %c0_41], %63 {strides = array<i32>} : memref<8x32xf32, #tpu.memory_space<vmem>>, vector<8x8xf32>,
    %65 = vector.extract_strided_slice %45 {offsets = [0, 8], sizes = [8, 8], strides = [1, 1]} : vector<8x32xf32> to vector<8x8xf32>
    %66 = vector.extract_strided_slice %46 {offsets = [0, 8], sizes = [8, 8], strides = [1, 1]} : vector<8x32xf32> to vector<8x8xf32>
    %67 = vector.extract_strided_slice %47 {offsets = [0, 8], sizes = [8, 8], strides = [1, 1]} : vector<8x32xf32> to vector<8x8xf32>
    %cst_42 = arith.constant dense<0.000000e+00> : vector<8x8xf32>
    %68 = tpu.matmul %65, %66, %cst_42 {dimension_numbers = #tpu.dot_dimension_numbers<[1], [1], [0], [0], [0, 0, 1, 0], [], []>} : vector<8x8xf32>, vector<8x8xf32>, vector<8x8xf32> -> vector<8x8xf32>
    %69 = arith.addf %68, %6 : vector<8x8xf32>
    %cst_43 = arith.constant dense<0xFF800000> : vector<8xf32>
    %70 = vector.multi_reduction <maximumf>, %69, %cst_43 [1] : vector<8x8xf32> to vector<8xf32>
    %71 = vector.shape_cast %70 : vector<8xf32> to vector<8x1xf32>
    %72 = vector.broadcast %71 : vector<8x1xf32> to vector<8x8xf32>
    %73 = arith.subf %69, %72 : vector<8x8xf32>
    %74 = math.exp %73 : vector<8x8xf32>
    %cst_44 = arith.constant dense<0.000000e+00> : vector<8xf32>
    %75 = vector.multi_reduction <add>, %74, %cst_44 [1] : vector<8x8xf32> to vector<8xf32>
    %76 = vector.shape_cast %75 : vector<8xf32> to vector<8x1xf32>
    %77 = tpu.reciprocal %76 {approx = true} : vector<8x1xf32> -> vector<8x1xf32>
    %78 = vector.broadcast %77 : vector<8x1xf32> to vector<8x8xf32>
    %79 = arith.mulf %74, %78 : vector<8x8xf32>
    %cst_45 = arith.constant dense<0.000000e+00> : vector<8x8xf32>
    %80 = tpu.matmul %79, %67, %cst_45 {dimension_numbers = #tpu.dot_dimension_numbers<[1], [0], [0], [1], [0, 0, 1, 1], [], []>} : vector<8x8xf32>, vector<8x8xf32>, vector<8x8xf32> -> vector<8x8xf32>
    %c0_46 = arith.constant 0 : index
    %c8 = arith.constant 8 : index
    %81 = vector.load %arg26[%c0_46, %c8] : memref<8x32xf32, #tpu.memory_space<vmem>>, vector<8x8xf32>
    tpu.vector_store %arg26[%c0_46, %c8], %80 {strides = array<i32>} : memref<8x32xf32, #tpu.memory_space<vmem>>, vector<8x8xf32>,
    %82 = vector.extract_strided_slice %45 {offsets = [0, 16], sizes = [8, 8], strides = [1, 1]} : vector<8x32xf32> to vector<8x8xf32>
    %83 = vector.extract_strided_slice %46 {offsets = [0, 16], sizes = [8, 8], strides = [1, 1]} : vector<8x32xf32> to vector<8x8xf32>
    %84 = vector.extract_strided_slice %47 {offsets = [0, 16], sizes = [8, 8], strides = [1, 1]} : vector<8x32xf32> to vector<8x8xf32>
    %cst_47 = arith.constant dense<0.000000e+00> : vector<8x8xf32>
    %85 = tpu.matmul %82, %83, %cst_47 {dimension_numbers = #tpu.dot_dimension_numbers<[1], [1], [0], [0], [0, 0, 1, 0], [], []>} : vector<8x8xf32>, vector<8x8xf32>, vector<8x8xf32> -> vector<8x8xf32>
    %86 = arith.addf %85, %6 : vector<8x8xf32>
    %cst_48 = arith.constant dense<0xFF800000> : vector<8xf32>
    %87 = vector.multi_reduction <maximumf>, %86, %cst_48 [1] : vector<8x8xf32> to vector<8xf32>
    %88 = vector.shape_cast %87 : vector<8xf32> to vector<8x1xf32>
    %89 = vector.broadcast %88 : vector<8x1xf32> to vector<8x8xf32>
    %90 = arith.subf %86, %89 : vector<8x8xf32>
    %91 = math.exp %90 : vector<8x8xf32>
    %cst_49 = arith.constant dense<0.000000e+00> : vector<8xf32>
    %92 = vector.multi_reduction <add>, %91, %cst_49 [1] : vector<8x8xf32> to vector<8xf32>
    %93 = vector.shape_cast %92 : vector<8xf32> to vector<8x1xf32>
    %94 = tpu.reciprocal %93 {approx = true} : vector<8x1xf32> -> vector<8x1xf32>
    %95 = vector.broadcast %94 : vector<8x1xf32> to vector<8x8xf32>
    %96 = arith.mulf %91, %95 : vector<8x8xf32>
    %cst_50 = arith.constant dense<0.000000e+00> : vector<8x8xf32>
    %97 = tpu.matmul %96, %84, %cst_50 {dimension_numbers = #tpu.dot_dimension_numbers<[1], [0], [0], [1], [0, 0, 1, 1], [], []>} : vector<8x8xf32>, vector<8x8xf32>, vector<8x8xf32> -> vector<8x8xf32>
    %c0_51 = arith.constant 0 : index
    %c16 = arith.constant 16 : index
    %98 = vector.load %arg26[%c0_51, %c16] : memref<8x32xf32, #tpu.memory_space<vmem>>, vector<8x8xf32>
    tpu.vector_store %arg26[%c0_51, %c16], %97 {strides = array<i32>} : memref<8x32xf32, #tpu.memory_space<vmem>>, vector<8x8xf32>,
    %99 = vector.extract_strided_slice %45 {offsets = [0, 24], sizes = [8, 8], strides = [1, 1]} : vector<8x32xf32> to vector<8x8xf32>
    %100 = vector.extract_strided_slice %46 {offsets = [0, 24], sizes = [8, 8], strides = [1, 1]} : vector<8x32xf32> to vector<8x8xf32>
    %101 = vector.extract_strided_slice %47 {offsets = [0, 24], sizes = [8, 8], strides = [1, 1]} : vector<8x32xf32> to vector<8x8xf32>
    %cst_52 = arith.constant dense<0.000000e+00> : vector<8x8xf32>
    %102 = tpu.matmul %99, %100, %cst_52 {dimension_numbers = #tpu.dot_dimension_numbers<[1], [1], [0], [0], [0, 0, 1, 0], [], []>} : vector<8x8xf32>, vector<8x8xf32>, vector<8x8xf32> -> vector<8x8xf32>
    %103 = arith.addf %102, %6 : vector<8x8xf32>
    %cst_53 = arith.constant dense<0xFF800000> : vector<8xf32>
    %104 = vector.multi_reduction <maximumf>, %103, %cst_53 [1] : vector<8x8xf32> to vector<8xf32>
    %105 = vector.shape_cast %104 : vector<8xf32> to vector<8x1xf32>
    %106 = vector.broadcast %105 : vector<8x1xf32> to vector<8x8xf32>
    %107 = arith.subf %103, %106 : vector<8x8xf32>
    %108 = math.exp %107 : vector<8x8xf32>
    %cst_54 = arith.constant dense<0.000000e+00> : vector<8xf32>
    %109 = vector.multi_reduction <add>, %108, %cst_54 [1] : vector<8x8xf32> to vector<8xf32>
    %110 = vector.shape_cast %109 : vector<8xf32> to vector<8x1xf32>
    %111 = tpu.reciprocal %110 {approx = true} : vector<8x1xf32> -> vector<8x1xf32>
    %112 = vector.broadcast %111 : vector<8x1xf32> to vector<8x8xf32>
    %113 = arith.mulf %108, %112 : vector<8x8xf32>
    %cst_55 = arith.constant dense<0.000000e+00> : vector<8x8xf32>
    %114 = tpu.matmul %113, %101, %cst_55 {dimension_numbers = #tpu.dot_dimension_numbers<[1], [0], [0], [1], [0, 0, 1, 1], [], []>} : vector<8x8xf32>, vector<8x8xf32>, vector<8x8xf32> -> vector<8x8xf32>
    %c0_56 = arith.constant 0 : index
    %c24 = arith.constant 24 : index
    %115 = vector.load %arg26[%c0_56, %c24] : memref<8x32xf32, #tpu.memory_space<vmem>>, vector<8x8xf32>
    tpu.vector_store %arg26[%c0_56, %c24], %114 {strides = array<i32>} : memref<8x32xf32, #tpu.memory_space<vmem>>, vector<8x8xf32>,
    %c0_57 = arith.constant 0 : index
    %c0_58 = arith.constant 0 : index
    %116 = vector.load %arg26[%c0_57, %c0_58] : memref<8x32xf32, #tpu.memory_space<vmem>>, vector<8x32xf32>
    %117 = arith.truncf %116 : vector<8x32xf32> to vector<8x32xbf16>
    %cst_59 = arith.constant dense<0.000000e+00> : vector<8x32xf32>
    %118 = tpu.matmul %117, %21, %cst_59 {dimension_numbers = #tpu.dot_dimension_numbers<[1], [0], [0], [1], [0, 0, 1, 1], [], []>} : vector<8x32xbf16>, vector<32x32xbf16>, vector<8x32xf32> -> vector<8x32xf32>
    %119 = arith.addf %118, %1 : vector<8x32xf32>
    %c0_60 = arith.constant 0 : index
    %c0_61 = arith.constant 0 : index
    %c0_62 = arith.constant 0 : index
    %120 = vector.load %arg11[%c0_60, %c0_61, %c0_62] : memref<2x1x32xf32, #tpu.memory_space<vmem>>, vector<1x1x32xf32>
    %121 = vector.shape_cast %120 : vector<1x1x32xf32> to vector<1x32xf32>
    %c0_63 = arith.constant 0 : index
    %c0_64 = arith.constant 0 : index
    %c0_65 = arith.constant 0 : index
    %122 = vector.load %arg12[%c0_63, %c0_64, %c0_65] : memref<2x1x32xf32, #tpu.memory_space<vmem>>, vector<1x1x32xf32>
    %123 = vector.shape_cast %122 : vector<1x1x32xf32> to vector<1x32xf32>
    %c0_66 = arith.constant 0 : index
    %c0_67 = arith.constant 0 : index
    %c0_68 = arith.constant 0 : index
    %124 = vector.load %arg13[%c0_66, %c0_67, %c0_68] : memref<2x32x32xbf16, #tpu.memory_space<vmem>>, vector<1x32x32xbf16>
    %125 = vector.shape_cast %124 : vector<1x32x32xbf16> to vector<32x32xbf16>
    %c0_69 = arith.constant 0 : index
    %c0_70 = arith.constant 0 : index
    %c0_71 = arith.constant 0 : index
    %126 = vector.load %arg14[%c0_69, %c0_70, %c0_71] : memref<2x32x32xbf16, #tpu.memory_space<vmem>>, vector<1x32x32xbf16>
    %127 = vector.shape_cast %126 : vector<1x32x32xbf16> to vector<32x32xbf16>
    %c0_72 = arith.constant 0 : index
    %c0_73 = arith.constant 0 : index
    %c0_74 = arith.constant 0 : index
    %128 = vector.load %arg15[%c0_72, %c0_73, %c0_74] : memref<2x32x32xbf16, #tpu.memory_space<vmem>>, vector<1x32x32xbf16>
    %129 = vector.shape_cast %128 : vector<1x32x32xbf16> to vector<32x32xbf16>
    %c0_75 = arith.constant 0 : index
    %c0_76 = arith.constant 0 : index
    %c0_77 = arith.constant 0 : index
    %130 = vector.load %arg16[%c0_75, %c0_76, %c0_77] : memref<2x32x32xbf16, #tpu.memory_space<vmem>>, vector<1x32x32xbf16>
    %131 = vector.shape_cast %130 : vector<1x32x32xbf16> to vector<32x32xbf16>
    %cst_78 = arith.constant dense<0.000000e+00> : vector<8xf32>
    %132 = vector.multi_reduction <add>, %119, %cst_78 [1] : vector<8x32xf32> to vector<8xf32>
    %133 = vector.shape_cast %132 : vector<8xf32> to vector<8x1xf32>
    %cst_79 = arith.constant 3.200000e+01 : f32
    %134 = vector.broadcast %cst_79 : f32 to vector<8x1xf32>
    %135 = arith.divf %133, %134 : vector<8x1xf32>
    %136 = vector.broadcast %135 : vector<8x1xf32> to vector<8x32xf32>
    %137 = arith.subf %119, %136 : vector<8x32xf32>
    %138 = arith.mulf %137, %137 : vector<8x32xf32>
    %cst_80 = arith.constant dense<0.000000e+00> : vector<8xf32>
    %139 = vector.multi_reduction <add>, %138, %cst_80 [1] : vector<8x32xf32> to vector<8xf32>
    %140 = vector.shape_cast %139 : vector<8xf32> to vector<8x1xf32>
    %cst_81 = arith.constant 3.200000e+01 : f32
    %141 = vector.broadcast %cst_81 : f32 to vector<8x1xf32>
    %142 = arith.divf %140, %141 : vector<8x1xf32>
    %143 = vector.broadcast %135 : vector<8x1xf32> to vector<8x32xf32>
    %144 = arith.subf %119, %143 : vector<8x32xf32>
    %cst_82 = arith.constant 9.99999997E-7 : f32
    %145 = vector.broadcast %cst_82 : f32 to vector<8x1xf32>
    %146 = arith.addf %142, %145 : vector<8x1xf32>
    %147 = math.rsqrt %146 : vector<8x1xf32>
    %148 = vector.broadcast %147 : vector<8x1xf32> to vector<8x32xf32>
    %149 = arith.mulf %144, %148 : vector<8x32xf32>
    %150 = vector.broadcast %121 : vector<1x32xf32> to vector<8x32xf32>
    %151 = arith.mulf %149, %150 : vector<8x32xf32>
    %152 = vector.broadcast %123 : vector<1x32xf32> to vector<8x32xf32>
    %153 = arith.addf %151, %152 : vector<8x32xf32>
    %154 = arith.truncf %153 : vector<8x32xf32> to vector<8x32xbf16>
    %cst_83 = arith.constant dense<0.000000e+00> : vector<8x32xf32>
    %155 = tpu.matmul %154, %125, %cst_83 {dimension_numbers = #tpu.dot_dimension_numbers<[1], [0], [0], [1], [0, 0, 1, 1], [], []>} : vector<8x32xbf16>, vector<32x32xbf16>, vector<8x32xf32> -> vector<8x32xf32>
    %cst_84 = arith.constant dense<0.000000e+00> : vector<8x32xf32>
    %156 = tpu.matmul %4, %127, %cst_84 {dimension_numbers = #tpu.dot_dimension_numbers<[1], [0], [0], [1], [0, 0, 1, 1], [], []>} : vector<8x32xbf16>, vector<32x32xbf16>, vector<8x32xf32> -> vector<8x32xf32>
    %cst_85 = arith.constant dense<0.000000e+00> : vector<8x32xf32>
    %157 = tpu.matmul %4, %129, %cst_85 {dimension_numbers = #tpu.dot_dimension_numbers<[1], [0], [0], [1], [0, 0, 1, 1], [], []>} : vector<8x32xbf16>, vector<32x32xbf16>, vector<8x32xf32> -> vector<8x32xf32>
    %158 = vector.extract_strided_slice %155 {offsets = [0, 0], sizes = [8, 8], strides = [1, 1]} : vector<8x32xf32> to vector<8x8xf32>
    %159 = vector.extract_strided_slice %156 {offsets = [0, 0], sizes = [8, 8], strides = [1, 1]} : vector<8x32xf32> to vector<8x8xf32>
    %160 = vector.extract_strided_slice %157 {offsets = [0, 0], sizes = [8, 8], strides = [1, 1]} : vector<8x32xf32> to vector<8x8xf32>
    %cst_86 = arith.constant dense<0.000000e+00> : vector<8x8xf32>
    %161 = tpu.matmul %158, %159, %cst_86 {dimension_numbers = #tpu.dot_dimension_numbers<[1], [1], [0], [0], [0, 0, 1, 0], [], []>} : vector<8x8xf32>, vector<8x8xf32>, vector<8x8xf32> -> vector<8x8xf32>
    %162 = vector.broadcast %8 : vector<1x8xf32> to vector<8x8xf32>
    %163 = arith.addf %161, %162 : vector<8x8xf32>
    %cst_87 = arith.constant dense<0xFF800000> : vector<8xf32>
    %164 = vector.multi_reduction <maximumf>, %163, %cst_87 [1] : vector<8x8xf32> to vector<8xf32>
    %165 = vector.shape_cast %164 : vector<8xf32> to vector<8x1xf32>
    %166 = vector.broadcast %165 : vector<8x1xf32> to vector<8x8xf32>
    %167 = arith.subf %163, %166 : vector<8x8xf32>
    %168 = math.exp %167 : vector<8x8xf32>
    %cst_88 = arith.constant dense<0.000000e+00> : vector<8xf32>
    %169 = vector.multi_reduction <add>, %168, %cst_88 [1] : vector<8x8xf32> to vector<8xf32>
    %170 = vector.shape_cast %169 : vector<8xf32> to vector<8x1xf32>
    %171 = tpu.reciprocal %170 {approx = true} : vector<8x1xf32> -> vector<8x1xf32>
    %172 = vector.broadcast %171 : vector<8x1xf32> to vector<8x8xf32>
    %173 = arith.mulf %168, %172 : vector<8x8xf32>
    %cst_89 = arith.constant dense<0.000000e+00> : vector<8x8xf32>
    %174 = tpu.matmul %173, %160, %cst_89 {dimension_numbers = #tpu.dot_dimension_numbers<[1], [0], [0], [1], [0, 0, 1, 1], [], []>} : vector<8x8xf32>, vector<8x8xf32>, vector<8x8xf32> -> vector<8x8xf32>
    %c0_90 = arith.constant 0 : index
    %c0_91 = arith.constant 0 : index
    %175 = vector.load %arg26[%c0_90, %c0_91] : memref<8x32xf32, #tpu.memory_space<vmem>>, vector<8x8xf32>
    tpu.vector_store %arg26[%c0_90, %c0_91], %174 {strides = array<i32>} : memref<8x32xf32, #tpu.memory_space<vmem>>, vector<8x8xf32>,
    %176 = vector.extract_strided_slice %155 {offsets = [0, 8], sizes = [8, 8], strides = [1, 1]} : vector<8x32xf32> to vector<8x8xf32>
    %177 = vector.extract_strided_slice %156 {offsets = [0, 8], sizes = [8, 8], strides = [1, 1]} : vector<8x32xf32> to vector<8x8xf32>
    %178 = vector.extract_strided_slice %157 {offsets = [0, 8], sizes = [8, 8], strides = [1, 1]} : vector<8x32xf32> to vector<8x8xf32>
    %cst_92 = arith.constant dense<0.000000e+00> : vector<8x8xf32>
    %179 = tpu.matmul %176, %177, %cst_92 {dimension_numbers = #tpu.dot_dimension_numbers<[1], [1], [0], [0], [0, 0, 1, 0], [], []>} : vector<8x8xf32>, vector<8x8xf32>, vector<8x8xf32> -> vector<8x8xf32>
    %180 = vector.broadcast %8 : vector<1x8xf32> to vector<8x8xf32>
    %181 = arith.addf %179, %180 : vector<8x8xf32>
    %cst_93 = arith.constant dense<0xFF800000> : vector<8xf32>
    %182 = vector.multi_reduction <maximumf>, %181, %cst_93 [1] : vector<8x8xf32> to vector<8xf32>
    %183 = vector.shape_cast %182 : vector<8xf32> to vector<8x1xf32>
    %184 = vector.broadcast %183 : vector<8x1xf32> to vector<8x8xf32>
    %185 = arith.subf %181, %184 : vector<8x8xf32>
    %186 = math.exp %185 : vector<8x8xf32>
    %cst_94 = arith.constant dense<0.000000e+00> : vector<8xf32>
    %187 = vector.multi_reduction <add>, %186, %cst_94 [1] : vector<8x8xf32> to vector<8xf32>
    %188 = vector.shape_cast %187 : vector<8xf32> to vector<8x1xf32>
    %189 = tpu.reciprocal %188 {approx = true} : vector<8x1xf32> -> vector<8x1xf32>
    %190 = vector.broadcast %189 : vector<8x1xf32> to vector<8x8xf32>
    %191 = arith.mulf %186, %190 : vector<8x8xf32>
    %cst_95 = arith.constant dense<0.000000e+00> : vector<8x8xf32>
    %192 = tpu.matmul %191, %178, %cst_95 {dimension_numbers = #tpu.dot_dimension_numbers<[1], [0], [0], [1], [0, 0, 1, 1], [], []>} : vector<8x8xf32>, vector<8x8xf32>, vector<8x8xf32> -> vector<8x8xf32>
    %c0_96 = arith.constant 0 : index
    %c8_97 = arith.constant 8 : index
    %193 = vector.load %arg26[%c0_96, %c8_97] : memref<8x32xf32, #tpu.memory_space<vmem>>, vector<8x8xf32>
    tpu.vector_store %arg26[%c0_96, %c8_97], %192 {strides = array<i32>} : memref<8x32xf32, #tpu.memory_space<vmem>>, vector<8x8xf32>,
    %194 = vector.extract_strided_slice %155 {offsets = [0, 16], sizes = [8, 8], strides = [1, 1]} : vector<8x32xf32> to vector<8x8xf32>
    %195 = vector.extract_strided_slice %156 {offsets = [0, 16], sizes = [8, 8], strides = [1, 1]} : vector<8x32xf32> to vector<8x8xf32>
    %196 = vector.extract_strided_slice %157 {offsets = [0, 16], sizes = [8, 8], strides = [1, 1]} : vector<8x32xf32> to vector<8x8xf32>
    %cst_98 = arith.constant dense<0.000000e+00> : vector<8x8xf32>
    %197 = tpu.matmul %194, %195, %cst_98 {dimension_numbers = #tpu.dot_dimension_numbers<[1], [1], [0], [0], [0, 0, 1, 0], [], []>} : vector<8x8xf32>, vector<8x8xf32>, vector<8x8xf32> -> vector<8x8xf32>
    %198 = vector.broadcast %8 : vector<1x8xf32> to vector<8x8xf32>
    %199 = arith.addf %197, %198 : vector<8x8xf32>
    %cst_99 = arith.constant dense<0xFF800000> : vector<8xf32>
    %200 = vector.multi_reduction <maximumf>, %199, %cst_99 [1] : vector<8x8xf32> to vector<8xf32>
    %201 = vector.shape_cast %200 : vector<8xf32> to vector<8x1xf32>
    %202 = vector.broadcast %201 : vector<8x1xf32> to vector<8x8xf32>
    %203 = arith.subf %199, %202 : vector<8x8xf32>
    %204 = math.exp %203 : vector<8x8xf32>
    %cst_100 = arith.constant dense<0.000000e+00> : vector<8xf32>
    %205 = vector.multi_reduction <add>, %204, %cst_100 [1] : vector<8x8xf32> to vector<8xf32>
    %206 = vector.shape_cast %205 : vector<8xf32> to vector<8x1xf32>
    %207 = tpu.reciprocal %206 {approx = true} : vector<8x1xf32> -> vector<8x1xf32>
    %208 = vector.broadcast %207 : vector<8x1xf32> to vector<8x8xf32>
    %209 = arith.mulf %204, %208 : vector<8x8xf32>
    %cst_101 = arith.constant dense<0.000000e+00> : vector<8x8xf32>
    %210 = tpu.matmul %209, %196, %cst_101 {dimension_numbers = #tpu.dot_dimension_numbers<[1], [0], [0], [1], [0, 0, 1, 1], [], []>} : vector<8x8xf32>, vector<8x8xf32>, vector<8x8xf32> -> vector<8x8xf32>
    %c0_102 = arith.constant 0 : index
    %c16_103 = arith.constant 16 : index
    %211 = vector.load %arg26[%c0_102, %c16_103] : memref<8x32xf32, #tpu.memory_space<vmem>>, vector<8x8xf32>
    tpu.vector_store %arg26[%c0_102, %c16_103], %210 {strides = array<i32>} : memref<8x32xf32, #tpu.memory_space<vmem>>, vector<8x8xf32>,
    %212 = vector.extract_strided_slice %155 {offsets = [0, 24], sizes = [8, 8], strides = [1, 1]} : vector<8x32xf32> to vector<8x8xf32>
    %213 = vector.extract_strided_slice %156 {offsets = [0, 24], sizes = [8, 8], strides = [1, 1]} : vector<8x32xf32> to vector<8x8xf32>
    %214 = vector.extract_strided_slice %157 {offsets = [0, 24], sizes = [8, 8], strides = [1, 1]} : vector<8x32xf32> to vector<8x8xf32>
    %cst_104 = arith.constant dense<0.000000e+00> : vector<8x8xf32>
    %215 = tpu.matmul %212, %213, %cst_104 {dimension_numbers = #tpu.dot_dimension_numbers<[1], [1], [0], [0], [0, 0, 1, 0], [], []>} : vector<8x8xf32>, vector<8x8xf32>, vector<8x8xf32> -> vector<8x8xf32>
    %216 = vector.broadcast %8 : vector<1x8xf32> to vector<8x8xf32>
    %217 = arith.addf %215, %216 : vector<8x8xf32>
    %cst_105 = arith.constant dense<0xFF800000> : vector<8xf32>
    %218 = vector.multi_reduction <maximumf>, %217, %cst_105 [1] : vector<8x8xf32> to vector<8xf32>
    %219 = vector.shape_cast %218 : vector<8xf32> to vector<8x1xf32>
    %220 = vector.broadcast %219 : vector<8x1xf32> to vector<8x8xf32>
    %221 = arith.subf %217, %220 : vector<8x8xf32>
    %222 = math.exp %221 : vector<8x8xf32>
    %cst_106 = arith.constant dense<0.000000e+00> : vector<8xf32>
    %223 = vector.multi_reduction <add>, %222, %cst_106 [1] : vector<8x8xf32> to vector<8xf32>
    %224 = vector.shape_cast %223 : vector<8xf32> to vector<8x1xf32>
    %225 = tpu.reciprocal %224 {approx = true} : vector<8x1xf32> -> vector<8x1xf32>
    %226 = vector.broadcast %225 : vector<8x1xf32> to vector<8x8xf32>
    %227 = arith.mulf %222, %226 : vector<8x8xf32>
    %cst_107 = arith.constant dense<0.000000e+00> : vector<8x8xf32>
    %228 = tpu.matmul %227, %214, %cst_107 {dimension_numbers = #tpu.dot_dimension_numbers<[1], [0], [0], [1], [0, 0, 1, 1], [], []>} : vector<8x8xf32>, vector<8x8xf32>, vector<8x8xf32> -> vector<8x8xf32>
    %c0_108 = arith.constant 0 : index
    %c24_109 = arith.constant 24 : index
    %229 = vector.load %arg26[%c0_108, %c24_109] : memref<8x32xf32, #tpu.memory_space<vmem>>, vector<8x8xf32>
    tpu.vector_store %arg26[%c0_108, %c24_109], %228 {strides = array<i32>} : memref<8x32xf32, #tpu.memory_space<vmem>>, vector<8x8xf32>,
    %c0_110 = arith.constant 0 : index
    %c0_111 = arith.constant 0 : index
    %230 = vector.load %arg26[%c0_110, %c0_111] : memref<8x32xf32, #tpu.memory_space<vmem>>, vector<8x32xf32>
    %231 = arith.truncf %230 : vector<8x32xf32> to vector<8x32xbf16>
    %cst_112 = arith.constant dense<0.000000e+00> : vector<8x32xf32>
    %232 = tpu.matmul %231, %131, %cst_112 {dimension_numbers = #tpu.dot_dimension_numbers<[1], [0], [0], [1], [0, 0, 1, 1], [], []>} : vector<8x32xbf16>, vector<32x32xbf16>, vector<8x32xf32> -> vector<8x32xf32>
    %233 = arith.addf %232, %119 : vector<8x32xf32>
    %c0_113 = arith.constant 0 : index
    %c0_114 = arith.constant 0 : index
    %c0_115 = arith.constant 0 : index
    %234 = vector.load %arg17[%c0_113, %c0_114, %c0_115] : memref<2x1x32xf32, #tpu.memory_space<vmem>>, vector<1x1x32xf32>
    %235 = vector.shape_cast %234 : vector<1x1x32xf32> to vector<1x32xf32>
    %c0_116 = arith.constant 0 : index
    %c0_117 = arith.constant 0 : index
    %c0_118 = arith.constant 0 : index
    %236 = vector.load %arg18[%c0_116, %c0_117, %c0_118] : memref<2x1x32xf32, #tpu.memory_space<vmem>>, vector<1x1x32xf32>
    %237 = vector.shape_cast %236 : vector<1x1x32xf32> to vector<1x32xf32>
    %c0_119 = arith.constant 0 : index
    %c0_120 = arith.constant 0 : index
    %c0_121 = arith.constant 0 : index
    %238 = vector.load %arg19[%c0_119, %c0_120, %c0_121] : memref<2x32x64xbf16, #tpu.memory_space<vmem>>, vector<1x32x64xbf16>
    %239 = vector.shape_cast %238 : vector<1x32x64xbf16> to vector<32x64xbf16>
    %c0_122 = arith.constant 0 : index
    %c0_123 = arith.constant 0 : index
    %c0_124 = arith.constant 0 : index
    %240 = vector.load %arg20[%c0_122, %c0_123, %c0_124] : memref<2x1x64xf32, #tpu.memory_space<vmem>>, vector<1x1x64xf32>
    %241 = vector.shape_cast %240 : vector<1x1x64xf32> to vector<1x64xf32>
    %c0_125 = arith.constant 0 : index
    %c0_126 = arith.constant 0 : index
    %c0_127 = arith.constant 0 : index
    %242 = vector.load %arg21[%c0_125, %c0_126, %c0_127] : memref<2x64x32xbf16, #tpu.memory_space<vmem>>, vector<1x64x32xbf16>
    %243 = vector.shape_cast %242 : vector<1x64x32xbf16> to vector<64x32xbf16>
    %c0_128 = arith.constant 0 : index
    %c0_129 = arith.constant 0 : index
    %c0_130 = arith.constant 0 : index
    %244 = vector.load %arg22[%c0_128, %c0_129, %c0_130] : memref<2x1x32xf32, #tpu.memory_space<vmem>>, vector<1x1x32xf32>
    %245 = vector.shape_cast %244 : vector<1x1x32xf32> to vector<1x32xf32>
    %cst_131 = arith.constant dense<0.000000e+00> : vector<8xf32>
    %246 = vector.multi_reduction <add>, %233, %cst_131 [1] : vector<8x32xf32> to vector<8xf32>
    %247 = vector.shape_cast %246 : vector<8xf32> to vector<8x1xf32>
    %cst_132 = arith.constant 3.200000e+01 : f32
    %248 = vector.broadcast %cst_132 : f32 to vector<8x1xf32>
    %249 = arith.divf %247, %248 : vector<8x1xf32>
    %250 = vector.broadcast %249 : vector<8x1xf32> to vector<8x32xf32>
    %251 = arith.subf %233, %250 : vector<8x32xf32>
    %252 = arith.mulf %251, %251 : vector<8x32xf32>
    %cst_133 = arith.constant dense<0.000000e+00> : vector<8xf32>
    %253 = vector.multi_reduction <add>, %252, %cst_133 [1] : vector<8x32xf32> to vector<8xf32>
    %254 = vector.shape_cast %253 : vector<8xf32> to vector<8x1xf32>
    %cst_134 = arith.constant 3.200000e+01 : f32
    %255 = vector.broadcast %cst_134 : f32 to vector<8x1xf32>
    %256 = arith.divf %254, %255 : vector<8x1xf32>
    %257 = vector.broadcast %249 : vector<8x1xf32> to vector<8x32xf32>
    %258 = arith.subf %233, %257 : vector<8x32xf32>
    %cst_135 = arith.constant 9.99999997E-7 : f32
    %259 = vector.broadcast %cst_135 : f32 to vector<8x1xf32>
    %260 = arith.addf %256, %259 : vector<8x1xf32>
    %261 = math.rsqrt %260 : vector<8x1xf32>
    %262 = vector.broadcast %261 : vector<8x1xf32> to vector<8x32xf32>
    %263 = arith.mulf %258, %262 : vector<8x32xf32>
    %264 = vector.broadcast %235 : vector<1x32xf32> to vector<8x32xf32>
    %265 = arith.mulf %263, %264 : vector<8x32xf32>
    %266 = vector.broadcast %237 : vector<1x32xf32> to vector<8x32xf32>
    %267 = arith.addf %265, %266 : vector<8x32xf32>
    %268 = arith.truncf %267 : vector<8x32xf32> to vector<8x32xbf16>
    %cst_136 = arith.constant dense<0.000000e+00> : vector<8x64xf32>
    %269 = tpu.matmul %268, %239, %cst_136 {dimension_numbers = #tpu.dot_dimension_numbers<[1], [0], [0], [1], [0, 0, 1, 1], [], []>} : vector<8x32xbf16>, vector<32x64xbf16>, vector<8x64xf32> -> vector<8x64xf32>
    %270 = vector.broadcast %241 : vector<1x64xf32> to vector<8x64xf32>
    %271 = arith.addf %269, %270 : vector<8x64xf32>
    %cst_137 = arith.constant 0.000000e+00 : f32
    %272 = vector.broadcast %cst_137 : f32 to vector<8x64xf32>
    %273 = arith.maximumf %271, %272 : vector<8x64xf32>
    %274 = arith.truncf %273 : vector<8x64xf32> to vector<8x64xbf16>
    %cst_138 = arith.constant dense<0.000000e+00> : vector<8x32xf32>
    %275 = tpu.matmul %274, %243, %cst_138 {dimension_numbers = #tpu.dot_dimension_numbers<[1], [0], [0], [1], [0, 0, 1, 1], [], []>} : vector<8x64xbf16>, vector<64x32xbf16>, vector<8x32xf32> -> vector<8x32xf32>
    %276 = vector.broadcast %245 : vector<1x32xf32> to vector<8x32xf32>
    %277 = arith.addf %275, %276 : vector<8x32xf32>
    %278 = arith.addf %277, %233 : vector<8x32xf32>
    %279 = arith.truncf %278 : vector<8x32xf32> to vector<8x32xbf16>
    %c1 = arith.constant 1 : index
    %c0_139 = arith.constant 0 : index
    %c0_140 = arith.constant 0 : index
    %280 = vector.load %arg5[%c1, %c0_139, %c0_140] : memref<2x1x32xf32, #tpu.memory_space<vmem>>, vector<1x1x32xf32>
    %281 = vector.shape_cast %280 : vector<1x1x32xf32> to vector<1x32xf32>
    %c1_141 = arith.constant 1 : index
    %c0_142 = arith.constant 0 : index
    %c0_143 = arith.constant 0 : index
    %282 = vector.load %arg6[%c1_141, %c0_142, %c0_143] : memref<2x1x32xf32, #tpu.memory_space<vmem>>, vector<1x1x32xf32>
    %283 = vector.shape_cast %282 : vector<1x1x32xf32> to vector<1x32xf32>
    %c1_144 = arith.constant 1 : index
    %c0_145 = arith.constant 0 : index
    %c0_146 = arith.constant 0 : index
    %284 = vector.load %arg7[%c1_144, %c0_145, %c0_146] : memref<2x32x32xbf16, #tpu.memory_space<vmem>>, vector<1x32x32xbf16>
    %285 = vector.shape_cast %284 : vector<1x32x32xbf16> to vector<32x32xbf16>
    %c1_147 = arith.constant 1 : index
    %c0_148 = arith.constant 0 : index
    %c0_149 = arith.constant 0 : index
    %286 = vector.load %arg8[%c1_147, %c0_148, %c0_149] : memref<2x32x32xbf16, #tpu.memory_space<vmem>>, vector<1x32x32xbf16>
    %287 = vector.shape_cast %286 : vector<1x32x32xbf16> to vector<32x32xbf16>
    %c1_150 = arith.constant 1 : index
    %c0_151 = arith.constant 0 : index
    %c0_152 = arith.constant 0 : index
    %288 = vector.load %arg9[%c1_150, %c0_151, %c0_152] : memref<2x32x32xbf16, #tpu.memory_space<vmem>>, vector<1x32x32xbf16>
    %289 = vector.shape_cast %288 : vector<1x32x32xbf16> to vector<32x32xbf16>
    %c1_153 = arith.constant 1 : index
    %c0_154 = arith.constant 0 : index
    %c0_155 = arith.constant 0 : index
    %290 = vector.load %arg10[%c1_153, %c0_154, %c0_155] : memref<2x32x32xbf16, #tpu.memory_space<vmem>>, vector<1x32x32xbf16>
    %291 = vector.shape_cast %290 : vector<1x32x32xbf16> to vector<32x32xbf16>
    %cst_156 = arith.constant dense<0.000000e+00> : vector<8xf32>
    %292 = vector.multi_reduction <add>, %278, %cst_156 [1] : vector<8x32xf32> to vector<8xf32>
    %293 = vector.shape_cast %292 : vector<8xf32> to vector<8x1xf32>
    %cst_157 = arith.constant 3.200000e+01 : f32
    %294 = vector.broadcast %cst_157 : f32 to vector<8x1xf32>
    %295 = arith.divf %293, %294 : vector<8x1xf32>
    %296 = vector.broadcast %295 : vector<8x1xf32> to vector<8x32xf32>
    %297 = arith.subf %278, %296 : vector<8x32xf32>
    %298 = arith.mulf %297, %297 : vector<8x32xf32>
    %cst_158 = arith.constant dense<0.000000e+00> : vector<8xf32>
    %299 = vector.multi_reduction <add>, %298, %cst_158 [1] : vector<8x32xf32> to vector<8xf32>
    %300 = vector.shape_cast %299 : vector<8xf32> to vector<8x1xf32>
    %cst_159 = arith.constant 3.200000e+01 : f32
    %301 = vector.broadcast %cst_159 : f32 to vector<8x1xf32>
    %302 = arith.divf %300, %301 : vector<8x1xf32>
    %303 = vector.broadcast %295 : vector<8x1xf32> to vector<8x32xf32>
    %304 = arith.subf %278, %303 : vector<8x32xf32>
    %cst_160 = arith.constant 9.99999997E-7 : f32
    %305 = vector.broadcast %cst_160 : f32 to vector<8x1xf32>
    %306 = arith.addf %302, %305 : vector<8x1xf32>
    %307 = math.rsqrt %306 : vector<8x1xf32>
    %308 = vector.broadcast %307 : vector<8x1xf32> to vector<8x32xf32>
    %309 = arith.mulf %304, %308 : vector<8x32xf32>
    %310 = vector.broadcast %281 : vector<1x32xf32> to vector<8x32xf32>
    %311 = arith.mulf %309, %310 : vector<8x32xf32>
    %312 = vector.broadcast %283 : vector<1x32xf32> to vector<8x32xf32>
    %313 = arith.addf %311, %312 : vector<8x32xf32>
    %314 = arith.truncf %313 : vector<8x32xf32> to vector<8x32xbf16>
    %cst_161 = arith.constant dense<0.000000e+00> : vector<8x32xf32>
    %315 = tpu.matmul %314, %285, %cst_161 {dimension_numbers = #tpu.dot_dimension_numbers<[1], [0], [0], [1], [0, 0, 1, 1], [], []>} : vector<8x32xbf16>, vector<32x32xbf16>, vector<8x32xf32> -> vector<8x32xf32>
    %cst_162 = arith.constant dense<0.000000e+00> : vector<8x32xf32>
    %316 = tpu.matmul %279, %287, %cst_162 {dimension_numbers = #tpu.dot_dimension_numbers<[1], [0], [0], [1], [0, 0, 1, 1], [], []>} : vector<8x32xbf16>, vector<32x32xbf16>, vector<8x32xf32> -> vector<8x32xf32>
    %cst_163 = arith.constant dense<0.000000e+00> : vector<8x32xf32>
    %317 = tpu.matmul %279, %289, %cst_163 {dimension_numbers = #tpu.dot_dimension_numbers<[1], [0], [0], [1], [0, 0, 1, 1], [], []>} : vector<8x32xbf16>, vector<32x32xbf16>, vector<8x32xf32> -> vector<8x32xf32>
    %318 = vector.extract_strided_slice %315 {offsets = [0, 0], sizes = [8, 8], strides = [1, 1]} : vector<8x32xf32> to vector<8x8xf32>
    %319 = vector.extract_strided_slice %316 {offsets = [0, 0], sizes = [8, 8], strides = [1, 1]} : vector<8x32xf32> to vector<8x8xf32>
    %320 = vector.extract_strided_slice %317 {offsets = [0, 0], sizes = [8, 8], strides = [1, 1]} : vector<8x32xf32> to vector<8x8xf32>
    %cst_164 = arith.constant dense<0.000000e+00> : vector<8x8xf32>
    %321 = tpu.matmul %318, %319, %cst_164 {dimension_numbers = #tpu.dot_dimension_numbers<[1], [1], [0], [0], [0, 0, 1, 0], [], []>} : vector<8x8xf32>, vector<8x8xf32>, vector<8x8xf32> -> vector<8x8xf32>
    %322 = arith.addf %321, %6 : vector<8x8xf32>
    %cst_165 = arith.constant dense<0xFF800000> : vector<8xf32>
    %323 = vector.multi_reduction <maximumf>, %322, %cst_165 [1] : vector<8x8xf32> to vector<8xf32>
    %324 = vector.shape_cast %323 : vector<8xf32> to vector<8x1xf32>
    %325 = vector.broadcast %324 : vector<8x1xf32> to vector<8x8xf32>
    %326 = arith.subf %322, %325 : vector<8x8xf32>
    %327 = math.exp %326 : vector<8x8xf32>
    %cst_166 = arith.constant dense<0.000000e+00> : vector<8xf32>
    %328 = vector.multi_reduction <add>, %327, %cst_166 [1] : vector<8x8xf32> to vector<8xf32>
    %329 = vector.shape_cast %328 : vector<8xf32> to vector<8x1xf32>
    %330 = tpu.reciprocal %329 {approx = true} : vector<8x1xf32> -> vector<8x1xf32>
    %331 = vector.broadcast %330 : vector<8x1xf32> to vector<8x8xf32>
    %332 = arith.mulf %327, %331 : vector<8x8xf32>
    %cst_167 = arith.constant dense<0.000000e+00> : vector<8x8xf32>
    %333 = tpu.matmul %332, %320, %cst_167 {dimension_numbers = #tpu.dot_dimension_numbers<[1], [0], [0], [1], [0, 0, 1, 1], [], []>} : vector<8x8xf32>, vector<8x8xf32>, vector<8x8xf32> -> vector<8x8xf32>
    %c0_168 = arith.constant 0 : index
    %c0_169 = arith.constant 0 : index
    %334 = vector.load %arg26[%c0_168, %c0_169] : memref<8x32xf32, #tpu.memory_space<vmem>>, vector<8x8xf32>
    tpu.vector_store %arg26[%c0_168, %c0_169], %333 {strides = array<i32>} : memref<8x32xf32, #tpu.memory_space<vmem>>, vector<8x8xf32>,
    %335 = vector.extract_strided_slice %315 {offsets = [0, 8], sizes = [8, 8], strides = [1, 1]} : vector<8x32xf32> to vector<8x8xf32>
    %336 = vector.extract_strided_slice %316 {offsets = [0, 8], sizes = [8, 8], strides = [1, 1]} : vector<8x32xf32> to vector<8x8xf32>
    %337 = vector.extract_strided_slice %317 {offsets = [0, 8], sizes = [8, 8], strides = [1, 1]} : vector<8x32xf32> to vector<8x8xf32>
    %cst_170 = arith.constant dense<0.000000e+00> : vector<8x8xf32>
    %338 = tpu.matmul %335, %336, %cst_170 {dimension_numbers = #tpu.dot_dimension_numbers<[1], [1], [0], [0], [0, 0, 1, 0], [], []>} : vector<8x8xf32>, vector<8x8xf32>, vector<8x8xf32> -> vector<8x8xf32>
    %339 = arith.addf %338, %6 : vector<8x8xf32>
    %cst_171 = arith.constant dense<0xFF800000> : vector<8xf32>
    %340 = vector.multi_reduction <maximumf>, %339, %cst_171 [1] : vector<8x8xf32> to vector<8xf32>
    %341 = vector.shape_cast %340 : vector<8xf32> to vector<8x1xf32>
    %342 = vector.broadcast %341 : vector<8x1xf32> to vector<8x8xf32>
    %343 = arith.subf %339, %342 : vector<8x8xf32>
    %344 = math.exp %343 : vector<8x8xf32>
    %cst_172 = arith.constant dense<0.000000e+00> : vector<8xf32>
    %345 = vector.multi_reduction <add>, %344, %cst_172 [1] : vector<8x8xf32> to vector<8xf32>
    %346 = vector.shape_cast %345 : vector<8xf32> to vector<8x1xf32>
    %347 = tpu.reciprocal %346 {approx = true} : vector<8x1xf32> -> vector<8x1xf32>
    %348 = vector.broadcast %347 : vector<8x1xf32> to vector<8x8xf32>
    %349 = arith.mulf %344, %348 : vector<8x8xf32>
    %cst_173 = arith.constant dense<0.000000e+00> : vector<8x8xf32>
    %350 = tpu.matmul %349, %337, %cst_173 {dimension_numbers = #tpu.dot_dimension_numbers<[1], [0], [0], [1], [0, 0, 1, 1], [], []>} : vector<8x8xf32>, vector<8x8xf32>, vector<8x8xf32> -> vector<8x8xf32>
    %c0_174 = arith.constant 0 : index
    %c8_175 = arith.constant 8 : index
    %351 = vector.load %arg26[%c0_174, %c8_175] : memref<8x32xf32, #tpu.memory_space<vmem>>, vector<8x8xf32>
    tpu.vector_store %arg26[%c0_174, %c8_175], %350 {strides = array<i32>} : memref<8x32xf32, #tpu.memory_space<vmem>>, vector<8x8xf32>,
    %352 = vector.extract_strided_slice %315 {offsets = [0, 16], sizes = [8, 8], strides = [1, 1]} : vector<8x32xf32> to vector<8x8xf32>
    %353 = vector.extract_strided_slice %316 {offsets = [0, 16], sizes = [8, 8], strides = [1, 1]} : vector<8x32xf32> to vector<8x8xf32>
    %354 = vector.extract_strided_slice %317 {offsets = [0, 16], sizes = [8, 8], strides = [1, 1]} : vector<8x32xf32> to vector<8x8xf32>
    %cst_176 = arith.constant dense<0.000000e+00> : vector<8x8xf32>
    %355 = tpu.matmul %352, %353, %cst_176 {dimension_numbers = #tpu.dot_dimension_numbers<[1], [1], [0], [0], [0, 0, 1, 0], [], []>} : vector<8x8xf32>, vector<8x8xf32>, vector<8x8xf32> -> vector<8x8xf32>
    %356 = arith.addf %355, %6 : vector<8x8xf32>
    %cst_177 = arith.constant dense<0xFF800000> : vector<8xf32>
    %357 = vector.multi_reduction <maximumf>, %356, %cst_177 [1] : vector<8x8xf32> to vector<8xf32>
    %358 = vector.shape_cast %357 : vector<8xf32> to vector<8x1xf32>
    %359 = vector.broadcast %358 : vector<8x1xf32> to vector<8x8xf32>
    %360 = arith.subf %356, %359 : vector<8x8xf32>
    %361 = math.exp %360 : vector<8x8xf32>
    %cst_178 = arith.constant dense<0.000000e+00> : vector<8xf32>
    %362 = vector.multi_reduction <add>, %361, %cst_178 [1] : vector<8x8xf32> to vector<8xf32>
    %363 = vector.shape_cast %362 : vector<8xf32> to vector<8x1xf32>
    %364 = tpu.reciprocal %363 {approx = true} : vector<8x1xf32> -> vector<8x1xf32>
    %365 = vector.broadcast %364 : vector<8x1xf32> to vector<8x8xf32>
    %366 = arith.mulf %361, %365 : vector<8x8xf32>
    %cst_179 = arith.constant dense<0.000000e+00> : vector<8x8xf32>
    %367 = tpu.matmul %366, %354, %cst_179 {dimension_numbers = #tpu.dot_dimension_numbers<[1], [0], [0], [1], [0, 0, 1, 1], [], []>} : vector<8x8xf32>, vector<8x8xf32>, vector<8x8xf32> -> vector<8x8xf32>
    %c0_180 = arith.constant 0 : index
    %c16_181 = arith.constant 16 : index
    %368 = vector.load %arg26[%c0_180, %c16_181] : memref<8x32xf32, #tpu.memory_space<vmem>>, vector<8x8xf32>
    tpu.vector_store %arg26[%c0_180, %c16_181], %367 {strides = array<i32>} : memref<8x32xf32, #tpu.memory_space<vmem>>, vector<8x8xf32>,
    %369 = vector.extract_strided_slice %315 {offsets = [0, 24], sizes = [8, 8], strides = [1, 1]} : vector<8x32xf32> to vector<8x8xf32>
    %370 = vector.extract_strided_slice %316 {offsets = [0, 24], sizes = [8, 8], strides = [1, 1]} : vector<8x32xf32> to vector<8x8xf32>
    %371 = vector.extract_strided_slice %317 {offsets = [0, 24], sizes = [8, 8], strides = [1, 1]} : vector<8x32xf32> to vector<8x8xf32>
    %cst_182 = arith.constant dense<0.000000e+00> : vector<8x8xf32>
    %372 = tpu.matmul %369, %370, %cst_182 {dimension_numbers = #tpu.dot_dimension_numbers<[1], [1], [0], [0], [0, 0, 1, 0], [], []>} : vector<8x8xf32>, vector<8x8xf32>, vector<8x8xf32> -> vector<8x8xf32>
    %373 = arith.addf %372, %6 : vector<8x8xf32>
    %cst_183 = arith.constant dense<0xFF800000> : vector<8xf32>
    %374 = vector.multi_reduction <maximumf>, %373, %cst_183 [1] : vector<8x8xf32> to vector<8xf32>
    %375 = vector.shape_cast %374 : vector<8xf32> to vector<8x1xf32>
    %376 = vector.broadcast %375 : vector<8x1xf32> to vector<8x8xf32>
    %377 = arith.subf %373, %376 : vector<8x8xf32>
    %378 = math.exp %377 : vector<8x8xf32>
    %cst_184 = arith.constant dense<0.000000e+00> : vector<8xf32>
    %379 = vector.multi_reduction <add>, %378, %cst_184 [1] : vector<8x8xf32> to vector<8xf32>
    %380 = vector.shape_cast %379 : vector<8xf32> to vector<8x1xf32>
    %381 = tpu.reciprocal %380 {approx = true} : vector<8x1xf32> -> vector<8x1xf32>
    %382 = vector.broadcast %381 : vector<8x1xf32> to vector<8x8xf32>
    %383 = arith.mulf %378, %382 : vector<8x8xf32>
    %cst_185 = arith.constant dense<0.000000e+00> : vector<8x8xf32>
    %384 = tpu.matmul %383, %371, %cst_185 {dimension_numbers = #tpu.dot_dimension_numbers<[1], [0], [0], [1], [0, 0, 1, 1], [], []>} : vector<8x8xf32>, vector<8x8xf32>, vector<8x8xf32> -> vector<8x8xf32>
    %c0_186 = arith.constant 0 : index
    %c24_187 = arith.constant 24 : index
    %385 = vector.load %arg26[%c0_186, %c24_187] : memref<8x32xf32, #tpu.memory_space<vmem>>, vector<8x8xf32>
    tpu.vector_store %arg26[%c0_186, %c24_187], %384 {strides = array<i32>} : memref<8x32xf32, #tpu.memory_space<vmem>>, vector<8x8xf32>,
    %c0_188 = arith.constant 0 : index
    %c0_189 = arith.constant 0 : index
    %386 = vector.load %arg26[%c0_188, %c0_189] : memref<8x32xf32, #tpu.memory_space<vmem>>, vector<8x32xf32>
    %387 = arith.truncf %386 : vector<8x32xf32> to vector<8x32xbf16>
    %cst_190 = arith.constant dense<0.000000e+00> : vector<8x32xf32>
    %388 = tpu.matmul %387, %291, %cst_190 {dimension_numbers = #tpu.dot_dimension_numbers<[1], [0], [0], [1], [0, 0, 1, 1], [], []>} : vector<8x32xbf16>, vector<32x32xbf16>, vector<8x32xf32> -> vector<8x32xf32>
    %389 = arith.addf %388, %278 : vector<8x32xf32>
    %c1_191 = arith.constant 1 : index
    %c0_192 = arith.constant 0 : index
    %c0_193 = arith.constant 0 : index
    %390 = vector.load %arg11[%c1_191, %c0_192, %c0_193] : memref<2x1x32xf32, #tpu.memory_space<vmem>>, vector<1x1x32xf32>
    %391 = vector.shape_cast %390 : vector<1x1x32xf32> to vector<1x32xf32>
    %c1_194 = arith.constant 1 : index
    %c0_195 = arith.constant 0 : index
    %c0_196 = arith.constant 0 : index
    %392 = vector.load %arg12[%c1_194, %c0_195, %c0_196] : memref<2x1x32xf32, #tpu.memory_space<vmem>>, vector<1x1x32xf32>
    %393 = vector.shape_cast %392 : vector<1x1x32xf32> to vector<1x32xf32>
    %c1_197 = arith.constant 1 : index
    %c0_198 = arith.constant 0 : index
    %c0_199 = arith.constant 0 : index
    %394 = vector.load %arg13[%c1_197, %c0_198, %c0_199] : memref<2x32x32xbf16, #tpu.memory_space<vmem>>, vector<1x32x32xbf16>
    %395 = vector.shape_cast %394 : vector<1x32x32xbf16> to vector<32x32xbf16>
    %c1_200 = arith.constant 1 : index
    %c0_201 = arith.constant 0 : index
    %c0_202 = arith.constant 0 : index
    %396 = vector.load %arg14[%c1_200, %c0_201, %c0_202] : memref<2x32x32xbf16, #tpu.memory_space<vmem>>, vector<1x32x32xbf16>
    %397 = vector.shape_cast %396 : vector<1x32x32xbf16> to vector<32x32xbf16>
    %c1_203 = arith.constant 1 : index
    %c0_204 = arith.constant 0 : index
    %c0_205 = arith.constant 0 : index
    %398 = vector.load %arg15[%c1_203, %c0_204, %c0_205] : memref<2x32x32xbf16, #tpu.memory_space<vmem>>, vector<1x32x32xbf16>
    %399 = vector.shape_cast %398 : vector<1x32x32xbf16> to vector<32x32xbf16>
    %c1_206 = arith.constant 1 : index
    %c0_207 = arith.constant 0 : index
    %c0_208 = arith.constant 0 : index
    %400 = vector.load %arg16[%c1_206, %c0_207, %c0_208] : memref<2x32x32xbf16, #tpu.memory_space<vmem>>, vector<1x32x32xbf16>
    %401 = vector.shape_cast %400 : vector<1x32x32xbf16> to vector<32x32xbf16>
    %cst_209 = arith.constant dense<0.000000e+00> : vector<8xf32>
    %402 = vector.multi_reduction <add>, %389, %cst_209 [1] : vector<8x32xf32> to vector<8xf32>
    %403 = vector.shape_cast %402 : vector<8xf32> to vector<8x1xf32>
    %cst_210 = arith.constant 3.200000e+01 : f32
    %404 = vector.broadcast %cst_210 : f32 to vector<8x1xf32>
    %405 = arith.divf %403, %404 : vector<8x1xf32>
    %406 = vector.broadcast %405 : vector<8x1xf32> to vector<8x32xf32>
    %407 = arith.subf %389, %406 : vector<8x32xf32>
    %408 = arith.mulf %407, %407 : vector<8x32xf32>
    %cst_211 = arith.constant dense<0.000000e+00> : vector<8xf32>
    %409 = vector.multi_reduction <add>, %408, %cst_211 [1] : vector<8x32xf32> to vector<8xf32>
    %410 = vector.shape_cast %409 : vector<8xf32> to vector<8x1xf32>
    %cst_212 = arith.constant 3.200000e+01 : f32
    %411 = vector.broadcast %cst_212 : f32 to vector<8x1xf32>
    %412 = arith.divf %410, %411 : vector<8x1xf32>
    %413 = vector.broadcast %405 : vector<8x1xf32> to vector<8x32xf32>
    %414 = arith.subf %389, %413 : vector<8x32xf32>
    %cst_213 = arith.constant 9.99999997E-7 : f32
    %415 = vector.broadcast %cst_213 : f32 to vector<8x1xf32>
    %416 = arith.addf %412, %415 : vector<8x1xf32>
    %417 = math.rsqrt %416 : vector<8x1xf32>
    %418 = vector.broadcast %417 : vector<8x1xf32> to vector<8x32xf32>
    %419 = arith.mulf %414, %418 : vector<8x32xf32>
    %420 = vector.broadcast %391 : vector<1x32xf32> to vector<8x32xf32>
    %421 = arith.mulf %419, %420 : vector<8x32xf32>
    %422 = vector.broadcast %393 : vector<1x32xf32> to vector<8x32xf32>
    %423 = arith.addf %421, %422 : vector<8x32xf32>
    %424 = arith.truncf %423 : vector<8x32xf32> to vector<8x32xbf16>
    %cst_214 = arith.constant dense<0.000000e+00> : vector<8x32xf32>
    %425 = tpu.matmul %424, %395, %cst_214 {dimension_numbers = #tpu.dot_dimension_numbers<[1], [0], [0], [1], [0, 0, 1, 1], [], []>} : vector<8x32xbf16>, vector<32x32xbf16>, vector<8x32xf32> -> vector<8x32xf32>
    %cst_215 = arith.constant dense<0.000000e+00> : vector<8x32xf32>
    %426 = tpu.matmul %4, %397, %cst_215 {dimension_numbers = #tpu.dot_dimension_numbers<[1], [0], [0], [1], [0, 0, 1, 1], [], []>} : vector<8x32xbf16>, vector<32x32xbf16>, vector<8x32xf32> -> vector<8x32xf32>
    %cst_216 = arith.constant dense<0.000000e+00> : vector<8x32xf32>
    %427 = tpu.matmul %4, %399, %cst_216 {dimension_numbers = #tpu.dot_dimension_numbers<[1], [0], [0], [1], [0, 0, 1, 1], [], []>} : vector<8x32xbf16>, vector<32x32xbf16>, vector<8x32xf32> -> vector<8x32xf32>
    %428 = vector.extract_strided_slice %425 {offsets = [0, 0], sizes = [8, 8], strides = [1, 1]} : vector<8x32xf32> to vector<8x8xf32>
    %429 = vector.extract_strided_slice %426 {offsets = [0, 0], sizes = [8, 8], strides = [1, 1]} : vector<8x32xf32> to vector<8x8xf32>
    %430 = vector.extract_strided_slice %427 {offsets = [0, 0], sizes = [8, 8], strides = [1, 1]} : vector<8x32xf32> to vector<8x8xf32>
    %cst_217 = arith.constant dense<0.000000e+00> : vector<8x8xf32>
    %431 = tpu.matmul %428, %429, %cst_217 {dimension_numbers = #tpu.dot_dimension_numbers<[1], [1], [0], [0], [0, 0, 1, 0], [], []>} : vector<8x8xf32>, vector<8x8xf32>, vector<8x8xf32> -> vector<8x8xf32>
    %432 = vector.broadcast %8 : vector<1x8xf32> to vector<8x8xf32>
    %433 = arith.addf %431, %432 : vector<8x8xf32>
    %cst_218 = arith.constant dense<0xFF800000> : vector<8xf32>
    %434 = vector.multi_reduction <maximumf>, %433, %cst_218 [1] : vector<8x8xf32> to vector<8xf32>
    %435 = vector.shape_cast %434 : vector<8xf32> to vector<8x1xf32>
    %436 = vector.broadcast %435 : vector<8x1xf32> to vector<8x8xf32>
    %437 = arith.subf %433, %436 : vector<8x8xf32>
    %438 = math.exp %437 : vector<8x8xf32>
    %cst_219 = arith.constant dense<0.000000e+00> : vector<8xf32>
    %439 = vector.multi_reduction <add>, %438, %cst_219 [1] : vector<8x8xf32> to vector<8xf32>
    %440 = vector.shape_cast %439 : vector<8xf32> to vector<8x1xf32>
    %441 = tpu.reciprocal %440 {approx = true} : vector<8x1xf32> -> vector<8x1xf32>
    %442 = vector.broadcast %441 : vector<8x1xf32> to vector<8x8xf32>
    %443 = arith.mulf %438, %442 : vector<8x8xf32>
    %cst_220 = arith.constant dense<0.000000e+00> : vector<8x8xf32>
    %444 = tpu.matmul %443, %430, %cst_220 {dimension_numbers = #tpu.dot_dimension_numbers<[1], [0], [0], [1], [0, 0, 1, 1], [], []>} : vector<8x8xf32>, vector<8x8xf32>, vector<8x8xf32> -> vector<8x8xf32>
    %c0_221 = arith.constant 0 : index
    %c0_222 = arith.constant 0 : index
    %445 = vector.load %arg26[%c0_221, %c0_222] : memref<8x32xf32, #tpu.memory_space<vmem>>, vector<8x8xf32>
    tpu.vector_store %arg26[%c0_221, %c0_222], %444 {strides = array<i32>} : memref<8x32xf32, #tpu.memory_space<vmem>>, vector<8x8xf32>,
    %446 = vector.extract_strided_slice %425 {offsets = [0, 8], sizes = [8, 8], strides = [1, 1]} : vector<8x32xf32> to vector<8x8xf32>
    %447 = vector.extract_strided_slice %426 {offsets = [0, 8], sizes = [8, 8], strides = [1, 1]} : vector<8x32xf32> to vector<8x8xf32>
    %448 = vector.extract_strided_slice %427 {offsets = [0, 8], sizes = [8, 8], strides = [1, 1]} : vector<8x32xf32> to vector<8x8xf32>
    %cst_223 = arith.constant dense<0.000000e+00> : vector<8x8xf32>
    %449 = tpu.matmul %446, %447, %cst_223 {dimension_numbers = #tpu.dot_dimension_numbers<[1], [1], [0], [0], [0, 0, 1, 0], [], []>} : vector<8x8xf32>, vector<8x8xf32>, vector<8x8xf32> -> vector<8x8xf32>
    %450 = vector.broadcast %8 : vector<1x8xf32> to vector<8x8xf32>
    %451 = arith.addf %449, %450 : vector<8x8xf32>
    %cst_224 = arith.constant dense<0xFF800000> : vector<8xf32>
    %452 = vector.multi_reduction <maximumf>, %451, %cst_224 [1] : vector<8x8xf32> to vector<8xf32>
    %453 = vector.shape_cast %452 : vector<8xf32> to vector<8x1xf32>
    %454 = vector.broadcast %453 : vector<8x1xf32> to vector<8x8xf32>
    %455 = arith.subf %451, %454 : vector<8x8xf32>
    %456 = math.exp %455 : vector<8x8xf32>
    %cst_225 = arith.constant dense<0.000000e+00> : vector<8xf32>
    %457 = vector.multi_reduction <add>, %456, %cst_225 [1] : vector<8x8xf32> to vector<8xf32>
    %458 = vector.shape_cast %457 : vector<8xf32> to vector<8x1xf32>
    %459 = tpu.reciprocal %458 {approx = true} : vector<8x1xf32> -> vector<8x1xf32>
    %460 = vector.broadcast %459 : vector<8x1xf32> to vector<8x8xf32>
    %461 = arith.mulf %456, %460 : vector<8x8xf32>
    %cst_226 = arith.constant dense<0.000000e+00> : vector<8x8xf32>
    %462 = tpu.matmul %461, %448, %cst_226 {dimension_numbers = #tpu.dot_dimension_numbers<[1], [0], [0], [1], [0, 0, 1, 1], [], []>} : vector<8x8xf32>, vector<8x8xf32>, vector<8x8xf32> -> vector<8x8xf32>
    %c0_227 = arith.constant 0 : index
    %c8_228 = arith.constant 8 : index
    %463 = vector.load %arg26[%c0_227, %c8_228] : memref<8x32xf32, #tpu.memory_space<vmem>>, vector<8x8xf32>
    tpu.vector_store %arg26[%c0_227, %c8_228], %462 {strides = array<i32>} : memref<8x32xf32, #tpu.memory_space<vmem>>, vector<8x8xf32>,
    %464 = vector.extract_strided_slice %425 {offsets = [0, 16], sizes = [8, 8], strides = [1, 1]} : vector<8x32xf32> to vector<8x8xf32>
    %465 = vector.extract_strided_slice %426 {offsets = [0, 16], sizes = [8, 8], strides = [1, 1]} : vector<8x32xf32> to vector<8x8xf32>
    %466 = vector.extract_strided_slice %427 {offsets = [0, 16], sizes = [8, 8], strides = [1, 1]} : vector<8x32xf32> to vector<8x8xf32>
    %cst_229 = arith.constant dense<0.000000e+00> : vector<8x8xf32>
    %467 = tpu.matmul %464, %465, %cst_229 {dimension_numbers = #tpu.dot_dimension_numbers<[1], [1], [0], [0], [0, 0, 1, 0], [], []>} : vector<8x8xf32>, vector<8x8xf32>, vector<8x8xf32> -> vector<8x8xf32>
    %468 = vector.broadcast %8 : vector<1x8xf32> to vector<8x8xf32>
    %469 = arith.addf %467, %468 : vector<8x8xf32>
    %cst_230 = arith.constant dense<0xFF800000> : vector<8xf32>
    %470 = vector.multi_reduction <maximumf>, %469, %cst_230 [1] : vector<8x8xf32> to vector<8xf32>
    %471 = vector.shape_cast %470 : vector<8xf32> to vector<8x1xf32>
    %472 = vector.broadcast %471 : vector<8x1xf32> to vector<8x8xf32>
    %473 = arith.subf %469, %472 : vector<8x8xf32>
    %474 = math.exp %473 : vector<8x8xf32>
    %cst_231 = arith.constant dense<0.000000e+00> : vector<8xf32>
    %475 = vector.multi_reduction <add>, %474, %cst_231 [1] : vector<8x8xf32> to vector<8xf32>
    %476 = vector.shape_cast %475 : vector<8xf32> to vector<8x1xf32>
    %477 = tpu.reciprocal %476 {approx = true} : vector<8x1xf32> -> vector<8x1xf32>
    %478 = vector.broadcast %477 : vector<8x1xf32> to vector<8x8xf32>
    %479 = arith.mulf %474, %478 : vector<8x8xf32>
    %cst_232 = arith.constant dense<0.000000e+00> : vector<8x8xf32>
    %480 = tpu.matmul %479, %466, %cst_232 {dimension_numbers = #tpu.dot_dimension_numbers<[1], [0], [0], [1], [0, 0, 1, 1], [], []>} : vector<8x8xf32>, vector<8x8xf32>, vector<8x8xf32> -> vector<8x8xf32>
    %c0_233 = arith.constant 0 : index
    %c16_234 = arith.constant 16 : index
    %481 = vector.load %arg26[%c0_233, %c16_234] : memref<8x32xf32, #tpu.memory_space<vmem>>, vector<8x8xf32>
    tpu.vector_store %arg26[%c0_233, %c16_234], %480 {strides = array<i32>} : memref<8x32xf32, #tpu.memory_space<vmem>>, vector<8x8xf32>,
    %482 = vector.extract_strided_slice %425 {offsets = [0, 24], sizes = [8, 8], strides = [1, 1]} : vector<8x32xf32> to vector<8x8xf32>
    %483 = vector.extract_strided_slice %426 {offsets = [0, 24], sizes = [8, 8], strides = [1, 1]} : vector<8x32xf32> to vector<8x8xf32>
    %484 = vector.extract_strided_slice %427 {offsets = [0, 24], sizes = [8, 8], strides = [1, 1]} : vector<8x32xf32> to vector<8x8xf32>
    %cst_235 = arith.constant dense<0.000000e+00> : vector<8x8xf32>
    %485 = tpu.matmul %482, %483, %cst_235 {dimension_numbers = #tpu.dot_dimension_numbers<[1], [1], [0], [0], [0, 0, 1, 0], [], []>} : vector<8x8xf32>, vector<8x8xf32>, vector<8x8xf32> -> vector<8x8xf32>
    %486 = vector.broadcast %8 : vector<1x8xf32> to vector<8x8xf32>
    %487 = arith.addf %485, %486 : vector<8x8xf32>
    %cst_236 = arith.constant dense<0xFF800000> : vector<8xf32>
    %488 = vector.multi_reduction <maximumf>, %487, %cst_236 [1] : vector<8x8xf32> to vector<8xf32>
    %489 = vector.shape_cast %488 : vector<8xf32> to vector<8x1xf32>
    %490 = vector.broadcast %489 : vector<8x1xf32> to vector<8x8xf32>
    %491 = arith.subf %487, %490 : vector<8x8xf32>
    %492 = math.exp %491 : vector<8x8xf32>
    %cst_237 = arith.constant dense<0.000000e+00> : vector<8xf32>
    %493 = vector.multi_reduction <add>, %492, %cst_237 [1] : vector<8x8xf32> to vector<8xf32>
    %494 = vector.shape_cast %493 : vector<8xf32> to vector<8x1xf32>
    %495 = tpu.reciprocal %494 {approx = true} : vector<8x1xf32> -> vector<8x1xf32>
    %496 = vector.broadcast %495 : vector<8x1xf32> to vector<8x8xf32>
    %497 = arith.mulf %492, %496 : vector<8x8xf32>
    %cst_238 = arith.constant dense<0.000000e+00> : vector<8x8xf32>
    %498 = tpu.matmul %497, %484, %cst_238 {dimension_numbers = #tpu.dot_dimension_numbers<[1], [0], [0], [1], [0, 0, 1, 1], [], []>} : vector<8x8xf32>, vector<8x8xf32>, vector<8x8xf32> -> vector<8x8xf32>
    %c0_239 = arith.constant 0 : index
    %c24_240 = arith.constant 24 : index
    %499 = vector.load %arg26[%c0_239, %c24_240] : memref<8x32xf32, #tpu.memory_space<vmem>>, vector<8x8xf32>
    tpu.vector_store %arg26[%c0_239, %c24_240], %498 {strides = array<i32>} : memref<8x32xf32, #tpu.memory_space<vmem>>, vector<8x8xf32>,
    %c0_241 = arith.constant 0 : index
    %c0_242 = arith.constant 0 : index
    %500 = vector.load %arg26[%c0_241, %c0_242] : memref<8x32xf32, #tpu.memory_space<vmem>>, vector<8x32xf32>
    %501 = arith.truncf %500 : vector<8x32xf32> to vector<8x32xbf16>
    %cst_243 = arith.constant dense<0.000000e+00> : vector<8x32xf32>
    %502 = tpu.matmul %501, %401, %cst_243 {dimension_numbers = #tpu.dot_dimension_numbers<[1], [0], [0], [1], [0, 0, 1, 1], [], []>} : vector<8x32xbf16>, vector<32x32xbf16>, vector<8x32xf32> -> vector<8x32xf32>
    %503 = arith.addf %502, %389 : vector<8x32xf32>
    %c1_244 = arith.constant 1 : index
    %c0_245 = arith.constant 0 : index
    %c0_246 = arith.constant 0 : index
    %504 = vector.load %arg17[%c1_244, %c0_245, %c0_246] : memref<2x1x32xf32, #tpu.memory_space<vmem>>, vector<1x1x32xf32>
    %505 = vector.shape_cast %504 : vector<1x1x32xf32> to vector<1x32xf32>
    %c1_247 = arith.constant 1 : index
    %c0_248 = arith.constant 0 : index
    %c0_249 = arith.constant 0 : index
    %506 = vector.load %arg18[%c1_247, %c0_248, %c0_249] : memref<2x1x32xf32, #tpu.memory_space<vmem>>, vector<1x1x32xf32>
    %507 = vector.shape_cast %506 : vector<1x1x32xf32> to vector<1x32xf32>
    %c1_250 = arith.constant 1 : index
    %c0_251 = arith.constant 0 : index
    %c0_252 = arith.constant 0 : index
    %508 = vector.load %arg19[%c1_250, %c0_251, %c0_252] : memref<2x32x64xbf16, #tpu.memory_space<vmem>>, vector<1x32x64xbf16>
    %509 = vector.shape_cast %508 : vector<1x32x64xbf16> to vector<32x64xbf16>
    %c1_253 = arith.constant 1 : index
    %c0_254 = arith.constant 0 : index
    %c0_255 = arith.constant 0 : index
    %510 = vector.load %arg20[%c1_253, %c0_254, %c0_255] : memref<2x1x64xf32, #tpu.memory_space<vmem>>, vector<1x1x64xf32>
    %511 = vector.shape_cast %510 : vector<1x1x64xf32> to vector<1x64xf32>
    %c1_256 = arith.constant 1 : index
    %c0_257 = arith.constant 0 : index
    %c0_258 = arith.constant 0 : index
    %512 = vector.load %arg21[%c1_256, %c0_257, %c0_258] : memref<2x64x32xbf16, #tpu.memory_space<vmem>>, vector<1x64x32xbf16>
    %513 = vector.shape_cast %512 : vector<1x64x32xbf16> to vector<64x32xbf16>
    %c1_259 = arith.constant 1 : index
    %c0_260 = arith.constant 0 : index
    %c0_261 = arith.constant 0 : index
    %514 = vector.load %arg22[%c1_259, %c0_260, %c0_261] : memref<2x1x32xf32, #tpu.memory_space<vmem>>, vector<1x1x32xf32>
    %515 = vector.shape_cast %514 : vector<1x1x32xf32> to vector<1x32xf32>
    %cst_262 = arith.constant dense<0.000000e+00> : vector<8xf32>
    %516 = vector.multi_reduction <add>, %503, %cst_262 [1] : vector<8x32xf32> to vector<8xf32>
    %517 = vector.shape_cast %516 : vector<8xf32> to vector<8x1xf32>
    %cst_263 = arith.constant 3.200000e+01 : f32
    %518 = vector.broadcast %cst_263 : f32 to vector<8x1xf32>
    %519 = arith.divf %517, %518 : vector<8x1xf32>
    %520 = vector.broadcast %519 : vector<8x1xf32> to vector<8x32xf32>
    %521 = arith.subf %503, %520 : vector<8x32xf32>
    %522 = arith.mulf %521, %521 : vector<8x32xf32>
    %cst_264 = arith.constant dense<0.000000e+00> : vector<8xf32>
    %523 = vector.multi_reduction <add>, %522, %cst_264 [1] : vector<8x32xf32> to vector<8xf32>
    %524 = vector.shape_cast %523 : vector<8xf32> to vector<8x1xf32>
    %cst_265 = arith.constant 3.200000e+01 : f32
    %525 = vector.broadcast %cst_265 : f32 to vector<8x1xf32>
    %526 = arith.divf %524, %525 : vector<8x1xf32>
    %527 = vector.broadcast %519 : vector<8x1xf32> to vector<8x32xf32>
    %528 = arith.subf %503, %527 : vector<8x32xf32>
    %cst_266 = arith.constant 9.99999997E-7 : f32
    %529 = vector.broadcast %cst_266 : f32 to vector<8x1xf32>
    %530 = arith.addf %526, %529 : vector<8x1xf32>
    %531 = math.rsqrt %530 : vector<8x1xf32>
    %532 = vector.broadcast %531 : vector<8x1xf32> to vector<8x32xf32>
    %533 = arith.mulf %528, %532 : vector<8x32xf32>
    %534 = vector.broadcast %505 : vector<1x32xf32> to vector<8x32xf32>
    %535 = arith.mulf %533, %534 : vector<8x32xf32>
    %536 = vector.broadcast %507 : vector<1x32xf32> to vector<8x32xf32>
    %537 = arith.addf %535, %536 : vector<8x32xf32>
    %538 = arith.truncf %537 : vector<8x32xf32> to vector<8x32xbf16>
    %cst_267 = arith.constant dense<0.000000e+00> : vector<8x64xf32>
    %539 = tpu.matmul %538, %509, %cst_267 {dimension_numbers = #tpu.dot_dimension_numbers<[1], [0], [0], [1], [0, 0, 1, 1], [], []>} : vector<8x32xbf16>, vector<32x64xbf16>, vector<8x64xf32> -> vector<8x64xf32>
    %540 = vector.broadcast %511 : vector<1x64xf32> to vector<8x64xf32>
    %541 = arith.addf %539, %540 : vector<8x64xf32>
    %cst_268 = arith.constant 0.000000e+00 : f32
    %542 = vector.broadcast %cst_268 : f32 to vector<8x64xf32>
    %543 = arith.maximumf %541, %542 : vector<8x64xf32>
    %544 = arith.truncf %543 : vector<8x64xf32> to vector<8x64xbf16>
    %cst_269 = arith.constant dense<0.000000e+00> : vector<8x32xf32>
    %545 = tpu.matmul %544, %513, %cst_269 {dimension_numbers = #tpu.dot_dimension_numbers<[1], [0], [0], [1], [0, 0, 1, 1], [], []>} : vector<8x64xbf16>, vector<64x32xbf16>, vector<8x32xf32> -> vector<8x32xf32>
    %546 = vector.broadcast %515 : vector<1x32xf32> to vector<8x32xf32>
    %547 = arith.addf %545, %546 : vector<8x32xf32>
    %548 = arith.addf %547, %503 : vector<8x32xf32>
    %c0_270 = arith.constant 0 : index
    %c0_271 = arith.constant 0 : index
    %549 = vector.load %arg23[%c0_270, %c0_271] : memref<1x32xf32, #tpu.memory_space<vmem>>, vector<1x32xf32>
    %c0_272 = arith.constant 0 : index
    %c0_273 = arith.constant 0 : index
    %550 = vector.load %arg24[%c0_272, %c0_273] : memref<1x32xf32, #tpu.memory_space<vmem>>, vector<1x32xf32>
    %cst_274 = arith.constant dense<0.000000e+00> : vector<8xf32>
    %551 = vector.multi_reduction <add>, %548, %cst_274 [1] : vector<8x32xf32> to vector<8xf32>
    %552 = vector.shape_cast %551 : vector<8xf32> to vector<8x1xf32>
    %cst_275 = arith.constant 3.200000e+01 : f32
    %553 = vector.broadcast %cst_275 : f32 to vector<8x1xf32>
    %554 = arith.divf %552, %553 : vector<8x1xf32>
    %555 = vector.broadcast %554 : vector<8x1xf32> to vector<8x32xf32>
    %556 = arith.subf %548, %555 : vector<8x32xf32>
    %557 = arith.mulf %556, %556 : vector<8x32xf32>
    %cst_276 = arith.constant dense<0.000000e+00> : vector<8xf32>
    %558 = vector.multi_reduction <add>, %557, %cst_276 [1] : vector<8x32xf32> to vector<8xf32>
    %559 = vector.shape_cast %558 : vector<8xf32> to vector<8x1xf32>
    %cst_277 = arith.constant 3.200000e+01 : f32
    %560 = vector.broadcast %cst_277 : f32 to vector<8x1xf32>
    %561 = arith.divf %559, %560 : vector<8x1xf32>
    %562 = vector.broadcast %554 : vector<8x1xf32> to vector<8x32xf32>
    %563 = arith.subf %548, %562 : vector<8x32xf32>
    %cst_278 = arith.constant 9.99999997E-7 : f32
    %564 = vector.broadcast %cst_278 : f32 to vector<8x1xf32>
    %565 = arith.addf %561, %564 : vector<8x1xf32>
    %566 = math.rsqrt %565 : vector<8x1xf32>
    %567 = vector.broadcast %566 : vector<8x1xf32> to vector<8x32xf32>
    %568 = arith.mulf %563, %567 : vector<8x32xf32>
    %569 = vector.broadcast %549 : vector<1x32xf32> to vector<8x32xf32>
    %570 = arith.mulf %568, %569 : vector<8x32xf32>
    %571 = vector.broadcast %550 : vector<1x32xf32> to vector<8x32xf32>
    %572 = arith.addf %570, %571 : vector<8x32xf32>
    %c0_279 = arith.constant 0 : index
    %c0_280 = arith.constant 0 : index
    %c0_281 = arith.constant 0 : index
    %573 = vector.load %arg25[%c0_279, %c0_280, %c0_281] : memref<1x8x32xf32, #tpu.memory_space<vmem>>, vector<1x8x32xf32>
    %574 = vector.shape_cast %573 : vector<1x8x32xf32> to vector<8x32xf32>
    %575 = vector.shape_cast %572 : vector<8x32xf32> to vector<1x8x32xf32>
    tpu.vector_store %arg25[%c0_279, %c0_280, %c0_281], %575 {strides = array<i32>} : memref<1x8x32xf32, #tpu.memory_space<vmem>>, vector<1x8x32xf32>,
    return
  }
  func.func @transform_0(%arg0: i32) -> (i32, i32, i32) {
    %c0_i32 = arith.constant 0 : i32
    %c0_i32_0 = arith.constant 0 : i32
    %c0_i32_1 = arith.constant 0 : i32
    return %arg0, %c0_i32, %c0_i32_0 : i32, i32, i32
  }
  func.func @transform_1(%arg0: i32) -> (i32, i32, i32) {
    %c0_i32 = arith.constant 0 : i32
    %c0_i32_0 = arith.constant 0 : i32
    %c0_i32_1 = arith.constant 0 : i32
    return %arg0, %c0_i32, %c0_i32_0 : i32, i32, i32
  }
  func.func @transform_2(%arg0: i32) -> (i32, i32, i32) {
    %c0_i32 = arith.constant 0 : i32
    %c0_i32_0 = arith.constant 0 : i32
    %c0_i32_1 = arith.constant 0 : i32
    return %arg0, %c0_i32, %c0_i32_0 : i32, i32, i32
  }
  func.func @transform_3(%arg0: i32) -> (i32, i32, i32) {
    %c0_i32 = arith.constant 0 : i32
    %c0_i32_0 = arith.constant 0 : i32
    %c0_i32_1 = arith.constant 0 : i32
    return %arg0, %c0_i32, %c0_i32_0 : i32, i32, i32
  }
  func.func @transform_4(%arg0: i32) -> (i32, i32, i32) {
    %c0_i32 = arith.constant 0 : i32
    %c0_i32_0 = arith.constant 0 : i32
    %c0_i32_1 = arith.constant 0 : i32
    %c0_i32_2 = arith.constant 0 : i32
    return %c0_i32, %c0_i32_0, %c0_i32_1 : i32, i32, i32
  }
  func.func @transform_5(%arg0: i32) -> (i32, i32, i32) {
    %c0_i32 = arith.constant 0 : i32
    %c0_i32_0 = arith.constant 0 : i32
    %c0_i32_1 = arith.constant 0 : i32
    %c0_i32_2 = arith.constant 0 : i32
    return %c0_i32, %c0_i32_0, %c0_i32_1 : i32, i32, i32
  }
  func.func @transform_6(%arg0: i32) -> (i32, i32, i32) {
    %c0_i32 = arith.constant 0 : i32
    %c0_i32_0 = arith.constant 0 : i32
    %c0_i32_1 = arith.constant 0 : i32
    %c0_i32_2 = arith.constant 0 : i32
    return %c0_i32, %c0_i32_0, %c0_i32_1 : i32, i32, i32
  }
  func.func @transform_7(%arg0: i32) -> (i32, i32, i32) {
    %c0_i32 = arith.constant 0 : i32
    %c0_i32_0 = arith.constant 0 : i32
    %c0_i32_1 = arith.constant 0 : i32
    %c0_i32_2 = arith.constant 0 : i32
    return %c0_i32, %c0_i32_0, %c0_i32_1 : i32, i32, i32
  }
  func.func @transform_8(%arg0: i32) -> (i32, i32, i32) {
    %c0_i32 = arith.constant 0 : i32
    %c0_i32_0 = arith.constant 0 : i32
    %c0_i32_1 = arith.constant 0 : i32
    %c0_i32_2 = arith.constant 0 : i32
    return %c0_i32, %c0_i32_0, %c0_i32_1 : i32, i32, i32
  }
  func.func @transform_9(%arg0: i32) -> (i32, i32, i32) {
    %c0_i32 = arith.constant 0 : i32
    %c0_i32_0 = arith.constant 0 : i32
    %c0_i32_1 = arith.constant 0 : i32
    %c0_i32_2 = arith.constant 0 : i32
    return %c0_i32, %c0_i32_0, %c0_i32_1 : i32, i32, i32
  }
  func.func @transform_10(%arg0: i32) -> (i32, i32, i32) {
    %c0_i32 = arith.constant 0 : i32
    %c0_i32_0 = arith.constant 0 : i32
    %c0_i32_1 = arith.constant 0 : i32
    %c0_i32_2 = arith.constant 0 : i32
    return %c0_i32, %c0_i32_0, %c0_i32_1 : i32, i32, i32
  }
  func.func @transform_11(%arg0: i32) -> (i32, i32, i32) {
    %c0_i32 = arith.constant 0 : i32
    %c0_i32_0 = arith.constant 0 : i32
    %c0_i32_1 = arith.constant 0 : i32
    %c0_i32_2 = arith.constant 0 : i32
    return %c0_i32, %c0_i32_0, %c0_i32_1 : i32, i32, i32
  }
  func.func @transform_12(%arg0: i32) -> (i32, i32, i32) {
    %c0_i32 = arith.constant 0 : i32
    %c0_i32_0 = arith.constant 0 : i32
    %c0_i32_1 = arith.constant 0 : i32
    %c0_i32_2 = arith.constant 0 : i32
    return %c0_i32, %c0_i32_0, %c0_i32_1 : i32, i32, i32
  }
  func.func @transform_13(%arg0: i32) -> (i32, i32, i32) {
    %c0_i32 = arith.constant 0 : i32
    %c0_i32_0 = arith.constant 0 : i32
    %c0_i32_1 = arith.constant 0 : i32
    %c0_i32_2 = arith.constant 0 : i32
    return %c0_i32, %c0_i32_0, %c0_i32_1 : i32, i32, i32
  }
  func.func @transform_14(%arg0: i32) -> (i32, i32, i32) {
    %c0_i32 = arith.constant 0 : i32
    %c0_i32_0 = arith.constant 0 : i32
    %c0_i32_1 = arith.constant 0 : i32
    %c0_i32_2 = arith.constant 0 : i32
    return %c0_i32, %c0_i32_0, %c0_i32_1 : i32, i32, i32
  }
  func.func @transform_15(%arg0: i32) -> (i32, i32, i32) {
    %c0_i32 = arith.constant 0 : i32
    %c0_i32_0 = arith.constant 0 : i32
    %c0_i32_1 = arith.constant 0 : i32
    %c0_i32_2 = arith.constant 0 : i32
    return %c0_i32, %c0_i32_0, %c0_i32_1 : i32, i32, i32
  }
  func.func @transform_16(%arg0: i32) -> (i32, i32, i32) {
    %c0_i32 = arith.constant 0 : i32
    %c0_i32_0 = arith.constant 0 : i32
    %c0_i32_1 = arith.constant 0 : i32
    %c0_i32_2 = arith.constant 0 : i32
    return %c0_i32, %c0_i32_0, %c0_i32_1 : i32, i32, i32
  }
  func.func @transform_17(%arg0: i32) -> (i32, i32, i32) {
    %c0_i32 = arith.constant 0 : i32
    %c0_i32_0 = arith.constant 0 : i32
    %c0_i32_1 = arith.constant 0 : i32
    %c0_i32_2 = arith.constant 0 : i32
    return %c0_i32, %c0_i32_0, %c0_i32_1 : i32, i32, i32
  }
  func.func @transform_18(%arg0: i32) -> (i32, i32, i32) {
    %c0_i32 = arith.constant 0 : i32
    %c0_i32_0 = arith.constant 0 : i32
    %c0_i32_1 = arith.constant 0 : i32
    %c0_i32_2 = arith.constant 0 : i32
    return %c0_i32, %c0_i32_0, %c0_i32_1 : i32, i32, i32
  }
  func.func @transform_19(%arg0: i32) -> (i32, i32, i32) {
    %c0_i32 = arith.constant 0 : i32
    %c0_i32_0 = arith.constant 0 : i32
    %c0_i32_1 = arith.constant 0 : i32
    %c0_i32_2 = arith.constant 0 : i32
    return %c0_i32, %c0_i32_0, %c0_i32_1 : i32, i32, i32
  }
  func.func @transform_20(%arg0: i32) -> (i32, i32, i32) {
    %c0_i32 = arith.constant 0 : i32
    %c0_i32_0 = arith.constant 0 : i32
    %c0_i32_1 = arith.constant 0 : i32
    %c0_i32_2 = arith.constant 0 : i32
    return %c0_i32, %c0_i32_0, %c0_i32_1 : i32, i32, i32
  }
  func.func @transform_21(%arg0: i32) -> (i32, i32, i32) {
    %c0_i32 = arith.constant 0 : i32
    %c0_i32_0 = arith.constant 0 : i32
    %c0_i32_1 = arith.constant 0 : i32
    %c0_i32_2 = arith.constant 0 : i32
    return %c0_i32, %c0_i32_0, %c0_i32_1 : i32, i32, i32
  }
  func.func @transform_22(%arg0: i32) -> (i32, i32) {
    %c0_i32 = arith.constant 0 : i32
    %c0_i32_0 = arith.constant 0 : i32
    %c0_i32_1 = arith.constant 0 : i32
    return %c0_i32, %c0_i32_0 : i32, i32
  }
  func.func @transform_23(%arg0: i32) -> (i32, i32) {
    %c0_i32 = arith.constant 0 : i32
    %c0_i32_0 = arith.constant 0 : i32
    %c0_i32_1 = arith.constant 0 : i32
    return %c0_i32, %c0_i32_0 : i32, i32
  }
  func.func @transform_24(%arg0: i32) -> (i32, i32, i32) {
    %c0_i32 = arith.constant 0 : i32
    %c0_i32_0 = arith.constant 0 : i32
    %c0_i32_1 = arith.constant 0 : i32
    return %arg0, %c0_i32, %c0_i32_0 : i32, i32, i32
  }
}

</mosaic_0001>

<llo_original>
// kernel: decoder_forward.1
$region0: #{decoder_forward.1}
  #allocation0 [shape = 'u32[]', space=smem, size = 0x4, offset = 0x4, fixed_abs, tag = 'smem constant byte address 0x4 - core index']
  #allocation1 [shape = 'u32[144,128]{1,0:T(1,128)}', space=vmem, size = 0x12000, scoped, tag = 'internal scratch']
  #allocation2 [shape = 'f32[8,32]{1,0:T(8,128)}', space=vmem, size = 0x1000, scoped, tag = 'scratch operand']
  %s0 = inlined_call_operand.vmem [shape: f32[2,8,32], index: 0, kind: input, shape index: {}]
  %s1 = inlined_call_operand.vmem [shape: f32[2,8,32], index: 1, kind: input, shape index: {}]
  %s2 = inlined_call_operand.vmem [shape: f32[2,8,8], index: 2, kind: input, shape index: {}]
  %s3 = inlined_call_operand.vmem [shape: f32[2,1,8], index: 3, kind: input, shape index: {}]
  %s4 = inlined_call_operand.vmem [shape: f32[2,1,32], index: 4, kind: input, shape index: {}]
  %s5 = inlined_call_operand.vmem [shape: f32[2,1,32], index: 5, kind: input, shape index: {}]
  %s6 = inlined_call_operand.vmem [shape: bf16[2,32,32], index: 6, kind: input, shape index: {}]
  %s7 = inlined_call_operand.vmem [shape: bf16[2,32,32], index: 7, kind: input, shape index: {}]
  %s8 = inlined_call_operand.vmem [shape: bf16[2,32,32], index: 8, kind: input, shape index: {}]
  %s9 = inlined_call_operand.vmem [shape: bf16[2,32,32], index: 9, kind: input, shape index: {}]
  %s10 = inlined_call_operand.vmem [shape: f32[2,1,32], index: 10, kind: input, shape index: {}]
  %s11 = inlined_call_operand.vmem [shape: f32[2,1,32], index: 11, kind: input, shape index: {}]
  %s12 = inlined_call_operand.vmem [shape: bf16[2,32,32], index: 12, kind: input, shape index: {}]
  %s13 = inlined_call_operand.vmem [shape: bf16[2,32,32], index: 13, kind: input, shape index: {}]
  %s14 = inlined_call_operand.vmem [shape: bf16[2,32,32], index: 14, kind: input, shape index: {}]
  %s15 = inlined_call_operand.vmem [shape: bf16[2,32,32], index: 15, kind: input, shape index: {}]
  %s16 = inlined_call_operand.vmem [shape: f32[2,1,32], index: 16, kind: input, shape index: {}]
  %s17 = inlined_call_operand.vmem [shape: f32[2,1,32], index: 17, kind: input, shape index: {}]
  %s18 = inlined_call_operand.vmem [shape: bf16[2,32,64], index: 18, kind: input, shape index: {}]
  %s19 = inlined_call_operand.vmem [shape: f32[2,1,64], index: 19, kind: input, shape index: {}]
  %s20 = inlined_call_operand.vmem [shape: bf16[2,64,32], index: 20, kind: input, shape index: {}]
  %s21 = inlined_call_operand.vmem [shape: f32[2,1,32], index: 21, kind: input, shape index: {}]
  %s22 = inlined_call_operand.vmem [shape: f32[1,32], index: 22, kind: input, shape index: {}]
  %s23 = inlined_call_operand.vmem [shape: f32[1,32], index: 23, kind: input, shape index: {}]
  %s24 = inlined_call_operand.hbm [shape: f32[2,8,32], index: 24, kind: output, shape index: {}]
  %s25 = sld [smem:[#allocation0]]
  $region129: #{decoder_forward.1} parent=0
    _
  %s27 = ssub.s32 1, %s25
  %s28 = scalar_select 0, %s27, %s25
  $region1: #{decoder_forward.1} parent=0
    #allocation3 [shape = 'u8[8192]{0}', space=vmem, size = 0x2000, scoped, tag = 'output window, operand 0']
    #allocation4 [shape = 's32[2]{0}', space=sflag, size = 0x8, scoped, tag = 'scoped memory for decoder_forward.1']
    %29 = vsyncpa [#allocation4], 0
    %s30 = scalar_lea.sflag [#allocation4], 1
    %31 = vsyncpa %s30, 0
    loop: start=0, step=1, limit=4
    $region2: #{decoder_forward.1} parent=1 // loop_pre_header
      _
    $region3: #{decoder_forward.1} parent=1 // loop_header
      %s33 = sphi 0, %s37
      %p34 = scmp.ge.s32.totalorder %s33, 4
      %s43 = sphi 0, %s45
      %s46 = sphi 0, %s43
      %s47 = sphi 0, %s46
      %s63 = sphi 0, %s47
      %s69 = sphi 0, %s71
      %s72 = sphi 0, %s69
      %s73 = sphi 0, %s72
      %s89 = sphi 0, %s73
      %s95 = sphi 0, %s97
      %s98 = sphi 0, %s95
      %s99 = sphi 0, %s98
      %s115 = sphi 0, %s99
      %s121 = sphi 0, %s123
      %s124 = sphi 0, %s121
      %s125 = sphi 0, %s124
      %s141 = sphi 0, %s125
      %s145 = sphi 0, %s145
      %s147 = sphi 0, %s145
      %s148 = sphi 0, %s147
      %s162 = sphi 0, %s148
      %s166 = sphi 0, %s166
      %s168 = sphi 0, %s166
      %s169 = sphi 0, %s168
      %s183 = sphi 0, %s169
      %s187 = sphi 0, %s187
      %s189 = sphi 0, %s187
      %s190 = sphi 0, %s189
      %s204 = sphi 0, %s190
      %s208 = sphi 0, %s208
      %s210 = sphi 0, %s208
      %s211 = sphi 0, %s210
      %s225 = sphi 0, %s211
      %s229 = sphi 0, %s229
      %s231 = sphi 0, %s229
      %s232 = sphi 0, %s231
      %s246 = sphi 0, %s232
      %s250 = sphi 0, %s250
      %s252 = sphi 0, %s250
      %s253 = sphi 0, %s252
      %s267 = sphi 0, %s253
      %s271 = sphi 0, %s271
      %s273 = sphi 0, %s271
      %s274 = sphi 0, %s273
      %s288 = sphi 0, %s274
      %s292 = sphi 0, %s292
      %s294 = sphi 0, %s292
      %s295 = sphi 0, %s294
      %s309 = sphi 0, %s295
      %s313 = sphi 0, %s313
      %s315 = sphi 0, %s313
      %s316 = sphi 0, %s315
      %s330 = sphi 0, %s316
      %s334 = sphi 0, %s334
      %s336 = sphi 0, %s334
      %s337 = sphi 0, %s336
      %s351 = sphi 0, %s337
      %s355 = sphi 0, %s355
      %s357 = sphi 0, %s355
      %s358 = sphi 0, %s357
      %s372 = sphi 0, %s358
      %s376 = sphi 0, %s376
      %s378 = sphi 0, %s376
      %s379 = sphi 0, %s378
      %s393 = sphi 0, %s379
      %s397 = sphi 0, %s397
      %s399 = sphi 0, %s397
      %s400 = sphi 0, %s399
      %s414 = sphi 0, %s400
      %s418 = sphi 0, %s418
      %s420 = sphi 0, %s418
      %s421 = sphi 0, %s420
      %s435 = sphi 0, %s421
      %s439 = sphi 0, %s439
      %s441 = sphi 0, %s439
      %s442 = sphi 0, %s441
      %s456 = sphi 0, %s442
      %s460 = sphi 0, %s460
      %s462 = sphi 0, %s460
      %s463 = sphi 0, %s462
      %s477 = sphi 0, %s463
      %s481 = sphi 0, %s481
      %s483 = sphi 0, %s481
      %s484 = sphi 0, %s483
      %s498 = sphi 0, %s484
      %s502 = sphi 0, %s502
      %s504 = sphi 0, %s502
      %s505 = sphi 0, %s504
      %s519 = sphi 0, %s505
      %s523 = sphi 0, %s523
      %s525 = sphi 0, %s523
      %s526 = sphi 0, %s525
      %s540 = sphi 0, %s526
      %s544 = sphi 0, %s544
      %s546 = sphi 0, %s544
      %s547 = sphi 0, %s546
      %s561 = sphi 0, %s547
      %s567 = sphi 0, %s569
      %s570 = sphi 0, %s567
      %s571 = sphi 0, %s570
      %s587 = sphi 0, %s571
    $region4: #{decoder_forward.1} parent=1 // loop_header_branch
      %36 = sbr.rel (%p34) target = $region8
    $region5: #{decoder_forward.1} parent=1 // loop_body
      %s38 = ssub.s32 %s33, 1
      %s39 = ssub.s32 %s33, 2
      %s40 = sadd.s32 %s33, 1
      %s41 = ssub.s32 %s33, %s40
      %p42 = scmp.eq.s32.totalorder %s41, 0
      %s44 = sadd.s32 %s43, 1
      %s45 = scalar_select %p42, %s43, %s44
      %p48 = pneg %p42
      %p49 = scmp.eq.s32.totalorder %s33, 1
      %p50 = por %p48, %p49
      %p51 = scmp.ne.s32.totalorder %s43, %s46
      %p52 = scmp.eq.s32.totalorder %s33, 0
      %p53 = por %p51, %p52
      %p54 = scmp.ne.s32.totalorder %s43, %s46
      %p55 = scmp.eq.s32.totalorder %s38, 1
      %p56 = por %p54, %p55
      %p57 = scmp.ne.s32.totalorder %s46, %s47
      %p58 = scmp.eq.s32.totalorder %s38, 0
      %p59 = por %p57, %p58
      %p60 = scmp.ne.s32.totalorder %s46, %s47
      %p61 = scmp.eq.s32.totalorder %s39, 1
      %p62 = por %p60, %p61
      %p64 = scmp.ne.s32.totalorder %s47, %s63
      %p65 = scmp.eq.s32.totalorder %s39, 0
      %p66 = por %p64, %p65
      %s67 = ssub.s32 %s33, %s40
      %p68 = scmp.eq.s32.totalorder %s67, 0
      %s70 = sadd.s32 %s69, 1
      %s71 = scalar_select %p68, %s69, %s70
      %p74 = pneg %p68
      %p75 = scmp.eq.s32.totalorder %s33, 1
      %p76 = por %p74, %p75
      %p77 = scmp.ne.s32.totalorder %s69, %s72
      %p78 = scmp.eq.s32.totalorder %s33, 0
      %p79 = por %p77, %p78
      %p80 = scmp.ne.s32.totalorder %s69, %s72
      %p81 = scmp.eq.s32.totalorder %s38, 1
      %p82 = por %p80, %p81
      %p83 = scmp.ne.s32.totalorder %s72, %s73
      %p84 = scmp.eq.s32.totalorder %s38, 0
      %p85 = por %p83, %p84
      %p86 = scmp.ne.s32.totalorder %s72, %s73
      %p87 = scmp.eq.s32.totalorder %s39, 1
      %p88 = por %p86, %p87
      %p90 = scmp.ne.s32.totalorder %s73, %s89
      %p91 = scmp.eq.s32.totalorder %s39, 0
      %p92 = por %p90, %p91
      %s93 = ssub.s32 %s33, %s40
      %p94 = scmp.eq.s32.totalorder %s93, 0
      %s96 = sadd.s32 %s95, 1
      %s97 = scalar_select %p94, %s95, %s96
      %p100 = pneg %p94
      %p101 = scmp.eq.s32.totalorder %s33, 1
      %p102 = por %p100, %p101
      %p103 = scmp.ne.s32.totalorder %s95, %s98
      %p104 = scmp.eq.s32.totalorder %s33, 0
      %p105 = por %p103, %p104
      %p106 = scmp.ne.s32.totalorder %s95, %s98
      %p107 = scmp.eq.s32.totalorder %s38, 1
      %p108 = por %p106, %p107
      %p109 = scmp.ne.s32.totalorder %s98, %s99
      %p110 = scmp.eq.s32.totalorder %s38, 0
      %p111 = por %p109, %p110
      %p112 = scmp.ne.s32.totalorder %s98, %s99
      %p113 = scmp.eq.s32.totalorder %s39, 1
      %p114 = por %p112, %p113
      %p116 = scmp.ne.s32.totalorder %s99, %s115
      %p117 = scmp.eq.s32.totalorder %s39, 0
      %p118 = por %p116, %p117
      %s119 = ssub.s32 %s33, %s40
      %p120 = scmp.eq.s32.totalorder %s119, 0
      %s122 = sadd.s32 %s121, 1
      %s123 = scalar_select %p120, %s121, %s122
      %p126 = pneg %p120
      %p127 = scmp.eq.s32.totalorder %s33, 1
      %p128 = por %p126, %p127
      %p129 = scmp.ne.s32.totalorder %s121, %s124
      %p130 = scmp.eq.s32.totalorder %s33, 0
      %p131 = por %p129, %p130
      %p132 = scmp.ne.s32.totalorder %s121, %s124
      %p133 = scmp.eq.s32.totalorder %s38, 1
      %p134 = por %p132, %p133
      %p135 = scmp.ne.s32.totalorder %s124, %s125
      %p136 = scmp.eq.s32.totalorder %s38, 0
      %p137 = por %p135, %p136
      %p138 = scmp.ne.s32.totalorder %s124, %s125
      %p139 = scmp.eq.s32.totalorder %s39, 1
      %p140 = por %p138, %p139
      %p142 = scmp.ne.s32.totalorder %s125, %s141
      %p143 = scmp.eq.s32.totalorder %s39, 0
      %p144 = por %p142, %p143
      %s146 = sadd.s32 %s145, 1
      %p149 = scmp.eq.s32.totalorder %s33, 1
      %p150 = scmp.ne.s32.totalorder %s145, %s147
      %p151 = scmp.eq.s32.totalorder %s33, 0
      %p152 = por %p150, %p151
      %p153 = scmp.ne.s32.totalorder %s145, %s147
      %p154 = scmp.eq.s32.totalorder %s38, 1
      %p155 = por %p153, %p154
      %p156 = scmp.ne.s32.totalorder %s147, %s148
      %p157 = scmp.eq.s32.totalorder %s38, 0
      %p158 = por %p156, %p157
      %p159 = scmp.ne.s32.totalorder %s147, %s148
      %p160 = scmp.eq.s32.totalorder %s39, 1
      %p161 = por %p159, %p160
      %p163 = scmp.ne.s32.totalorder %s148, %s162
      %p164 = scmp.eq.s32.totalorder %s39, 0
      %p165 = por %p163, %p164
      %s167 = sadd.s32 %s166, 1
      %p170 = scmp.eq.s32.totalorder %s33, 1
      %p171 = scmp.ne.s32.totalorder %s166, %s168
      %p172 = scmp.eq.s32.totalorder %s33, 0
      %p173 = por %p171, %p172
      %p174 = scmp.ne.s32.totalorder %s166, %s168
      %p175 = scmp.eq.s32.totalorder %s38, 1
      %p176 = por %p174, %p175
      %p177 = scmp.ne.s32.totalorder %s168, %s169
      %p178 = scmp.eq.s32.totalorder %s38, 0
      %p179 = por %p177, %p178
      %p180 = scmp.ne.s32.totalorder %s168, %s169
      %p181 = scmp.eq.s32.totalorder %s39, 1
      %p182 = por %p180, %p181
      %p184 = scmp.ne.s32.totalorder %s169, %s183
      %p185 = scmp.eq.s32.totalorder %s39, 0
      %p186 = por %p184, %p185
      %s188 = sadd.s32 %s187, 1
      %p191 = scmp.eq.s32.totalorder %s33, 1
      %p192 = scmp.ne.s32.totalorder %s187, %s189
      %p193 = scmp.eq.s32.totalorder %s33, 0
      %p194 = por %p192, %p193
      %p195 = scmp.ne.s32.totalorder %s187, %s189
      %p196 = scmp.eq.s32.totalorder %s38, 1
      %p197 = por %p195, %p196
      %p198 = scmp.ne.s32.totalorder %s189, %s190
      %p199 = scmp.eq.s32.totalorder %s38, 0
      %p200 = por %p198, %p199
      %p201 = scmp.ne.s32.totalorder %s189, %s190
      %p202 = scmp.eq.s32.totalorder %s39, 1
      %p203 = por %p201, %p202
      %p205 = scmp.ne.s32.totalorder %s190, %s204
      %p206 = scmp.eq.s32.totalorder %s39, 0
      %p207 = por %p205, %p206
      %s209 = sadd.s32 %s208, 1
      %p212 = scmp.eq.s32.totalorder %s33, 1
      %p213 = scmp.ne.s32.totalorder %s208, %s210
      %p214 = scmp.eq.s32.totalorder %s33, 0
      %p215 = por %p213, %p214
      %p216 = scmp.ne.s32.totalorder %s208, %s210
      %p217 = scmp.eq.s32.totalorder %s38, 1
      %p218 = por %p216, %p217
      %p219 = scmp.ne.s32.totalorder %s210, %s211
      %p220 = scmp.eq.s32.totalorder %s38, 0
      %p221 = por %p219, %p220
      %p222 = scmp.ne.s32.totalorder %s210, %s211
      %p223 = scmp.eq.s32.totalorder %s39, 1
      %p224 = por %p222, %p223
      %p226 = scmp.ne.s32.totalorder %s211, %s225
      %p227 = scmp.eq.s32.totalorder %s39, 0
      %p228 = por %p226, %p227
      %s230 = sadd.s32 %s229, 1
      %p233 = scmp.eq.s32.totalorder %s33, 1
      %p234 = scmp.ne.s32.totalorder %s229, %s231
      %p235 = scmp.eq.s32.totalorder %s33, 0
      %p236 = por %p234, %p235
      %p237 = scmp.ne.s32.totalorder %s229, %s231
      %p238 = scmp.eq.s32.totalorder %s38, 1
      %p239 = por %p237, %p238
      %p240 = scmp.ne.s32.totalorder %s231, %s232
      %p241 = scmp.eq.s32.totalorder %s38, 0
      %p242 = por %p240, %p241
      %p243 = scmp.ne.s32.totalorder %s231, %s232
      %p244 = scmp.eq.s32.totalorder %s39, 1
      %p245 = por %p243, %p244
      %p247 = scmp.ne.s32.totalorder %s232, %s246
      %p248 = scmp.eq.s32.totalorder %s39, 0
      %p249 = por %p247, %p248
      %s251 = sadd.s32 %s250, 1
      %p254 = scmp.eq.s32.totalorder %s33, 1
      %p255 = scmp.ne.s32.totalorder %s250, %s252
      %p256 = scmp.eq.s32.totalorder %s33, 0
      %p257 = por %p255, %p256
      %p258 = scmp.ne.s32.totalorder %s250, %s252
      %p259 = scmp.eq.s32.totalorder %s38, 1
      %p260 = por %p258, %p259
      %p261 = scmp.ne.s32.totalorder %s252, %s253
      %p262 = scmp.eq.s32.totalorder %s38, 0
      %p263 = por %p261, %p262
      %p264 = scmp.ne.s32.totalorder %s252, %s253
      %p265 = scmp.eq.s32.totalorder %s39, 1
      %p266 = por %p264, %p265
      %p268 = scmp.ne.s32.totalorder %s253, %s267
      %p269 = scmp.eq.s32.totalorder %s39, 0
      %p270 = por %p268, %p269
      %s272 = sadd.s32 %s271, 1
      %p275 = scmp.eq.s32.totalorder %s33, 1
      %p276 = scmp.ne.s32.totalorder %s271, %s273
      %p277 = scmp.eq.s32.totalorder %s33, 0
      %p278 = por %p276, %p277
      %p279 = scmp.ne.s32.totalorder %s271, %s273
      %p280 = scmp.eq.s32.totalorder %s38, 1
      %p281 = por %p279, %p280
      %p282 = scmp.ne.s32.totalorder %s273, %s274
      %p283 = scmp.eq.s32.totalorder %s38, 0
      %p284 = por %p282, %p283
      %p285 = scmp.ne.s32.totalorder %s273, %s274
      %p286 = scmp.eq.s32.totalorder %s39, 1
      %p287 = por %p285, %p286
      %p289 = scmp.ne.s32.totalorder %s274, %s288
      %p290 = scmp.eq.s32.totalorder %s39, 0
      %p291 = por %p289, %p290
      %s293 = sadd.s32 %s292, 1
      %p296 = scmp.eq.s32.totalorder %s33, 1
      %p297 = scmp.ne.s32.totalorder %s292, %s294
      %p298 = scmp.eq.s32.totalorder %s33, 0
      %p299 = por %p297, %p298
      %p300 = scmp.ne.s32.totalorder %s292, %s294
      %p301 = scmp.eq.s32.totalorder %s38, 1
      %p302 = por %p300, %p301
      %p303 = scmp.ne.s32.totalorder %s294, %s295
      %p304 = scmp.eq.s32.totalorder %s38, 0
      %p305 = por %p303, %p304
      %p306 = scmp.ne.s32.totalorder %s294, %s295
      %p307 = scmp.eq.s32.totalorder %s39, 1
      %p308 = por %p306, %p307
      %p310 = scmp.ne.s32.totalorder %s295, %s309
      %p311 = scmp.eq.s32.totalorder %s39, 0
      %p312 = por %p310, %p311
      %s314 = sadd.s32 %s313, 1
      %p317 = scmp.eq.s32.totalorder %s33, 1
      %p318 = scmp.ne.s32.totalorder %s313, %s315
      %p319 = scmp.eq.s32.totalorder %s33, 0
      %p320 = por %p318, %p319
      %p321 = scmp.ne.s32.totalorder %s313, %s315
      %p322 = scmp.eq.s32.totalorder %s38, 1
      %p323 = por %p321, %p322
      %p324 = scmp.ne.s32.totalorder %s315, %s316
      %p325 = scmp.eq.s32.totalorder %s38, 0
      %p326 = por %p324, %p325
      %p327 = scmp.ne.s32.totalorder %s315, %s316
      %p328 = scmp.eq.s32.totalorder %s39, 1
      %p329 = por %p327, %p328
      %p331 = scmp.ne.s32.totalorder %s316, %s330
      %p332 = scmp.eq.s32.totalorder %s39, 0
      %p333 = por %p331, %p332
      %s335 = sadd.s32 %s334, 1
      %p338 = scmp.eq.s32.totalorder %s33, 1
      %p339 = scmp.ne.s32.totalorder %s334, %s336
      %p340 = scmp.eq.s32.totalorder %s33, 0
      %p341 = por %p339, %p340
      %p342 = scmp.ne.s32.totalorder %s334, %s336
      %p343 = scmp.eq.s32.totalorder %s38, 1
      %p344 = por %p342, %p343
      %p345 = scmp.ne.s32.totalorder %s336, %s337
      %p346 = scmp.eq.s32.totalorder %s38, 0
      %p347 = por %p345, %p346
      %p348 = scmp.ne.s32.totalorder %s336, %s337
      %p349 = scmp.eq.s32.totalorder %s39, 1
      %p350 = por %p348, %p349
      %p352 = scmp.ne.s32.totalorder %s337, %s351
      %p353 = scmp.eq.s32.totalorder %s39, 0
      %p354 = por %p352, %p353
      %s356 = sadd.s32 %s355, 1
      %p359 = scmp.eq.s32.totalorder %s33, 1
      %p360 = scmp.ne.s32.totalorder %s355, %s357
      %p361 = scmp.eq.s32.totalorder %s33, 0
      %p362 = por %p360, %p361
      %p363 = scmp.ne.s32.totalorder %s355, %s357
      %p364 = scmp.eq.s32.totalorder %s38, 1
      %p365 = por %p363, %p364
      %p366 = scmp.ne.s32.totalorder %s357, %s358
      %p367 = scmp.eq.s32.totalorder %s38, 0
      %p368 = por %p366, %p367
      %p369 = scmp.ne.s32.totalorder %s357, %s358
      %p370 = scmp.eq.s32.totalorder %s39, 1
      %p371 = por %p369, %p370
      %p373 = scmp.ne.s32.totalorder %s358, %s372
      %p374 = scmp.eq.s32.totalorder %s39, 0
      %p375 = por %p373, %p374
      %s377 = sadd.s32 %s376, 1
      %p380 = scmp.eq.s32.totalorder %s33, 1
      %p381 = scmp.ne.s32.totalorder %s376, %s378
      %p382 = scmp.eq.s32.totalorder %s33, 0
      %p383 = por %p381, %p382
      %p384 = scmp.ne.s32.totalorder %s376, %s378
      %p385 = scmp.eq.s32.totalorder %s38, 1
      %p386 = por %p384, %p385
      %p387 = scmp.ne.s32.totalorder %s378, %s379
      %p388 = scmp.eq.s32.totalorder %s38, 0
      %p389 = por %p387, %p388
      %p390 = scmp.ne.s32.totalorder %s378, %s379
      %p391 = scmp.eq.s32.totalorder %s39, 1
      %p392 = por %p390, %p391
      %p394 = scmp.ne.s32.totalorder %s379, %s393
      %p395 = scmp.eq.s32.totalorder %s39, 0
      %p396 = por %p394, %p395
      %s398 = sadd.s32 %s397, 1
      %p401 = scmp.eq.s32.totalorder %s33, 1
      %p402 = scmp.ne.s32.totalorder %s397, %s399
      %p403 = scmp.eq.s32.totalorder %s33, 0
      %p404 = por %p402, %p403
      %p405 = scmp.ne.s32.totalorder %s397, %s399
      %p406 = scmp.eq.s32.totalorder %s38, 1
      %p407 = por %p405, %p406
      %p408 = scmp.ne.s32.totalorder %s399, %s400
      %p409 = scmp.eq.s32.totalorder %s38, 0
      %p410 = por %p408, %p409
      %p411 = scmp.ne.s32.totalorder %s399, %s400
      %p412 = scmp.eq.s32.totalorder %s39, 1
      %p413 = por %p411, %p412
      %p415 = scmp.ne.s32.totalorder %s400, %s414
      %p416 = scmp.eq.s32.totalorder %s39, 0
      %p417 = por %p415, %p416
      %s419 = sadd.s32 %s418, 1
      %p422 = scmp.eq.s32.totalorder %s33, 1
      %p423 = scmp.ne.s32.totalorder %s418, %s420
      %p424 = scmp.eq.s32.totalorder %s33, 0
      %p425 = por %p423, %p424
      %p426 = scmp.ne.s32.totalorder %s418, %s420
      %p427 = scmp.eq.s32.totalorder %s38, 1
      %p428 = por %p426, %p427
      %p429 = scmp.ne.s32.totalorder %s420, %s421
      %p430 = scmp.eq.s32.totalorder %s38, 0
      %p431 = por %p429, %p430
      %p432 = scmp.ne.s32.totalorder %s420, %s421
      %p433 = scmp.eq.s32.totalorder %s39, 1
      %p434 = por %p432, %p433
      %p436 = scmp.ne.s32.totalorder %s421, %s435
      %p437 = scmp.eq.s32.totalorder %s39, 0
      %p438 = por %p436, %p437
      %s440 = sadd.s32 %s439, 1
      %p443 = scmp.eq.s32.totalorder %s33, 1
      %p444 = scmp.ne.s32.totalorder %s439, %s441
      %p445 = scmp.eq.s32.totalorder %s33, 0
      %p446 = por %p444, %p445
      %p447 = scmp.ne.s32.totalorder %s439, %s441
      %p448 = scmp.eq.s32.totalorder %s38, 1
      %p449 = por %p447, %p448
      %p450 = scmp.ne.s32.totalorder %s441, %s442
      %p451 = scmp.eq.s32.totalorder %s38, 0
      %p452 = por %p450, %p451
      %p453 = scmp.ne.s32.totalorder %s441, %s442
      %p454 = scmp.eq.s32.totalorder %s39, 1
      %p455 = por %p453, %p454
      %p457 = scmp.ne.s32.totalorder %s442, %s456
      %p458 = scmp.eq.s32.totalorder %s39, 0
      %p459 = por %p457, %p458
      %s461 = sadd.s32 %s460, 1
      %p464 = scmp.eq.s32.totalorder %s33, 1
      %p465 = scmp.ne.s32.totalorder %s460, %s462
      %p466 = scmp.eq.s32.totalorder %s33, 0
      %p467 = por %p465, %p466
      %p468 = scmp.ne.s32.totalorder %s460, %s462
      %p469 = scmp.eq.s32.totalorder %s38, 1
      %p470 = por %p468, %p469
      %p471 = scmp.ne.s32.totalorder %s462, %s463
      %p472 = scmp.eq.s32.totalorder %s38, 0
      %p473 = por %p471, %p472
      %p474 = scmp.ne.s32.totalorder %s462, %s463
      %p475 = scmp.eq.s32.totalorder %s39, 1
      %p476 = por %p474, %p475
      %p478 = scmp.ne.s32.totalorder %s463, %s477
      %p479 = scmp.eq.s32.totalorder %s39, 0
      %p480 = por %p478, %p479
      %s482 = sadd.s32 %s481, 1
      %p485 = scmp.eq.s32.totalorder %s33, 1
      %p486 = scmp.ne.s32.totalorder %s481, %s483
      %p487 = scmp.eq.s32.totalorder %s33, 0
      %p488 = por %p486, %p487
      %p489 = scmp.ne.s32.totalorder %s481, %s483
      %p490 = scmp.eq.s32.totalorder %s38, 1
      %p491 = por %p489, %p490
      %p492 = scmp.ne.s32.totalorder %s483, %s484
      %p493 = scmp.eq.s32.totalorder %s38, 0
      %p494 = por %p492, %p493
      %p495 = scmp.ne.s32.totalorder %s483, %s484
      %p496 = scmp.eq.s32.totalorder %s39, 1
      %p497 = por %p495, %p496
      %p499 = scmp.ne.s32.totalorder %s484, %s498
      %p500 = scmp.eq.s32.totalorder %s39, 0
      %p501 = por %p499, %p500
      %s503 = sadd.s32 %s502, 1
      %p506 = scmp.eq.s32.totalorder %s33, 1
      %p507 = scmp.ne.s32.totalorder %s502, %s504
      %p508 = scmp.eq.s32.totalorder %s33, 0
      %p509 = por %p507, %p508
      %p510 = scmp.ne.s32.totalorder %s502, %s504
      %p511 = scmp.eq.s32.totalorder %s38, 1
      %p512 = por %p510, %p511
      %p513 = scmp.ne.s32.totalorder %s504, %s505
      %p514 = scmp.eq.s32.totalorder %s38, 0
      %p515 = por %p513, %p514
      %p516 = scmp.ne.s32.totalorder %s504, %s505
      %p517 = scmp.eq.s32.totalorder %s39, 1
      %p518 = por %p516, %p517
      %p520 = scmp.ne.s32.totalorder %s505, %s519
      %p521 = scmp.eq.s32.totalorder %s39, 0
      %p522 = por %p520, %p521
      %s524 = sadd.s32 %s523, 1
      %p527 = scmp.eq.s32.totalorder %s33, 1
      %p528 = scmp.ne.s32.totalorder %s523, %s525
      %p529 = scmp.eq.s32.totalorder %s33, 0
      %p530 = por %p528, %p529
      %p531 = scmp.ne.s32.totalorder %s523, %s525
      %p532 = scmp.eq.s32.totalorder %s38, 1
      %p533 = por %p531, %p532
      %p534 = scmp.ne.s32.totalorder %s525, %s526
      %p535 = scmp.eq.s32.totalorder %s38, 0
      %p536 = por %p534, %p535
      %p537 = scmp.ne.s32.totalorder %s525, %s526
      %p538 = scmp.eq.s32.totalorder %s39, 1
      %p539 = por %p537, %p538
      %p541 = scmp.ne.s32.totalorder %s526, %s540
      %p542 = scmp.eq.s32.totalorder %s39, 0
      %p543 = por %p541, %p542
      %s545 = sadd.s32 %s544, 1
      %p548 = scmp.eq.s32.totalorder %s33, 1
      %p549 = scmp.ne.s32.totalorder %s544, %s546
      %p550 = scmp.eq.s32.totalorder %s33, 0
      %p551 = por %p549, %p550
      %p552 = scmp.ne.s32.totalorder %s544, %s546
      %p553 = scmp.eq.s32.totalorder %s38, 1
      %p554 = por %p552, %p553
      %p555 = scmp.ne.s32.totalorder %s546, %s547
      %p556 = scmp.eq.s32.totalorder %s38, 0
      %p557 = por %p555, %p556
      %p558 = scmp.ne.s32.totalorder %s546, %s547
      %p559 = scmp.eq.s32.totalorder %s39, 1
      %p560 = por %p558, %p559
      %p562 = scmp.ne.s32.totalorder %s547, %s561
      %p563 = scmp.eq.s32.totalorder %s39, 0
      %p564 = por %p562, %p563
      %s565 = ssub.s32 %s33, %s40
      %p566 = scmp.eq.s32.totalorder %s565, 0
      %s568 = sadd.s32 %s567, 1
      %s569 = scalar_select %p566, %s567, %s568
      %p572 = pneg %p566
      %p573 = scmp.eq.s32.totalorder %s33, 1
      %p574 = por %p572, %p573
      %p575 = scmp.ne.s32.totalorder %s567, %s570
      %p576 = scmp.eq.s32.totalorder %s33, 0
      %p577 = por %p575, %p576
      %p578 = scmp.ne.s32.totalorder %s567, %s570
      %p579 = scmp.eq.s32.totalorder %s38, 1
      %p580 = por %p578, %p579
      %p581 = scmp.ne.s32.totalorder %s570, %s571
      %p582 = scmp.eq.s32.totalorder %s38, 0
      %p583 = por %p581, %p582
      %p584 = scmp.ne.s32.totalorder %s570, %s571
      %p585 = scmp.eq.s32.totalorder %s39, 1
      %p586 = por %p584, %p585
      %p588 = scmp.ne.s32.totalorder %s571, %s587
      %p589 = scmp.eq.s32.totalorder %s39, 0
      %p590 = por %p588, %p589
      %p591 = scmp.le.s32.totalorder 1, %s33
      %p592 = scmp.lt.s32.totalorder %s33, 3
      %p593 = pnand %p591, %p592
      %p594 = pneg %p593
      // Predicated region
      $region9: #{decoder_forward.1} parent=5 // pred_check
        _
      $region10: #{decoder_forward.1} parent=5 // pred_check_branch
        %596 = sbr.rel (%p593) target = $region12
      $region11: #{decoder_forward.1} parent=5 // pred_region
        %s597 = ssub.s32 %s33, 1
        // Predicated region
        $region13: #{decoder_forward.1} parent=11 // pred_check
          %p598 = pneg %p158
        $region14: #{decoder_forward.1} parent=11 // pred_check_branch
          %600 = sbr.rel (%p598) target = $region16
        $region15: #{decoder_forward.1} parent=11 // pred_region
          _
        $region16: #{decoder_forward.1} parent=11 // pred_fallthru
          _
        // Predicated region
        $region17: #{decoder_forward.1} parent=11 // pred_check
          %p601 = pneg %p179
        $region18: #{decoder_forward.1} parent=11 // pred_check_branch
          %603 = sbr.rel (%p601) target = $region20
        $region19: #{decoder_forward.1} parent=11 // pred_region
          _
        $region20: #{decoder_forward.1} parent=11 // pred_fallthru
          _
        // Predicated region
        $region21: #{decoder_forward.1} parent=11 // pred_check
          %p604 = pneg %p200
        $region22: #{decoder_forward.1} parent=11 // pred_check_branch
          %606 = sbr.rel (%p604) target = $region24
        $region23: #{decoder_forward.1} parent=11 // pred_region
          _
        $region24: #{decoder_forward.1} parent=11 // pred_fallthru
          _
        // Predicated region
        $region25: #{decoder_forward.1} parent=11 // pred_check
          %p607 = pneg %p221
        $region26: #{decoder_forward.1} parent=11 // pred_check_branch
          %609 = sbr.rel (%p607) target = $region28
        $region27: #{decoder_forward.1} parent=11 // pred_region
          _
        $region28: #{decoder_forward.1} parent=11 // pred_fallthru
          _
        // Predicated region
        $region29: #{decoder_forward.1} parent=11 // pred_check
          %p610 = pneg %p242
        $region30: #{decoder_forward.1} parent=11 // pred_check_branch
          %612 = sbr.rel (%p610) target = $region32
        $region31: #{decoder_forward.1} parent=11 // pred_region
          _
        $region32: #{decoder_forward.1} parent=11 // pred_fallthru
          _
        // Predicated region
        $region33: #{decoder_forward.1} parent=11 // pred_check
          %p613 = pneg %p263
        $region34: #{decoder_forward.1} parent=11 // pred_check_branch
          %615 = sbr.rel (%p613) target = $region36
        $region35: #{decoder_forward.1} parent=11 // pred_region
          _
        $region36: #{decoder_forward.1} parent=11 // pred_fallthru
          _
        // Predicated region
        $region37: #{decoder_forward.1} parent=11 // pred_check
          %p616 = pneg %p284
        $region38: #{decoder_forward.1} parent=11 // pred_check_branch
          %618 = sbr.rel (%p616) target = $region40
        $region39: #{decoder_forward.1} parent=11 // pred_region
          _
        $region40: #{decoder_forward.1} parent=11 // pred_fallthru
          _
        // Predicated region
        $region41: #{decoder_forward.1} parent=11 // pred_check
          %p619 = pneg %p305
        $region42: #{decoder_forward.1} parent=11 // pred_check_branch
          %621 = sbr.rel (%p619) target = $region44
        $region43: #{decoder_forward.1} parent=11 // pred_region
          _
        $region44: #{decoder_forward.1} parent=11 // pred_fallthru
          _
        // Predicated region
        $region45: #{decoder_forward.1} parent=11 // pred_check
          %p622 = pneg %p326
        $region46: #{decoder_forward.1} parent=11 // pred_check_branch
          %624 = sbr.rel (%p622) target = $region48
        $region47: #{decoder_forward.1} parent=11 // pred_region
          _
        $region48: #{decoder_forward.1} parent=11 // pred_fallthru
          _
        // Predicated region
        $region49: #{decoder_forward.1} parent=11 // pred_check
          %p625 = pneg %p347
        $region50: #{decoder_forward.1} parent=11 // pred_check_branch
          %627 = sbr.rel (%p625) target = $region52
        $region51: #{decoder_forward.1} parent=11 // pred_region
          _
        $region52: #{decoder_forward.1} parent=11 // pred_fallthru
          _
        // Predicated region
        $region53: #{decoder_forward.1} parent=11 // pred_check
          %p628 = pneg %p368
        $region54: #{decoder_forward.1} parent=11 // pred_check_branch
          %630 = sbr.rel (%p628) target = $region56
        $region55: #{decoder_forward.1} parent=11 // pred_region
          _
        $region56: #{decoder_forward.1} parent=11 // pred_fallthru
          _
        // Predicated region
        $region57: #{decoder_forward.1} parent=11 // pred_check
          %p631 = pneg %p389
        $region58: #{decoder_forward.1} parent=11 // pred_check_branch
          %633 = sbr.rel (%p631) target = $region60
        $region59: #{decoder_forward.1} parent=11 // pred_region
          _
        $region60: #{decoder_forward.1} parent=11 // pred_fallthru
          _
        // Predicated region
        $region61: #{decoder_forward.1} parent=11 // pred_check
          %p634 = pneg %p410
        $region62: #{decoder_forward.1} parent=11 // pred_check_branch
          %636 = sbr.rel (%p634) target = $region64
        $region63: #{decoder_forward.1} parent=11 // pred_region
          _
        $region64: #{decoder_forward.1} parent=11 // pred_fallthru
          _
        // Predicated region
        $region65: #{decoder_forward.1} parent=11 // pred_check
          %p637 = pneg %p431
        $region66: #{decoder_forward.1} parent=11 // pred_check_branch
          %639 = sbr.rel (%p637) target = $region68
        $region67: #{decoder_forward.1} parent=11 // pred_region
          _
        $region68: #{decoder_forward.1} parent=11 // pred_fallthru
          _
        // Predicated region
        $region69: #{decoder_forward.1} parent=11 // pred_check
          %p640 = pneg %p452
        $region70: #{decoder_forward.1} parent=11 // pred_check_branch
          %642 = sbr.rel (%p640) target = $region72
        $region71: #{decoder_forward.1} parent=11 // pred_region
          _
        $region72: #{decoder_forward.1} parent=11 // pred_fallthru
          _
        // Predicated region
        $region73: #{decoder_forward.1} parent=11 // pred_check
          %p643 = pneg %p473
        $region74: #{decoder_forward.1} parent=11 // pred_check_branch
          %645 = sbr.rel (%p643) target = $region76
        $region75: #{decoder_forward.1} parent=11 // pred_region
          _
        $region76: #{decoder_forward.1} parent=11 // pred_fallthru
          _
        // Predicated region
        $region77: #{decoder_forward.1} parent=11 // pred_check
          %p646 = pneg %p494
        $region78: #{decoder_forward.1} parent=11 // pred_check_branch
          %648 = sbr.rel (%p646) target = $region80
        $region79: #{decoder_forward.1} parent=11 // pred_region
          _
        $region80: #{decoder_forward.1} parent=11 // pred_fallthru
          _
        // Predicated region
        $region81: #{decoder_forward.1} parent=11 // pred_check
          %p649 = pneg %p515
        $region82: #{decoder_forward.1} parent=11 // pred_check_branch
          %651 = sbr.rel (%p649) target = $region84
        $region83: #{decoder_forward.1} parent=11 // pred_region
          _
        $region84: #{decoder_forward.1} parent=11 // pred_fallthru
          _
        // Predicated region
        $region85: #{decoder_forward.1} parent=11 // pred_check
          %p652 = pneg %p536
        $region86: #{decoder_forward.1} parent=11 // pred_check_branch
          %654 = sbr.rel (%p652) target = $region88
        $region87: #{decoder_forward.1} parent=11 // pred_region
          _
        $region88: #{decoder_forward.1} parent=11 // pred_fallthru
          _
        // Predicated region
        $region89: #{decoder_forward.1} parent=11 // pred_check
          %p655 = pneg %p557
        $region90: #{decoder_forward.1} parent=11 // pred_check_branch
          %657 = sbr.rel (%p655) target = $region92
        $region91: #{decoder_forward.1} parent=11 // pred_region
          _
        $region92: #{decoder_forward.1} parent=11 // pred_fallthru
          _
      $region12: #{decoder_forward.1} parent=5 // pred_fallthru
        _
      %p658 = scmp.lt.s32.totalorder %s33, 2
      // Predicated region
      $region93: #{decoder_forward.1} parent=5 // pred_check
        %p659 = pneg %p658
      $region94: #{decoder_forward.1} parent=5 // pred_check_branch
        %661 = sbr.rel (%p659) target = $region96
      $region95: #{decoder_forward.1} parent=5 // pred_region
        // Predicated region
        $region97: #{decoder_forward.1} parent=95 // pred_check
          %p662 = pneg %p53
        $region98: #{decoder_forward.1} parent=95 // pred_check_branch
          %664 = sbr.rel (%p662) target = $region100
        $region99: #{decoder_forward.1} parent=95 // pred_region
          %p665 = scmp.lt.s32.totalorder %s33, 1
          %s666 = scalar_select %p665, %s33, 1
          %s667 = smul.addr %s666, 8
          %s668 = scalar_lea.vmem %s0, %s667
        $region100: #{decoder_forward.1} parent=95 // pred_fallthru
          _
        // Predicated region
        $region101: #{decoder_forward.1} parent=95 // pred_check
          %p669 = pneg %p79
        $region102: #{decoder_forward.1} parent=95 // pred_check_branch
          %671 = sbr.rel (%p669) target = $region104
        $region103: #{decoder_forward.1} parent=95 // pred_region
          %p672 = scmp.lt.s32.totalorder %s33, 1
          %s673 = scalar_select %p672, %s33, 1
          %s674 = smul.addr %s673, 8
          %s675 = scalar_lea.vmem %s1, %s674
        $region104: #{decoder_forward.1} parent=95 // pred_fallthru
          _
        // Predicated region
        $region105: #{decoder_forward.1} parent=95 // pred_check
          %p676 = pneg %p105
        $region106: #{decoder_forward.1} parent=95 // pred_check_branch
          %678 = sbr.rel (%p676) target = $region108
        $region107: #{decoder_forward.1} parent=95 // pred_region
          %p679 = scmp.lt.s32.totalorder %s33, 1
          %s680 = scalar_select %p679, %s33, 1
          %s681 = smul.addr %s680, 8
          %s682 = scalar_lea.vmem %s2, %s681
        $region108: #{decoder_forward.1} parent=95 // pred_fallthru
          _
        // Predicated region
        $region109: #{decoder_forward.1} parent=95 // pred_check
          %p683 = pneg %p131
        $region110: #{decoder_forward.1} parent=95 // pred_check_branch
          %685 = sbr.rel (%p683) target = $region112
        $region111: #{decoder_forward.1} parent=95 // pred_region
          %p686 = scmp.lt.s32.totalorder %s33, 1
          %s687 = scalar_select %p686, %s33, 1
          %s688 = scalar_lea.vmem %s3, %s687
        $region112: #{decoder_forward.1} parent=95 // pred_fallthru
          _
      $region96: #{decoder_forward.1} parent=5 // pred_fallthru
        _
      %p689 = scmp.le.s32.totalorder 1, %s33
      %p690 = scmp.lt.s32.totalorder %s33, 3
      %p691 = pnand %p689, %p690
      %p692 = pneg %p691
      // Predicated region
      $region113: #{decoder_forward.1} parent=5 // pred_check
        _
      $region114: #{decoder_forward.1} parent=5 // pred_check_branch
        %694 = sbr.rel (%p691) target = $region116
      $region115: #{decoder_forward.1} parent=5 // pred_region
        %s695 = ssub.s32 %s33, 1
        %p696 = scmp.lt.s32.totalorder %s38, 1
        %s697 = scalar_select %p696, %s38, 1
        %s698 = smul.addr %s697, 8
        %s699 = scalar_lea.vmem %s0, %s698
        %p700 = pneg %p59
        %p701 = pneg %p56
        %p702 = scmp.lt.s32.totalorder %s38, 1
        %s703 = scalar_select %p702, %s38, 1
        %s704 = smul.addr %s703, 8
        %s705 = scalar_lea.vmem %s1, %s704
        %p706 = pneg %p85
        %p707 = pneg %p82
        %p708 = scmp.lt.s32.totalorder %s38, 1
        %s709 = scalar_select %p708, %s38, 1
        %s710 = smul.addr %s709, 8
        %s711 = scalar_lea.vmem %s2, %s710
        %p712 = pneg %p111
        %p713 = pneg %p108
        %p714 = scmp.lt.s32.totalorder %s38, 1
        %s715 = scalar_select %p714, %s38, 1
        %s716 = scalar_lea.vmem %s3, %s715
        %p717 = pneg %p137
        %p718 = pneg %p134
        %p719 = pneg %p158
        %p720 = pneg %p155
        %p721 = pneg %p179
        %p722 = pneg %p176
        %p723 = pneg %p200
        %p724 = pneg %p197
        %p725 = pneg %p221
        %p726 = pneg %p218
        %p727 = pneg %p242
        %p728 = pneg %p239
        %p729 = pneg %p263
        %p730 = pneg %p260
        %p731 = pneg %p284
        %p732 = pneg %p281
        %p733 = pneg %p305
        %p734 = pneg %p302
        %p735 = pneg %p326
        %p736 = pneg %p323
        %p737 = pneg %p347
        %p738 = pneg %p344
        %p739 = pneg %p368
        %p740 = pneg %p365
        %p741 = pneg %p389
        %p742 = pneg %p386
        %p743 = pneg %p410
        %p744 = pneg %p407
        %p745 = pneg %p431
        %p746 = pneg %p428
        %p747 = pneg %p452
        %p748 = pneg %p449
        %p749 = pneg %p473
        %p750 = pneg %p470
        %p751 = pneg %p494
        %p752 = pneg %p491
        %p753 = pneg %p515
        %p754 = pneg %p512
        %p755 = pneg %p536
        %p756 = pneg %p533
        %p757 = pneg %p557
        %p758 = pneg %p554
        %p759 = pneg %p583
        %p760 = pneg %p580
        %s761 = sand.u32 %s570, 1
        %s762 = scalar_lea.sflag [#allocation4], %s761
        %s763 = sand.u32 %s570, 1
        %s764 = smul.addr %s763, 8
        %s765 = scalar_lea.vmem [#allocation3], %s764
        %p766 = scmp.lt.s32.totalorder %s38, 1
        %s767 = scalar_select %p766, %s38, 1
        %s768 = smul.addr %s767, 8
        %s769 = scalar_lea.vmem %s0, %s768
        %p770 = scmp.lt.s32.totalorder %s38, 1
        %s771 = scalar_select %p770, %s38, 1
        %s772 = smul.addr %s771, 8
        %s773 = scalar_lea.vmem %s1, %s772
        %p774 = scmp.lt.s32.totalorder %s38, 1
        %s775 = scalar_select %p774, %s38, 1
        %s776 = smul.addr %s775, 8
        %s777 = scalar_lea.vmem %s2, %s776
        %p778 = scmp.lt.s32.totalorder %s38, 1
        %s779 = scalar_select %p778, %s38, 1
        %s780 = scalar_lea.vmem %s3, %s779
        %v782 = vld [vmem:[%s769] sm:$0xff]
        %v783 = vld [vmem:[%s773] sm:$0xff]
        %v784 = vpack.c.bf16 %v783, %v783
        %v785 = vld [vmem:[%s777] sm:$0xff]
        %v786 = vld [vmem:[%s780] sm:$0x1]
        %v787 = vpack.c.bf16 %v782, %v782
        %v788 = vld [vmem:[%s4] sm:$0x1]
        %v789 = vld [vmem:[%s5] sm:$0x1]
        %v790 = vld [vmem:[%s6] sm:$0xf]
        %v791 = vld [vmem:[%s6 + $0x4] sm:$0xf]
        %v792 = vld [vmem:[%s6 + $0x8] sm:$0xf]
        %v793 = vld [vmem:[%s6 + $0xc] sm:$0xf]
        %v794 = vld [vmem:[%s7] sm:$0xf]
        %v795 = vld [vmem:[%s7 + $0x4] sm:$0xf]
        %v796 = vld [vmem:[%s7 + $0x8] sm:$0xf]
        %v797 = vld [vmem:[%s7 + $0xc] sm:$0xf]
        %v798 = vld [vmem:[%s8] sm:$0xf]
        %v799 = vld [vmem:[%s8 + $0x4] sm:$0xf]
        %v800 = vld [vmem:[%s8 + $0x8] sm:$0xf]
        %v801 = vld [vmem:[%s8 + $0xc] sm:$0xf]
        %v802 = vld [vmem:[%s9] sm:$0xf]
        %v803 = vld [vmem:[%s9 + $0x4] sm:$0xf]
        %v804 = vld [vmem:[%s9 + $0x8] sm:$0xf]
        %v805 = vld [vmem:[%s9 + $0xc] sm:$0xf]
        %vm806 = vcmask 261120
        %v807 = vsel %vm806, %v782, 0.0
        %808 = vadd.xlane.f32.xlu0 %v807
        %v809 = vpop.xlane.xlu0 %808
        %v810 = vrcp.pop 32.0
        %v811 = vmul.f32 %v809, %v810
        %v812 = vsub.f32 %v782, %v811
        %v813 = vmul.f32 %v812, %v812
        %v814 = vsel %vm806, %v813, 0.0
        %815 = vadd.xlane.f32.xlu0 %v814
        %v816 = vpop.xlane.xlu0 %815
        %v817 = vmul.f32 %v816, %v810
        %v818 = vadd.f32 %v817, 1e-06
        %v819 = vrsqrt.pop %v818
        %v820 = vmul.f32 %v812, %v819
        %v822 = vlaneseq
        %v823 = vshrl.u32 %v822, 7
        %v824 = vsub.s32 0, %v823
        %v825 = vrot.slane %v788, %v824
        %v827 = vmul.f32 %v820, %v825
        %v829 = vlaneseq
        %v830 = vshrl.u32 %v829, 7
        %v831 = vsub.s32 0, %v830
        %v832 = vrot.slane %v789, %v831
        %v834 = vadd.f32 %v827, %v832
        %v835 = vpack.c.bf16 %v834, %v834
        %v840 = vunpack.c.l.b16 %v790
        %v841 = vunpack.c.l.b16 %v791
        %v842 = vunpack.c.l.b16 %v792
        %v843 = vunpack.c.l.b16 %v793
        %v844 = vpack.c.b16 %v841, %v840
        %v845 = vpack.c.b16 %v843, %v842
        %v849 = vsel %vm806, %v835, 0
        %851 = vmatprep.subr.bf16.mxu0 0
        %852 = vmatpush1.bf16.msra.mxu0 0
        %853 = vmatprep.subr.bf16.mxu0 0
        %854 = vmatpush1.bf16.msra.mxu0 0
        %855 = vmatprep.subr.bf16.mxu0 0
        %856 = vmatpush1.bf16.msra.mxu0 0
        %857 = vmatprep.subr.bf16.mxu0 0
        %858 = vmatpush1.bf16.msra.mxu0 0
        %859 = vmatprep.subr.bf16.mxu0 0
        %860 = vmatpush1.bf16.msra.mxu0 0
        %861 = vmatprep.subr.bf16.mxu0 0
        %862 = vmatpush1.bf16.msra.mxu0 0
        %863 = vmatprep.subr.bf16.mxu0 0
        %864 = vmatpush1.bf16.msra.mxu0 %v845
        %865 = vmatprep.subr.bf16.mxu0 0
        %866 = vmatpush1.bf16.msra.mxu0 %v844
        %867 = vmatprep.subr.bf16.mxu0 0
        %868 = vmatpush2.bf16.msra.mxu0 0
        %869 = vmatprep.subr.bf16.mxu0 0
        %870 = vmatpush2.bf16.msra.mxu0 0
        %871 = vmatprep.subr.bf16.mxu0 0
        %872 = vmatpush2.bf16.msra.mxu0 0
        %873 = vmatprep.subr.bf16.mxu0 0
        %874 = vmatpush2.bf16.msra.mxu0 0
        %875 = vmatprep.subr.bf16.mxu0 0
        %876 = vmatpush2.bf16.msra.mxu0 0
        %877 = vmatprep.subr.bf16.mxu0 0
        %878 = vmatpush2.bf16.msra.mxu0 0
        %879 = vmatprep.subr.bf16.mxu0 0
        %880 = vmatpush2.bf16.msra.mxu0 0
        %881 = vmatprep.subr.bf16.mxu0 0
        %882 = vmatpush2.bf16.msra.mxu0 0
        %883 = vmatprep.mubr.bf16.mxu0 0
        %884 = vmatmul.mubr.bf16.gmra.mxu0 %v849
        %v885 = vpop.f32.mrf.mxu0
        %v886 = vadd.f32 0.0, %v885
        %v887 = vpop.f32.mrf.mxu0
        %v888 = vpop.f32.mrf.mxu0
        %v889 = vpop.f32.mrf.mxu0
        %890 = vdwg.mxu0
        %v895 = vunpack.c.l.b16 %v794
        %v896 = vunpack.c.l.b16 %v795
        %v897 = vunpack.c.l.b16 %v796
        %v898 = vunpack.c.l.b16 %v797
        %v899 = vpack.c.b16 %v896, %v895
        %v900 = vpack.c.b16 %v898, %v897
        %v904 = vsel %vm806, %v787, 0
        %906 = vmatprep.subr.bf16.mxu0 0
        %907 = vmatpush1.bf16.msra.mxu0 0
        %908 = vmatprep.subr.bf16.mxu0 0
        %909 = vmatpush1.bf16.msra.mxu0 0
        %910 = vmatprep.subr.bf16.mxu0 0
        %911 = vmatpush1.bf16.msra.mxu0 0
        %912 = vmatprep.subr.bf16.mxu0 0
        %913 = vmatpush1.bf16.msra.mxu0 0
        %914 = vmatprep.subr.bf16.mxu0 0
        %915 = vmatpush1.bf16.msra.mxu0 0
        %916 = vmatprep.subr.bf16.mxu0 0
        %917 = vmatpush1.bf16.msra.mxu0 0
        %918 = vmatprep.subr.bf16.mxu0 0
        %919 = vmatpush1.bf16.msra.mxu0 %v900
        %920 = vmatprep.subr.bf16.mxu0 0
        %921 = vmatpush1.bf16.msra.mxu0 %v899
        %922 = vmatprep.subr.bf16.mxu0 0
        %923 = vmatpush2.bf16.msra.mxu0 0
        %924 = vmatprep.subr.bf16.mxu0 0
        %925 = vmatpush2.bf16.msra.mxu0 0
        %926 = vmatprep.subr.bf16.mxu0 0
        %927 = vmatpush2.bf16.msra.mxu0 0
        %928 = vmatprep.subr.bf16.mxu0 0
        %929 = vmatpush2.bf16.msra.mxu0 0
        %930 = vmatprep.subr.bf16.mxu0 0
        %931 = vmatpush2.bf16.msra.mxu0 0
        %932 = vmatprep.subr.bf16.mxu0 0
        %933 = vmatpush2.bf16.msra.mxu0 0
        %934 = vmatprep.subr.bf16.mxu0 0
        %935 = vmatpush2.bf16.msra.mxu0 0
        %936 = vmatprep.subr.bf16.mxu0 0
        %937 = vmatpush2.bf16.msra.mxu0 0
        %938 = vmatprep.mubr.bf16.mxu0 0
        %939 = vmatmul.mubr.bf16.gmra.mxu0 %v904
        %v940 = vpop.f32.mrf.mxu0
        %v941 = vadd.f32 0.0, %v940
        %v942 = vpop.f32.mrf.mxu0
        %v943 = vpop.f32.mrf.mxu0
        %v944 = vpop.f32.mrf.mxu0
        %945 = vdwg.mxu0
        %v950 = vunpack.c.l.b16 %v798
        %v951 = vunpack.c.l.b16 %v799
        %v952 = vunpack.c.l.b16 %v800
        %v953 = vunpack.c.l.b16 %v801
        %v954 = vpack.c.b16 %v951, %v950
        %v955 = vpack.c.b16 %v953, %v952
        %958 = vmatprep.subr.bf16.mxu0 0
        %959 = vmatpush1.bf16.msra.mxu0 0
        %960 = vmatprep.subr.bf16.mxu0 0
        %961 = vmatpush1.bf16.msra.mxu0 0
        %962 = vmatprep.subr.bf16.mxu0 0
        %963 = vmatpush1.bf16.msra.mxu0 0
        %964 = vmatprep.subr.bf16.mxu0 0
        %965 = vmatpush1.bf16.msra.mxu0 0
        %966 = vmatprep.subr.bf16.mxu0 0
        %967 = vmatpush1.bf16.msra.mxu0 0
        %968 = vmatprep.subr.bf16.mxu0 0
        %969 = vmatpush1.bf16.msra.mxu0 0
        %970 = vmatprep.subr.bf16.mxu0 0
        %971 = vmatpush1.bf16.msra.mxu0 %v955
        %972 = vmatprep.subr.bf16.mxu0 0
        %973 = vmatpush1.bf16.msra.mxu0 %v954
        %974 = vmatprep.subr.bf16.mxu0 0
        %975 = vmatpush2.bf16.msra.mxu0 0
        %976 = vmatprep.subr.bf16.mxu0 0
        %977 = vmatpush2.bf16.msra.mxu0 0
        %978 = vmatprep.subr.bf16.mxu0 0
        %979 = vmatpush2.bf16.msra.mxu0 0
        %980 = vmatprep.subr.bf16.mxu0 0
        %981 = vmatpush2.bf16.msra.mxu0 0
        %982 = vmatprep.subr.bf16.mxu0 0
        %983 = vmatpush2.bf16.msra.mxu0 0
        %984 = vmatprep.subr.bf16.mxu0 0
        %985 = vmatpush2.bf16.msra.mxu0 0
        %986 = vmatprep.subr.bf16.mxu0 0
        %987 = vmatpush2.bf16.msra.mxu0 0
        %988 = vmatprep.subr.bf16.mxu0 0
        %989 = vmatpush2.bf16.msra.mxu0 0
        %990 = vmatprep.mubr.bf16.mxu0 0
        %991 = vmatmul.mubr.bf16.gmra.mxu0 %v904
        %v992 = vpop.f32.mrf.mxu0
        %v993 = vadd.f32 0.0, %v992
        %v994 = vpop.f32.mrf.mxu0
        %v995 = vpop.f32.mrf.mxu0
        %v996 = vpop.f32.mrf.mxu0
        %997 = vdwg.mxu0
        %vm998 = vcmask 64512
        %v1000 = vsel %vm998, %v886, 0
        %v1003 = vsel %vm998, %v941, 0
        %1005 = vmatprep.subr.mxu0 0.0
        %1006 = vmatpush1.xpose.msra.mxu0 0.0
        %1007 = vmatprep.subr.mxu0 0.0
        %1008 = vmatpush1.xpose.msra.mxu0 0.0
        %1009 = vmatprep.subr.mxu0 0.0
        %1010 = vmatpush1.xpose.msra.mxu0 0.0
        %1011 = vmatprep.subr.mxu0 0.0
        %1012 = vmatpush1.xpose.msra.mxu0 0.0
        %1013 = vmatprep.subr.mxu0 0.0
        %1014 = vmatpush1.xpose.msra.mxu0 0.0
        %1015 = vmatprep.subr.mxu0 0.0
        %1016 = vmatpush1.xpose.msra.mxu0 0.0
        %1017 = vmatprep.subr.mxu0 0.0
        %1018 = vmatpush1.xpose.msra.mxu0 0.0
        %1019 = vmatprep.subr.mxu0 0.0
        %1020 = vmatpush1.xpose.msra.mxu0 0.0
        %1021 = vmatprep.subr.mxu0 0.0
        %1022 = vmatpush1.xpose.msra.mxu0 0.0
        %1023 = vmatprep.subr.mxu0 0.0
        %1024 = vmatpush1.xpose.msra.mxu0 0.0
        %1025 = vmatprep.subr.mxu0 0.0
        %1026 = vmatpush1.xpose.msra.mxu0 0.0
        %1027 = vmatprep.subr.mxu0 0.0
        %1028 = vmatpush1.xpose.msra.mxu0 0.0
        %1029 = vmatprep.subr.mxu0 0.0
        %1030 = vmatpush1.xpose.msra.mxu0 0.0
        %1031 = vmatprep.subr.mxu0 0.0
        %1032 = vmatpush1.xpose.msra.mxu0 0.0
        %1033 = vmatprep.subr.mxu0 0.0
        %1034 = vmatpush1.xpose.msra.mxu0 0.0
        %1035 = vmatprep.subr.mxu0 0.0
        %1036 = vmatpush1.xpose.msra.mxu0 %v1003
        %1037 = vmatprep.subr.mxu0 0.0
        %1038 = vmatpush2.xpose.msra.mxu0 0.0
        %1039 = vmatprep.subr.mxu0 0.0
        %1040 = vmatpush2.xpose.msra.mxu0 0.0
        %1041 = vmatprep.subr.mxu0 0.0
        %1042 = vmatpush2.xpose.msra.mxu0 0.0
        %1043 = vmatprep.subr.mxu0 0.0
        %1044 = vmatpush2.xpose.msra.mxu0 0.0
        %1045 = vmatprep.subr.mxu0 0.0
        %1046 = vmatpush2.xpose.msra.mxu0 0.0
        %1047 = vmatprep.subr.mxu0 0.0
        %1048 = vmatpush2.xpose.msra.mxu0 0.0
        %1049 = vmatprep.subr.mxu0 0.0
        %1050 = vmatpush2.xpose.msra.mxu0 0.0
        %1051 = vmatprep.subr.mxu0 0.0
        %1052 = vmatpush2.xpose.msra.mxu0 0.0
        %1053 = vmatprep.subr.mxu0 0.0
        %1054 = vmatpush2.xpose.msra.mxu0 0.0
        %1055 = vmatprep.subr.mxu0 0.0
        %1056 = vmatpush2.xpose.msra.mxu0 0.0
        %1057 = vmatprep.subr.mxu0 0.0
        %1058 = vmatpush2.xpose.msra.mxu0 0.0
        %1059 = vmatprep.subr.mxu0 0.0
        %1060 = vmatpush2.xpose.msra.mxu0 0.0
        %1061 = vmatprep.subr.mxu0 0.0
        %1062 = vmatpush2.xpose.msra.mxu0 0.0
        %1063 = vmatprep.subr.mxu0 0.0
        %1064 = vmatpush2.xpose.msra.mxu0 0.0
        %1065 = vmatprep.subr.mxu0 0.0
        %1066 = vmatpush2.xpose.msra.mxu0 0.0
        %1067 = vmatprep.subr.mxu0 0.0
        %1068 = vmatpush2.xpose.msra.mxu0 0.0
        %1069 = vmatprep.mubr.f32.mxu0 0.0
        %1070 = vmatmul.mubr.f32.gmra.mxu0 %v1000
        %v1071 = vpop.f32.mrf.mxu0
        %v1072 = vadd.f32 %v785, %v1071
        %v1073 = vpop.f32.mrf.mxu0
        %1074 = vdwg.mxu0
        %v1075 = vsel %vm998, %v1072, -inf
        %1076 = vmax.xlane.f32.xlu0 %v1075
        %v1077 = vpop.xlane.xlu0 %1076
        %v1078 = vsub.f32 %v1072, %v1077
        %v1079 = vmul.f32 %v1078, 1.442695
        %v1080 = vpow.pop %v1079
        %v1081 = vsel %vm998, %v1080, 0.0
        %1082 = vadd.xlane.f32.xlu0 %v1081
        %v1083 = vpop.xlane.xlu0 %1082
        %v1084 = vrcp.pop %v1083
        %v1085 = vmul.f32 %v1080, %v1084
        %v1087 = vsel %vm998, %v1085, 0
        %1089 = vmatprep.subr.mxu0 0.0
        %1090 = vmatpush1.msra.mxu0 0.0
        %1091 = vmatprep.subr.mxu0 0.0
        %1092 = vmatpush1.msra.mxu0 0.0
        %1093 = vmatprep.subr.mxu0 0.0
        %1094 = vmatpush1.msra.mxu0 0.0
        %1095 = vmatprep.subr.mxu0 0.0
        %1096 = vmatpush1.msra.mxu0 0.0
        %1097 = vmatprep.subr.mxu0 0.0
        %1098 = vmatpush1.msra.mxu0 0.0
        %1099 = vmatprep.subr.mxu0 0.0
        %1100 = vmatpush1.msra.mxu0 0.0
        %1101 = vmatprep.subr.mxu0 0.0
        %1102 = vmatpush1.msra.mxu0 0.0
        %1103 = vmatprep.subr.mxu0 0.0
        %1104 = vmatpush1.msra.mxu0 0.0
        %1105 = vmatprep.subr.mxu0 0.0
        %1106 = vmatpush1.msra.mxu0 0.0
        %1107 = vmatprep.subr.mxu0 0.0
        %1108 = vmatpush1.msra.mxu0 0.0
        %1109 = vmatprep.subr.mxu0 0.0
        %1110 = vmatpush1.msra.mxu0 0.0
        %1111 = vmatprep.subr.mxu0 0.0
        %1112 = vmatpush1.msra.mxu0 0.0
        %1113 = vmatprep.subr.mxu0 0.0
        %1114 = vmatpush1.msra.mxu0 0.0
        %1115 = vmatprep.subr.mxu0 0.0
        %1116 = vmatpush1.msra.mxu0 0.0
        %1117 = vmatprep.subr.mxu0 0.0
        %1118 = vmatpush1.msra.mxu0 0.0
        %1119 = vmatprep.subr.mxu0 0.0
        %1120 = vmatpush1.msra.mxu0 %v993
        %1121 = vmatprep.subr.mxu0 0.0
        %1122 = vmatpush2.msra.mxu0 0.0
        %1123 = vmatprep.subr.mxu0 0.0
        %1124 = vmatpush2.msra.mxu0 0.0
        %1125 = vmatprep.subr.mxu0 0.0
        %1126 = vmatpush2.msra.mxu0 0.0
        %1127 = vmatprep.subr.mxu0 0.0
        %1128 = vmatpush2.msra.mxu0 0.0
        %1129 = vmatprep.subr.mxu0 0.0
        %1130 = vmatpush2.msra.mxu0 0.0
        %1131 = vmatprep.subr.mxu0 0.0
        %1132 = vmatpush2.msra.mxu0 0.0
        %1133 = vmatprep.subr.mxu0 0.0
        %1134 = vmatpush2.msra.mxu0 0.0
        %1135 = vmatprep.subr.mxu0 0.0
        %1136 = vmatpush2.msra.mxu0 0.0
        %1137 = vmatprep.subr.mxu0 0.0
        %1138 = vmatpush2.msra.mxu0 0.0
        %1139 = vmatprep.subr.mxu0 0.0
        %1140 = vmatpush2.msra.mxu0 0.0
        %1141 = vmatprep.subr.mxu0 0.0
        %1142 = vmatpush2.msra.mxu0 0.0
        %1143 = vmatprep.subr.mxu0 0.0
        %1144 = vmatpush2.msra.mxu0 0.0
        %1145 = vmatprep.subr.mxu0 0.0
        %1146 = vmatpush2.msra.mxu0 0.0
        %1147 = vmatprep.subr.mxu0 0.0
        %1148 = vmatpush2.msra.mxu0 0.0
        %1149 = vmatprep.subr.mxu0 0.0
        %1150 = vmatpush2.msra.mxu0 0.0
        %1151 = vmatprep.subr.mxu0 0.0
        %1152 = vmatpush2.msra.mxu0 0.0
        %1153 = vmatprep.mubr.f32.mxu0 0.0
        %1154 = vmatmul.mubr.f32.gmra.mxu0 %v1087
        %v1155 = vpop.f32.mrf.mxu0
        %v1156 = vadd.f32 0.0, %v1155
        %v1157 = vpop.f32.mrf.mxu0
        %1158 = vdwg.mxu0
        %1159 = vst.msk [vmem:[#allocation2] sm:$0xff] %vm998, %v1156
        %1160 = vrot.lane.b32.xlu0 %v886, 120
        %v1161 = vpop.permute.xlu0 %1160
        %1162 = vrot.lane.b32.xlu0 %v941, 120
        %v1163 = vpop.permute.xlu0 %1162
        %v1164 = vsel %vm998, %v1161, 0
        %v1166 = vsel %vm998, %v1163, 0
        %1168 = vmatprep.subr.mxu0 0.0
        %1169 = vmatpush1.xpose.msra.mxu0 0.0
        %1170 = vmatprep.subr.mxu0 0.0
        %1171 = vmatpush1.xpose.msra.mxu0 0.0
        %1172 = vmatprep.subr.mxu0 0.0
        %1173 = vmatpush1.xpose.msra.mxu0 0.0
        %1174 = vmatprep.subr.mxu0 0.0
        %1175 = vmatpush1.xpose.msra.mxu0 0.0
        %1176 = vmatprep.subr.mxu0 0.0
        %1177 = vmatpush1.xpose.msra.mxu0 0.0
        %1178 = vmatprep.subr.mxu0 0.0
        %1179 = vmatpush1.xpose.msra.mxu0 0.0
        %1180 = vmatprep.subr.mxu0 0.0
        %1181 = vmatpush1.xpose.msra.mxu0 0.0
        %1182 = vmatprep.subr.mxu0 0.0
        %1183 = vmatpush1.xpose.msra.mxu0 0.0
        %1184 = vmatprep.subr.mxu0 0.0
        %1185 = vmatpush1.xpose.msra.mxu0 0.0
        %1186 = vmatprep.subr.mxu0 0.0
        %1187 = vmatpush1.xpose.msra.mxu0 0.0
        %1188 = vmatprep.subr.mxu0 0.0
        %1189 = vmatpush1.xpose.msra.mxu0 0.0
        %1190 = vmatprep.subr.mxu0 0.0
        %1191 = vmatpush1.xpose.msra.mxu0 0.0
        %1192 = vmatprep.subr.mxu0 0.0
        %1193 = vmatpush1.xpose.msra.mxu0 0.0
        %1194 = vmatprep.subr.mxu0 0.0
        %1195 = vmatpush1.xpose.msra.mxu0 0.0
        %1196 = vmatprep.subr.mxu0 0.0
        %1197 = vmatpush1.xpose.msra.mxu0 0.0
        %1198 = vmatprep.subr.mxu0 0.0
        %1199 = vmatpush1.xpose.msra.mxu0 %v1166
        %1200 = vmatprep.subr.mxu0 0.0
        %1201 = vmatpush2.xpose.msra.mxu0 0.0
        %1202 = vmatprep.subr.mxu0 0.0
        %1203 = vmatpush2.xpose.msra.mxu0 0.0
        %1204 = vmatprep.subr.mxu0 0.0
        %1205 = vmatpush2.xpose.msra.mxu0 0.0
        %1206 = vmatprep.subr.mxu0 0.0
        %1207 = vmatpush2.xpose.msra.mxu0 0.0
        %1208 = vmatprep.subr.mxu0 0.0
        %1209 = vmatpush2.xpose.msra.mxu0 0.0
        %1210 = vmatprep.subr.mxu0 0.0
        %1211 = vmatpush2.xpose.msra.mxu0 0.0
        %1212 = vmatprep.subr.mxu0 0.0
        %1213 = vmatpush2.xpose.msra.mxu0 0.0
        %1214 = vmatprep.subr.mxu0 0.0
        %1215 = vmatpush2.xpose.msra.mxu0 0.0
        %1216 = vmatprep.subr.mxu0 0.0
        %1217 = vmatpush2.xpose.msra.mxu0 0.0
        %1218 = vmatprep.subr.mxu0 0.0
        %1219 = vmatpush2.xpose.msra.mxu0 0.0
        %1220 = vmatprep.subr.mxu0 0.0
        %1221 = vmatpush2.xpose.msra.mxu0 0.0
        %1222 = vmatprep.subr.mxu0 0.0
        %1223 = vmatpush2.xpose.msra.mxu0 0.0
        %1224 = vmatprep.subr.mxu0 0.0
        %1225 = vmatpush2.xpose.msra.mxu0 0.0
        %1226 = vmatprep.subr.mxu0 0.0
        %1227 = vmatpush2.xpose.msra.mxu0 0.0
        %1228 = vmatprep.subr.mxu0 0.0
        %1229 = vmatpush2.xpose.msra.mxu0 0.0
        %1230 = vmatprep.subr.mxu0 0.0
        %1231 = vmatpush2.xpose.msra.mxu0 0.0
        %1232 = vmatprep.mubr.f32.mxu0 0.0
        %1233 = vmatmul.mubr.f32.gmra.mxu0 %v1164
        %v1234 = vpop.f32.mrf.mxu0
        %v1235 = vadd.f32 %v785, %v1234
        %v1236 = vpop.f32.mrf.mxu0
        %1237 = vdwg.mxu0
        %v1238 = vsel %vm998, %v1235, -inf
        %1239 = vmax.xlane.f32.xlu0 %v1238
        %v1240 = vpop.xlane.xlu0 %1239
        %v1241 = vsub.f32 %v1235, %v1240
        %v1242 = vmul.f32 %v1241, 1.442695
        %v1243 = vpow.pop %v1242
        %v1244 = vsel %vm998, %v1243, 0.0
        %1245 = vadd.xlane.f32.xlu0 %v1244
        %v1246 = vpop.xlane.xlu0 %1245
        %v1247 = vrcp.pop %v1246
        %v1248 = vmul.f32 %v1243, %v1247
        %1250 = vrot.lane.b32.xlu0 %v993, 120
        %v1251 = vpop.permute.xlu0 %1250
        %v1254 = vsel %vm998, %v1248, 0
        %1256 = vmatprep.subr.mxu0 0.0
        %1257 = vmatpush1.msra.mxu0 0.0
        %1258 = vmatprep.subr.mxu0 0.0
        %1259 = vmatpush1.msra.mxu0 0.0
        %1260 = vmatprep.subr.mxu0 0.0
        %1261 = vmatpush1.msra.mxu0 0.0
        %1262 = vmatprep.subr.mxu0 0.0
        %1263 = vmatpush1.msra.mxu0 0.0
        %1264 = vmatprep.subr.mxu0 0.0
        %1265 = vmatpush1.msra.mxu0 0.0
        %1266 = vmatprep.subr.mxu0 0.0
        %1267 = vmatpush1.msra.mxu0 0.0
        %1268 = vmatprep.subr.mxu0 0.0
        %1269 = vmatpush1.msra.mxu0 0.0
        %1270 = vmatprep.subr.mxu0 0.0
        %1271 = vmatpush1.msra.mxu0 0.0
        %1272 = vmatprep.subr.mxu0 0.0
        %1273 = vmatpush1.msra.mxu0 0.0
        %1274 = vmatprep.subr.mxu0 0.0
        %1275 = vmatpush1.msra.mxu0 0.0
        %1276 = vmatprep.subr.mxu0 0.0
        %1277 = vmatpush1.msra.mxu0 0.0
        %1278 = vmatprep.subr.mxu0 0.0
        %1279 = vmatpush1.msra.mxu0 0.0
        %1280 = vmatprep.subr.mxu0 0.0
        %1281 = vmatpush1.msra.mxu0 0.0
        %1282 = vmatprep.subr.mxu0 0.0
        %1283 = vmatpush1.msra.mxu0 0.0
        %1284 = vmatprep.subr.mxu0 0.0
        %1285 = vmatpush1.msra.mxu0 0.0
        %1286 = vmatprep.subr.mxu0 0.0
        %1287 = vmatpush1.msra.mxu0 %v1251
        %1288 = vmatprep.subr.mxu0 0.0
        %1289 = vmatpush2.msra.mxu0 0.0
        %1290 = vmatprep.subr.mxu0 0.0
        %1291 = vmatpush2.msra.mxu0 0.0
        %1292 = vmatprep.subr.mxu0 0.0
        %1293 = vmatpush2.msra.mxu0 0.0
        %1294 = vmatprep.subr.mxu0 0.0
        %1295 = vmatpush2.msra.mxu0 0.0
        %1296 = vmatprep.subr.mxu0 0.0
        %1297 = vmatpush2.msra.mxu0 0.0
        %1298 = vmatprep.subr.mxu0 0.0
        %1299 = vmatpush2.msra.mxu0 0.0
        %1300 = vmatprep.subr.mxu0 0.0
        %1301 = vmatpush2.msra.mxu0 0.0
        %1302 = vmatprep.subr.mxu0 0.0
        %1303 = vmatpush2.msra.mxu0 0.0
        %1304 = vmatprep.subr.mxu0 0.0
        %1305 = vmatpush2.msra.mxu0 0.0
        %1306 = vmatprep.subr.mxu0 0.0
        %1307 = vmatpush2.msra.mxu0 0.0
        %1308 = vmatprep.subr.mxu0 0.0
        %1309 = vmatpush2.msra.mxu0 0.0
        %1310 = vmatprep.subr.mxu0 0.0
        %1311 = vmatpush2.msra.mxu0 0.0
        %1312 = vmatprep.subr.mxu0 0.0
        %1313 = vmatpush2.msra.mxu0 0.0
        %1314 = vmatprep.subr.mxu0 0.0
        %1315 = vmatpush2.msra.mxu0 0.0
        %1316 = vmatprep.subr.mxu0 0.0
        %1317 = vmatpush2.msra.mxu0 0.0
        %1318 = vmatprep.subr.mxu0 0.0
        %1319 = vmatpush2.msra.mxu0 0.0
        %1320 = vmatprep.mubr.f32.mxu0 0.0
        %1321 = vmatmul.mubr.f32.gmra.mxu0 %v1254
        %v1322 = vpop.f32.mrf.mxu0
        %v1323 = vadd.f32 0.0, %v1322
        %v1324 = vpop.f32.mrf.mxu0
        %1325 = vdwg.mxu0
        %1327 = vrot.lane.b32.xlu0 %v1323, 8
        %v1328 = vpop.permute.xlu0 %1327
        %vm1330 = vcmask 130112
        %1331 = vst.msk [vmem:[#allocation2] sm:$0xff] %vm1330, %v1328
        %1332 = vrot.lane.b32.xlu0 %v886, 112
        %v1333 = vpop.permute.xlu0 %1332
        %1334 = vrot.lane.b32.xlu0 %v941, 112
        %v1335 = vpop.permute.xlu0 %1334
        %v1336 = vsel %vm998, %v1333, 0
        %v1338 = vsel %vm998, %v1335, 0
        %1340 = vmatprep.subr.mxu0 0.0
        %1341 = vmatpush1.xpose.msra.mxu0 0.0
        %1342 = vmatprep.subr.mxu0 0.0
        %1343 = vmatpush1.xpose.msra.mxu0 0.0
        %1344 = vmatprep.subr.mxu0 0.0
        %1345 = vmatpush1.xpose.msra.mxu0 0.0
        %1346 = vmatprep.subr.mxu0 0.0
        %1347 = vmatpush1.xpose.msra.mxu0 0.0
        %1348 = vmatprep.subr.mxu0 0.0
        %1349 = vmatpush1.xpose.msra.mxu0 0.0
        %1350 = vmatprep.subr.mxu0 0.0
        %1351 = vmatpush1.xpose.msra.mxu0 0.0
        %1352 = vmatprep.subr.mxu0 0.0
        %1353 = vmatpush1.xpose.msra.mxu0 0.0
        %1354 = vmatprep.subr.mxu0 0.0
        %1355 = vmatpush1.xpose.msra.mxu0 0.0
        %1356 = vmatprep.subr.mxu0 0.0
        %1357 = vmatpush1.xpose.msra.mxu0 0.0
        %1358 = vmatprep.subr.mxu0 0.0
        %1359 = vmatpush1.xpose.msra.mxu0 0.0
        %1360 = vmatprep.subr.mxu0 0.0
        %1361 = vmatpush1.xpose.msra.mxu0 0.0
        %1362 = vmatprep.subr.mxu0 0.0
        %1363 = vmatpush1.xpose.msra.mxu0 0.0
        %1364 = vmatprep.subr.mxu0 0.0
        %1365 = vmatpush1.xpose.msra.mxu0 0.0
        %1366 = vmatprep.subr.mxu0 0.0
        %1367 = vmatpush1.xpose.msra.mxu0 0.0
        %1368 = vmatprep.subr.mxu0 0.0
        %1369 = vmatpush1.xpose.msra.mxu0 0.0
        %1370 = vmatprep.subr.mxu0 0.0
        %1371 = vmatpush1.xpose.msra.mxu0 %v1338
        %1372 = vmatprep.subr.mxu0 0.0
        %1373 = vmatpush2.xpose.msra.mxu0 0.0
        %1374 = vmatprep.subr.mxu0 0.0
        %1375 = vmatpush2.xpose.msra.mxu0 0.0
        %1376 = vmatprep.subr.mxu0 0.0
        %1377 = vmatpush2.xpose.msra.mxu0 0.0
        %1378 = vmatprep.subr.mxu0 0.0
        %1379 = vmatpush2.xpose.msra.mxu0 0.0
        %1380 = vmatprep.subr.mxu0 0.0
        %1381 = vmatpush2.xpose.msra.mxu0 0.0
        %1382 = vmatprep.subr.mxu0 0.0
        %1383 = vmatpush2.xpose.msra.mxu0 0.0
        %1384 = vmatprep.subr.mxu0 0.0
        %1385 = vmatpush2.xpose.msra.mxu0 0.0
        %1386 = vmatprep.subr.mxu0 0.0
        %1387 = vmatpush2.xpose.msra.mxu0 0.0
        %1388 = vmatprep.subr.mxu0 0.0
        %1389 = vmatpush2.xpose.msra.mxu0 0.0
        %1390 = vmatprep.subr.mxu0 0.0
        %1391 = vmatpush2.xpose.msra.mxu0 0.0
        %1392 = vmatprep.subr.mxu0 0.0
        %1393 = vmatpush2.xpose.msra.mxu0 0.0
        %1394 = vmatprep.subr.mxu0 0.0
        %1395 = vmatpush2.xpose.msra.mxu0 0.0
        %1396 = vmatprep.subr.mxu0 0.0
        %1397 = vmatpush2.xpose.msra.mxu0 0.0
        %1398 = vmatprep.subr.mxu0 0.0
        %1399 = vmatpush2.xpose.msra.mxu0 0.0
        %1400 = vmatprep.subr.mxu0 0.0
        %1401 = vmatpush2.xpose.msra.mxu0 0.0
        %1402 = vmatprep.subr.mxu0 0.0
        %1403 = vmatpush2.xpose.msra.mxu0 0.0
        %1404 = vmatprep.mubr.f32.mxu0 0.0
        %1405 = vmatmul.mubr.f32.gmra.mxu0 %v1336
        %v1406 = vpop.f32.mrf.mxu0
        %v1407 = vadd.f32 %v785, %v1406
        %v1408 = vpop.f32.mrf.mxu0
        %1409 = vdwg.mxu0
        %v1410 = vsel %vm998, %v1407, -inf
        %1411 = vmax.xlane.f32.xlu0 %v1410
        %v1412 = vpop.xlane.xlu0 %1411
        %v1413 = vsub.f32 %v1407, %v1412
        %v1414 = vmul.f32 %v1413, 1.442695
        %v1415 = vpow.pop %v1414
        %v1416 = vsel %vm998, %v1415, 0.0
        %1417 = vadd.xlane.f32.xlu0 %v1416
        %v1418 = vpop.xlane.xlu0 %1417
        %v1419 = vrcp.pop %v1418
        %v1420 = vmul.f32 %v1415, %v1419
        %1421 = vrot.lane.b32.xlu0 %v993, 112
        %v1422 = vpop.permute.xlu0 %1421
        %v1425 = vsel %vm998, %v1420, 0
        %1427 = vmatprep.subr.mxu0 0.0
        %1428 = vmatpush1.msra.mxu0 0.0
        %1429 = vmatprep.subr.mxu0 0.0
        %1430 = vmatpush1.msra.mxu0 0.0
        %1431 = vmatprep.subr.mxu0 0.0
        %1432 = vmatpush1.msra.mxu0 0.0
        %1433 = vmatprep.subr.mxu0 0.0
        %1434 = vmatpush1.msra.mxu0 0.0
        %1435 = vmatprep.subr.mxu0 0.0
        %1436 = vmatpush1.msra.mxu0 0.0
        %1437 = vmatprep.subr.mxu0 0.0
        %1438 = vmatpush1.msra.mxu0 0.0
        %1439 = vmatprep.subr.mxu0 0.0
        %1440 = vmatpush1.msra.mxu0 0.0
        %1441 = vmatprep.subr.mxu0 0.0
        %1442 = vmatpush1.msra.mxu0 0.0
        %1443 = vmatprep.subr.mxu0 0.0
        %1444 = vmatpush1.msra.mxu0 0.0
        %1445 = vmatprep.subr.mxu0 0.0
        %1446 = vmatpush1.msra.mxu0 0.0
        %1447 = vmatprep.subr.mxu0 0.0
        %1448 = vmatpush1.msra.mxu0 0.0
        %1449 = vmatprep.subr.mxu0 0.0
        %1450 = vmatpush1.msra.mxu0 0.0
        %1451 = vmatprep.subr.mxu0 0.0
        %1452 = vmatpush1.msra.mxu0 0.0
        %1453 = vmatprep.subr.mxu0 0.0
        %1454 = vmatpush1.msra.mxu0 0.0
        %1455 = vmatprep.subr.mxu0 0.0
        %1456 = vmatpush1.msra.mxu0 0.0
        %1457 = vmatprep.subr.mxu0 0.0
        %1458 = vmatpush1.msra.mxu0 %v1422
        %1459 = vmatprep.subr.mxu0 0.0
        %1460 = vmatpush2.msra.mxu0 0.0
        %1461 = vmatprep.subr.mxu0 0.0
        %1462 = vmatpush2.msra.mxu0 0.0
        %1463 = vmatprep.subr.mxu0 0.0
        %1464 = vmatpush2.msra.mxu0 0.0
        %1465 = vmatprep.subr.mxu0 0.0
        %1466 = vmatpush2.msra.mxu0 0.0
        %1467 = vmatprep.subr.mxu0 0.0
        %1468 = vmatpush2.msra.mxu0 0.0
        %1469 = vmatprep.subr.mxu0 0.0
        %1470 = vmatpush2.msra.mxu0 0.0
        %1471 = vmatprep.subr.mxu0 0.0
        %1472 = vmatpush2.msra.mxu0 0.0
        %1473 = vmatprep.subr.mxu0 0.0
        %1474 = vmatpush2.msra.mxu0 0.0
        %1475 = vmatprep.subr.mxu0 0.0
        %1476 = vmatpush2.msra.mxu0 0.0
        %1477 = vmatprep.subr.mxu0 0.0
        %1478 = vmatpush2.msra.mxu0 0.0
        %1479 = vmatprep.subr.mxu0 0.0
        %1480 = vmatpush2.msra.mxu0 0.0
        %1481 = vmatprep.subr.mxu0 0.0
        %1482 = vmatpush2.msra.mxu0 0.0
        %1483 = vmatprep.subr.mxu0 0.0
        %1484 = vmatpush2.msra.mxu0 0.0
        %1485 = vmatprep.subr.mxu0 0.0
        %1486 = vmatpush2.msra.mxu0 0.0
        %1487 = vmatprep.subr.mxu0 0.0
        %1488 = vmatpush2.msra.mxu0 0.0
        %1489 = vmatprep.subr.mxu0 0.0
        %1490 = vmatpush2.msra.mxu0 0.0
        %1491 = vmatprep.mubr.f32.mxu0 0.0
        %1492 = vmatmul.mubr.f32.gmra.mxu0 %v1425
        %v1493 = vpop.f32.mrf.mxu0
        %v1494 = vadd.f32 0.0, %v1493
        %v1495 = vpop.f32.mrf.mxu0
        %1496 = vdwg.mxu0
        %1498 = vrot.lane.b32.xlu0 %v1494, 16
        %v1499 = vpop.permute.xlu0 %1498
        %vm1501 = vcmask 195712
        %1502 = vst.msk [vmem:[#allocation2] sm:$0xff] %vm1501, %v1499
        %1503 = vrot.lane.b32.xlu0 %v886, 104
        %v1504 = vpop.permute.xlu0 %1503
        %1505 = vrot.lane.b32.xlu0 %v941, 104
        %v1506 = vpop.permute.xlu0 %1505
        %v1507 = vsel %vm998, %v1504, 0
        %v1509 = vsel %vm998, %v1506, 0
        %1511 = vmatprep.subr.mxu0 0.0
        %1512 = vmatpush1.xpose.msra.mxu0 0.0
        %1513 = vmatprep.subr.mxu0 0.0
        %1514 = vmatpush1.xpose.msra.mxu0 0.0
        %1515 = vmatprep.subr.mxu0 0.0
        %1516 = vmatpush1.xpose.msra.mxu0 0.0
        %1517 = vmatprep.subr.mxu0 0.0
        %1518 = vmatpush1.xpose.msra.mxu0 0.0
        %1519 = vmatprep.subr.mxu0 0.0
        %1520 = vmatpush1.xpose.msra.mxu0 0.0
        %1521 = vmatprep.subr.mxu0 0.0
        %1522 = vmatpush1.xpose.msra.mxu0 0.0
        %1523 = vmatprep.subr.mxu0 0.0
        %1524 = vmatpush1.xpose.msra.mxu0 0.0
        %1525 = vmatprep.subr.mxu0 0.0
        %1526 = vmatpush1.xpose.msra.mxu0 0.0
        %1527 = vmatprep.subr.mxu0 0.0
        %1528 = vmatpush1.xpose.msra.mxu0 0.0
        %1529 = vmatprep.subr.mxu0 0.0
        %1530 = vmatpush1.xpose.msra.mxu0 0.0
        %1531 = vmatprep.subr.mxu0 0.0
        %1532 = vmatpush1.xpose.msra.mxu0 0.0
        %1533 = vmatprep.subr.mxu0 0.0
        %1534 = vmatpush1.xpose.msra.mxu0 0.0
        %1535 = vmatprep.subr.mxu0 0.0
        %1536 = vmatpush1.xpose.msra.mxu0 0.0
        %1537 = vmatprep.subr.mxu0 0.0
        %1538 = vmatpush1.xpose.msra.mxu0 0.0
        %1539 = vmatprep.subr.mxu0 0.0
        %1540 = vmatpush1.xpose.msra.mxu0 0.0
        %1541 = vmatprep.subr.mxu0 0.0
        %1542 = vmatpush1.xpose.msra.mxu0 %v1509
        %1543 = vmatprep.subr.mxu0 0.0
        %1544 = vmatpush2.xpose.msra.mxu0 0.0
        %1545 = vmatprep.subr.mxu0 0.0
        %1546 = vmatpush2.xpose.msra.mxu0 0.0
        %1547 = vmatprep.subr.mxu0 0.0
        %1548 = vmatpush2.xpose.msra.mxu0 0.0
        %1549 = vmatprep.subr.mxu0 0.0
        %1550 = vmatpush2.xpose.msra.mxu0 0.0
        %1551 = vmatprep.subr.mxu0 0.0
        %1552 = vmatpush2.xpose.msra.mxu0 0.0
        %1553 = vmatprep.subr.mxu0 0.0
        %1554 = vmatpush2.xpose.msra.mxu0 0.0
        %1555 = vmatprep.subr.mxu0 0.0
        %1556 = vmatpush2.xpose.msra.mxu0 0.0
        %1557 = vmatprep.subr.mxu0 0.0
        %1558 = vmatpush2.xpose.msra.mxu0 0.0
        %1559 = vmatprep.subr.mxu0 0.0
        %1560 = vmatpush2.xpose.msra.mxu0 0.0
        %1561 = vmatprep.subr.mxu0 0.0
        %1562 = vmatpush2.xpose.msra.mxu0 0.0
        %1563 = vmatprep.subr.mxu0 0.0
        %1564 = vmatpush2.xpose.msra.mxu0 0.0
        %1565 = vmatprep.subr.mxu0 0.0
        %1566 = vmatpush2.xpose.msra.mxu0 0.0
        %1567 = vmatprep.subr.mxu0 0.0
        %1568 = vmatpush2.xpose.msra.mxu0 0.0
        %1569 = vmatprep.subr.mxu0 0.0
        %1570 = vmatpush2.xpose.msra.mxu0 0.0
        %1571 = vmatprep.subr.mxu0 0.0
        %1572 = vmatpush2.xpose.msra.mxu0 0.0
        %1573 = vmatprep.subr.mxu0 0.0
        %1574 = vmatpush2.xpose.msra.mxu0 0.0
        %1575 = vmatprep.mubr.f32.mxu0 0.0
        %1576 = vmatmul.mubr.f32.gmra.mxu0 %v1507
        %v1577 = vpop.f32.mrf.mxu0
        %v1578 = vadd.f32 %v785, %v1577
        %v1579 = vpop.f32.mrf.mxu0
        %1580 = vdwg.mxu0
        %v1581 = vsel %vm998, %v1578, -inf
        %1582 = vmax.xlane.f32.xlu0 %v1581
        %v1583 = vpop.xlane.xlu0 %1582
        %v1584 = vsub.f32 %v1578, %v1583
        %v1585 = vmul.f32 %v1584, 1.442695
        %v1586 = vpow.pop %v1585
        %v1587 = vsel %vm998, %v1586, 0.0
        %1588 = vadd.xlane.f32.xlu0 %v1587
        %v1589 = vpop.xlane.xlu0 %1588
        %v1590 = vrcp.pop %v1589
        %v1591 = vmul.f32 %v1586, %v1590
        %1592 = vrot.lane.b32.xlu0 %v993, 104
        %v1593 = vpop.permute.xlu0 %1592
        %v1596 = vsel %vm998, %v1591, 0
        %1598 = vmatprep.subr.mxu0 0.0
        %1599 = vmatpush1.msra.mxu0 0.0
        %1600 = vmatprep.subr.mxu0 0.0
        %1601 = vmatpush1.msra.mxu0 0.0
        %1602 = vmatprep.subr.mxu0 0.0
        %1603 = vmatpush1.msra.mxu0 0.0
        %1604 = vmatprep.subr.mxu0 0.0
        %1605 = vmatpush1.msra.mxu0 0.0
        %1606 = vmatprep.subr.mxu0 0.0
        %1607 = vmatpush1.msra.mxu0 0.0
        %1608 = vmatprep.subr.mxu0 0.0
        %1609 = vmatpush1.msra.mxu0 0.0
        %1610 = vmatprep.subr.mxu0 0.0
        %1611 = vmatpush1.msra.mxu0 0.0
        %1612 = vmatprep.subr.mxu0 0.0
        %1613 = vmatpush1.msra.mxu0 0.0
        %1614 = vmatprep.subr.mxu0 0.0
        %1615 = vmatpush1.msra.mxu0 0.0
        %1616 = vmatprep.subr.mxu0 0.0
        %1617 = vmatpush1.msra.mxu0 0.0
        %1618 = vmatprep.subr.mxu0 0.0
        %1619 = vmatpush1.msra.mxu0 0.0
        %1620 = vmatprep.subr.mxu0 0.0
        %1621 = vmatpush1.msra.mxu0 0.0
        %1622 = vmatprep.subr.mxu0 0.0
        %1623 = vmatpush1.msra.mxu0 0.0
        %1624 = vmatprep.subr.mxu0 0.0
        %1625 = vmatpush1.msra.mxu0 0.0
        %1626 = vmatprep.subr.mxu0 0.0
        %1627 = vmatpush1.msra.mxu0 0.0
        %1628 = vmatprep.subr.mxu0 0.0
        %1629 = vmatpush1.msra.mxu0 %v1593
        %1630 = vmatprep.subr.mxu0 0.0
        %1631 = vmatpush2.msra.mxu0 0.0
        %1632 = vmatprep.subr.mxu0 0.0
        %1633 = vmatpush2.msra.mxu0 0.0
        %1634 = vmatprep.subr.mxu0 0.0
        %1635 = vmatpush2.msra.mxu0 0.0
        %1636 = vmatprep.subr.mxu0 0.0
        %1637 = vmatpush2.msra.mxu0 0.0
        %1638 = vmatprep.subr.mxu0 0.0
        %1639 = vmatpush2.msra.mxu0 0.0
        %1640 = vmatprep.subr.mxu0 0.0
        %1641 = vmatpush2.msra.mxu0 0.0
        %1642 = vmatprep.subr.mxu0 0.0
        %1643 = vmatpush2.msra.mxu0 0.0
        %1644 = vmatprep.subr.mxu0 0.0
        %1645 = vmatpush2.msra.mxu0 0.0
        %1646 = vmatprep.subr.mxu0 0.0
        %1647 = vmatpush2.msra.mxu0 0.0
        %1648 = vmatprep.subr.mxu0 0.0
        %1649 = vmatpush2.msra.mxu0 0.0
        %1650 = vmatprep.subr.mxu0 0.0
        %1651 = vmatpush2.msra.mxu0 0.0
        %1652 = vmatprep.subr.mxu0 0.0
        %1653 = vmatpush2.msra.mxu0 0.0
        %1654 = vmatprep.subr.mxu0 0.0
        %1655 = vmatpush2.msra.mxu0 0.0
        %1656 = vmatprep.subr.mxu0 0.0
        %1657 = vmatpush2.msra.mxu0 0.0
        %1658 = vmatprep.subr.mxu0 0.0
        %1659 = vmatpush2.msra.mxu0 0.0
        %1660 = vmatprep.subr.mxu0 0.0
        %1661 = vmatpush2.msra.mxu0 0.0
        %1662 = vmatprep.mubr.f32.mxu0 0.0
        %1663 = vmatmul.mubr.f32.gmra.mxu0 %v1596
        %v1664 = vpop.f32.mrf.mxu0
        %v1665 = vadd.f32 0.0, %v1664
        %v1666 = vpop.f32.mrf.mxu0
        %1667 = vdwg.mxu0
        %1669 = vrot.lane.b32.xlu0 %v1665, 24
        %v1670 = vpop.permute.xlu0 %1669
        %vm1672 = vcmask 261312
        %1673 = vst.msk [vmem:[#allocation2] sm:$0xff] %vm1672, %v1670
        %v1674 = vld [vmem:[#allocation2] sm:$0xff]
        %v1675 = vpack.c.bf16 %v1674, %v1674
        %v1680 = vunpack.c.l.b16 %v802
        %v1681 = vunpack.c.l.b16 %v803
        %v1682 = vunpack.c.l.b16 %v804
        %v1683 = vunpack.c.l.b16 %v805
        %v1684 = vpack.c.b16 %v1681, %v1680
        %v1685 = vpack.c.b16 %v1683, %v1682
        %v1689 = vsel %vm806, %v1675, 0
        %1691 = vmatprep.subr.bf16.mxu0 0
        %1692 = vmatpush1.bf16.msra.mxu0 0
        %1693 = vmatprep.subr.bf16.mxu0 0
        %1694 = vmatpush1.bf16.msra.mxu0 0
        %1695 = vmatprep.subr.bf16.mxu0 0
        %1696 = vmatpush1.bf16.msra.mxu0 0
        %1697 = vmatprep.subr.bf16.mxu0 0
        %1698 = vmatpush1.bf16.msra.mxu0 0
        %1699 = vmatprep.subr.bf16.mxu0 0
        %1700 = vmatpush1.bf16.msra.mxu0 0
        %1701 = vmatprep.subr.bf16.mxu0 0
        %1702 = vmatpush1.bf16.msra.mxu0 0
        %1703 = vmatprep.subr.bf16.mxu0 0
        %1704 = vmatpush1.bf16.msra.mxu0 %v1685
        %1705 = vmatprep.subr.bf16.mxu0 0
        %1706 = vmatpush1.bf16.msra.mxu0 %v1684
        %1707 = vmatprep.subr.bf16.mxu0 0
        %1708 = vmatpush2.bf16.msra.mxu0 0
        %1709 = vmatprep.subr.bf16.mxu0 0
        %1710 = vmatpush2.bf16.msra.mxu0 0
        %1711 = vmatprep.subr.bf16.mxu0 0
        %1712 = vmatpush2.bf16.msra.mxu0 0
        %1713 = vmatprep.subr.bf16.mxu0 0
        %1714 = vmatpush2.bf16.msra.mxu0 0
        %1715 = vmatprep.subr.bf16.mxu0 0
        %1716 = vmatpush2.bf16.msra.mxu0 0
        %1717 = vmatprep.subr.bf16.mxu0 0
        %1718 = vmatpush2.bf16.msra.mxu0 0
        %1719 = vmatprep.subr.bf16.mxu0 0
        %1720 = vmatpush2.bf16.msra.mxu0 0
        %1721 = vmatprep.subr.bf16.mxu0 0
        %1722 = vmatpush2.bf16.msra.mxu0 0
        %1723 = vmatprep.mubr.bf16.mxu0 0
        %1724 = vmatmul.mubr.bf16.gmra.mxu0 %v1689
        %v1725 = vpop.f32.mrf.mxu0
        %v1726 = vadd.f32 %v782, %v1725
        %v1727 = vpop.f32.mrf.mxu0
        %v1728 = vpop.f32.mrf.mxu0
        %v1729 = vpop.f32.mrf.mxu0
        %1730 = vdwg.mxu0
        %v1731 = vld [vmem:[%s10] sm:$0x1]
        %v1732 = vld [vmem:[%s11] sm:$0x1]
        %v1733 = vld [vmem:[%s12] sm:$0xf]
        %v1734 = vld [vmem:[%s12 + $0x4] sm:$0xf]
        %v1735 = vld [vmem:[%s12 + $0x8] sm:$0xf]
        %v1736 = vld [vmem:[%s12 + $0xc] sm:$0xf]
        %v1737 = vld [vmem:[%s13] sm:$0xf]
        %v1738 = vld [vmem:[%s13 + $0x4] sm:$0xf]
        %v1739 = vld [vmem:[%s13 + $0x8] sm:$0xf]
        %v1740 = vld [vmem:[%s13 + $0xc] sm:$0xf]
        %v1741 = vld [vmem:[%s14] sm:$0xf]
        %v1742 = vld [vmem:[%s14 + $0x4] sm:$0xf]
        %v1743 = vld [vmem:[%s14 + $0x8] sm:$0xf]
        %v1744 = vld [vmem:[%s14 + $0xc] sm:$0xf]
        %v1745 = vld [vmem:[%s15] sm:$0xf]
        %v1746 = vld [vmem:[%s15 + $0x4] sm:$0xf]
        %v1747 = vld [vmem:[%s15 + $0x8] sm:$0xf]
        %v1748 = vld [vmem:[%s15 + $0xc] sm:$0xf]
        %v1749 = vsel %vm806, %v1726, 0.0
        %1750 = vadd.xlane.f32.xlu0 %v1749
        %v1751 = vpop.xlane.xlu0 %1750
        %v1752 = vmul.f32 %v1751, %v810
        %v1753 = vsub.f32 %v1726, %v1752
        %v1754 = vmul.f32 %v1753, %v1753
        %v1755 = vsel %vm806, %v1754, 0.0
        %1756 = vadd.xlane.f32.xlu0 %v1755
        %v1757 = vpop.xlane.xlu0 %1756
        %v1758 = vmul.f32 %v1757, %v810
        %v1759 = vadd.f32 %v1758, 1e-06
        %v1760 = vrsqrt.pop %v1759
        %v1761 = vmul.f32 %v1753, %v1760
        %v1763 = vlaneseq
        %v1764 = vshrl.u32 %v1763, 7
        %v1765 = vsub.s32 0, %v1764
        %v1766 = vrot.slane %v1731, %v1765
        %v1768 = vmul.f32 %v1761, %v1766
        %v1770 = vlaneseq
        %v1771 = vshrl.u32 %v1770, 7
        %v1772 = vsub.s32 0, %v1771
        %v1773 = vrot.slane %v1732, %v1772
        %v1775 = vadd.f32 %v1768, %v1773
        %v1776 = vpack.c.bf16 %v1775, %v1775
        %v1781 = vunpack.c.l.b16 %v1733
        %v1782 = vunpack.c.l.b16 %v1734
        %v1783 = vunpack.c.l.b16 %v1735
        %v1784 = vunpack.c.l.b16 %v1736
        %v1785 = vpack.c.b16 %v1782, %v1781
        %v1786 = vpack.c.b16 %v1784, %v1783
        %v1790 = vsel %vm806, %v1776, 0
        %1792 = vmatprep.subr.bf16.mxu0 0
        %1793 = vmatpush1.bf16.msra.mxu0 0
        %1794 = vmatprep.subr.bf16.mxu0 0
        %1795 = vmatpush1.bf16.msra.mxu0 0
        %1796 = vmatprep.subr.bf16.mxu0 0
        %1797 = vmatpush1.bf16.msra.mxu0 0
        %1798 = vmatprep.subr.bf16.mxu0 0
        %1799 = vmatpush1.bf16.msra.mxu0 0
        %1800 = vmatprep.subr.bf16.mxu0 0
        %1801 = vmatpush1.bf16.msra.mxu0 0
        %1802 = vmatprep.subr.bf16.mxu0 0
        %1803 = vmatpush1.bf16.msra.mxu0 0
        %1804 = vmatprep.subr.bf16.mxu0 0
        %1805 = vmatpush1.bf16.msra.mxu0 %v1786
        %1806 = vmatprep.subr.bf16.mxu0 0
        %1807 = vmatpush1.bf16.msra.mxu0 %v1785
        %1808 = vmatprep.subr.bf16.mxu0 0
        %1809 = vmatpush2.bf16.msra.mxu0 0
        %1810 = vmatprep.subr.bf16.mxu0 0
        %1811 = vmatpush2.bf16.msra.mxu0 0
        %1812 = vmatprep.subr.bf16.mxu0 0
        %1813 = vmatpush2.bf16.msra.mxu0 0
        %1814 = vmatprep.subr.bf16.mxu0 0
        %1815 = vmatpush2.bf16.msra.mxu0 0
        %1816 = vmatprep.subr.bf16.mxu0 0
        %1817 = vmatpush2.bf16.msra.mxu0 0
        %1818 = vmatprep.subr.bf16.mxu0 0
        %1819 = vmatpush2.bf16.msra.mxu0 0
        %1820 = vmatprep.subr.bf16.mxu0 0
        %1821 = vmatpush2.bf16.msra.mxu0 0
        %1822 = vmatprep.subr.bf16.mxu0 0
        %1823 = vmatpush2.bf16.msra.mxu0 0
        %1824 = vmatprep.mubr.bf16.mxu0 0
        %1825 = vmatmul.mubr.bf16.gmra.mxu0 %v1790
        %v1826 = vpop.f32.mrf.mxu0
        %v1827 = vadd.f32 0.0, %v1826
        %v1828 = vpop.f32.mrf.mxu0
        %v1829 = vpop.f32.mrf.mxu0
        %v1830 = vpop.f32.mrf.mxu0
        %1831 = vdwg.mxu0
        %v1836 = vunpack.c.l.b16 %v1737
        %v1837 = vunpack.c.l.b16 %v1738
        %v1838 = vunpack.c.l.b16 %v1739
        %v1839 = vunpack.c.l.b16 %v1740
        %v1840 = vpack.c.b16 %v1837, %v1836
        %v1841 = vpack.c.b16 %v1839, %v1838
        %v1845 = vsel %vm806, %v784, 0
        %1847 = vmatprep.subr.bf16.mxu0 0
        %1848 = vmatpush1.bf16.msra.mxu0 0
        %1849 = vmatprep.subr.bf16.mxu0 0
        %1850 = vmatpush1.bf16.msra.mxu0 0
        %1851 = vmatprep.subr.bf16.mxu0 0
        %1852 = vmatpush1.bf16.msra.mxu0 0
        %1853 = vmatprep.subr.bf16.mxu0 0
        %1854 = vmatpush1.bf16.msra.mxu0 0
        %1855 = vmatprep.subr.bf16.mxu0 0
        %1856 = vmatpush1.bf16.msra.mxu0 0
        %1857 = vmatprep.subr.bf16.mxu0 0
        %1858 = vmatpush1.bf16.msra.mxu0 0
        %1859 = vmatprep.subr.bf16.mxu0 0
        %1860 = vmatpush1.bf16.msra.mxu0 %v1841
        %1861 = vmatprep.subr.bf16.mxu0 0
        %1862 = vmatpush1.bf16.msra.mxu0 %v1840
        %1863 = vmatprep.subr.bf16.mxu0 0
        %1864 = vmatpush2.bf16.msra.mxu0 0
        %1865 = vmatprep.subr.bf16.mxu0 0
        %1866 = vmatpush2.bf16.msra.mxu0 0
        %1867 = vmatprep.subr.bf16.mxu0 0
        %1868 = vmatpush2.bf16.msra.mxu0 0
        %1869 = vmatprep.subr.bf16.mxu0 0
        %1870 = vmatpush2.bf16.msra.mxu0 0
        %1871 = vmatprep.subr.bf16.mxu0 0
        %1872 = vmatpush2.bf16.msra.mxu0 0
        %1873 = vmatprep.subr.bf16.mxu0 0
        %1874 = vmatpush2.bf16.msra.mxu0 0
        %1875 = vmatprep.subr.bf16.mxu0 0
        %1876 = vmatpush2.bf16.msra.mxu0 0
        %1877 = vmatprep.subr.bf16.mxu0 0
        %1878 = vmatpush2.bf16.msra.mxu0 0
        %1879 = vmatprep.mubr.bf16.mxu0 0
        %1880 = vmatmul.mubr.bf16.gmra.mxu0 %v1845
        %v1881 = vpop.f32.mrf.mxu0
        %v1882 = vadd.f32 0.0, %v1881
        %v1883 = vpop.f32.mrf.mxu0
        %v1884 = vpop.f32.mrf.mxu0
        %v1885 = vpop.f32.mrf.mxu0
        %1886 = vdwg.mxu0
        %v1891 = vunpack.c.l.b16 %v1741
        %v1892 = vunpack.c.l.b16 %v1742
        %v1893 = vunpack.c.l.b16 %v1743
        %v1894 = vunpack.c.l.b16 %v1744
        %v1895 = vpack.c.b16 %v1892, %v1891
        %v1896 = vpack.c.b16 %v1894, %v1893
        %1899 = vmatprep.subr.bf16.mxu0 0
        %1900 = vmatpush1.bf16.msra.mxu0 0
        %1901 = vmatprep.subr.bf16.mxu0 0
        %1902 = vmatpush1.bf16.msra.mxu0 0
        %1903 = vmatprep.subr.bf16.mxu0 0
        %1904 = vmatpush1.bf16.msra.mxu0 0
        %1905 = vmatprep.subr.bf16.mxu0 0
        %1906 = vmatpush1.bf16.msra.mxu0 0
        %1907 = vmatprep.subr.bf16.mxu0 0
        %1908 = vmatpush1.bf16.msra.mxu0 0
        %1909 = vmatprep.subr.bf16.mxu0 0
        %1910 = vmatpush1.bf16.msra.mxu0 0
        %1911 = vmatprep.subr.bf16.mxu0 0
        %1912 = vmatpush1.bf16.msra.mxu0 %v1896
        %1913 = vmatprep.subr.bf16.mxu0 0
        %1914 = vmatpush1.bf16.msra.mxu0 %v1895
        %1915 = vmatprep.subr.bf16.mxu0 0
        %1916 = vmatpush2.bf16.msra.mxu0 0
        %1917 = vmatprep.subr.bf16.mxu0 0
        %1918 = vmatpush2.bf16.msra.mxu0 0
        %1919 = vmatprep.subr.bf16.mxu0 0
        %1920 = vmatpush2.bf16.msra.mxu0 0
        %1921 = vmatprep.subr.bf16.mxu0 0
        %1922 = vmatpush2.bf16.msra.mxu0 0
        %1923 = vmatprep.subr.bf16.mxu0 0
        %1924 = vmatpush2.bf16.msra.mxu0 0
        %1925 = vmatprep.subr.bf16.mxu0 0
        %1926 = vmatpush2.bf16.msra.mxu0 0
        %1927 = vmatprep.subr.bf16.mxu0 0
        %1928 = vmatpush2.bf16.msra.mxu0 0
        %1929 = vmatprep.subr.bf16.mxu0 0
        %1930 = vmatpush2.bf16.msra.mxu0 0
        %1931 = vmatprep.mubr.bf16.mxu0 0
        %1932 = vmatmul.mubr.bf16.gmra.mxu0 %v1845
        %v1933 = vpop.f32.mrf.mxu0
        %v1934 = vadd.f32 0.0, %v1933
        %v1935 = vpop.f32.mrf.mxu0
        %v1936 = vpop.f32.mrf.mxu0
        %v1937 = vpop.f32.mrf.mxu0
        %1938 = vdwg.mxu0
        %v1940 = vlaneseq
        %v1941 = vshrl.u32 %v1940, 7
        %v1942 = vsub.s32 0, %v1941
        %v1943 = vrot.slane %v786, %v1942
        %v1946 = vsel %vm998, %v1827, 0
        %v1949 = vsel %vm998, %v1882, 0
        %1951 = vmatprep.subr.mxu0 0.0
        %1952 = vmatpush1.xpose.msra.mxu0 0.0
        %1953 = vmatprep.subr.mxu0 0.0
        %1954 = vmatpush1.xpose.msra.mxu0 0.0
        %1955 = vmatprep.subr.mxu0 0.0
        %1956 = vmatpush1.xpose.msra.mxu0 0.0
        %1957 = vmatprep.subr.mxu0 0.0
        %1958 = vmatpush1.xpose.msra.mxu0 0.0
        %1959 = vmatprep.subr.mxu0 0.0
        %1960 = vmatpush1.xpose.msra.mxu0 0.0
        %1961 = vmatprep.subr.mxu0 0.0
        %1962 = vmatpush1.xpose.msra.mxu0 0.0
        %1963 = vmatprep.subr.mxu0 0.0
        %1964 = vmatpush1.xpose.msra.mxu0 0.0
        %1965 = vmatprep.subr.mxu0 0.0
        %1966 = vmatpush1.xpose.msra.mxu0 0.0
        %1967 = vmatprep.subr.mxu0 0.0
        %1968 = vmatpush1.xpose.msra.mxu0 0.0
        %1969 = vmatprep.subr.mxu0 0.0
        %1970 = vmatpush1.xpose.msra.mxu0 0.0
        %1971 = vmatprep.subr.mxu0 0.0
        %1972 = vmatpush1.xpose.msra.mxu0 0.0
        %1973 = vmatprep.subr.mxu0 0.0
        %1974 = vmatpush1.xpose.msra.mxu0 0.0
        %1975 = vmatprep.subr.mxu0 0.0
        %1976 = vmatpush1.xpose.msra.mxu0 0.0
        %1977 = vmatprep.subr.mxu0 0.0
        %1978 = vmatpush1.xpose.msra.mxu0 0.0
        %1979 = vmatprep.subr.mxu0 0.0
        %1980 = vmatpush1.xpose.msra.mxu0 0.0
        %1981 = vmatprep.subr.mxu0 0.0
        %1982 = vmatpush1.xpose.msra.mxu0 %v1949
        %1983 = vmatprep.subr.mxu0 0.0
        %1984 = vmatpush2.xpose.msra.mxu0 0.0
        %1985 = vmatprep.subr.mxu0 0.0
        %1986 = vmatpush2.xpose.msra.mxu0 0.0
        %1987 = vmatprep.subr.mxu0 0.0
        %1988 = vmatpush2.xpose.msra.mxu0 0.0
        %1989 = vmatprep.subr.mxu0 0.0
        %1990 = vmatpush2.xpose.msra.mxu0 0.0
        %1991 = vmatprep.subr.mxu0 0.0
        %1992 = vmatpush2.xpose.msra.mxu0 0.0
        %1993 = vmatprep.subr.mxu0 0.0
        %1994 = vmatpush2.xpose.msra.mxu0 0.0
        %1995 = vmatprep.subr.mxu0 0.0
        %1996 = vmatpush2.xpose.msra.mxu0 0.0
        %1997 = vmatprep.subr.mxu0 0.0
        %1998 = vmatpush2.xpose.msra.mxu0 0.0
        %1999 = vmatprep.subr.mxu0 0.0
        %2000 = vmatpush2.xpose.msra.mxu0 0.0
        %2001 = vmatprep.subr.mxu0 0.0
        %2002 = vmatpush2.xpose.msra.mxu0 0.0
        %2003 = vmatprep.subr.mxu0 0.0
        %2004 = vmatpush2.xpose.msra.mxu0 0.0
        %2005 = vmatprep.subr.mxu0 0.0
        %2006 = vmatpush2.xpose.msra.mxu0 0.0
        %2007 = vmatprep.subr.mxu0 0.0
        %2008 = vmatpush2.xpose.msra.mxu0 0.0
        %2009 = vmatprep.subr.mxu0 0.0
        %2010 = vmatpush2.xpose.msra.mxu0 0.0
        %2011 = vmatprep.subr.mxu0 0.0
        %2012 = vmatpush2.xpose.msra.mxu0 0.0
        %2013 = vmatprep.subr.mxu0 0.0
        %2014 = vmatpush2.xpose.msra.mxu0 0.0
        %2015 = vmatprep.mubr.f32.mxu0 0.0
        %2016 = vmatmul.mubr.f32.gmra.mxu0 %v1946
        %v2017 = vpop.f32.mrf.mxu0
        %v2018 = vadd.f32 %v1943, %v2017
        %v2019 = vpop.f32.mrf.mxu0
        %2020 = vdwg.mxu0
        %v2021 = vsel %vm998, %v2018, -inf
        %2022 = vmax.xlane.f32.xlu0 %v2021
        %v2023 = vpop.xlane.xlu0 %2022
        %v2024 = vsub.f32 %v2018, %v2023
        %v2025 = vmul.f32 %v2024, 1.442695
        %v2026 = vpow.pop %v2025
        %v2027 = vsel %vm998, %v2026, 0.0
        %2028 = vadd.xlane.f32.xlu0 %v2027
        %v2029 = vpop.xlane.xlu0 %2028
        %v2030 = vrcp.pop %v2029
        %v2031 = vmul.f32 %v2026, %v2030
        %v2033 = vsel %vm998, %v2031, 0
        %2035 = vmatprep.subr.mxu0 0.0
        %2036 = vmatpush1.msra.mxu0 0.0
        %2037 = vmatprep.subr.mxu0 0.0
        %2038 = vmatpush1.msra.mxu0 0.0
        %2039 = vmatprep.subr.mxu0 0.0
        %2040 = vmatpush1.msra.mxu0 0.0
        %2041 = vmatprep.subr.mxu0 0.0
        %2042 = vmatpush1.msra.mxu0 0.0
        %2043 = vmatprep.subr.mxu0 0.0
        %2044 = vmatpush1.msra.mxu0 0.0
        %2045 = vmatprep.subr.mxu0 0.0
        %2046 = vmatpush1.msra.mxu0 0.0
        %2047 = vmatprep.subr.mxu0 0.0
        %2048 = vmatpush1.msra.mxu0 0.0
        %2049 = vmatprep.subr.mxu0 0.0
        %2050 = vmatpush1.msra.mxu0 0.0
        %2051 = vmatprep.subr.mxu0 0.0
        %2052 = vmatpush1.msra.mxu0 0.0
        %2053 = vmatprep.subr.mxu0 0.0
        %2054 = vmatpush1.msra.mxu0 0.0
        %2055 = vmatprep.subr.mxu0 0.0
        %2056 = vmatpush1.msra.mxu0 0.0
        %2057 = vmatprep.subr.mxu0 0.0
        %2058 = vmatpush1.msra.mxu0 0.0
        %2059 = vmatprep.subr.mxu0 0.0
        %2060 = vmatpush1.msra.mxu0 0.0
        %2061 = vmatprep.subr.mxu0 0.0
        %2062 = vmatpush1.msra.mxu0 0.0
        %2063 = vmatprep.subr.mxu0 0.0
        %2064 = vmatpush1.msra.mxu0 0.0
        %2065 = vmatprep.subr.mxu0 0.0
        %2066 = vmatpush1.msra.mxu0 %v1934
        %2067 = vmatprep.subr.mxu0 0.0
        %2068 = vmatpush2.msra.mxu0 0.0
        %2069 = vmatprep.subr.mxu0 0.0
        %2070 = vmatpush2.msra.mxu0 0.0
        %2071 = vmatprep.subr.mxu0 0.0
        %2072 = vmatpush2.msra.mxu0 0.0
        %2073 = vmatprep.subr.mxu0 0.0
        %2074 = vmatpush2.msra.mxu0 0.0
        %2075 = vmatprep.subr.mxu0 0.0
        %2076 = vmatpush2.msra.mxu0 0.0
        %2077 = vmatprep.subr.mxu0 0.0
        %2078 = vmatpush2.msra.mxu0 0.0
        %2079 = vmatprep.subr.mxu0 0.0
        %2080 = vmatpush2.msra.mxu0 0.0
        %2081 = vmatprep.subr.mxu0 0.0
        %2082 = vmatpush2.msra.mxu0 0.0
        %2083 = vmatprep.subr.mxu0 0.0
        %2084 = vmatpush2.msra.mxu0 0.0
        %2085 = vmatprep.subr.mxu0 0.0
        %2086 = vmatpush2.msra.mxu0 0.0
        %2087 = vmatprep.subr.mxu0 0.0
        %2088 = vmatpush2.msra.mxu0 0.0
        %2089 = vmatprep.subr.mxu0 0.0
        %2090 = vmatpush2.msra.mxu0 0.0
        %2091 = vmatprep.subr.mxu0 0.0
        %2092 = vmatpush2.msra.mxu0 0.0
        %2093 = vmatprep.subr.mxu0 0.0
        %2094 = vmatpush2.msra.mxu0 0.0
        %2095 = vmatprep.subr.mxu0 0.0
        %2096 = vmatpush2.msra.mxu0 0.0
        %2097 = vmatprep.subr.mxu0 0.0
        %2098 = vmatpush2.msra.mxu0 0.0
        %2099 = vmatprep.mubr.f32.mxu0 0.0
        %2100 = vmatmul.mubr.f32.gmra.mxu0 %v2033
        %v2101 = vpop.f32.mrf.mxu0
        %v2102 = vadd.f32 0.0, %v2101
        %v2103 = vpop.f32.mrf.mxu0
        %2104 = vdwg.mxu0
        %2105 = vst.msk [vmem:[#allocation2] sm:$0xff] %vm998, %v2102
        %2106 = vrot.lane.b32.xlu0 %v1827, 120
        %v2107 = vpop.permute.xlu0 %2106
        %2108 = vrot.lane.b32.xlu0 %v1882, 120
        %v2109 = vpop.permute.xlu0 %2108
        %v2110 = vsel %vm998, %v2107, 0
        %v2112 = vsel %vm998, %v2109, 0
        %2114 = vmatprep.subr.mxu0 0.0
        %2115 = vmatpush1.xpose.msra.mxu0 0.0
        %2116 = vmatprep.subr.mxu0 0.0
        %2117 = vmatpush1.xpose.msra.mxu0 0.0
        %2118 = vmatprep.subr.mxu0 0.0
        %2119 = vmatpush1.xpose.msra.mxu0 0.0
        %2120 = vmatprep.subr.mxu0 0.0
        %2121 = vmatpush1.xpose.msra.mxu0 0.0
        %2122 = vmatprep.subr.mxu0 0.0
        %2123 = vmatpush1.xpose.msra.mxu0 0.0
        %2124 = vmatprep.subr.mxu0 0.0
        %2125 = vmatpush1.xpose.msra.mxu0 0.0
        %2126 = vmatprep.subr.mxu0 0.0
        %2127 = vmatpush1.xpose.msra.mxu0 0.0
        %2128 = vmatprep.subr.mxu0 0.0
        %2129 = vmatpush1.xpose.msra.mxu0 0.0
        %2130 = vmatprep.subr.mxu0 0.0
        %2131 = vmatpush1.xpose.msra.mxu0 0.0
        %2132 = vmatprep.subr.mxu0 0.0
        %2133 = vmatpush1.xpose.msra.mxu0 0.0
        %2134 = vmatprep.subr.mxu0 0.0
        %2135 = vmatpush1.xpose.msra.mxu0 0.0
        %2136 = vmatprep.subr.mxu0 0.0
        %2137 = vmatpush1.xpose.msra.mxu0 0.0
        %2138 = vmatprep.subr.mxu0 0.0
        %2139 = vmatpush1.xpose.msra.mxu0 0.0
        %2140 = vmatprep.subr.mxu0 0.0
        %2141 = vmatpush1.xpose.msra.mxu0 0.0
        %2142 = vmatprep.subr.mxu0 0.0
        %2143 = vmatpush1.xpose.msra.mxu0 0.0
        %2144 = vmatprep.subr.mxu0 0.0
        %2145 = vmatpush1.xpose.msra.mxu0 %v2112
        %2146 = vmatprep.subr.mxu0 0.0
        %2147 = vmatpush2.xpose.msra.mxu0 0.0
        %2148 = vmatprep.subr.mxu0 0.0
        %2149 = vmatpush2.xpose.msra.mxu0 0.0
        %2150 = vmatprep.subr.mxu0 0.0
        %2151 = vmatpush2.xpose.msra.mxu0 0.0
        %2152 = vmatprep.subr.mxu0 0.0
        %2153 = vmatpush2.xpose.msra.mxu0 0.0
        %2154 = vmatprep.subr.mxu0 0.0
        %2155 = vmatpush2.xpose.msra.mxu0 0.0
        %2156 = vmatprep.subr.mxu0 0.0
        %2157 = vmatpush2.xpose.msra.mxu0 0.0
        %2158 = vmatprep.subr.mxu0 0.0
        %2159 = vmatpush2.xpose.msra.mxu0 0.0
        %2160 = vmatprep.subr.mxu0 0.0
        %2161 = vmatpush2.xpose.msra.mxu0 0.0
        %2162 = vmatprep.subr.mxu0 0.0
        %2163 = vmatpush2.xpose.msra.mxu0 0.0
        %2164 = vmatprep.subr.mxu0 0.0
        %2165 = vmatpush2.xpose.msra.mxu0 0.0
        %2166 = vmatprep.subr.mxu0 0.0
        %2167 = vmatpush2.xpose.msra.mxu0 0.0
        %2168 = vmatprep.subr.mxu0 0.0
        %2169 = vmatpush2.xpose.msra.mxu0 0.0
        %2170 = vmatprep.subr.mxu0 0.0
        %2171 = vmatpush2.xpose.msra.mxu0 0.0
        %2172 = vmatprep.subr.mxu0 0.0
        %2173 = vmatpush2.xpose.msra.mxu0 0.0
        %2174 = vmatprep.subr.mxu0 0.0
        %2175 = vmatpush2.xpose.msra.mxu0 0.0
        %2176 = vmatprep.subr.mxu0 0.0
        %2177 = vmatpush2.xpose.msra.mxu0 0.0
        %2178 = vmatprep.mubr.f32.mxu0 0.0
        %2179 = vmatmul.mubr.f32.gmra.mxu0 %v2110
        %v2180 = vpop.f32.mrf.mxu0
        %v2181 = vadd.f32 %v1943, %v2180
        %v2182 = vpop.f32.mrf.mxu0
        %2183 = vdwg.mxu0
        %v2184 = vsel %vm998, %v2181, -inf
        %2185 = vmax.xlane.f32.xlu0 %v2184
        %v2186 = vpop.xlane.xlu0 %2185
        %v2187 = vsub.f32 %v2181, %v2186
        %v2188 = vmul.f32 %v2187, 1.442695
        %v2189 = vpow.pop %v2188
        %v2190 = vsel %vm998, %v2189, 0.0
        %2191 = vadd.xlane.f32.xlu0 %v2190
        %v2192 = vpop.xlane.xlu0 %2191
        %v2193 = vrcp.pop %v2192
        %v2194 = vmul.f32 %v2189, %v2193
        %2196 = vrot.lane.b32.xlu0 %v1934, 120
        %v2197 = vpop.permute.xlu0 %2196
        %v2200 = vsel %vm998, %v2194, 0
        %2202 = vmatprep.subr.mxu0 0.0
        %2203 = vmatpush1.msra.mxu0 0.0
        %2204 = vmatprep.subr.mxu0 0.0
        %2205 = vmatpush1.msra.mxu0 0.0
        %2206 = vmatprep.subr.mxu0 0.0
        %2207 = vmatpush1.msra.mxu0 0.0
        %2208 = vmatprep.subr.mxu0 0.0
        %2209 = vmatpush1.msra.mxu0 0.0
        %2210 = vmatprep.subr.mxu0 0.0
        %2211 = vmatpush1.msra.mxu0 0.0
        %2212 = vmatprep.subr.mxu0 0.0
        %2213 = vmatpush1.msra.mxu0 0.0
        %2214 = vmatprep.subr.mxu0 0.0
        %2215 = vmatpush1.msra.mxu0 0.0
        %2216 = vmatprep.subr.mxu0 0.0
        %2217 = vmatpush1.msra.mxu0 0.0
        %2218 = vmatprep.subr.mxu0 0.0
        %2219 = vmatpush1.msra.mxu0 0.0
        %2220 = vmatprep.subr.mxu0 0.0
        %2221 = vmatpush1.msra.mxu0 0.0
        %2222 = vmatprep.subr.mxu0 0.0
        %2223 = vmatpush1.msra.mxu0 0.0
        %2224 = vmatprep.subr.mxu0 0.0
        %2225 = vmatpush1.msra.mxu0 0.0
        %2226 = vmatprep.subr.mxu0 0.0
        %2227 = vmatpush1.msra.mxu0 0.0
        %2228 = vmatprep.subr.mxu0 0.0
        %2229 = vmatpush1.msra.mxu0 0.0
        %2230 = vmatprep.subr.mxu0 0.0
        %2231 = vmatpush1.msra.mxu0 0.0
        %2232 = vmatprep.subr.mxu0 0.0
        %2233 = vmatpush1.msra.mxu0 %v2197
        %2234 = vmatprep.subr.mxu0 0.0
        %2235 = vmatpush2.msra.mxu0 0.0
        %2236 = vmatprep.subr.mxu0 0.0
        %2237 = vmatpush2.msra.mxu0 0.0
        %2238 = vmatprep.subr.mxu0 0.0
        %2239 = vmatpush2.msra.mxu0 0.0
        %2240 = vmatprep.subr.mxu0 0.0
        %2241 = vmatpush2.msra.mxu0 0.0
        %2242 = vmatprep.subr.mxu0 0.0
        %2243 = vmatpush2.msra.mxu0 0.0
        %2244 = vmatprep.subr.mxu0 0.0
        %2245 = vmatpush2.msra.mxu0 0.0
        %2246 = vmatprep.subr.mxu0 0.0
        %2247 = vmatpush2.msra.mxu0 0.0
        %2248 = vmatprep.subr.mxu0 0.0
        %2249 = vmatpush2.msra.mxu0 0.0
        %2250 = vmatprep.subr.mxu0 0.0
        %2251 = vmatpush2.msra.mxu0 0.0
        %2252 = vmatprep.subr.mxu0 0.0
        %2253 = vmatpush2.msra.mxu0 0.0
        %2254 = vmatprep.subr.mxu0 0.0
        %2255 = vmatpush2.msra.mxu0 0.0
        %2256 = vmatprep.subr.mxu0 0.0
        %2257 = vmatpush2.msra.mxu0 0.0
        %2258 = vmatprep.subr.mxu0 0.0
        %2259 = vmatpush2.msra.mxu0 0.0
        %2260 = vmatprep.subr.mxu0 0.0
        %2261 = vmatpush2.msra.mxu0 0.0
        %2262 = vmatprep.subr.mxu0 0.0
        %2263 = vmatpush2.msra.mxu0 0.0
        %2264 = vmatprep.subr.mxu0 0.0
        %2265 = vmatpush2.msra.mxu0 0.0
        %2266 = vmatprep.mubr.f32.mxu0 0.0
        %2267 = vmatmul.mubr.f32.gmra.mxu0 %v2200
        %v2268 = vpop.f32.mrf.mxu0
        %v2269 = vadd.f32 0.0, %v2268
        %v2270 = vpop.f32.mrf.mxu0
        %2271 = vdwg.mxu0
        %2273 = vrot.lane.b32.xlu0 %v2269, 8
        %v2274 = vpop.permute.xlu0 %2273
        %2276 = vst.msk [vmem:[#allocation2] sm:$0xff] %vm1330, %v2274
        %2277 = vrot.lane.b32.xlu0 %v1827, 112
        %v2278 = vpop.permute.xlu0 %2277
        %2279 = vrot.lane.b32.xlu0 %v1882, 112
        %v2280 = vpop.permute.xlu0 %2279
        %v2281 = vsel %vm998, %v2278, 0
        %v2283 = vsel %vm998, %v2280, 0
        %2285 = vmatprep.subr.mxu0 0.0
        %2286 = vmatpush1.xpose.msra.mxu0 0.0
        %2287 = vmatprep.subr.mxu0 0.0
        %2288 = vmatpush1.xpose.msra.mxu0 0.0
        %2289 = vmatprep.subr.mxu0 0.0
        %2290 = vmatpush1.xpose.msra.mxu0 0.0
        %2291 = vmatprep.subr.mxu0 0.0
        %2292 = vmatpush1.xpose.msra.mxu0 0.0
        %2293 = vmatprep.subr.mxu0 0.0
        %2294 = vmatpush1.xpose.msra.mxu0 0.0
        %2295 = vmatprep.subr.mxu0 0.0
        %2296 = vmatpush1.xpose.msra.mxu0 0.0
        %2297 = vmatprep.subr.mxu0 0.0
        %2298 = vmatpush1.xpose.msra.mxu0 0.0
        %2299 = vmatprep.subr.mxu0 0.0
        %2300 = vmatpush1.xpose.msra.mxu0 0.0
        %2301 = vmatprep.subr.mxu0 0.0
        %2302 = vmatpush1.xpose.msra.mxu0 0.0
        %2303 = vmatprep.subr.mxu0 0.0
        %2304 = vmatpush1.xpose.msra.mxu0 0.0
        %2305 = vmatprep.subr.mxu0 0.0
        %2306 = vmatpush1.xpose.msra.mxu0 0.0
        %2307 = vmatprep.subr.mxu0 0.0
        %2308 = vmatpush1.xpose.msra.mxu0 0.0
        %2309 = vmatprep.subr.mxu0 0.0
        %2310 = vmatpush1.xpose.msra.mxu0 0.0
        %2311 = vmatprep.subr.mxu0 0.0
        %2312 = vmatpush1.xpose.msra.mxu0 0.0
        %2313 = vmatprep.subr.mxu0 0.0
        %2314 = vmatpush1.xpose.msra.mxu0 0.0
        %2315 = vmatprep.subr.mxu0 0.0
        %2316 = vmatpush1.xpose.msra.mxu0 %v2283
        %2317 = vmatprep.subr.mxu0 0.0
        %2318 = vmatpush2.xpose.msra.mxu0 0.0
        %2319 = vmatprep.subr.mxu0 0.0
        %2320 = vmatpush2.xpose.msra.mxu0 0.0
        %2321 = vmatprep.subr.mxu0 0.0
        %2322 = vmatpush2.xpose.msra.mxu0 0.0
        %2323 = vmatprep.subr.mxu0 0.0
        %2324 = vmatpush2.xpose.msra.mxu0 0.0
        %2325 = vmatprep.subr.mxu0 0.0
        %2326 = vmatpush2.xpose.msra.mxu0 0.0
        %2327 = vmatprep.subr.mxu0 0.0
        %2328 = vmatpush2.xpose.msra.mxu0 0.0
        %2329 = vmatprep.subr.mxu0 0.0
        %2330 = vmatpush2.xpose.msra.mxu0 0.0
        %2331 = vmatprep.subr.mxu0 0.0
        %2332 = vmatpush2.xpose.msra.mxu0 0.0
        %2333 = vmatprep.subr.mxu0 0.0
        %2334 = vmatpush2.xpose.msra.mxu0 0.0
        %2335 = vmatprep.subr.mxu0 0.0
        %2336 = vmatpush2.xpose.msra.mxu0 0.0
        %2337 = vmatprep.subr.mxu0 0.0
        %2338 = vmatpush2.xpose.msra.mxu0 0.0
        %2339 = vmatprep.subr.mxu0 0.0
        %2340 = vmatpush2.xpose.msra.mxu0 0.0
        %2341 = vmatprep.subr.mxu0 0.0
        %2342 = vmatpush2.xpose.msra.mxu0 0.0
        %2343 = vmatprep.subr.mxu0 0.0
        %2344 = vmatpush2.xpose.msra.mxu0 0.0
        %2345 = vmatprep.subr.mxu0 0.0
        %2346 = vmatpush2.xpose.msra.mxu0 0.0
        %2347 = vmatprep.subr.mxu0 0.0
        %2348 = vmatpush2.xpose.msra.mxu0 0.0
        %2349 = vmatprep.mubr.f32.mxu0 0.0
        %2350 = vmatmul.mubr.f32.gmra.mxu0 %v2281
        %v2351 = vpop.f32.mrf.mxu0
        %v2352 = vadd.f32 %v1943, %v2351
        %v2353 = vpop.f32.mrf.mxu0
        %2354 = vdwg.mxu0
        %v2355 = vsel %vm998, %v2352, -inf
        %2356 = vmax.xlane.f32.xlu0 %v2355
        %v2357 = vpop.xlane.xlu0 %2356
        %v2358 = vsub.f32 %v2352, %v2357
        %v2359 = vmul.f32 %v2358, 1.442695
        %v2360 = vpow.pop %v2359
        %v2361 = vsel %vm998, %v2360, 0.0
        %2362 = vadd.xlane.f32.xlu0 %v2361
        %v2363 = vpop.xlane.xlu0 %2362
        %v2364 = vrcp.pop %v2363
        %v2365 = vmul.f32 %v2360, %v2364
        %2366 = vrot.lane.b32.xlu0 %v1934, 112
        %v2367 = vpop.permute.xlu0 %2366
        %v2370 = vsel %vm998, %v2365, 0
        %2372 = vmatprep.subr.mxu0 0.0
        %2373 = vmatpush1.msra.mxu0 0.0
        %2374 = vmatprep.subr.mxu0 0.0
        %2375 = vmatpush1.msra.mxu0 0.0
        %2376 = vmatprep.subr.mxu0 0.0
        %2377 = vmatpush1.msra.mxu0 0.0
        %2378 = vmatprep.subr.mxu0 0.0
        %2379 = vmatpush1.msra.mxu0 0.0
        %2380 = vmatprep.subr.mxu0 0.0
        %2381 = vmatpush1.msra.mxu0 0.0
        %2382 = vmatprep.subr.mxu0 0.0
        %2383 = vmatpush1.msra.mxu0 0.0
        %2384 = vmatprep.subr.mxu0 0.0
        %2385 = vmatpush1.msra.mxu0 0.0
        %2386 = vmatprep.subr.mxu0 0.0
        %2387 = vmatpush1.msra.mxu0 0.0
        %2388 = vmatprep.subr.mxu0 0.0
        %2389 = vmatpush1.msra.mxu0 0.0
        %2390 = vmatprep.subr.mxu0 0.0
        %2391 = vmatpush1.msra.mxu0 0.0
        %2392 = vmatprep.subr.mxu0 0.0
        %2393 = vmatpush1.msra.mxu0 0.0
        %2394 = vmatprep.subr.mxu0 0.0
        %2395 = vmatpush1.msra.mxu0 0.0
        %2396 = vmatprep.subr.mxu0 0.0
        %2397 = vmatpush1.msra.mxu0 0.0
        %2398 = vmatprep.subr.mxu0 0.0
        %2399 = vmatpush1.msra.mxu0 0.0
        %2400 = vmatprep.subr.mxu0 0.0
        %2401 = vmatpush1.msra.mxu0 0.0
        %2402 = vmatprep.subr.mxu0 0.0
        %2403 = vmatpush1.msra.mxu0 %v2367
        %2404 = vmatprep.subr.mxu0 0.0
        %2405 = vmatpush2.msra.mxu0 0.0
        %2406 = vmatprep.subr.mxu0 0.0
        %2407 = vmatpush2.msra.mxu0 0.0
        %2408 = vmatprep.subr.mxu0 0.0
        %2409 = vmatpush2.msra.mxu0 0.0
        %2410 = vmatprep.subr.mxu0 0.0
        %2411 = vmatpush2.msra.mxu0 0.0
        %2412 = vmatprep.subr.mxu0 0.0
        %2413 = vmatpush2.msra.mxu0 0.0
        %2414 = vmatprep.subr.mxu0 0.0
        %2415 = vmatpush2.msra.mxu0 0.0
        %2416 = vmatprep.subr.mxu0 0.0
        %2417 = vmatpush2.msra.mxu0 0.0
        %2418 = vmatprep.subr.mxu0 0.0
        %2419 = vmatpush2.msra.mxu0 0.0
        %2420 = vmatprep.subr.mxu0 0.0
        %2421 = vmatpush2.msra.mxu0 0.0
        %2422 = vmatprep.subr.mxu0 0.0
        %2423 = vmatpush2.msra.mxu0 0.0
        %2424 = vmatprep.subr.mxu0 0.0
        %2425 = vmatpush2.msra.mxu0 0.0
        %2426 = vmatprep.subr.mxu0 0.0
        %2427 = vmatpush2.msra.mxu0 0.0
        %2428 = vmatprep.subr.mxu0 0.0
        %2429 = vmatpush2.msra.mxu0 0.0
        %2430 = vmatprep.subr.mxu0 0.0
        %2431 = vmatpush2.msra.mxu0 0.0
        %2432 = vmatprep.subr.mxu0 0.0
        %2433 = vmatpush2.msra.mxu0 0.0
        %2434 = vmatprep.subr.mxu0 0.0
        %2435 = vmatpush2.msra.mxu0 0.0
        %2436 = vmatprep.mubr.f32.mxu0 0.0
        %2437 = vmatmul.mubr.f32.gmra.mxu0 %v2370
        %v2438 = vpop.f32.mrf.mxu0
        %v2439 = vadd.f32 0.0, %v2438
        %v2440 = vpop.f32.mrf.mxu0
        %2441 = vdwg.mxu0
        %2443 = vrot.lane.b32.xlu0 %v2439, 16
        %v2444 = vpop.permute.xlu0 %2443
        %2446 = vst.msk [vmem:[#allocation2] sm:$0xff] %vm1501, %v2444
        %2447 = vrot.lane.b32.xlu0 %v1827, 104
        %v2448 = vpop.permute.xlu0 %2447
        %2449 = vrot.lane.b32.xlu0 %v1882, 104
        %v2450 = vpop.permute.xlu0 %2449
        %v2451 = vsel %vm998, %v2448, 0
        %v2453 = vsel %vm998, %v2450, 0
        %2455 = vmatprep.subr.mxu0 0.0
        %2456 = vmatpush1.xpose.msra.mxu0 0.0
        %2457 = vmatprep.subr.mxu0 0.0
        %2458 = vmatpush1.xpose.msra.mxu0 0.0
        %2459 = vmatprep.subr.mxu0 0.0
        %2460 = vmatpush1.xpose.msra.mxu0 0.0
        %2461 = vmatprep.subr.mxu0 0.0
        %2462 = vmatpush1.xpose.msra.mxu0 0.0
        %2463 = vmatprep.subr.mxu0 0.0
        %2464 = vmatpush1.xpose.msra.mxu0 0.0
        %2465 = vmatprep.subr.mxu0 0.0
        %2466 = vmatpush1.xpose.msra.mxu0 0.0
        %2467 = vmatprep.subr.mxu0 0.0
        %2468 = vmatpush1.xpose.msra.mxu0 0.0
        %2469 = vmatprep.subr.mxu0 0.0
        %2470 = vmatpush1.xpose.msra.mxu0 0.0
        %2471 = vmatprep.subr.mxu0 0.0
        %2472 = vmatpush1.xpose.msra.mxu0 0.0
        %2473 = vmatprep.subr.mxu0 0.0
        %2474 = vmatpush1.xpose.msra.mxu0 0.0
        %2475 = vmatprep.subr.mxu0 0.0
        %2476 = vmatpush1.xpose.msra.mxu0 0.0
        %2477 = vmatprep.subr.mxu0 0.0
        %2478 = vmatpush1.xpose.msra.mxu0 0.0
        %2479 = vmatprep.subr.mxu0 0.0
        %2480 = vmatpush1.xpose.msra.mxu0 0.0
        %2481 = vmatprep.subr.mxu0 0.0
        %2482 = vmatpush1.xpose.msra.mxu0 0.0
        %2483 = vmatprep.subr.mxu0 0.0
        %2484 = vmatpush1.xpose.msra.mxu0 0.0
        %2485 = vmatprep.subr.mxu0 0.0
        %2486 = vmatpush1.xpose.msra.mxu0 %v2453
        %2487 = vmatprep.subr.mxu0 0.0
        %2488 = vmatpush2.xpose.msra.mxu0 0.0
        %2489 = vmatprep.subr.mxu0 0.0
        %2490 = vmatpush2.xpose.msra.mxu0 0.0
        %2491 = vmatprep.subr.mxu0 0.0
        %2492 = vmatpush2.xpose.msra.mxu0 0.0
        %2493 = vmatprep.subr.mxu0 0.0
        %2494 = vmatpush2.xpose.msra.mxu0 0.0
        %2495 = vmatprep.subr.mxu0 0.0
        %2496 = vmatpush2.xpose.msra.mxu0 0.0
        %2497 = vmatprep.subr.mxu0 0.0
        %2498 = vmatpush2.xpose.msra.mxu0 0.0
        %2499 = vmatprep.subr.mxu0 0.0
        %2500 = vmatpush2.xpose.msra.mxu0 0.0
        %2501 = vmatprep.subr.mxu0 0.0
        %2502 = vmatpush2.xpose.msra.mxu0 0.0
        %2503 = vmatprep.subr.mxu0 0.0
        %2504 = vmatpush2.xpose.msra.mxu0 0.0
        %2505 = vmatprep.subr.mxu0 0.0
        %2506 = vmatpush2.xpose.msra.mxu0 0.0
        %2507 = vmatprep.subr.mxu0 0.0
        %2508 = vmatpush2.xpose.msra.mxu0 0.0
        %2509 = vmatprep.subr.mxu0 0.0
        %2510 = vmatpush2.xpose.msra.mxu0 0.0
        %2511 = vmatprep.subr.mxu0 0.0
        %2512 = vmatpush2.xpose.msra.mxu0 0.0
        %2513 = vmatprep.subr.mxu0 0.0
        %2514 = vmatpush2.xpose.msra.mxu0 0.0
        %2515 = vmatprep.subr.mxu0 0.0
        %2516 = vmatpush2.xpose.msra.mxu0 0.0
        %2517 = vmatprep.subr.mxu0 0.0
        %2518 = vmatpush2.xpose.msra.mxu0 0.0
        %2519 = vmatprep.mubr.f32.mxu0 0.0
        %2520 = vmatmul.mubr.f32.gmra.mxu0 %v2451
        %v2521 = vpop.f32.mrf.mxu0
        %v2522 = vadd.f32 %v1943, %v2521
        %v2523 = vpop.f32.mrf.mxu0
        %2524 = vdwg.mxu0
        %v2525 = vsel %vm998, %v2522, -inf
        %2526 = vmax.xlane.f32.xlu0 %v2525
        %v2527 = vpop.xlane.xlu0 %2526
        %v2528 = vsub.f32 %v2522, %v2527
        %v2529 = vmul.f32 %v2528, 1.442695
        %v2530 = vpow.pop %v2529
        %v2531 = vsel %vm998, %v2530, 0.0
        %2532 = vadd.xlane.f32.xlu0 %v2531
        %v2533 = vpop.xlane.xlu0 %2532
        %v2534 = vrcp.pop %v2533
        %v2535 = vmul.f32 %v2530, %v2534
        %2536 = vrot.lane.b32.xlu0 %v1934, 104
        %v2537 = vpop.permute.xlu0 %2536
        %v2540 = vsel %vm998, %v2535, 0
        %2542 = vmatprep.subr.mxu0 0.0
        %2543 = vmatpush1.msra.mxu0 0.0
        %2544 = vmatprep.subr.mxu0 0.0
        %2545 = vmatpush1.msra.mxu0 0.0
        %2546 = vmatprep.subr.mxu0 0.0
        %2547 = vmatpush1.msra.mxu0 0.0
        %2548 = vmatprep.subr.mxu0 0.0
        %2549 = vmatpush1.msra.mxu0 0.0
        %2550 = vmatprep.subr.mxu0 0.0
        %2551 = vmatpush1.msra.mxu0 0.0
        %2552 = vmatprep.subr.mxu0 0.0
        %2553 = vmatpush1.msra.mxu0 0.0
        %2554 = vmatprep.subr.mxu0 0.0
        %2555 = vmatpush1.msra.mxu0 0.0
        %2556 = vmatprep.subr.mxu0 0.0
        %2557 = vmatpush1.msra.mxu0 0.0
        %2558 = vmatprep.subr.mxu0 0.0
        %2559 = vmatpush1.msra.mxu0 0.0
        %2560 = vmatprep.subr.mxu0 0.0
        %2561 = vmatpush1.msra.mxu0 0.0
        %2562 = vmatprep.subr.mxu0 0.0
        %2563 = vmatpush1.msra.mxu0 0.0
        %2564 = vmatprep.subr.mxu0 0.0
        %2565 = vmatpush1.msra.mxu0 0.0
        %2566 = vmatprep.subr.mxu0 0.0
        %2567 = vmatpush1.msra.mxu0 0.0
        %2568 = vmatprep.subr.mxu0 0.0
        %2569 = vmatpush1.msra.mxu0 0.0
        %2570 = vmatprep.subr.mxu0 0.0
        %2571 = vmatpush1.msra.mxu0 0.0
        %2572 = vmatprep.subr.mxu0 0.0
        %2573 = vmatpush1.msra.mxu0 %v2537
        %2574 = vmatprep.subr.mxu0 0.0
        %2575 = vmatpush2.msra.mxu0 0.0
        %2576 = vmatprep.subr.mxu0 0.0
        %2577 = vmatpush2.msra.mxu0 0.0
        %2578 = vmatprep.subr.mxu0 0.0
        %2579 = vmatpush2.msra.mxu0 0.0
        %2580 = vmatprep.subr.mxu0 0.0
        %2581 = vmatpush2.msra.mxu0 0.0
        %2582 = vmatprep.subr.mxu0 0.0
        %2583 = vmatpush2.msra.mxu0 0.0
        %2584 = vmatprep.subr.mxu0 0.0
        %2585 = vmatpush2.msra.mxu0 0.0
        %2586 = vmatprep.subr.mxu0 0.0
        %2587 = vmatpush2.msra.mxu0 0.0
        %2588 = vmatprep.subr.mxu0 0.0
        %2589 = vmatpush2.msra.mxu0 0.0
        %2590 = vmatprep.subr.mxu0 0.0
        %2591 = vmatpush2.msra.mxu0 0.0
        %2592 = vmatprep.subr.mxu0 0.0
        %2593 = vmatpush2.msra.mxu0 0.0
        %2594 = vmatprep.subr.mxu0 0.0
        %2595 = vmatpush2.msra.mxu0 0.0
        %2596 = vmatprep.subr.mxu0 0.0
        %2597 = vmatpush2.msra.mxu0 0.0
        %2598 = vmatprep.subr.mxu0 0.0
        %2599 = vmatpush2.msra.mxu0 0.0
        %2600 = vmatprep.subr.mxu0 0.0
        %2601 = vmatpush2.msra.mxu0 0.0
        %2602 = vmatprep.subr.mxu0 0.0
        %2603 = vmatpush2.msra.mxu0 0.0
        %2604 = vmatprep.subr.mxu0 0.0
        %2605 = vmatpush2.msra.mxu0 0.0
        %2606 = vmatprep.mubr.f32.mxu0 0.0
        %2607 = vmatmul.mubr.f32.gmra.mxu0 %v2540
        %v2608 = vpop.f32.mrf.mxu0
        %v2609 = vadd.f32 0.0, %v2608
        %v2610 = vpop.f32.mrf.mxu0
        %2611 = vdwg.mxu0
        %2613 = vrot.lane.b32.xlu0 %v2609, 24
        %v2614 = vpop.permute.xlu0 %2613
        %2616 = vst.msk [vmem:[#allocation2] sm:$0xff] %vm1672, %v2614
        %v2617 = vld [vmem:[#allocation2] sm:$0xff]
        %v2618 = vpack.c.bf16 %v2617, %v2617
        %v2623 = vunpack.c.l.b16 %v1745
        %v2624 = vunpack.c.l.b16 %v1746
        %v2625 = vunpack.c.l.b16 %v1747
        %v2626 = vunpack.c.l.b16 %v1748
        %v2627 = vpack.c.b16 %v2624, %v2623
        %v2628 = vpack.c.b16 %v2626, %v2625
        %v2632 = vsel %vm806, %v2618, 0
        %2634 = vmatprep.subr.bf16.mxu0 0
        %2635 = vmatpush1.bf16.msra.mxu0 0
        %2636 = vmatprep.subr.bf16.mxu0 0
        %2637 = vmatpush1.bf16.msra.mxu0 0
        %2638 = vmatprep.subr.bf16.mxu0 0
        %2639 = vmatpush1.bf16.msra.mxu0 0
        %2640 = vmatprep.subr.bf16.mxu0 0
        %2641 = vmatpush1.bf16.msra.mxu0 0
        %2642 = vmatprep.subr.bf16.mxu0 0
        %2643 = vmatpush1.bf16.msra.mxu0 0
        %2644 = vmatprep.subr.bf16.mxu0 0
        %2645 = vmatpush1.bf16.msra.mxu0 0
        %2646 = vmatprep.subr.bf16.mxu0 0
        %2647 = vmatpush1.bf16.msra.mxu0 %v2628
        %2648 = vmatprep.subr.bf16.mxu0 0
        %2649 = vmatpush1.bf16.msra.mxu0 %v2627
        %2650 = vmatprep.subr.bf16.mxu0 0
        %2651 = vmatpush2.bf16.msra.mxu0 0
        %2652 = vmatprep.subr.bf16.mxu0 0
        %2653 = vmatpush2.bf16.msra.mxu0 0
        %2654 = vmatprep.subr.bf16.mxu0 0
        %2655 = vmatpush2.bf16.msra.mxu0 0
        %2656 = vmatprep.subr.bf16.mxu0 0
        %2657 = vmatpush2.bf16.msra.mxu0 0
        %2658 = vmatprep.subr.bf16.mxu0 0
        %2659 = vmatpush2.bf16.msra.mxu0 0
        %2660 = vmatprep.subr.bf16.mxu0 0
        %2661 = vmatpush2.bf16.msra.mxu0 0
        %2662 = vmatprep.subr.bf16.mxu0 0
        %2663 = vmatpush2.bf16.msra.mxu0 0
        %2664 = vmatprep.subr.bf16.mxu0 0
        %2665 = vmatpush2.bf16.msra.mxu0 0
        %2666 = vmatprep.mubr.bf16.mxu0 0
        %2667 = vmatmul.mubr.bf16.gmra.mxu0 %v2632
        %v2668 = vpop.f32.mrf.mxu0
        %v2669 = vadd.f32 %v1726, %v2668
        %v2670 = vpop.f32.mrf.mxu0
        %v2671 = vpop.f32.mrf.mxu0
        %v2672 = vpop.f32.mrf.mxu0
        %2673 = vdwg.mxu0
        %v2674 = vld [vmem:[%s16] sm:$0x1]
        %v2675 = vld [vmem:[%s17] sm:$0x1]
        %v2676 = vld [vmem:[%s18] sm:$0xf]
        %v2677 = vld [vmem:[%s18 + $0x4] sm:$0xf]
        %v2678 = vld [vmem:[%s18 + $0x8] sm:$0xf]
        %v2679 = vld [vmem:[%s18 + $0xc] sm:$0xf]
        %v2680 = vld [vmem:[%s19] sm:$0x1]
        %v2681 = vld [vmem:[%s20] sm:$0xf]
        %v2682 = vld [vmem:[%s20 + $0x4] sm:$0xf]
        %v2683 = vld [vmem:[%s20 + $0x8] sm:$0xf]
        %v2684 = vld [vmem:[%s20 + $0xc] sm:$0xf]
        %v2685 = vld [vmem:[%s20 + $0x10] sm:$0xf]
        %v2686 = vld [vmem:[%s20 + $0x14] sm:$0xf]
        %v2687 = vld [vmem:[%s20 + $0x18] sm:$0xf]
        %v2688 = vld [vmem:[%s20 + $0x1c] sm:$0xf]
        %v2689 = vld [vmem:[%s21] sm:$0x1]
        %v2690 = vsel %vm806, %v2669, 0.0
        %2691 = vadd.xlane.f32.xlu0 %v2690
        %v2692 = vpop.xlane.xlu0 %2691
        %v2693 = vmul.f32 %v2692, %v810
        %v2694 = vsub.f32 %v2669, %v2693
        %v2695 = vmul.f32 %v2694, %v2694
        %v2696 = vsel %vm806, %v2695, 0.0
        %2697 = vadd.xlane.f32.xlu0 %v2696
        %v2698 = vpop.xlane.xlu0 %2697
        %v2699 = vmul.f32 %v2698, %v810
        %v2700 = vadd.f32 %v2699, 1e-06
        %v2701 = vrsqrt.pop %v2700
        %v2702 = vmul.f32 %v2694, %v2701
        %v2704 = vlaneseq
        %v2705 = vshrl.u32 %v2704, 7
        %v2706 = vsub.s32 0, %v2705
        %v2707 = vrot.slane %v2674, %v2706
        %v2709 = vmul.f32 %v2702, %v2707
        %v2711 = vlaneseq
        %v2712 = vshrl.u32 %v2711, 7
        %v2713 = vsub.s32 0, %v2712
        %v2714 = vrot.slane %v2675, %v2713
        %v2716 = vadd.f32 %v2709, %v2714
        %v2717 = vpack.c.bf16 %v2716, %v2716
        %v2719 = vlaneseq
        %v2720 = vshrl.u32 %v2719, 7
        %v2721 = vsub.s32 0, %v2720
        %v2722 = vrot.slane %v2680, %v2721
        %v2728 = vunpack.c.l.b16 %v2676
        %v2729 = vunpack.c.l.b16 %v2677
        %v2730 = vunpack.c.l.b16 %v2678
        %v2731 = vunpack.c.l.b16 %v2679
        %v2732 = vpack.c.b16 %v2729, %v2728
        %v2733 = vpack.c.b16 %v2731, %v2730
        %v2737 = vsel %vm806, %v2717, 0
        %2739 = vmatprep.subr.bf16.mxu0 0
        %2740 = vmatpush1.bf16.msra.mxu0 0
        %2741 = vmatprep.subr.bf16.mxu0 0
        %2742 = vmatpush1.bf16.msra.mxu0 0
        %2743 = vmatprep.subr.bf16.mxu0 0
        %2744 = vmatpush1.bf16.msra.mxu0 0
        %2745 = vmatprep.subr.bf16.mxu0 0
        %2746 = vmatpush1.bf16.msra.mxu0 0
        %2747 = vmatprep.subr.bf16.mxu0 0
        %2748 = vmatpush1.bf16.msra.mxu0 0
        %2749 = vmatprep.subr.bf16.mxu0 0
        %2750 = vmatpush1.bf16.msra.mxu0 0
        %2751 = vmatprep.subr.bf16.mxu0 0
        %2752 = vmatpush1.bf16.msra.mxu0 %v2733
        %2753 = vmatprep.subr.bf16.mxu0 0
        %2754 = vmatpush1.bf16.msra.mxu0 %v2732
        %2755 = vmatprep.subr.bf16.mxu0 0
        %2756 = vmatpush2.bf16.msra.mxu0 0
        %2757 = vmatprep.subr.bf16.mxu0 0
        %2758 = vmatpush2.bf16.msra.mxu0 0
        %2759 = vmatprep.subr.bf16.mxu0 0
        %2760 = vmatpush2.bf16.msra.mxu0 0
        %2761 = vmatprep.subr.bf16.mxu0 0
        %2762 = vmatpush2.bf16.msra.mxu0 0
        %2763 = vmatprep.subr.bf16.mxu0 0
        %2764 = vmatpush2.bf16.msra.mxu0 0
        %2765 = vmatprep.subr.bf16.mxu0 0
        %2766 = vmatpush2.bf16.msra.mxu0 0
        %2767 = vmatprep.subr.bf16.mxu0 0
        %2768 = vmatpush2.bf16.msra.mxu0 0
        %2769 = vmatprep.subr.bf16.mxu0 0
        %2770 = vmatpush2.bf16.msra.mxu0 0
        %2771 = vmatprep.mubr.bf16.mxu0 0
        %2772 = vmatmul.mubr.bf16.gmra.mxu0 %v2737
        %v2773 = vpop.f32.mrf.mxu0
        %v2774 = vadd.f32 %v2722, %v2773
        %v2775 = vpop.f32.mrf.mxu0
        %v2776 = vpop.f32.mrf.mxu0
        %v2777 = vpop.f32.mrf.mxu0
        %2778 = vdwg.mxu0
        %v2779 = vmax.f32 %v2774, 0.0
        %v2780 = vpack.c.bf16 %v2779, %v2779
        %v2782 = vlaneseq
        %v2783 = vshrl.u32 %v2782, 7
        %v2784 = vsub.s32 0, %v2783
        %v2785 = vrot.slane %v2689, %v2784
        %v2795 = vunpack.c.l.b16 %v2681
        %v2796 = vunpack.c.l.b16 %v2682
        %v2797 = vunpack.c.l.b16 %v2683
        %v2798 = vunpack.c.l.b16 %v2684
        %v2799 = vunpack.c.l.b16 %v2685
        %v2800 = vunpack.c.l.b16 %v2686
        %v2801 = vunpack.c.l.b16 %v2687
        %v2802 = vunpack.c.l.b16 %v2688
        %v2803 = vpack.c.b16 %v2796, %v2795
        %v2804 = vpack.c.b16 %v2798, %v2797
        %v2805 = vpack.c.b16 %v2800, %v2799
        %v2806 = vpack.c.b16 %v2802, %v2801
        %vm2811 = vcmask 523264
        %v2813 = vsel %vm2811, %v2780, 0
        %2815 = vmatprep.subr.bf16.mxu0 0
        %2816 = vmatpush1.bf16.msra.mxu0 0
        %2817 = vmatprep.subr.bf16.mxu0 0
        %2818 = vmatpush1.bf16.msra.mxu0 0
        %2819 = vmatprep.subr.bf16.mxu0 0
        %2820 = vmatpush1.bf16.msra.mxu0 0
        %2821 = vmatprep.subr.bf16.mxu0 0
        %2822 = vmatpush1.bf16.msra.mxu0 0
        %2823 = vmatprep.subr.bf16.mxu0 0
        %2824 = vmatpush1.bf16.msra.mxu0 %v2806
        %2825 = vmatprep.subr.bf16.mxu0 0
        %2826 = vmatpush1.bf16.msra.mxu0 %v2805
        %2827 = vmatprep.subr.bf16.mxu0 0
        %2828 = vmatpush1.bf16.msra.mxu0 %v2804
        %2829 = vmatprep.subr.bf16.mxu0 0
        %2830 = vmatpush1.bf16.msra.mxu0 %v2803
        %2831 = vmatprep.subr.bf16.mxu0 0
        %2832 = vmatpush2.bf16.msra.mxu0 0
        %2833 = vmatprep.subr.bf16.mxu0 0
        %2834 = vmatpush2.bf16.msra.mxu0 0
        %2835 = vmatprep.subr.bf16.mxu0 0
        %2836 = vmatpush2.bf16.msra.mxu0 0
        %2837 = vmatprep.subr.bf16.mxu0 0
        %2838 = vmatpush2.bf16.msra.mxu0 0
        %2839 = vmatprep.subr.bf16.mxu0 0
        %2840 = vmatpush2.bf16.msra.mxu0 0
        %2841 = vmatprep.subr.bf16.mxu0 0
        %2842 = vmatpush2.bf16.msra.mxu0 0
        %2843 = vmatprep.subr.bf16.mxu0 0
        %2844 = vmatpush2.bf16.msra.mxu0 0
        %2845 = vmatprep.subr.bf16.mxu0 0
        %2846 = vmatpush2.bf16.msra.mxu0 0
        %2847 = vmatprep.mubr.bf16.mxu0 0
        %2848 = vmatmul.mubr.bf16.gmra.mxu0 %v2813
        %v2849 = vpop.f32.mrf.mxu0
        %v2850 = vadd.f32 %v2785, %v2849
        %v2851 = vpop.f32.mrf.mxu0
        %v2852 = vpop.f32.mrf.mxu0
        %v2853 = vpop.f32.mrf.mxu0
        %2854 = vdwg.mxu0
        %v2855 = vadd.f32 %v2850, %v2669
        %v2856 = vpack.c.bf16 %v2855, %v2855
        %s2857 = scalar_lea.vmem %s4, 1
        %v2858 = vld [vmem:[%s2857] sm:$0x1]
        %s2859 = scalar_lea.vmem %s5, 1
        %v2860 = vld [vmem:[%s2859] sm:$0x1]
        %s2861 = scalar_lea.vmem %s6, 16
        %v2862 = vld [vmem:[%s2861] sm:$0xf]
        %v2863 = vld [vmem:[%s2861 + $0x4] sm:$0xf]
        %v2864 = vld [vmem:[%s2861 + $0x8] sm:$0xf]
        %v2865 = vld [vmem:[%s2861 + $0xc] sm:$0xf]
        %s2866 = scalar_lea.vmem %s7, 16
        %v2867 = vld [vmem:[%s2866] sm:$0xf]
        %v2868 = vld [vmem:[%s2866 + $0x4] sm:$0xf]
        %v2869 = vld [vmem:[%s2866 + $0x8] sm:$0xf]
        %v2870 = vld [vmem:[%s2866 + $0xc] sm:$0xf]
        %s2871 = scalar_lea.vmem %s8, 16
        %v2872 = vld [vmem:[%s2871] sm:$0xf]
        %v2873 = vld [vmem:[%s2871 + $0x4] sm:$0xf]
        %v2874 = vld [vmem:[%s2871 + $0x8] sm:$0xf]
        %v2875 = vld [vmem:[%s2871 + $0xc] sm:$0xf]
        %s2876 = scalar_lea.vmem %s9, 16
        %v2877 = vld [vmem:[%s2876] sm:$0xf]
        %v2878 = vld [vmem:[%s2876 + $0x4] sm:$0xf]
        %v2879 = vld [vmem:[%s2876 + $0x8] sm:$0xf]
        %v2880 = vld [vmem:[%s2876 + $0xc] sm:$0xf]
        %v2881 = vsel %vm806, %v2855, 0.0
        %2882 = vadd.xlane.f32.xlu0 %v2881
        %v2883 = vpop.xlane.xlu0 %2882
        %v2884 = vmul.f32 %v2883, %v810
        %v2885 = vsub.f32 %v2855, %v2884
        %v2886 = vmul.f32 %v2885, %v2885
        %v2887 = vsel %vm806, %v2886, 0.0
        %2888 = vadd.xlane.f32.xlu0 %v2887
        %v2889 = vpop.xlane.xlu0 %2888
        %v2890 = vmul.f32 %v2889, %v810
        %v2891 = vadd.f32 %v2890, 1e-06
        %v2892 = vrsqrt.pop %v2891
        %v2893 = vmul.f32 %v2885, %v2892
        %v2895 = vlaneseq
        %v2896 = vshrl.u32 %v2895, 7
        %v2897 = vsub.s32 0, %v2896
        %v2898 = vrot.slane %v2858, %v2897
        %v2900 = vmul.f32 %v2893, %v2898
        %v2902 = vlaneseq
        %v2903 = vshrl.u32 %v2902, 7
        %v2904 = vsub.s32 0, %v2903
        %v2905 = vrot.slane %v2860, %v2904
        %v2907 = vadd.f32 %v2900, %v2905
        %v2908 = vpack.c.bf16 %v2907, %v2907
        %v2913 = vunpack.c.l.b16 %v2862
        %v2914 = vunpack.c.l.b16 %v2863
        %v2915 = vunpack.c.l.b16 %v2864
        %v2916 = vunpack.c.l.b16 %v2865
        %v2917 = vpack.c.b16 %v2914, %v2913
        %v2918 = vpack.c.b16 %v2916, %v2915
        %v2922 = vsel %vm806, %v2908, 0
        %2924 = vmatprep.subr.bf16.mxu0 0
        %2925 = vmatpush1.bf16.msra.mxu0 0
        %2926 = vmatprep.subr.bf16.mxu0 0
        %2927 = vmatpush1.bf16.msra.mxu0 0
        %2928 = vmatprep.subr.bf16.mxu0 0
        %2929 = vmatpush1.bf16.msra.mxu0 0
        %2930 = vmatprep.subr.bf16.mxu0 0
        %2931 = vmatpush1.bf16.msra.mxu0 0
        %2932 = vmatprep.subr.bf16.mxu0 0
        %2933 = vmatpush1.bf16.msra.mxu0 0
        %2934 = vmatprep.subr.bf16.mxu0 0
        %2935 = vmatpush1.bf16.msra.mxu0 0
        %2936 = vmatprep.subr.bf16.mxu0 0
        %2937 = vmatpush1.bf16.msra.mxu0 %v2918
        %2938 = vmatprep.subr.bf16.mxu0 0
        %2939 = vmatpush1.bf16.msra.mxu0 %v2917
        %2940 = vmatprep.subr.bf16.mxu0 0
        %2941 = vmatpush2.bf16.msra.mxu0 0
        %2942 = vmatprep.subr.bf16.mxu0 0
        %2943 = vmatpush2.bf16.msra.mxu0 0
        %2944 = vmatprep.subr.bf16.mxu0 0
        %2945 = vmatpush2.bf16.msra.mxu0 0
        %2946 = vmatprep.subr.bf16.mxu0 0
        %2947 = vmatpush2.bf16.msra.mxu0 0
        %2948 = vmatprep.subr.bf16.mxu0 0
        %2949 = vmatpush2.bf16.msra.mxu0 0
        %2950 = vmatprep.subr.bf16.mxu0 0
        %2951 = vmatpush2.bf16.msra.mxu0 0
        %2952 = vmatprep.subr.bf16.mxu0 0
        %2953 = vmatpush2.bf16.msra.mxu0 0
        %2954 = vmatprep.subr.bf16.mxu0 0
        %2955 = vmatpush2.bf16.msra.mxu0 0
        %2956 = vmatprep.mubr.bf16.mxu0 0
        %2957 = vmatmul.mubr.bf16.gmra.mxu0 %v2922
        %v2958 = vpop.f32.mrf.mxu0
        %v2959 = vadd.f32 0.0, %v2958
        %v2960 = vpop.f32.mrf.mxu0
        %v2961 = vpop.f32.mrf.mxu0
        %v2962 = vpop.f32.mrf.mxu0
        %2963 = vdwg.mxu0
        %v2968 = vunpack.c.l.b16 %v2867
        %v2969 = vunpack.c.l.b16 %v2868
        %v2970 = vunpack.c.l.b16 %v2869
        %v2971 = vunpack.c.l.b16 %v2870
        %v2972 = vpack.c.b16 %v2969, %v2968
        %v2973 = vpack.c.b16 %v2971, %v2970
        %v2977 = vsel %vm806, %v2856, 0
        %2979 = vmatprep.subr.bf16.mxu0 0
        %2980 = vmatpush1.bf16.msra.mxu0 0
        %2981 = vmatprep.subr.bf16.mxu0 0
        %2982 = vmatpush1.bf16.msra.mxu0 0
        %2983 = vmatprep.subr.bf16.mxu0 0
        %2984 = vmatpush1.bf16.msra.mxu0 0
        %2985 = vmatprep.subr.bf16.mxu0 0
        %2986 = vmatpush1.bf16.msra.mxu0 0
        %2987 = vmatprep.subr.bf16.mxu0 0
        %2988 = vmatpush1.bf16.msra.mxu0 0
        %2989 = vmatprep.subr.bf16.mxu0 0
        %2990 = vmatpush1.bf16.msra.mxu0 0
        %2991 = vmatprep.subr.bf16.mxu0 0
        %2992 = vmatpush1.bf16.msra.mxu0 %v2973
        %2993 = vmatprep.subr.bf16.mxu0 0
        %2994 = vmatpush1.bf16.msra.mxu0 %v2972
        %2995 = vmatprep.subr.bf16.mxu0 0
        %2996 = vmatpush2.bf16.msra.mxu0 0
        %2997 = vmatprep.subr.bf16.mxu0 0
        %2998 = vmatpush2.bf16.msra.mxu0 0
        %2999 = vmatprep.subr.bf16.mxu0 0
        %3000 = vmatpush2.bf16.msra.mxu0 0
        %3001 = vmatprep.subr.bf16.mxu0 0
        %3002 = vmatpush2.bf16.msra.mxu0 0
        %3003 = vmatprep.subr.bf16.mxu0 0
        %3004 = vmatpush2.bf16.msra.mxu0 0
        %3005 = vmatprep.subr.bf16.mxu0 0
        %3006 = vmatpush2.bf16.msra.mxu0 0
        %3007 = vmatprep.subr.bf16.mxu0 0
        %3008 = vmatpush2.bf16.msra.mxu0 0
        %3009 = vmatprep.subr.bf16.mxu0 0
        %3010 = vmatpush2.bf16.msra.mxu0 0
        %3011 = vmatprep.mubr.bf16.mxu0 0
        %3012 = vmatmul.mubr.bf16.gmra.mxu0 %v2977
        %v3013 = vpop.f32.mrf.mxu0
        %v3014 = vadd.f32 0.0, %v3013
        %v3015 = vpop.f32.mrf.mxu0
        %v3016 = vpop.f32.mrf.mxu0
        %v3017 = vpop.f32.mrf.mxu0
        %3018 = vdwg.mxu0
        %v3023 = vunpack.c.l.b16 %v2872
        %v3024 = vunpack.c.l.b16 %v2873
        %v3025 = vunpack.c.l.b16 %v2874
        %v3026 = vunpack.c.l.b16 %v2875
        %v3027 = vpack.c.b16 %v3024, %v3023
        %v3028 = vpack.c.b16 %v3026, %v3025
        %3031 = vmatprep.subr.bf16.mxu0 0
        %3032 = vmatpush1.bf16.msra.mxu0 0
        %3033 = vmatprep.subr.bf16.mxu0 0
        %3034 = vmatpush1.bf16.msra.mxu0 0
        %3035 = vmatprep.subr.bf16.mxu0 0
        %3036 = vmatpush1.bf16.msra.mxu0 0
        %3037 = vmatprep.subr.bf16.mxu0 0
        %3038 = vmatpush1.bf16.msra.mxu0 0
        %3039 = vmatprep.subr.bf16.mxu0 0
        %3040 = vmatpush1.bf16.msra.mxu0 0
        %3041 = vmatprep.subr.bf16.mxu0 0
        %3042 = vmatpush1.bf16.msra.mxu0 0
        %3043 = vmatprep.subr.bf16.mxu0 0
        %3044 = vmatpush1.bf16.msra.mxu0 %v3028
        %3045 = vmatprep.subr.bf16.mxu0 0
        %3046 = vmatpush1.bf16.msra.mxu0 %v3027
        %3047 = vmatprep.subr.bf16.mxu0 0
        %3048 = vmatpush2.bf16.msra.mxu0 0
        %3049 = vmatprep.subr.bf16.mxu0 0
        %3050 = vmatpush2.bf16.msra.mxu0 0
        %3051 = vmatprep.subr.bf16.mxu0 0
        %3052 = vmatpush2.bf16.msra.mxu0 0
        %3053 = vmatprep.subr.bf16.mxu0 0
        %3054 = vmatpush2.bf16.msra.mxu0 0
        %3055 = vmatprep.subr.bf16.mxu0 0
        %3056 = vmatpush2.bf16.msra.mxu0 0
        %3057 = vmatprep.subr.bf16.mxu0 0
        %3058 = vmatpush2.bf16.msra.mxu0 0
        %3059 = vmatprep.subr.bf16.mxu0 0
        %3060 = vmatpush2.bf16.msra.mxu0 0
        %3061 = vmatprep.subr.bf16.mxu0 0
        %3062 = vmatpush2.bf16.msra.mxu0 0
        %3063 = vmatprep.mubr.bf16.mxu0 0
        %3064 = vmatmul.mubr.bf16.gmra.mxu0 %v2977
        %v3065 = vpop.f32.mrf.mxu0
        %v3066 = vadd.f32 0.0, %v3065
        %v3067 = vpop.f32.mrf.mxu0
        %v3068 = vpop.f32.mrf.mxu0
        %v3069 = vpop.f32.mrf.mxu0
        %3070 = vdwg.mxu0
        %v3072 = vsel %vm998, %v2959, 0
        %v3075 = vsel %vm998, %v3014, 0
        %3077 = vmatprep.subr.mxu0 0.0
        %3078 = vmatpush1.xpose.msra.mxu0 0.0
        %3079 = vmatprep.subr.mxu0 0.0
        %3080 = vmatpush1.xpose.msra.mxu0 0.0
        %3081 = vmatprep.subr.mxu0 0.0
        %3082 = vmatpush1.xpose.msra.mxu0 0.0
        %3083 = vmatprep.subr.mxu0 0.0
        %3084 = vmatpush1.xpose.msra.mxu0 0.0
        %3085 = vmatprep.subr.mxu0 0.0
        %3086 = vmatpush1.xpose.msra.mxu0 0.0
        %3087 = vmatprep.subr.mxu0 0.0
        %3088 = vmatpush1.xpose.msra.mxu0 0.0
        %3089 = vmatprep.subr.mxu0 0.0
        %3090 = vmatpush1.xpose.msra.mxu0 0.0
        %3091 = vmatprep.subr.mxu0 0.0
        %3092 = vmatpush1.xpose.msra.mxu0 0.0
        %3093 = vmatprep.subr.mxu0 0.0
        %3094 = vmatpush1.xpose.msra.mxu0 0.0
        %3095 = vmatprep.subr.mxu0 0.0
        %3096 = vmatpush1.xpose.msra.mxu0 0.0
        %3097 = vmatprep.subr.mxu0 0.0
        %3098 = vmatpush1.xpose.msra.mxu0 0.0
        %3099 = vmatprep.subr.mxu0 0.0
        %3100 = vmatpush1.xpose.msra.mxu0 0.0
        %3101 = vmatprep.subr.mxu0 0.0
        %3102 = vmatpush1.xpose.msra.mxu0 0.0
        %3103 = vmatprep.subr.mxu0 0.0
        %3104 = vmatpush1.xpose.msra.mxu0 0.0
        %3105 = vmatprep.subr.mxu0 0.0
        %3106 = vmatpush1.xpose.msra.mxu0 0.0
        %3107 = vmatprep.subr.mxu0 0.0
        %3108 = vmatpush1.xpose.msra.mxu0 %v3075
        %3109 = vmatprep.subr.mxu0 0.0
        %3110 = vmatpush2.xpose.msra.mxu0 0.0
        %3111 = vmatprep.subr.mxu0 0.0
        %3112 = vmatpush2.xpose.msra.mxu0 0.0
        %3113 = vmatprep.subr.mxu0 0.0
        %3114 = vmatpush2.xpose.msra.mxu0 0.0
        %3115 = vmatprep.subr.mxu0 0.0
        %3116 = vmatpush2.xpose.msra.mxu0 0.0
        %3117 = vmatprep.subr.mxu0 0.0
        %3118 = vmatpush2.xpose.msra.mxu0 0.0
        %3119 = vmatprep.subr.mxu0 0.0
        %3120 = vmatpush2.xpose.msra.mxu0 0.0
        %3121 = vmatprep.subr.mxu0 0.0
        %3122 = vmatpush2.xpose.msra.mxu0 0.0
        %3123 = vmatprep.subr.mxu0 0.0
        %3124 = vmatpush2.xpose.msra.mxu0 0.0
        %3125 = vmatprep.subr.mxu0 0.0
        %3126 = vmatpush2.xpose.msra.mxu0 0.0
        %3127 = vmatprep.subr.mxu0 0.0
        %3128 = vmatpush2.xpose.msra.mxu0 0.0
        %3129 = vmatprep.subr.mxu0 0.0
        %3130 = vmatpush2.xpose.msra.mxu0 0.0
        %3131 = vmatprep.subr.mxu0 0.0
        %3132 = vmatpush2.xpose.msra.mxu0 0.0
        %3133 = vmatprep.subr.mxu0 0.0
        %3134 = vmatpush2.xpose.msra.mxu0 0.0
        %3135 = vmatprep.subr.mxu0 0.0
        %3136 = vmatpush2.xpose.msra.mxu0 0.0
        %3137 = vmatprep.subr.mxu0 0.0
        %3138 = vmatpush2.xpose.msra.mxu0 0.0
        %3139 = vmatprep.subr.mxu0 0.0
        %3140 = vmatpush2.xpose.msra.mxu0 0.0
        %3141 = vmatprep.mubr.f32.mxu0 0.0
        %3142 = vmatmul.mubr.f32.gmra.mxu0 %v3072
        %v3143 = vpop.f32.mrf.mxu0
        %v3144 = vadd.f32 %v785, %v3143
        %v3145 = vpop.f32.mrf.mxu0
        %3146 = vdwg.mxu0
        %v3147 = vsel %vm998, %v3144, -inf
        %3148 = vmax.xlane.f32.xlu0 %v3147
        %v3149 = vpop.xlane.xlu0 %3148
        %v3150 = vsub.f32 %v3144, %v3149
        %v3151 = vmul.f32 %v3150, 1.442695
        %v3152 = vpow.pop %v3151
        %v3153 = vsel %vm998, %v3152, 0.0
        %3154 = vadd.xlane.f32.xlu0 %v3153
        %v3155 = vpop.xlane.xlu0 %3154
        %v3156 = vrcp.pop %v3155
        %v3157 = vmul.f32 %v3152, %v3156
        %v3159 = vsel %vm998, %v3157, 0
        %3161 = vmatprep.subr.mxu0 0.0
        %3162 = vmatpush1.msra.mxu0 0.0
        %3163 = vmatprep.subr.mxu0 0.0
        %3164 = vmatpush1.msra.mxu0 0.0
        %3165 = vmatprep.subr.mxu0 0.0
        %3166 = vmatpush1.msra.mxu0 0.0
        %3167 = vmatprep.subr.mxu0 0.0
        %3168 = vmatpush1.msra.mxu0 0.0
        %3169 = vmatprep.subr.mxu0 0.0
        %3170 = vmatpush1.msra.mxu0 0.0
        %3171 = vmatprep.subr.mxu0 0.0
        %3172 = vmatpush1.msra.mxu0 0.0
        %3173 = vmatprep.subr.mxu0 0.0
        %3174 = vmatpush1.msra.mxu0 0.0
        %3175 = vmatprep.subr.mxu0 0.0
        %3176 = vmatpush1.msra.mxu0 0.0
        %3177 = vmatprep.subr.mxu0 0.0
        %3178 = vmatpush1.msra.mxu0 0.0
        %3179 = vmatprep.subr.mxu0 0.0
        %3180 = vmatpush1.msra.mxu0 0.0
        %3181 = vmatprep.subr.mxu0 0.0
        %3182 = vmatpush1.msra.mxu0 0.0
        %3183 = vmatprep.subr.mxu0 0.0
        %3184 = vmatpush1.msra.mxu0 0.0
        %3185 = vmatprep.subr.mxu0 0.0
        %3186 = vmatpush1.msra.mxu0 0.0
        %3187 = vmatprep.subr.mxu0 0.0
        %3188 = vmatpush1.msra.mxu0 0.0
        %3189 = vmatprep.subr.mxu0 0.0
        %3190 = vmatpush1.msra.mxu0 0.0
        %3191 = vmatprep.subr.mxu0 0.0
        %3192 = vmatpush1.msra.mxu0 %v3066
        %3193 = vmatprep.subr.mxu0 0.0
        %3194 = vmatpush2.msra.mxu0 0.0
        %3195 = vmatprep.subr.mxu0 0.0
        %3196 = vmatpush2.msra.mxu0 0.0
        %3197 = vmatprep.subr.mxu0 0.0
        %3198 = vmatpush2.msra.mxu0 0.0
        %3199 = vmatprep.subr.mxu0 0.0
        %3200 = vmatpush2.msra.mxu0 0.0
        %3201 = vmatprep.subr.mxu0 0.0
        %3202 = vmatpush2.msra.mxu0 0.0
        %3203 = vmatprep.subr.mxu0 0.0
        %3204 = vmatpush2.msra.mxu0 0.0
        %3205 = vmatprep.subr.mxu0 0.0
        %3206 = vmatpush2.msra.mxu0 0.0
        %3207 = vmatprep.subr.mxu0 0.0
        %3208 = vmatpush2.msra.mxu0 0.0
        %3209 = vmatprep.subr.mxu0 0.0
        %3210 = vmatpush2.msra.mxu0 0.0
        %3211 = vmatprep.subr.mxu0 0.0
        %3212 = vmatpush2.msra.mxu0 0.0
        %3213 = vmatprep.subr.mxu0 0.0
        %3214 = vmatpush2.msra.mxu0 0.0
        %3215 = vmatprep.subr.mxu0 0.0
        %3216 = vmatpush2.msra.mxu0 0.0
        %3217 = vmatprep.subr.mxu0 0.0
        %3218 = vmatpush2.msra.mxu0 0.0
        %3219 = vmatprep.subr.mxu0 0.0
        %3220 = vmatpush2.msra.mxu0 0.0
        %3221 = vmatprep.subr.mxu0 0.0
        %3222 = vmatpush2.msra.mxu0 0.0
        %3223 = vmatprep.subr.mxu0 0.0
        %3224 = vmatpush2.msra.mxu0 0.0
        %3225 = vmatprep.mubr.f32.mxu0 0.0
        %3226 = vmatmul.mubr.f32.gmra.mxu0 %v3159
        %v3227 = vpop.f32.mrf.mxu0
        %v3228 = vadd.f32 0.0, %v3227
        %v3229 = vpop.f32.mrf.mxu0
        %3230 = vdwg.mxu0
        %3231 = vst.msk [vmem:[#allocation2] sm:$0xff] %vm998, %v3228
        %3232 = vrot.lane.b32.xlu0 %v2959, 120
        %v3233 = vpop.permute.xlu0 %3232
        %3234 = vrot.lane.b32.xlu0 %v3014, 120
        %v3235 = vpop.permute.xlu0 %3234
        %v3236 = vsel %vm998, %v3233, 0
        %v3238 = vsel %vm998, %v3235, 0
        %3240 = vmatprep.subr.mxu0 0.0
        %3241 = vmatpush1.xpose.msra.mxu0 0.0
        %3242 = vmatprep.subr.mxu0 0.0
        %3243 = vmatpush1.xpose.msra.mxu0 0.0
        %3244 = vmatprep.subr.mxu0 0.0
        %3245 = vmatpush1.xpose.msra.mxu0 0.0
        %3246 = vmatprep.subr.mxu0 0.0
        %3247 = vmatpush1.xpose.msra.mxu0 0.0
        %3248 = vmatprep.subr.mxu0 0.0
        %3249 = vmatpush1.xpose.msra.mxu0 0.0
        %3250 = vmatprep.subr.mxu0 0.0
        %3251 = vmatpush1.xpose.msra.mxu0 0.0
        %3252 = vmatprep.subr.mxu0 0.0
        %3253 = vmatpush1.xpose.msra.mxu0 0.0
        %3254 = vmatprep.subr.mxu0 0.0
        %3255 = vmatpush1.xpose.msra.mxu0 0.0
        %3256 = vmatprep.subr.mxu0 0.0
        %3257 = vmatpush1.xpose.msra.mxu0 0.0
        %3258 = vmatprep.subr.mxu0 0.0
        %3259 = vmatpush1.xpose.msra.mxu0 0.0
        %3260 = vmatprep.subr.mxu0 0.0
        %3261 = vmatpush1.xpose.msra.mxu0 0.0
        %3262 = vmatprep.subr.mxu0 0.0
        %3263 = vmatpush1.xpose.msra.mxu0 0.0
        %3264 = vmatprep.subr.mxu0 0.0
        %3265 = vmatpush1.xpose.msra.mxu0 0.0
        %3266 = vmatprep.subr.mxu0 0.0
        %3267 = vmatpush1.xpose.msra.mxu0 0.0
        %3268 = vmatprep.subr.mxu0 0.0
        %3269 = vmatpush1.xpose.msra.mxu0 0.0
        %3270 = vmatprep.subr.mxu0 0.0
        %3271 = vmatpush1.xpose.msra.mxu0 %v3238
        %3272 = vmatprep.subr.mxu0 0.0
        %3273 = vmatpush2.xpose.msra.mxu0 0.0
        %3274 = vmatprep.subr.mxu0 0.0
        %3275 = vmatpush2.xpose.msra.mxu0 0.0
        %3276 = vmatprep.subr.mxu0 0.0
        %3277 = vmatpush2.xpose.msra.mxu0 0.0
        %3278 = vmatprep.subr.mxu0 0.0
        %3279 = vmatpush2.xpose.msra.mxu0 0.0
        %3280 = vmatprep.subr.mxu0 0.0
        %3281 = vmatpush2.xpose.msra.mxu0 0.0
        %3282 = vmatprep.subr.mxu0 0.0
        %3283 = vmatpush2.xpose.msra.mxu0 0.0
        %3284 = vmatprep.subr.mxu0 0.0
        %3285 = vmatpush2.xpose.msra.mxu0 0.0
        %3286 = vmatprep.subr.mxu0 0.0
        %3287 = vmatpush2.xpose.msra.mxu0 0.0
        %3288 = vmatprep.subr.mxu0 0.0
        %3289 = vmatpush2.xpose.msra.mxu0 0.0
        %3290 = vmatprep.subr.mxu0 0.0
        %3291 = vmatpush2.xpose.msra.mxu0 0.0
        %3292 = vmatprep.subr.mxu0 0.0
        %3293 = vmatpush2.xpose.msra.mxu0 0.0
        %3294 = vmatprep.subr.mxu0 0.0
        %3295 = vmatpush2.xpose.msra.mxu0 0.0
        %3296 = vmatprep.subr.mxu0 0.0
        %3297 = vmatpush2.xpose.msra.mxu0 0.0
        %3298 = vmatprep.subr.mxu0 0.0
        %3299 = vmatpush2.xpose.msra.mxu0 0.0
        %3300 = vmatprep.subr.mxu0 0.0
        %3301 = vmatpush2.xpose.msra.mxu0 0.0
        %3302 = vmatprep.subr.mxu0 0.0
        %3303 = vmatpush2.xpose.msra.mxu0 0.0
        %3304 = vmatprep.mubr.f32.mxu0 0.0
        %3305 = vmatmul.mubr.f32.gmra.mxu0 %v3236
        %v3306 = vpop.f32.mrf.mxu0
        %v3307 = vadd.f32 %v785, %v3306
        %v3308 = vpop.f32.mrf.mxu0
        %3309 = vdwg.mxu0
        %v3310 = vsel %vm998, %v3307, -inf
        %3311 = vmax.xlane.f32.xlu0 %v3310
        %v3312 = vpop.xlane.xlu0 %3311
        %v3313 = vsub.f32 %v3307, %v3312
        %v3314 = vmul.f32 %v3313, 1.442695
        %v3315 = vpow.pop %v3314
        %v3316 = vsel %vm998, %v3315, 0.0
        %3317 = vadd.xlane.f32.xlu0 %v3316
        %v3318 = vpop.xlane.xlu0 %3317
        %v3319 = vrcp.pop %v3318
        %v3320 = vmul.f32 %v3315, %v3319
        %3322 = vrot.lane.b32.xlu0 %v3066, 120
        %v3323 = vpop.permute.xlu0 %3322
        %v3326 = vsel %vm998, %v3320, 0
        %3328 = vmatprep.subr.mxu0 0.0
        %3329 = vmatpush1.msra.mxu0 0.0
        %3330 = vmatprep.subr.mxu0 0.0
        %3331 = vmatpush1.msra.mxu0 0.0
        %3332 = vmatprep.subr.mxu0 0.0
        %3333 = vmatpush1.msra.mxu0 0.0
        %3334 = vmatprep.subr.mxu0 0.0
        %3335 = vmatpush1.msra.mxu0 0.0
        %3336 = vmatprep.subr.mxu0 0.0
        %3337 = vmatpush1.msra.mxu0 0.0
        %3338 = vmatprep.subr.mxu0 0.0
        %3339 = vmatpush1.msra.mxu0 0.0
        %3340 = vmatprep.subr.mxu0 0.0
        %3341 = vmatpush1.msra.mxu0 0.0
        %3342 = vmatprep.subr.mxu0 0.0
        %3343 = vmatpush1.msra.mxu0 0.0
        %3344 = vmatprep.subr.mxu0 0.0
        %3345 = vmatpush1.msra.mxu0 0.0
        %3346 = vmatprep.subr.mxu0 0.0
        %3347 = vmatpush1.msra.mxu0 0.0
        %3348 = vmatprep.subr.mxu0 0.0
        %3349 = vmatpush1.msra.mxu0 0.0
        %3350 = vmatprep.subr.mxu0 0.0
        %3351 = vmatpush1.msra.mxu0 0.0
        %3352 = vmatprep.subr.mxu0 0.0
        %3353 = vmatpush1.msra.mxu0 0.0
        %3354 = vmatprep.subr.mxu0 0.0
        %3355 = vmatpush1.msra.mxu0 0.0
        %3356 = vmatprep.subr.mxu0 0.0
        %3357 = vmatpush1.msra.mxu0 0.0
        %3358 = vmatprep.subr.mxu0 0.0
        %3359 = vmatpush1.msra.mxu0 %v3323
        %3360 = vmatprep.subr.mxu0 0.0
        %3361 = vmatpush2.msra.mxu0 0.0
        %3362 = vmatprep.subr.mxu0 0.0
        %3363 = vmatpush2.msra.mxu0 0.0
        %3364 = vmatprep.subr.mxu0 0.0
        %3365 = vmatpush2.msra.mxu0 0.0
        %3366 = vmatprep.subr.mxu0 0.0
        %3367 = vmatpush2.msra.mxu0 0.0
        %3368 = vmatprep.subr.mxu0 0.0
        %3369 = vmatpush2.msra.mxu0 0.0
        %3370 = vmatprep.subr.mxu0 0.0
        %3371 = vmatpush2.msra.mxu0 0.0
        %3372 = vmatprep.subr.mxu0 0.0
        %3373 = vmatpush2.msra.mxu0 0.0
        %3374 = vmatprep.subr.mxu0 0.0
        %3375 = vmatpush2.msra.mxu0 0.0
        %3376 = vmatprep.subr.mxu0 0.0
        %3377 = vmatpush2.msra.mxu0 0.0
        %3378 = vmatprep.subr.mxu0 0.0
        %3379 = vmatpush2.msra.mxu0 0.0
        %3380 = vmatprep.subr.mxu0 0.0
        %3381 = vmatpush2.msra.mxu0 0.0
        %3382 = vmatprep.subr.mxu0 0.0
        %3383 = vmatpush2.msra.mxu0 0.0
        %3384 = vmatprep.subr.mxu0 0.0
        %3385 = vmatpush2.msra.mxu0 0.0
        %3386 = vmatprep.subr.mxu0 0.0
        %3387 = vmatpush2.msra.mxu0 0.0
        %3388 = vmatprep.subr.mxu0 0.0
        %3389 = vmatpush2.msra.mxu0 0.0
        %3390 = vmatprep.subr.mxu0 0.0
        %3391 = vmatpush2.msra.mxu0 0.0
        %3392 = vmatprep.mubr.f32.mxu0 0.0
        %3393 = vmatmul.mubr.f32.gmra.mxu0 %v3326
        %v3394 = vpop.f32.mrf.mxu0
        %v3395 = vadd.f32 0.0, %v3394
        %v3396 = vpop.f32.mrf.mxu0
        %3397 = vdwg.mxu0
        %3399 = vrot.lane.b32.xlu0 %v3395, 8
        %v3400 = vpop.permute.xlu0 %3399
        %3402 = vst.msk [vmem:[#allocation2] sm:$0xff] %vm1330, %v3400
        %3403 = vrot.lane.b32.xlu0 %v2959, 112
        %v3404 = vpop.permute.xlu0 %3403
        %3405 = vrot.lane.b32.xlu0 %v3014, 112
        %v3406 = vpop.permute.xlu0 %3405
        %v3407 = vsel %vm998, %v3404, 0
        %v3409 = vsel %vm998, %v3406, 0
        %3411 = vmatprep.subr.mxu0 0.0
        %3412 = vmatpush1.xpose.msra.mxu0 0.0
        %3413 = vmatprep.subr.mxu0 0.0
        %3414 = vmatpush1.xpose.msra.mxu0 0.0
        %3415 = vmatprep.subr.mxu0 0.0
        %3416 = vmatpush1.xpose.msra.mxu0 0.0
        %3417 = vmatprep.subr.mxu0 0.0
        %3418 = vmatpush1.xpose.msra.mxu0 0.0
        %3419 = vmatprep.subr.mxu0 0.0
        %3420 = vmatpush1.xpose.msra.mxu0 0.0
        %3421 = vmatprep.subr.mxu0 0.0
        %3422 = vmatpush1.xpose.msra.mxu0 0.0
        %3423 = vmatprep.subr.mxu0 0.0
        %3424 = vmatpush1.xpose.msra.mxu0 0.0
        %3425 = vmatprep.subr.mxu0 0.0
        %3426 = vmatpush1.xpose.msra.mxu0 0.0
        %3427 = vmatprep.subr.mxu0 0.0
        %3428 = vmatpush1.xpose.msra.mxu0 0.0
        %3429 = vmatprep.subr.mxu0 0.0
        %3430 = vmatpush1.xpose.msra.mxu0 0.0
        %3431 = vmatprep.subr.mxu0 0.0
        %3432 = vmatpush1.xpose.msra.mxu0 0.0
        %3433 = vmatprep.subr.mxu0 0.0
        %3434 = vmatpush1.xpose.msra.mxu0 0.0
        %3435 = vmatprep.subr.mxu0 0.0
        %3436 = vmatpush1.xpose.msra.mxu0 0.0
        %3437 = vmatprep.subr.mxu0 0.0
        %3438 = vmatpush1.xpose.msra.mxu0 0.0
        %3439 = vmatprep.subr.mxu0 0.0
        %3440 = vmatpush1.xpose.msra.mxu0 0.0
        %3441 = vmatprep.subr.mxu0 0.0
        %3442 = vmatpush1.xpose.msra.mxu0 %v3409
        %3443 = vmatprep.subr.mxu0 0.0
        %3444 = vmatpush2.xpose.msra.mxu0 0.0
        %3445 = vmatprep.subr.mxu0 0.0
        %3446 = vmatpush2.xpose.msra.mxu0 0.0
        %3447 = vmatprep.subr.mxu0 0.0
        %3448 = vmatpush2.xpose.msra.mxu0 0.0
        %3449 = vmatprep.subr.mxu0 0.0
        %3450 = vmatpush2.xpose.msra.mxu0 0.0
        %3451 = vmatprep.subr.mxu0 0.0
        %3452 = vmatpush2.xpose.msra.mxu0 0.0
        %3453 = vmatprep.subr.mxu0 0.0
        %3454 = vmatpush2.xpose.msra.mxu0 0.0
        %3455 = vmatprep.subr.mxu0 0.0
        %3456 = vmatpush2.xpose.msra.mxu0 0.0
        %3457 = vmatprep.subr.mxu0 0.0
        %3458 = vmatpush2.xpose.msra.mxu0 0.0
        %3459 = vmatprep.subr.mxu0 0.0
        %3460 = vmatpush2.xpose.msra.mxu0 0.0
        %3461 = vmatprep.subr.mxu0 0.0
        %3462 = vmatpush2.xpose.msra.mxu0 0.0
        %3463 = vmatprep.subr.mxu0 0.0
        %3464 = vmatpush2.xpose.msra.mxu0 0.0
        %3465 = vmatprep.subr.mxu0 0.0
        %3466 = vmatpush2.xpose.msra.mxu0 0.0
        %3467 = vmatprep.subr.mxu0 0.0
        %3468 = vmatpush2.xpose.msra.mxu0 0.0
        %3469 = vmatprep.subr.mxu0 0.0
        %3470 = vmatpush2.xpose.msra.mxu0 0.0
        %3471 = vmatprep.subr.mxu0 0.0
        %3472 = vmatpush2.xpose.msra.mxu0 0.0
        %3473 = vmatprep.subr.mxu0 0.0
        %3474 = vmatpush2.xpose.msra.mxu0 0.0
        %3475 = vmatprep.mubr.f32.mxu0 0.0
        %3476 = vmatmul.mubr.f32.gmra.mxu0 %v3407
        %v3477 = vpop.f32.mrf.mxu0
        %v3478 = vadd.f32 %v785, %v3477
        %v3479 = vpop.f32.mrf.mxu0
        %3480 = vdwg.mxu0
        %v3481 = vsel %vm998, %v3478, -inf
        %3482 = vmax.xlane.f32.xlu0 %v3481
        %v3483 = vpop.xlane.xlu0 %3482
        %v3484 = vsub.f32 %v3478, %v3483
        %v3485 = vmul.f32 %v3484, 1.442695
        %v3486 = vpow.pop %v3485
        %v3487 = vsel %vm998, %v3486, 0.0
        %3488 = vadd.xlane.f32.xlu0 %v3487
        %v3489 = vpop.xlane.xlu0 %3488
        %v3490 = vrcp.pop %v3489
        %v3491 = vmul.f32 %v3486, %v3490
        %3492 = vrot.lane.b32.xlu0 %v3066, 112
        %v3493 = vpop.permute.xlu0 %3492
        %v3496 = vsel %vm998, %v3491, 0
        %3498 = vmatprep.subr.mxu0 0.0
        %3499 = vmatpush1.msra.mxu0 0.0
        %3500 = vmatprep.subr.mxu0 0.0
        %3501 = vmatpush1.msra.mxu0 0.0
        %3502 = vmatprep.subr.mxu0 0.0
        %3503 = vmatpush1.msra.mxu0 0.0
        %3504 = vmatprep.subr.mxu0 0.0
        %3505 = vmatpush1.msra.mxu0 0.0
        %3506 = vmatprep.subr.mxu0 0.0
        %3507 = vmatpush1.msra.mxu0 0.0
        %3508 = vmatprep.subr.mxu0 0.0
        %3509 = vmatpush1.msra.mxu0 0.0
        %3510 = vmatprep.subr.mxu0 0.0
        %3511 = vmatpush1.msra.mxu0 0.0
        %3512 = vmatprep.subr.mxu0 0.0
        %3513 = vmatpush1.msra.mxu0 0.0
        %3514 = vmatprep.subr.mxu0 0.0
        %3515 = vmatpush1.msra.mxu0 0.0
        %3516 = vmatprep.subr.mxu0 0.0
        %3517 = vmatpush1.msra.mxu0 0.0
        %3518 = vmatprep.subr.mxu0 0.0
        %3519 = vmatpush1.msra.mxu0 0.0
        %3520 = vmatprep.subr.mxu0 0.0
        %3521 = vmatpush1.msra.mxu0 0.0
        %3522 = vmatprep.subr.mxu0 0.0
        %3523 = vmatpush1.msra.mxu0 0.0
        %3524 = vmatprep.subr.mxu0 0.0
        %3525 = vmatpush1.msra.mxu0 0.0
        %3526 = vmatprep.subr.mxu0 0.0
        %3527 = vmatpush1.msra.mxu0 0.0
        %3528 = vmatprep.subr.mxu0 0.0
        %3529 = vmatpush1.msra.mxu0 %v3493
        %3530 = vmatprep.subr.mxu0 0.0
        %3531 = vmatpush2.msra.mxu0 0.0
        %3532 = vmatprep.subr.mxu0 0.0
        %3533 = vmatpush2.msra.mxu0 0.0
        %3534 = vmatprep.subr.mxu0 0.0
        %3535 = vmatpush2.msra.mxu0 0.0
        %3536 = vmatprep.subr.mxu0 0.0
        %3537 = vmatpush2.msra.mxu0 0.0
        %3538 = vmatprep.subr.mxu0 0.0
        %3539 = vmatpush2.msra.mxu0 0.0
        %3540 = vmatprep.subr.mxu0 0.0
        %3541 = vmatpush2.msra.mxu0 0.0
        %3542 = vmatprep.subr.mxu0 0.0
        %3543 = vmatpush2.msra.mxu0 0.0
        %3544 = vmatprep.subr.mxu0 0.0
        %3545 = vmatpush2.msra.mxu0 0.0
        %3546 = vmatprep.subr.mxu0 0.0
        %3547 = vmatpush2.msra.mxu0 0.0
        %3548 = vmatprep.subr.mxu0 0.0
        %3549 = vmatpush2.msra.mxu0 0.0
        %3550 = vmatprep.subr.mxu0 0.0
        %3551 = vmatpush2.msra.mxu0 0.0
        %3552 = vmatprep.subr.mxu0 0.0
        %3553 = vmatpush2.msra.mxu0 0.0
        %3554 = vmatprep.subr.mxu0 0.0
        %3555 = vmatpush2.msra.mxu0 0.0
        %3556 = vmatprep.subr.mxu0 0.0
        %3557 = vmatpush2.msra.mxu0 0.0
        %3558 = vmatprep.subr.mxu0 0.0
        %3559 = vmatpush2.msra.mxu0 0.0
        %3560 = vmatprep.subr.mxu0 0.0
        %3561 = vmatpush2.msra.mxu0 0.0
        %3562 = vmatprep.mubr.f32.mxu0 0.0
        %3563 = vmatmul.mubr.f32.gmra.mxu0 %v3496
        %v3564 = vpop.f32.mrf.mxu0
        %v3565 = vadd.f32 0.0, %v3564
        %v3566 = vpop.f32.mrf.mxu0
        %3567 = vdwg.mxu0
        %3569 = vrot.lane.b32.xlu0 %v3565, 16
        %v3570 = vpop.permute.xlu0 %3569
        %3572 = vst.msk [vmem:[#allocation2] sm:$0xff] %vm1501, %v3570
        %3573 = vrot.lane.b32.xlu0 %v2959, 104
        %v3574 = vpop.permute.xlu0 %3573
        %3575 = vrot.lane.b32.xlu0 %v3014, 104
        %v3576 = vpop.permute.xlu0 %3575
        %v3577 = vsel %vm998, %v3574, 0
        %v3579 = vsel %vm998, %v3576, 0
        %3581 = vmatprep.subr.mxu0 0.0
        %3582 = vmatpush1.xpose.msra.mxu0 0.0
        %3583 = vmatprep.subr.mxu0 0.0
        %3584 = vmatpush1.xpose.msra.mxu0 0.0
        %3585 = vmatprep.subr.mxu0 0.0
        %3586 = vmatpush1.xpose.msra.mxu0 0.0
        %3587 = vmatprep.subr.mxu0 0.0
        %3588 = vmatpush1.xpose.msra.mxu0 0.0
        %3589 = vmatprep.subr.mxu0 0.0
        %3590 = vmatpush1.xpose.msra.mxu0 0.0
        %3591 = vmatprep.subr.mxu0 0.0
        %3592 = vmatpush1.xpose.msra.mxu0 0.0
        %3593 = vmatprep.subr.mxu0 0.0
        %3594 = vmatpush1.xpose.msra.mxu0 0.0
        %3595 = vmatprep.subr.mxu0 0.0
        %3596 = vmatpush1.xpose.msra.mxu0 0.0
        %3597 = vmatprep.subr.mxu0 0.0
        %3598 = vmatpush1.xpose.msra.mxu0 0.0
        %3599 = vmatprep.subr.mxu0 0.0
        %3600 = vmatpush1.xpose.msra.mxu0 0.0
        %3601 = vmatprep.subr.mxu0 0.0
        %3602 = vmatpush1.xpose.msra.mxu0 0.0
        %3603 = vmatprep.subr.mxu0 0.0
        %3604 = vmatpush1.xpose.msra.mxu0 0.0
        %3605 = vmatprep.subr.mxu0 0.0
        %3606 = vmatpush1.xpose.msra.mxu0 0.0
        %3607 = vmatprep.subr.mxu0 0.0
        %3608 = vmatpush1.xpose.msra.mxu0 0.0
        %3609 = vmatprep.subr.mxu0 0.0
        %3610 = vmatpush1.xpose.msra.mxu0 0.0
        %3611 = vmatprep.subr.mxu0 0.0
        %3612 = vmatpush1.xpose.msra.mxu0 %v3579
        %3613 = vmatprep.subr.mxu0 0.0
        %3614 = vmatpush2.xpose.msra.mxu0 0.0
        %3615 = vmatprep.subr.mxu0 0.0
        %3616 = vmatpush2.xpose.msra.mxu0 0.0
        %3617 = vmatprep.subr.mxu0 0.0
        %3618 = vmatpush2.xpose.msra.mxu0 0.0
        %3619 = vmatprep.subr.mxu0 0.0
        %3620 = vmatpush2.xpose.msra.mxu0 0.0
        %3621 = vmatprep.subr.mxu0 0.0
        %3622 = vmatpush2.xpose.msra.mxu0 0.0
        %3623 = vmatprep.subr.mxu0 0.0
        %3624 = vmatpush2.xpose.msra.mxu0 0.0
        %3625 = vmatprep.subr.mxu0 0.0
        %3626 = vmatpush2.xpose.msra.mxu0 0.0
        %3627 = vmatprep.subr.mxu0 0.0
        %3628 = vmatpush2.xpose.msra.mxu0 0.0
        %3629 = vmatprep.subr.mxu0 0.0
        %3630 = vmatpush2.xpose.msra.mxu0 0.0
        %3631 = vmatprep.subr.mxu0 0.0
        %3632 = vmatpush2.xpose.msra.mxu0 0.0
        %3633 = vmatprep.subr.mxu0 0.0
        %3634 = vmatpush2.xpose.msra.mxu0 0.0
        %3635 = vmatprep.subr.mxu0 0.0
        %3636 = vmatpush2.xpose.msra.mxu0 0.0
        %3637 = vmatprep.subr.mxu0 0.0
        %3638 = vmatpush2.xpose.msra.mxu0 0.0
        %3639 = vmatprep.subr.mxu0 0.0
        %3640 = vmatpush2.xpose.msra.mxu0 0.0
        %3641 = vmatprep.subr.mxu0 0.0
        %3642 = vmatpush2.xpose.msra.mxu0 0.0
        %3643 = vmatprep.subr.mxu0 0.0
        %3644 = vmatpush2.xpose.msra.mxu0 0.0
        %3645 = vmatprep.mubr.f32.mxu0 0.0
        %3646 = vmatmul.mubr.f32.gmra.mxu0 %v3577
        %v3647 = vpop.f32.mrf.mxu0
        %v3648 = vadd.f32 %v785, %v3647
        %v3649 = vpop.f32.mrf.mxu0
        %3650 = vdwg.mxu0
        %v3651 = vsel %vm998, %v3648, -inf
        %3652 = vmax.xlane.f32.xlu0 %v3651
        %v3653 = vpop.xlane.xlu0 %3652
        %v3654 = vsub.f32 %v3648, %v3653
        %v3655 = vmul.f32 %v3654, 1.442695
        %v3656 = vpow.pop %v3655
        %v3657 = vsel %vm998, %v3656, 0.0
        %3658 = vadd.xlane.f32.xlu0 %v3657
        %v3659 = vpop.xlane.xlu0 %3658
        %v3660 = vrcp.pop %v3659
        %v3661 = vmul.f32 %v3656, %v3660
        %3662 = vrot.lane.b32.xlu0 %v3066, 104
        %v3663 = vpop.permute.xlu0 %3662
        %v3666 = vsel %vm998, %v3661, 0
        %3668 = vmatprep.subr.mxu0 0.0
        %3669 = vmatpush1.msra.mxu0 0.0
        %3670 = vmatprep.subr.mxu0 0.0
        %3671 = vmatpush1.msra.mxu0 0.0
        %3672 = vmatprep.subr.mxu0 0.0
        %3673 = vmatpush1.msra.mxu0 0.0
        %3674 = vmatprep.subr.mxu0 0.0
        %3675 = vmatpush1.msra.mxu0 0.0
        %3676 = vmatprep.subr.mxu0 0.0
        %3677 = vmatpush1.msra.mxu0 0.0
        %3678 = vmatprep.subr.mxu0 0.0
        %3679 = vmatpush1.msra.mxu0 0.0
        %3680 = vmatprep.subr.mxu0 0.0
        %3681 = vmatpush1.msra.mxu0 0.0
        %3682 = vmatprep.subr.mxu0 0.0
        %3683 = vmatpush1.msra.mxu0 0.0
        %3684 = vmatprep.subr.mxu0 0.0
        %3685 = vmatpush1.msra.mxu0 0.0
        %3686 = vmatprep.subr.mxu0 0.0
        %3687 = vmatpush1.msra.mxu0 0.0
        %3688 = vmatprep.subr.mxu0 0.0
        %3689 = vmatpush1.msra.mxu0 0.0
        %3690 = vmatprep.subr.mxu0 0.0
        %3691 = vmatpush1.msra.mxu0 0.0
        %3692 = vmatprep.subr.mxu0 0.0
        %3693 = vmatpush1.msra.mxu0 0.0
        %3694 = vmatprep.subr.mxu0 0.0
        %3695 = vmatpush1.msra.mxu0 0.0
        %3696 = vmatprep.subr.mxu0 0.0
        %3697 = vmatpush1.msra.mxu0 0.0
        %3698 = vmatprep.subr.mxu0 0.0
        %3699 = vmatpush1.msra.mxu0 %v3663
        %3700 = vmatprep.subr.mxu0 0.0
        %3701 = vmatpush2.msra.mxu0 0.0
        %3702 = vmatprep.subr.mxu0 0.0
        %3703 = vmatpush2.msra.mxu0 0.0
        %3704 = vmatprep.subr.mxu0 0.0
        %3705 = vmatpush2.msra.mxu0 0.0
        %3706 = vmatprep.subr.mxu0 0.0
        %3707 = vmatpush2.msra.mxu0 0.0
        %3708 = vmatprep.subr.mxu0 0.0
        %3709 = vmatpush2.msra.mxu0 0.0
        %3710 = vmatprep.subr.mxu0 0.0
        %3711 = vmatpush2.msra.mxu0 0.0
        %3712 = vmatprep.subr.mxu0 0.0
        %3713 = vmatpush2.msra.mxu0 0.0
        %3714 = vmatprep.subr.mxu0 0.0
        %3715 = vmatpush2.msra.mxu0 0.0
        %3716 = vmatprep.subr.mxu0 0.0
        %3717 = vmatpush2.msra.mxu0 0.0
        %3718 = vmatprep.subr.mxu0 0.0
        %3719 = vmatpush2.msra.mxu0 0.0
        %3720 = vmatprep.subr.mxu0 0.0
        %3721 = vmatpush2.msra.mxu0 0.0
        %3722 = vmatprep.subr.mxu0 0.0
        %3723 = vmatpush2.msra.mxu0 0.0
        %3724 = vmatprep.subr.mxu0 0.0
        %3725 = vmatpush2.msra.mxu0 0.0
        %3726 = vmatprep.subr.mxu0 0.0
        %3727 = vmatpush2.msra.mxu0 0.0
        %3728 = vmatprep.subr.mxu0 0.0
        %3729 = vmatpush2.msra.mxu0 0.0
        %3730 = vmatprep.subr.mxu0 0.0
        %3731 = vmatpush2.msra.mxu0 0.0
        %3732 = vmatprep.mubr.f32.mxu0 0.0
        %3733 = vmatmul.mubr.f32.gmra.mxu0 %v3666
        %v3734 = vpop.f32.mrf.mxu0
        %v3735 = vadd.f32 0.0, %v3734
        %v3736 = vpop.f32.mrf.mxu0
        %3737 = vdwg.mxu0
        %3739 = vrot.lane.b32.xlu0 %v3735, 24
        %v3740 = vpop.permute.xlu0 %3739
        %3742 = vst.msk [vmem:[#allocation2] sm:$0xff] %vm1672, %v3740
        %v3743 = vld [vmem:[#allocation2] sm:$0xff]
        %v3744 = vpack.c.bf16 %v3743, %v3743
        %v3749 = vunpack.c.l.b16 %v2877
        %v3750 = vunpack.c.l.b16 %v2878
        %v3751 = vunpack.c.l.b16 %v2879
        %v3752 = vunpack.c.l.b16 %v2880
        %v3753 = vpack.c.b16 %v3750, %v3749
        %v3754 = vpack.c.b16 %v3752, %v3751
        %v3758 = vsel %vm806, %v3744, 0
        %3760 = vmatprep.subr.bf16.mxu0 0
        %3761 = vmatpush1.bf16.msra.mxu0 0
        %3762 = vmatprep.subr.bf16.mxu0 0
        %3763 = vmatpush1.bf16.msra.mxu0 0
        %3764 = vmatprep.subr.bf16.mxu0 0
        %3765 = vmatpush1.bf16.msra.mxu0 0
        %3766 = vmatprep.subr.bf16.mxu0 0
        %3767 = vmatpush1.bf16.msra.mxu0 0
        %3768 = vmatprep.subr.bf16.mxu0 0
        %3769 = vmatpush1.bf16.msra.mxu0 0
        %3770 = vmatprep.subr.bf16.mxu0 0
        %3771 = vmatpush1.bf16.msra.mxu0 0
        %3772 = vmatprep.subr.bf16.mxu0 0
        %3773 = vmatpush1.bf16.msra.mxu0 %v3754
        %3774 = vmatprep.subr.bf16.mxu0 0
        %3775 = vmatpush1.bf16.msra.mxu0 %v3753
        %3776 = vmatprep.subr.bf16.mxu0 0
        %3777 = vmatpush2.bf16.msra.mxu0 0
        %3778 = vmatprep.subr.bf16.mxu0 0
        %3779 = vmatpush2.bf16.msra.mxu0 0
        %3780 = vmatprep.subr.bf16.mxu0 0
        %3781 = vmatpush2.bf16.msra.mxu0 0
        %3782 = vmatprep.subr.bf16.mxu0 0
        %3783 = vmatpush2.bf16.msra.mxu0 0
        %3784 = vmatprep.subr.bf16.mxu0 0
        %3785 = vmatpush2.bf16.msra.mxu0 0
        %3786 = vmatprep.subr.bf16.mxu0 0
        %3787 = vmatpush2.bf16.msra.mxu0 0
        %3788 = vmatprep.subr.bf16.mxu0 0
        %3789 = vmatpush2.bf16.msra.mxu0 0
        %3790 = vmatprep.subr.bf16.mxu0 0
        %3791 = vmatpush2.bf16.msra.mxu0 0
        %3792 = vmatprep.mubr.bf16.mxu0 0
        %3793 = vmatmul.mubr.bf16.gmra.mxu0 %v3758
        %v3794 = vpop.f32.mrf.mxu0
        %v3795 = vadd.f32 %v2855, %v3794
        %v3796 = vpop.f32.mrf.mxu0
        %v3797 = vpop.f32.mrf.mxu0
        %v3798 = vpop.f32.mrf.mxu0
        %3799 = vdwg.mxu0
        %s3800 = scalar_lea.vmem %s10, 1
        %v3801 = vld [vmem:[%s3800] sm:$0x1]
        %s3802 = scalar_lea.vmem %s11, 1
        %v3803 = vld [vmem:[%s3802] sm:$0x1]
        %s3804 = scalar_lea.vmem %s12, 16
        %v3805 = vld [vmem:[%s3804] sm:$0xf]
        %v3806 = vld [vmem:[%s3804 + $0x4] sm:$0xf]
        %v3807 = vld [vmem:[%s3804 + $0x8] sm:$0xf]
        %v3808 = vld [vmem:[%s3804 + $0xc] sm:$0xf]
        %s3809 = scalar_lea.vmem %s13, 16
        %v3810 = vld [vmem:[%s3809] sm:$0xf]
        %v3811 = vld [vmem:[%s3809 + $0x4] sm:$0xf]
        %v3812 = vld [vmem:[%s3809 + $0x8] sm:$0xf]
        %v3813 = vld [vmem:[%s3809 + $0xc] sm:$0xf]
        %s3814 = scalar_lea.vmem %s14, 16
        %v3815 = vld [vmem:[%s3814] sm:$0xf]
        %v3816 = vld [vmem:[%s3814 + $0x4] sm:$0xf]
        %v3817 = vld [vmem:[%s3814 + $0x8] sm:$0xf]
        %v3818 = vld [vmem:[%s3814 + $0xc] sm:$0xf]
        %s3819 = scalar_lea.vmem %s15, 16
        %v3820 = vld [vmem:[%s3819] sm:$0xf]
        %v3821 = vld [vmem:[%s3819 + $0x4] sm:$0xf]
        %v3822 = vld [vmem:[%s3819 + $0x8] sm:$0xf]
        %v3823 = vld [vmem:[%s3819 + $0xc] sm:$0xf]
        %v3824 = vsel %vm806, %v3795, 0.0
        %3825 = vadd.xlane.f32.xlu0 %v3824
        %v3826 = vpop.xlane.xlu0 %3825
        %v3827 = vmul.f32 %v3826, %v810
        %v3828 = vsub.f32 %v3795, %v3827
        %v3829 = vmul.f32 %v3828, %v3828
        %v3830 = vsel %vm806, %v3829, 0.0
        %3831 = vadd.xlane.f32.xlu0 %v3830
        %v3832 = vpop.xlane.xlu0 %3831
        %v3833 = vmul.f32 %v3832, %v810
        %v3834 = vadd.f32 %v3833, 1e-06
        %v3835 = vrsqrt.pop %v3834
        %v3836 = vmul.f32 %v3828, %v3835
        %v3838 = vlaneseq
        %v3839 = vshrl.u32 %v3838, 7
        %v3840 = vsub.s32 0, %v3839
        %v3841 = vrot.slane %v3801, %v3840
        %v3843 = vmul.f32 %v3836, %v3841
        %v3845 = vlaneseq
        %v3846 = vshrl.u32 %v3845, 7
        %v3847 = vsub.s32 0, %v3846
        %v3848 = vrot.slane %v3803, %v3847
        %v3850 = vadd.f32 %v3843, %v3848
        %v3851 = vpack.c.bf16 %v3850, %v3850
        %v3856 = vunpack.c.l.b16 %v3805
        %v3857 = vunpack.c.l.b16 %v3806
        %v3858 = vunpack.c.l.b16 %v3807
        %v3859 = vunpack.c.l.b16 %v3808
        %v3860 = vpack.c.b16 %v3857, %v3856
        %v3861 = vpack.c.b16 %v3859, %v3858
        %v3865 = vsel %vm806, %v3851, 0
        %3867 = vmatprep.subr.bf16.mxu0 0
        %3868 = vmatpush1.bf16.msra.mxu0 0
        %3869 = vmatprep.subr.bf16.mxu0 0
        %3870 = vmatpush1.bf16.msra.mxu0 0
        %3871 = vmatprep.subr.bf16.mxu0 0
        %3872 = vmatpush1.bf16.msra.mxu0 0
        %3873 = vmatprep.subr.bf16.mxu0 0
        %3874 = vmatpush1.bf16.msra.mxu0 0
        %3875 = vmatprep.subr.bf16.mxu0 0
        %3876 = vmatpush1.bf16.msra.mxu0 0
        %3877 = vmatprep.subr.bf16.mxu0 0
        %3878 = vmatpush1.bf16.msra.mxu0 0
        %3879 = vmatprep.subr.bf16.mxu0 0
        %3880 = vmatpush1.bf16.msra.mxu0 %v3861
        %3881 = vmatprep.subr.bf16.mxu0 0
        %3882 = vmatpush1.bf16.msra.mxu0 %v3860
        %3883 = vmatprep.subr.bf16.mxu0 0
        %3884 = vmatpush2.bf16.msra.mxu0 0
        %3885 = vmatprep.subr.bf16.mxu0 0
        %3886 = vmatpush2.bf16.msra.mxu0 0
        %3887 = vmatprep.subr.bf16.mxu0 0
        %3888 = vmatpush2.bf16.msra.mxu0 0
        %3889 = vmatprep.subr.bf16.mxu0 0
        %3890 = vmatpush2.bf16.msra.mxu0 0
        %3891 = vmatprep.subr.bf16.mxu0 0
        %3892 = vmatpush2.bf16.msra.mxu0 0
        %3893 = vmatprep.subr.bf16.mxu0 0
        %3894 = vmatpush2.bf16.msra.mxu0 0
        %3895 = vmatprep.subr.bf16.mxu0 0
        %3896 = vmatpush2.bf16.msra.mxu0 0
        %3897 = vmatprep.subr.bf16.mxu0 0
        %3898 = vmatpush2.bf16.msra.mxu0 0
        %3899 = vmatprep.mubr.bf16.mxu0 0
        %3900 = vmatmul.mubr.bf16.gmra.mxu0 %v3865
        %v3901 = vpop.f32.mrf.mxu0
        %v3902 = vadd.f32 0.0, %v3901
        %v3903 = vpop.f32.mrf.mxu0
        %v3904 = vpop.f32.mrf.mxu0
        %v3905 = vpop.f32.mrf.mxu0
        %3906 = vdwg.mxu0
        %v3911 = vunpack.c.l.b16 %v3810
        %v3912 = vunpack.c.l.b16 %v3811
        %v3913 = vunpack.c.l.b16 %v3812
        %v3914 = vunpack.c.l.b16 %v3813
        %v3915 = vpack.c.b16 %v3912, %v3911
        %v3916 = vpack.c.b16 %v3914, %v3913
        %3919 = vmatprep.subr.bf16.mxu0 0
        %3920 = vmatpush1.bf16.msra.mxu0 0
        %3921 = vmatprep.subr.bf16.mxu0 0
        %3922 = vmatpush1.bf16.msra.mxu0 0
        %3923 = vmatprep.subr.bf16.mxu0 0
        %3924 = vmatpush1.bf16.msra.mxu0 0
        %3925 = vmatprep.subr.bf16.mxu0 0
        %3926 = vmatpush1.bf16.msra.mxu0 0
        %3927 = vmatprep.subr.bf16.mxu0 0
        %3928 = vmatpush1.bf16.msra.mxu0 0
        %3929 = vmatprep.subr.bf16.mxu0 0
        %3930 = vmatpush1.bf16.msra.mxu0 0
        %3931 = vmatprep.subr.bf16.mxu0 0
        %3932 = vmatpush1.bf16.msra.mxu0 %v3916
        %3933 = vmatprep.subr.bf16.mxu0 0
        %3934 = vmatpush1.bf16.msra.mxu0 %v3915
        %3935 = vmatprep.subr.bf16.mxu0 0
        %3936 = vmatpush2.bf16.msra.mxu0 0
        %3937 = vmatprep.subr.bf16.mxu0 0
        %3938 = vmatpush2.bf16.msra.mxu0 0
        %3939 = vmatprep.subr.bf16.mxu0 0
        %3940 = vmatpush2.bf16.msra.mxu0 0
        %3941 = vmatprep.subr.bf16.mxu0 0
        %3942 = vmatpush2.bf16.msra.mxu0 0
        %3943 = vmatprep.subr.bf16.mxu0 0
        %3944 = vmatpush2.bf16.msra.mxu0 0
        %3945 = vmatprep.subr.bf16.mxu0 0
        %3946 = vmatpush2.bf16.msra.mxu0 0
        %3947 = vmatprep.subr.bf16.mxu0 0
        %3948 = vmatpush2.bf16.msra.mxu0 0
        %3949 = vmatprep.subr.bf16.mxu0 0
        %3950 = vmatpush2.bf16.msra.mxu0 0
        %3951 = vmatprep.mubr.bf16.mxu0 0
        %3952 = vmatmul.mubr.bf16.gmra.mxu0 %v1845
        %v3953 = vpop.f32.mrf.mxu0
        %v3954 = vadd.f32 0.0, %v3953
        %v3955 = vpop.f32.mrf.mxu0
        %v3956 = vpop.f32.mrf.mxu0
        %v3957 = vpop.f32.mrf.mxu0
        %3958 = vdwg.mxu0
        %v3963 = vunpack.c.l.b16 %v3815
        %v3964 = vunpack.c.l.b16 %v3816
        %v3965 = vunpack.c.l.b16 %v3817
        %v3966 = vunpack.c.l.b16 %v3818
        %v3967 = vpack.c.b16 %v3964, %v3963
        %v3968 = vpack.c.b16 %v3966, %v3965
        %3971 = vmatprep.subr.bf16.mxu0 0
        %3972 = vmatpush1.bf16.msra.mxu0 0
        %3973 = vmatprep.subr.bf16.mxu0 0
        %3974 = vmatpush1.bf16.msra.mxu0 0
        %3975 = vmatprep.subr.bf16.mxu0 0
        %3976 = vmatpush1.bf16.msra.mxu0 0
        %3977 = vmatprep.subr.bf16.mxu0 0
        %3978 = vmatpush1.bf16.msra.mxu0 0
        %3979 = vmatprep.subr.bf16.mxu0 0
        %3980 = vmatpush1.bf16.msra.mxu0 0
        %3981 = vmatprep.subr.bf16.mxu0 0
        %3982 = vmatpush1.bf16.msra.mxu0 0
        %3983 = vmatprep.subr.bf16.mxu0 0
        %3984 = vmatpush1.bf16.msra.mxu0 %v3968
        %3985 = vmatprep.subr.bf16.mxu0 0
        %3986 = vmatpush1.bf16.msra.mxu0 %v3967
        %3987 = vmatprep.subr.bf16.mxu0 0
        %3988 = vmatpush2.bf16.msra.mxu0 0
        %3989 = vmatprep.subr.bf16.mxu0 0
        %3990 = vmatpush2.bf16.msra.mxu0 0
        %3991 = vmatprep.subr.bf16.mxu0 0
        %3992 = vmatpush2.bf16.msra.mxu0 0
        %3993 = vmatprep.subr.bf16.mxu0 0
        %3994 = vmatpush2.bf16.msra.mxu0 0
        %3995 = vmatprep.subr.bf16.mxu0 0
        %3996 = vmatpush2.bf16.msra.mxu0 0
        %3997 = vmatprep.subr.bf16.mxu0 0
        %3998 = vmatpush2.bf16.msra.mxu0 0
        %3999 = vmatprep.subr.bf16.mxu0 0
        %4000 = vmatpush2.bf16.msra.mxu0 0
        %4001 = vmatprep.subr.bf16.mxu0 0
        %4002 = vmatpush2.bf16.msra.mxu0 0
        %4003 = vmatprep.mubr.bf16.mxu0 0
        %4004 = vmatmul.mubr.bf16.gmra.mxu0 %v1845
        %v4005 = vpop.f32.mrf.mxu0
        %v4006 = vadd.f32 0.0, %v4005
        %v4007 = vpop.f32.mrf.mxu0
        %v4008 = vpop.f32.mrf.mxu0
        %v4009 = vpop.f32.mrf.mxu0
        %4010 = vdwg.mxu0
        %v4012 = vsel %vm998, %v3902, 0
        %v4015 = vsel %vm998, %v3954, 0
        %4017 = vmatprep.subr.mxu0 0.0
        %4018 = vmatpush1.xpose.msra.mxu0 0.0
        %4019 = vmatprep.subr.mxu0 0.0
        %4020 = vmatpush1.xpose.msra.mxu0 0.0
        %4021 = vmatprep.subr.mxu0 0.0
        %4022 = vmatpush1.xpose.msra.mxu0 0.0
        %4023 = vmatprep.subr.mxu0 0.0
        %4024 = vmatpush1.xpose.msra.mxu0 0.0
        %4025 = vmatprep.subr.mxu0 0.0
        %4026 = vmatpush1.xpose.msra.mxu0 0.0
        %4027 = vmatprep.subr.mxu0 0.0
        %4028 = vmatpush1.xpose.msra.mxu0 0.0
        %4029 = vmatprep.subr.mxu0 0.0
        %4030 = vmatpush1.xpose.msra.mxu0 0.0
        %4031 = vmatprep.subr.mxu0 0.0
        %4032 = vmatpush1.xpose.msra.mxu0 0.0
        %4033 = vmatprep.subr.mxu0 0.0
        %4034 = vmatpush1.xpose.msra.mxu0 0.0
        %4035 = vmatprep.subr.mxu0 0.0
        %4036 = vmatpush1.xpose.msra.mxu0 0.0
        %4037 = vmatprep.subr.mxu0 0.0
        %4038 = vmatpush1.xpose.msra.mxu0 0.0
        %4039 = vmatprep.subr.mxu0 0.0
        %4040 = vmatpush1.xpose.msra.mxu0 0.0
        %4041 = vmatprep.subr.mxu0 0.0
        %4042 = vmatpush1.xpose.msra.mxu0 0.0
        %4043 = vmatprep.subr.mxu0 0.0
        %4044 = vmatpush1.xpose.msra.mxu0 0.0
        %4045 = vmatprep.subr.mxu0 0.0
        %4046 = vmatpush1.xpose.msra.mxu0 0.0
        %4047 = vmatprep.subr.mxu0 0.0
        %4048 = vmatpush1.xpose.msra.mxu0 %v4015
        %4049 = vmatprep.subr.mxu0 0.0
        %4050 = vmatpush2.xpose.msra.mxu0 0.0
        %4051 = vmatprep.subr.mxu0 0.0
        %4052 = vmatpush2.xpose.msra.mxu0 0.0
        %4053 = vmatprep.subr.mxu0 0.0
        %4054 = vmatpush2.xpose.msra.mxu0 0.0
        %4055 = vmatprep.subr.mxu0 0.0
        %4056 = vmatpush2.xpose.msra.mxu0 0.0
        %4057 = vmatprep.subr.mxu0 0.0
        %4058 = vmatpush2.xpose.msra.mxu0 0.0
        %4059 = vmatprep.subr.mxu0 0.0
        %4060 = vmatpush2.xpose.msra.mxu0 0.0
        %4061 = vmatprep.subr.mxu0 0.0
        %4062 = vmatpush2.xpose.msra.mxu0 0.0
        %4063 = vmatprep.subr.mxu0 0.0
        %4064 = vmatpush2.xpose.msra.mxu0 0.0
        %4065 = vmatprep.subr.mxu0 0.0
        %4066 = vmatpush2.xpose.msra.mxu0 0.0
        %4067 = vmatprep.subr.mxu0 0.0
        %4068 = vmatpush2.xpose.msra.mxu0 0.0
        %4069 = vmatprep.subr.mxu0 0.0
        %4070 = vmatpush2.xpose.msra.mxu0 0.0
        %4071 = vmatprep.subr.mxu0 0.0
        %4072 = vmatpush2.xpose.msra.mxu0 0.0
        %4073 = vmatprep.subr.mxu0 0.0
        %4074 = vmatpush2.xpose.msra.mxu0 0.0
        %4075 = vmatprep.subr.mxu0 0.0
        %4076 = vmatpush2.xpose.msra.mxu0 0.0
        %4077 = vmatprep.subr.mxu0 0.0
        %4078 = vmatpush2.xpose.msra.mxu0 0.0
        %4079 = vmatprep.subr.mxu0 0.0
        %4080 = vmatpush2.xpose.msra.mxu0 0.0
        %4081 = vmatprep.mubr.f32.mxu0 0.0
        %4082 = vmatmul.mubr.f32.gmra.mxu0 %v4012
        %v4083 = vpop.f32.mrf.mxu0
        %v4084 = vadd.f32 %v1943, %v4083
        %v4085 = vpop.f32.mrf.mxu0
        %4086 = vdwg.mxu0
        %v4087 = vsel %vm998, %v4084, -inf
        %4088 = vmax.xlane.f32.xlu0 %v4087
        %v4089 = vpop.xlane.xlu0 %4088
        %v4090 = vsub.f32 %v4084, %v4089
        %v4091 = vmul.f32 %v4090, 1.442695
        %v4092 = vpow.pop %v4091
        %v4093 = vsel %vm998, %v4092, 0.0
        %4094 = vadd.xlane.f32.xlu0 %v4093
        %v4095 = vpop.xlane.xlu0 %4094
        %v4096 = vrcp.pop %v4095
        %v4097 = vmul.f32 %v4092, %v4096
        %v4099 = vsel %vm998, %v4097, 0
        %4101 = vmatprep.subr.mxu0 0.0
        %4102 = vmatpush1.msra.mxu0 0.0
        %4103 = vmatprep.subr.mxu0 0.0
        %4104 = vmatpush1.msra.mxu0 0.0
        %4105 = vmatprep.subr.mxu0 0.0
        %4106 = vmatpush1.msra.mxu0 0.0
        %4107 = vmatprep.subr.mxu0 0.0
        %4108 = vmatpush1.msra.mxu0 0.0
        %4109 = vmatprep.subr.mxu0 0.0
        %4110 = vmatpush1.msra.mxu0 0.0
        %4111 = vmatprep.subr.mxu0 0.0
        %4112 = vmatpush1.msra.mxu0 0.0
        %4113 = vmatprep.subr.mxu0 0.0
        %4114 = vmatpush1.msra.mxu0 0.0
        %4115 = vmatprep.subr.mxu0 0.0
        %4116 = vmatpush1.msra.mxu0 0.0
        %4117 = vmatprep.subr.mxu0 0.0
        %4118 = vmatpush1.msra.mxu0 0.0
        %4119 = vmatprep.subr.mxu0 0.0
        %4120 = vmatpush1.msra.mxu0 0.0
        %4121 = vmatprep.subr.mxu0 0.0
        %4122 = vmatpush1.msra.mxu0 0.0
        %4123 = vmatprep.subr.mxu0 0.0
        %4124 = vmatpush1.msra.mxu0 0.0
        %4125 = vmatprep.subr.mxu0 0.0
        %4126 = vmatpush1.msra.mxu0 0.0
        %4127 = vmatprep.subr.mxu0 0.0
        %4128 = vmatpush1.msra.mxu0 0.0
        %4129 = vmatprep.subr.mxu0 0.0
        %4130 = vmatpush1.msra.mxu0 0.0
        %4131 = vmatprep.subr.mxu0 0.0
        %4132 = vmatpush1.msra.mxu0 %v4006
        %4133 = vmatprep.subr.mxu0 0.0
        %4134 = vmatpush2.msra.mxu0 0.0
        %4135 = vmatprep.subr.mxu0 0.0
        %4136 = vmatpush2.msra.mxu0 0.0
        %4137 = vmatprep.subr.mxu0 0.0
        %4138 = vmatpush2.msra.mxu0 0.0
        %4139 = vmatprep.subr.mxu0 0.0
        %4140 = vmatpush2.msra.mxu0 0.0
        %4141 = vmatprep.subr.mxu0 0.0
        %4142 = vmatpush2.msra.mxu0 0.0
        %4143 = vmatprep.subr.mxu0 0.0
        %4144 = vmatpush2.msra.mxu0 0.0
        %4145 = vmatprep.subr.mxu0 0.0
        %4146 = vmatpush2.msra.mxu0 0.0
        %4147 = vmatprep.subr.mxu0 0.0
        %4148 = vmatpush2.msra.mxu0 0.0
        %4149 = vmatprep.subr.mxu0 0.0
        %4150 = vmatpush2.msra.mxu0 0.0
        %4151 = vmatprep.subr.mxu0 0.0
        %4152 = vmatpush2.msra.mxu0 0.0
        %4153 = vmatprep.subr.mxu0 0.0
        %4154 = vmatpush2.msra.mxu0 0.0
        %4155 = vmatprep.subr.mxu0 0.0
        %4156 = vmatpush2.msra.mxu0 0.0
        %4157 = vmatprep.subr.mxu0 0.0
        %4158 = vmatpush2.msra.mxu0 0.0
        %4159 = vmatprep.subr.mxu0 0.0
        %4160 = vmatpush2.msra.mxu0 0.0
        %4161 = vmatprep.subr.mxu0 0.0
        %4162 = vmatpush2.msra.mxu0 0.0
        %4163 = vmatprep.subr.mxu0 0.0
        %4164 = vmatpush2.msra.mxu0 0.0
        %4165 = vmatprep.mubr.f32.mxu0 0.0
        %4166 = vmatmul.mubr.f32.gmra.mxu0 %v4099
        %v4167 = vpop.f32.mrf.mxu0
        %v4168 = vadd.f32 0.0, %v4167
        %v4169 = vpop.f32.mrf.mxu0
        %4170 = vdwg.mxu0
        %4171 = vst.msk [vmem:[#allocation2] sm:$0xff] %vm998, %v4168
        %4172 = vrot.lane.b32.xlu0 %v3902, 120
        %v4173 = vpop.permute.xlu0 %4172
        %4174 = vrot.lane.b32.xlu0 %v3954, 120
        %v4175 = vpop.permute.xlu0 %4174
        %v4176 = vsel %vm998, %v4173, 0
        %v4178 = vsel %vm998, %v4175, 0
        %4180 = vmatprep.subr.mxu0 0.0
        %4181 = vmatpush1.xpose.msra.mxu0 0.0
        %4182 = vmatprep.subr.mxu0 0.0
        %4183 = vmatpush1.xpose.msra.mxu0 0.0
        %4184 = vmatprep.subr.mxu0 0.0
        %4185 = vmatpush1.xpose.msra.mxu0 0.0
        %4186 = vmatprep.subr.mxu0 0.0
        %4187 = vmatpush1.xpose.msra.mxu0 0.0
        %4188 = vmatprep.subr.mxu0 0.0
        %4189 = vmatpush1.xpose.msra.mxu0 0.0
        %4190 = vmatprep.subr.mxu0 0.0
        %4191 = vmatpush1.xpose.msra.mxu0 0.0
        %4192 = vmatprep.subr.mxu0 0.0
        %4193 = vmatpush1.xpose.msra.mxu0 0.0
        %4194 = vmatprep.subr.mxu0 0.0
        %4195 = vmatpush1.xpose.msra.mxu0 0.0
        %4196 = vmatprep.subr.mxu0 0.0
        %4197 = vmatpush1.xpose.msra.mxu0 0.0
        %4198 = vmatprep.subr.mxu0 0.0
        %4199 = vmatpush1.xpose.msra.mxu0 0.0
        %4200 = vmatprep.subr.mxu0 0.0
        %4201 = vmatpush1.xpose.msra.mxu0 0.0
        %4202 = vmatprep.subr.mxu0 0.0
        %4203 = vmatpush1.xpose.msra.mxu0 0.0
        %4204 = vmatprep.subr.mxu0 0.0
        %4205 = vmatpush1.xpose.msra.mxu0 0.0
        %4206 = vmatprep.subr.mxu0 0.0
        %4207 = vmatpush1.xpose.msra.mxu0 0.0
        %4208 = vmatprep.subr.mxu0 0.0
        %4209 = vmatpush1.xpose.msra.mxu0 0.0
        %4210 = vmatprep.subr.mxu0 0.0
        %4211 = vmatpush1.xpose.msra.mxu0 %v4178
        %4212 = vmatprep.subr.mxu0 0.0
        %4213 = vmatpush2.xpose.msra.mxu0 0.0
        %4214 = vmatprep.subr.mxu0 0.0
        %4215 = vmatpush2.xpose.msra.mxu0 0.0
        %4216 = vmatprep.subr.mxu0 0.0
        %4217 = vmatpush2.xpose.msra.mxu0 0.0
        %4218 = vmatprep.subr.mxu0 0.0
        %4219 = vmatpush2.xpose.msra.mxu0 0.0
        %4220 = vmatprep.subr.mxu0 0.0
        %4221 = vmatpush2.xpose.msra.mxu0 0.0
        %4222 = vmatprep.subr.mxu0 0.0
        %4223 = vmatpush2.xpose.msra.mxu0 0.0
        %4224 = vmatprep.subr.mxu0 0.0
        %4225 = vmatpush2.xpose.msra.mxu0 0.0
        %4226 = vmatprep.subr.mxu0 0.0
        %4227 = vmatpush2.xpose.msra.mxu0 0.0
        %4228 = vmatprep.subr.mxu0 0.0
        %4229 = vmatpush2.xpose.msra.mxu0 0.0
        %4230 = vmatprep.subr.mxu0 0.0
        %4231 = vmatpush2.xpose.msra.mxu0 0.0
        %4232 = vmatprep.subr.mxu0 0.0
        %4233 = vmatpush2.xpose.msra.mxu0 0.0
        %4234 = vmatprep.subr.mxu0 0.0
        %4235 = vmatpush2.xpose.msra.mxu0 0.0
        %4236 = vmatprep.subr.mxu0 0.0
        %4237 = vmatpush2.xpose.msra.mxu0 0.0
        %4238 = vmatprep.subr.mxu0 0.0
        %4239 = vmatpush2.xpose.msra.mxu0 0.0
        %4240 = vmatprep.subr.mxu0 0.0
        %4241 = vmatpush2.xpose.msra.mxu0 0.0
        %4242 = vmatprep.subr.mxu0 0.0
        %4243 = vmatpush2.xpose.msra.mxu0 0.0
        %4244 = vmatprep.mubr.f32.mxu0 0.0
        %4245 = vmatmul.mubr.f32.gmra.mxu0 %v4176
        %v4246 = vpop.f32.mrf.mxu0
        %v4247 = vadd.f32 %v1943, %v4246
        %v4248 = vpop.f32.mrf.mxu0
        %4249 = vdwg.mxu0
        %v4250 = vsel %vm998, %v4247, -inf
        %4251 = vmax.xlane.f32.xlu0 %v4250
        %v4252 = vpop.xlane.xlu0 %4251
        %v4253 = vsub.f32 %v4247, %v4252
        %v4254 = vmul.f32 %v4253, 1.442695
        %v4255 = vpow.pop %v4254
        %v4256 = vsel %vm998, %v4255, 0.0
        %4257 = vadd.xlane.f32.xlu0 %v4256
        %v4258 = vpop.xlane.xlu0 %4257
        %v4259 = vrcp.pop %v4258
        %v4260 = vmul.f32 %v4255, %v4259
        %4262 = vrot.lane.b32.xlu0 %v4006, 120
        %v4263 = vpop.permute.xlu0 %4262
        %v4266 = vsel %vm998, %v4260, 0
        %4268 = vmatprep.subr.mxu0 0.0
        %4269 = vmatpush1.msra.mxu0 0.0
        %4270 = vmatprep.subr.mxu0 0.0
        %4271 = vmatpush1.msra.mxu0 0.0
        %4272 = vmatprep.subr.mxu0 0.0
        %4273 = vmatpush1.msra.mxu0 0.0
        %4274 = vmatprep.subr.mxu0 0.0
        %4275 = vmatpush1.msra.mxu0 0.0
        %4276 = vmatprep.subr.mxu0 0.0
        %4277 = vmatpush1.msra.mxu0 0.0
        %4278 = vmatprep.subr.mxu0 0.0
        %4279 = vmatpush1.msra.mxu0 0.0
        %4280 = vmatprep.subr.mxu0 0.0
        %4281 = vmatpush1.msra.mxu0 0.0
        %4282 = vmatprep.subr.mxu0 0.0
        %4283 = vmatpush1.msra.mxu0 0.0
        %4284 = vmatprep.subr.mxu0 0.0
        %4285 = vmatpush1.msra.mxu0 0.0
        %4286 = vmatprep.subr.mxu0 0.0
        %4287 = vmatpush1.msra.mxu0 0.0
        %4288 = vmatprep.subr.mxu0 0.0
        %4289 = vmatpush1.msra.mxu0 0.0
        %4290 = vmatprep.subr.mxu0 0.0
        %4291 = vmatpush1.msra.mxu0 0.0
        %4292 = vmatprep.subr.mxu0 0.0
        %4293 = vmatpush1.msra.mxu0 0.0
        %4294 = vmatprep.subr.mxu0 0.0
        %4295 = vmatpush1.msra.mxu0 0.0
        %4296 = vmatprep.subr.mxu0 0.0
        %4297 = vmatpush1.msra.mxu0 0.0
        %4298 = vmatprep.subr.mxu0 0.0
        %4299 = vmatpush1.msra.mxu0 %v4263
        %4300 = vmatprep.subr.mxu0 0.0
        %4301 = vmatpush2.msra.mxu0 0.0
        %4302 = vmatprep.subr.mxu0 0.0
        %4303 = vmatpush2.msra.mxu0 0.0
        %4304 = vmatprep.subr.mxu0 0.0
        %4305 = vmatpush2.msra.mxu0 0.0
        %4306 = vmatprep.subr.mxu0 0.0
        %4307 = vmatpush2.msra.mxu0 0.0
        %4308 = vmatprep.subr.mxu0 0.0
        %4309 = vmatpush2.msra.mxu0 0.0
        %4310 = vmatprep.subr.mxu0 0.0
        %4311 = vmatpush2.msra.mxu0 0.0
        %4312 = vmatprep.subr.mxu0 0.0
        %4313 = vmatpush2.msra.mxu0 0.0
        %4314 = vmatprep.subr.mxu0 0.0
        %4315 = vmatpush2.msra.mxu0 0.0
        %4316 = vmatprep.subr.mxu0 0.0
        %4317 = vmatpush2.msra.mxu0 0.0
        %4318 = vmatprep.subr.mxu0 0.0
        %4319 = vmatpush2.msra.mxu0 0.0
        %4320 = vmatprep.subr.mxu0 0.0
        %4321 = vmatpush2.msra.mxu0 0.0
        %4322 = vmatprep.subr.mxu0 0.0
        %4323 = vmatpush2.msra.mxu0 0.0
        %4324 = vmatprep.subr.mxu0 0.0
        %4325 = vmatpush2.msra.mxu0 0.0
        %4326 = vmatprep.subr.mxu0 0.0
        %4327 = vmatpush2.msra.mxu0 0.0
        %4328 = vmatprep.subr.mxu0 0.0
        %4329 = vmatpush2.msra.mxu0 0.0
        %4330 = vmatprep.subr.mxu0 0.0
        %4331 = vmatpush2.msra.mxu0 0.0
        %4332 = vmatprep.mubr.f32.mxu0 0.0
        %4333 = vmatmul.mubr.f32.gmra.mxu0 %v4266
        %v4334 = vpop.f32.mrf.mxu0
        %v4335 = vadd.f32 0.0, %v4334
        %v4336 = vpop.f32.mrf.mxu0
        %4337 = vdwg.mxu0
        %4339 = vrot.lane.b32.xlu0 %v4335, 8
        %v4340 = vpop.permute.xlu0 %4339
        %4342 = vst.msk [vmem:[#allocation2] sm:$0xff] %vm1330, %v4340
        %4343 = vrot.lane.b32.xlu0 %v3902, 112
        %v4344 = vpop.permute.xlu0 %4343
        %4345 = vrot.lane.b32.xlu0 %v3954, 112
        %v4346 = vpop.permute.xlu0 %4345
        %v4347 = vsel %vm998, %v4344, 0
        %v4349 = vsel %vm998, %v4346, 0
        %4351 = vmatprep.subr.mxu0 0.0
        %4352 = vmatpush1.xpose.msra.mxu0 0.0
        %4353 = vmatprep.subr.mxu0 0.0
        %4354 = vmatpush1.xpose.msra.mxu0 0.0
        %4355 = vmatprep.subr.mxu0 0.0
        %4356 = vmatpush1.xpose.msra.mxu0 0.0
        %4357 = vmatprep.subr.mxu0 0.0
        %4358 = vmatpush1.xpose.msra.mxu0 0.0
        %4359 = vmatprep.subr.mxu0 0.0
        %4360 = vmatpush1.xpose.msra.mxu0 0.0
        %4361 = vmatprep.subr.mxu0 0.0
        %4362 = vmatpush1.xpose.msra.mxu0 0.0
        %4363 = vmatprep.subr.mxu0 0.0
        %4364 = vmatpush1.xpose.msra.mxu0 0.0
        %4365 = vmatprep.subr.mxu0 0.0
        %4366 = vmatpush1.xpose.msra.mxu0 0.0
        %4367 = vmatprep.subr.mxu0 0.0
        %4368 = vmatpush1.xpose.msra.mxu0 0.0
        %4369 = vmatprep.subr.mxu0 0.0
        %4370 = vmatpush1.xpose.msra.mxu0 0.0
        %4371 = vmatprep.subr.mxu0 0.0
        %4372 = vmatpush1.xpose.msra.mxu0 0.0
        %4373 = vmatprep.subr.mxu0 0.0
        %4374 = vmatpush1.xpose.msra.mxu0 0.0
        %4375 = vmatprep.subr.mxu0 0.0
        %4376 = vmatpush1.xpose.msra.mxu0 0.0
        %4377 = vmatprep.subr.mxu0 0.0
        %4378 = vmatpush1.xpose.msra.mxu0 0.0
        %4379 = vmatprep.subr.mxu0 0.0
        %4380 = vmatpush1.xpose.msra.mxu0 0.0
        %4381 = vmatprep.subr.mxu0 0.0
        %4382 = vmatpush1.xpose.msra.mxu0 %v4349
        %4383 = vmatprep.subr.mxu0 0.0
        %4384 = vmatpush2.xpose.msra.mxu0 0.0
        %4385 = vmatprep.subr.mxu0 0.0
        %4386 = vmatpush2.xpose.msra.mxu0 0.0
        %4387 = vmatprep.subr.mxu0 0.0
        %4388 = vmatpush2.xpose.msra.mxu0 0.0
        %4389 = vmatprep.subr.mxu0 0.0
        %4390 = vmatpush2.xpose.msra.mxu0 0.0
        %4391 = vmatprep.subr.mxu0 0.0
        %4392 = vmatpush2.xpose.msra.mxu0 0.0
        %4393 = vmatprep.subr.mxu0 0.0
        %4394 = vmatpush2.xpose.msra.mxu0 0.0
        %4395 = vmatprep.subr.mxu0 0.0
        %4396 = vmatpush2.xpose.msra.mxu0 0.0
        %4397 = vmatprep.subr.mxu0 0.0
        %4398 = vmatpush2.xpose.msra.mxu0 0.0
        %4399 = vmatprep.subr.mxu0 0.0
        %4400 = vmatpush2.xpose.msra.mxu0 0.0
        %4401 = vmatprep.subr.mxu0 0.0
        %4402 = vmatpush2.xpose.msra.mxu0 0.0
        %4403 = vmatprep.subr.mxu0 0.0
        %4404 = vmatpush2.xpose.msra.mxu0 0.0
        %4405 = vmatprep.subr.mxu0 0.0
        %4406 = vmatpush2.xpose.msra.mxu0 0.0
        %4407 = vmatprep.subr.mxu0 0.0
        %4408 = vmatpush2.xpose.msra.mxu0 0.0
        %4409 = vmatprep.subr.mxu0 0.0
        %4410 = vmatpush2.xpose.msra.mxu0 0.0
        %4411 = vmatprep.subr.mxu0 0.0
        %4412 = vmatpush2.xpose.msra.mxu0 0.0
        %4413 = vmatprep.subr.mxu0 0.0
        %4414 = vmatpush2.xpose.msra.mxu0 0.0
        %4415 = vmatprep.mubr.f32.mxu0 0.0
        %4416 = vmatmul.mubr.f32.gmra.mxu0 %v4347
        %v4417 = vpop.f32.mrf.mxu0
        %v4418 = vadd.f32 %v1943, %v4417
        %v4419 = vpop.f32.mrf.mxu0
        %4420 = vdwg.mxu0
        %v4421 = vsel %vm998, %v4418, -inf
        %4422 = vmax.xlane.f32.xlu0 %v4421
        %v4423 = vpop.xlane.xlu0 %4422
        %v4424 = vsub.f32 %v4418, %v4423
        %v4425 = vmul.f32 %v4424, 1.442695
        %v4426 = vpow.pop %v4425
        %v4427 = vsel %vm998, %v4426, 0.0
        %4428 = vadd.xlane.f32.xlu0 %v4427
        %v4429 = vpop.xlane.xlu0 %4428
        %v4430 = vrcp.pop %v4429
        %v4431 = vmul.f32 %v4426, %v4430
        %4432 = vrot.lane.b32.xlu0 %v4006, 112
        %v4433 = vpop.permute.xlu0 %4432
        %v4436 = vsel %vm998, %v4431, 0
        %4438 = vmatprep.subr.mxu0 0.0
        %4439 = vmatpush1.msra.mxu0 0.0
        %4440 = vmatprep.subr.mxu0 0.0
        %4441 = vmatpush1.msra.mxu0 0.0
        %4442 = vmatprep.subr.mxu0 0.0
        %4443 = vmatpush1.msra.mxu0 0.0
        %4444 = vmatprep.subr.mxu0 0.0
        %4445 = vmatpush1.msra.mxu0 0.0
        %4446 = vmatprep.subr.mxu0 0.0
        %4447 = vmatpush1.msra.mxu0 0.0
        %4448 = vmatprep.subr.mxu0 0.0
        %4449 = vmatpush1.msra.mxu0 0.0
        %4450 = vmatprep.subr.mxu0 0.0
        %4451 = vmatpush1.msra.mxu0 0.0
        %4452 = vmatprep.subr.mxu0 0.0
        %4453 = vmatpush1.msra.mxu0 0.0
        %4454 = vmatprep.subr.mxu0 0.0
        %4455 = vmatpush1.msra.mxu0 0.0
        %4456 = vmatprep.subr.mxu0 0.0
        %4457 = vmatpush1.msra.mxu0 0.0
        %4458 = vmatprep.subr.mxu0 0.0
        %4459 = vmatpush1.msra.mxu0 0.0
        %4460 = vmatprep.subr.mxu0 0.0
        %4461 = vmatpush1.msra.mxu0 0.0
        %4462 = vmatprep.subr.mxu0 0.0
        %4463 = vmatpush1.msra.mxu0 0.0
        %4464 = vmatprep.subr.mxu0 0.0
        %4465 = vmatpush1.msra.mxu0 0.0
        %4466 = vmatprep.subr.mxu0 0.0
        %4467 = vmatpush1.msra.mxu0 0.0
        %4468 = vmatprep.subr.mxu0 0.0
        %4469 = vmatpush1.msra.mxu0 %v4433
        %4470 = vmatprep.subr.mxu0 0.0
        %4471 = vmatpush2.msra.mxu0 0.0
        %4472 = vmatprep.subr.mxu0 0.0
        %4473 = vmatpush2.msra.mxu0 0.0
        %4474 = vmatprep.subr.mxu0 0.0
        %4475 = vmatpush2.msra.mxu0 0.0
        %4476 = vmatprep.subr.mxu0 0.0
        %4477 = vmatpush2.msra.mxu0 0.0
        %4478 = vmatprep.subr.mxu0 0.0
        %4479 = vmatpush2.msra.mxu0 0.0
        %4480 = vmatprep.subr.mxu0 0.0
        %4481 = vmatpush2.msra.mxu0 0.0
        %4482 = vmatprep.subr.mxu0 0.0
        %4483 = vmatpush2.msra.mxu0 0.0
        %4484 = vmatprep.subr.mxu0 0.0
        %4485 = vmatpush2.msra.mxu0 0.0
        %4486 = vmatprep.subr.mxu0 0.0
        %4487 = vmatpush2.msra.mxu0 0.0
        %4488 = vmatprep.subr.mxu0 0.0
        %4489 = vmatpush2.msra.mxu0 0.0
        %4490 = vmatprep.subr.mxu0 0.0
        %4491 = vmatpush2.msra.mxu0 0.0
        %4492 = vmatprep.subr.mxu0 0.0
        %4493 = vmatpush2.msra.mxu0 0.0
        %4494 = vmatprep.subr.mxu0 0.0
        %4495 = vmatpush2.msra.mxu0 0.0
        %4496 = vmatprep.subr.mxu0 0.0
        %4497 = vmatpush2.msra.mxu0 0.0
        %4498 = vmatprep.subr.mxu0 0.0
        %4499 = vmatpush2.msra.mxu0 0.0
        %4500 = vmatprep.subr.mxu0 0.0
        %4501 = vmatpush2.msra.mxu0 0.0
        %4502 = vmatprep.mubr.f32.mxu0 0.0
        %4503 = vmatmul.mubr.f32.gmra.mxu0 %v4436
        %v4504 = vpop.f32.mrf.mxu0
        %v4505 = vadd.f32 0.0, %v4504
        %v4506 = vpop.f32.mrf.mxu0
        %4507 = vdwg.mxu0
        %4509 = vrot.lane.b32.xlu0 %v4505, 16
        %v4510 = vpop.permute.xlu0 %4509
        %4512 = vst.msk [vmem:[#allocation2] sm:$0xff] %vm1501, %v4510
        %4513 = vrot.lane.b32.xlu0 %v3902, 104
        %v4514 = vpop.permute.xlu0 %4513
        %4515 = vrot.lane.b32.xlu0 %v3954, 104
        %v4516 = vpop.permute.xlu0 %4515
        %v4517 = vsel %vm998, %v4514, 0
        %v4519 = vsel %vm998, %v4516, 0
        %4521 = vmatprep.subr.mxu0 0.0
        %4522 = vmatpush1.xpose.msra.mxu0 0.0
        %4523 = vmatprep.subr.mxu0 0.0
        %4524 = vmatpush1.xpose.msra.mxu0 0.0
        %4525 = vmatprep.subr.mxu0 0.0
        %4526 = vmatpush1.xpose.msra.mxu0 0.0
        %4527 = vmatprep.subr.mxu0 0.0
        %4528 = vmatpush1.xpose.msra.mxu0 0.0
        %4529 = vmatprep.subr.mxu0 0.0
        %4530 = vmatpush1.xpose.msra.mxu0 0.0
        %4531 = vmatprep.subr.mxu0 0.0
        %4532 = vmatpush1.xpose.msra.mxu0 0.0
        %4533 = vmatprep.subr.mxu0 0.0
        %4534 = vmatpush1.xpose.msra.mxu0 0.0
        %4535 = vmatprep.subr.mxu0 0.0
        %4536 = vmatpush1.xpose.msra.mxu0 0.0
        %4537 = vmatprep.subr.mxu0 0.0
        %4538 = vmatpush1.xpose.msra.mxu0 0.0
        %4539 = vmatprep.subr.mxu0 0.0
        %4540 = vmatpush1.xpose.msra.mxu0 0.0
        %4541 = vmatprep.subr.mxu0 0.0
        %4542 = vmatpush1.xpose.msra.mxu0 0.0
        %4543 = vmatprep.subr.mxu0 0.0
        %4544 = vmatpush1.xpose.msra.mxu0 0.0
        %4545 = vmatprep.subr.mxu0 0.0
        %4546 = vmatpush1.xpose.msra.mxu0 0.0
        %4547 = vmatprep.subr.mxu0 0.0
        %4548 = vmatpush1.xpose.msra.mxu0 0.0
        %4549 = vmatprep.subr.mxu0 0.0
        %4550 = vmatpush1.xpose.msra.mxu0 0.0
        %4551 = vmatprep.subr.mxu0 0.0
        %4552 = vmatpush1.xpose.msra.mxu0 %v4519
        %4553 = vmatprep.subr.mxu0 0.0
        %4554 = vmatpush2.xpose.msra.mxu0 0.0
        %4555 = vmatprep.subr.mxu0 0.0
        %4556 = vmatpush2.xpose.msra.mxu0 0.0
        %4557 = vmatprep.subr.mxu0 0.0
        %4558 = vmatpush2.xpose.msra.mxu0 0.0
        %4559 = vmatprep.subr.mxu0 0.0
        %4560 = vmatpush2.xpose.msra.mxu0 0.0
        %4561 = vmatprep.subr.mxu0 0.0
        %4562 = vmatpush2.xpose.msra.mxu0 0.0
        %4563 = vmatprep.subr.mxu0 0.0
        %4564 = vmatpush2.xpose.msra.mxu0 0.0
        %4565 = vmatprep.subr.mxu0 0.0
        %4566 = vmatpush2.xpose.msra.mxu0 0.0
        %4567 = vmatprep.subr.mxu0 0.0
        %4568 = vmatpush2.xpose.msra.mxu0 0.0
        %4569 = vmatprep.subr.mxu0 0.0
        %4570 = vmatpush2.xpose.msra.mxu0 0.0
        %4571 = vmatprep.subr.mxu0 0.0
        %4572 = vmatpush2.xpose.msra.mxu0 0.0
        %4573 = vmatprep.subr.mxu0 0.0
        %4574 = vmatpush2.xpose.msra.mxu0 0.0
        %4575 = vmatprep.subr.mxu0 0.0
        %4576 = vmatpush2.xpose.msra.mxu0 0.0
        %4577 = vmatprep.subr.mxu0 0.0
        %4578 = vmatpush2.xpose.msra.mxu0 0.0
        %4579 = vmatprep.subr.mxu0 0.0
        %4580 = vmatpush2.xpose.msra.mxu0 0.0
        %4581 = vmatprep.subr.mxu0 0.0
        %4582 = vmatpush2.xpose.msra.mxu0 0.0
        %4583 = vmatprep.subr.mxu0 0.0
        %4584 = vmatpush2.xpose.msra.mxu0 0.0
        %4585 = vmatprep.mubr.f32.mxu0 0.0
        %4586 = vmatmul.mubr.f32.gmra.mxu0 %v4517
        %v4587 = vpop.f32.mrf.mxu0
        %v4588 = vadd.f32 %v1943, %v4587
        %v4589 = vpop.f32.mrf.mxu0
        %4590 = vdwg.mxu0
        %v4591 = vsel %vm998, %v4588, -inf
        %4592 = vmax.xlane.f32.xlu0 %v4591
        %v4593 = vpop.xlane.xlu0 %4592
        %v4594 = vsub.f32 %v4588, %v4593
        %v4595 = vmul.f32 %v4594, 1.442695
        %v4596 = vpow.pop %v4595
        %v4597 = vsel %vm998, %v4596, 0.0
        %4598 = vadd.xlane.f32.xlu0 %v4597
        %v4599 = vpop.xlane.xlu0 %4598
        %v4600 = vrcp.pop %v4599
        %v4601 = vmul.f32 %v4596, %v4600
        %4602 = vrot.lane.b32.xlu0 %v4006, 104
        %v4603 = vpop.permute.xlu0 %4602
        %v4606 = vsel %vm998, %v4601, 0
        %4608 = vmatprep.subr.mxu0 0.0
        %4609 = vmatpush1.msra.mxu0 0.0
        %4610 = vmatprep.subr.mxu0 0.0
        %4611 = vmatpush1.msra.mxu0 0.0
        %4612 = vmatprep.subr.mxu0 0.0
        %4613 = vmatpush1.msra.mxu0 0.0
        %4614 = vmatprep.subr.mxu0 0.0
        %4615 = vmatpush1.msra.mxu0 0.0
        %4616 = vmatprep.subr.mxu0 0.0
        %4617 = vmatpush1.msra.mxu0 0.0
        %4618 = vmatprep.subr.mxu0 0.0
        %4619 = vmatpush1.msra.mxu0 0.0
        %4620 = vmatprep.subr.mxu0 0.0
        %4621 = vmatpush1.msra.mxu0 0.0
        %4622 = vmatprep.subr.mxu0 0.0
        %4623 = vmatpush1.msra.mxu0 0.0
        %4624 = vmatprep.subr.mxu0 0.0
        %4625 = vmatpush1.msra.mxu0 0.0
        %4626 = vmatprep.subr.mxu0 0.0
        %4627 = vmatpush1.msra.mxu0 0.0
        %4628 = vmatprep.subr.mxu0 0.0
        %4629 = vmatpush1.msra.mxu0 0.0
        %4630 = vmatprep.subr.mxu0 0.0
        %4631 = vmatpush1.msra.mxu0 0.0
        %4632 = vmatprep.subr.mxu0 0.0
        %4633 = vmatpush1.msra.mxu0 0.0
        %4634 = vmatprep.subr.mxu0 0.0
        %4635 = vmatpush1.msra.mxu0 0.0
        %4636 = vmatprep.subr.mxu0 0.0
        %4637 = vmatpush1.msra.mxu0 0.0
        %4638 = vmatprep.subr.mxu0 0.0
        %4639 = vmatpush1.msra.mxu0 %v4603
        %4640 = vmatprep.subr.mxu0 0.0
        %4641 = vmatpush2.msra.mxu0 0.0
        %4642 = vmatprep.subr.mxu0 0.0
        %4643 = vmatpush2.msra.mxu0 0.0
        %4644 = vmatprep.subr.mxu0 0.0
        %4645 = vmatpush2.msra.mxu0 0.0
        %4646 = vmatprep.subr.mxu0 0.0
        %4647 = vmatpush2.msra.mxu0 0.0
        %4648 = vmatprep.subr.mxu0 0.0
        %4649 = vmatpush2.msra.mxu0 0.0
        %4650 = vmatprep.subr.mxu0 0.0
        %4651 = vmatpush2.msra.mxu0 0.0
        %4652 = vmatprep.subr.mxu0 0.0
        %4653 = vmatpush2.msra.mxu0 0.0
        %4654 = vmatprep.subr.mxu0 0.0
        %4655 = vmatpush2.msra.mxu0 0.0
        %4656 = vmatprep.subr.mxu0 0.0
        %4657 = vmatpush2.msra.mxu0 0.0
        %4658 = vmatprep.subr.mxu0 0.0
        %4659 = vmatpush2.msra.mxu0 0.0
        %4660 = vmatprep.subr.mxu0 0.0
        %4661 = vmatpush2.msra.mxu0 0.0
        %4662 = vmatprep.subr.mxu0 0.0
        %4663 = vmatpush2.msra.mxu0 0.0
        %4664 = vmatprep.subr.mxu0 0.0
        %4665 = vmatpush2.msra.mxu0 0.0
        %4666 = vmatprep.subr.mxu0 0.0
        %4667 = vmatpush2.msra.mxu0 0.0
        %4668 = vmatprep.subr.mxu0 0.0
        %4669 = vmatpush2.msra.mxu0 0.0
        %4670 = vmatprep.subr.mxu0 0.0
        %4671 = vmatpush2.msra.mxu0 0.0
        %4672 = vmatprep.mubr.f32.mxu0 0.0
        %4673 = vmatmul.mubr.f32.gmra.mxu0 %v4606
        %v4674 = vpop.f32.mrf.mxu0
        %v4675 = vadd.f32 0.0, %v4674
        %v4676 = vpop.f32.mrf.mxu0
        %4677 = vdwg.mxu0
        %4679 = vrot.lane.b32.xlu0 %v4675, 24
        %v4680 = vpop.permute.xlu0 %4679
        %4682 = vst.msk [vmem:[#allocation2] sm:$0xff] %vm1672, %v4680
        %v4683 = vld [vmem:[#allocation2] sm:$0xff]
        %v4684 = vpack.c.bf16 %v4683, %v4683
        %v4689 = vunpack.c.l.b16 %v3820
        %v4690 = vunpack.c.l.b16 %v3821
        %v4691 = vunpack.c.l.b16 %v3822
        %v4692 = vunpack.c.l.b16 %v3823
        %v4693 = vpack.c.b16 %v4690, %v4689
        %v4694 = vpack.c.b16 %v4692, %v4691
        %v4698 = vsel %vm806, %v4684, 0
        %4700 = vmatprep.subr.bf16.mxu0 0
        %4701 = vmatpush1.bf16.msra.mxu0 0
        %4702 = vmatprep.subr.bf16.mxu0 0
        %4703 = vmatpush1.bf16.msra.mxu0 0
        %4704 = vmatprep.subr.bf16.mxu0 0
        %4705 = vmatpush1.bf16.msra.mxu0 0
        %4706 = vmatprep.subr.bf16.mxu0 0
        %4707 = vmatpush1.bf16.msra.mxu0 0
        %4708 = vmatprep.subr.bf16.mxu0 0
        %4709 = vmatpush1.bf16.msra.mxu0 0
        %4710 = vmatprep.subr.bf16.mxu0 0
        %4711 = vmatpush1.bf16.msra.mxu0 0
        %4712 = vmatprep.subr.bf16.mxu0 0
        %4713 = vmatpush1.bf16.msra.mxu0 %v4694
        %4714 = vmatprep.subr.bf16.mxu0 0
        %4715 = vmatpush1.bf16.msra.mxu0 %v4693
        %4716 = vmatprep.subr.bf16.mxu0 0
        %4717 = vmatpush2.bf16.msra.mxu0 0
        %4718 = vmatprep.subr.bf16.mxu0 0
        %4719 = vmatpush2.bf16.msra.mxu0 0
        %4720 = vmatprep.subr.bf16.mxu0 0
        %4721 = vmatpush2.bf16.msra.mxu0 0
        %4722 = vmatprep.subr.bf16.mxu0 0
        %4723 = vmatpush2.bf16.msra.mxu0 0
        %4724 = vmatprep.subr.bf16.mxu0 0
        %4725 = vmatpush2.bf16.msra.mxu0 0
        %4726 = vmatprep.subr.bf16.mxu0 0
        %4727 = vmatpush2.bf16.msra.mxu0 0
        %4728 = vmatprep.subr.bf16.mxu0 0
        %4729 = vmatpush2.bf16.msra.mxu0 0
        %4730 = vmatprep.subr.bf16.mxu0 0
        %4731 = vmatpush2.bf16.msra.mxu0 0
        %4732 = vmatprep.mubr.bf16.mxu0 0
        %4733 = vmatmul.mubr.bf16.gmra.mxu0 %v4698
        %v4734 = vpop.f32.mrf.mxu0
        %v4735 = vadd.f32 %v3795, %v4734
        %v4736 = vpop.f32.mrf.mxu0
        %v4737 = vpop.f32.mrf.mxu0
        %v4738 = vpop.f32.mrf.mxu0
        %4739 = vdwg.mxu0
        %s4740 = scalar_lea.vmem %s16, 1
        %v4741 = vld [vmem:[%s4740] sm:$0x1]
        %s4742 = scalar_lea.vmem %s17, 1
        %v4743 = vld [vmem:[%s4742] sm:$0x1]
        %s4744 = scalar_lea.vmem %s18, 16
        %v4745 = vld [vmem:[%s4744] sm:$0xf]
        %v4746 = vld [vmem:[%s4744 + $0x4] sm:$0xf]
        %v4747 = vld [vmem:[%s4744 + $0x8] sm:$0xf]
        %v4748 = vld [vmem:[%s4744 + $0xc] sm:$0xf]
        %s4749 = scalar_lea.vmem %s19, 1
        %v4750 = vld [vmem:[%s4749] sm:$0x1]
        %s4751 = scalar_lea.vmem %s20, 32
        %v4752 = vld [vmem:[%s4751] sm:$0xf]
        %v4753 = vld [vmem:[%s4751 + $0x4] sm:$0xf]
        %v4754 = vld [vmem:[%s4751 + $0x8] sm:$0xf]
        %v4755 = vld [vmem:[%s4751 + $0xc] sm:$0xf]
        %v4756 = vld [vmem:[%s4751 + $0x10] sm:$0xf]
        %v4757 = vld [vmem:[%s4751 + $0x14] sm:$0xf]
        %v4758 = vld [vmem:[%s4751 + $0x18] sm:$0xf]
        %v4759 = vld [vmem:[%s4751 + $0x1c] sm:$0xf]
        %s4760 = scalar_lea.vmem %s21, 1
        %v4761 = vld [vmem:[%s4760] sm:$0x1]
        %v4762 = vsel %vm806, %v4735, 0.0
        %4763 = vadd.xlane.f32.xlu0 %v4762
        %v4764 = vpop.xlane.xlu0 %4763
        %v4765 = vmul.f32 %v4764, %v810
        %v4766 = vsub.f32 %v4735, %v4765
        %v4767 = vmul.f32 %v4766, %v4766
        %v4768 = vsel %vm806, %v4767, 0.0
        %4769 = vadd.xlane.f32.xlu0 %v4768
        %v4770 = vpop.xlane.xlu0 %4769
        %v4771 = vmul.f32 %v4770, %v810
        %v4772 = vadd.f32 %v4771, 1e-06
        %v4773 = vrsqrt.pop %v4772
        %v4774 = vmul.f32 %v4766, %v4773
        %v4776 = vlaneseq
        %v4777 = vshrl.u32 %v4776, 7
        %v4778 = vsub.s32 0, %v4777
        %v4779 = vrot.slane %v4741, %v4778
        %v4781 = vmul.f32 %v4774, %v4779
        %v4783 = vlaneseq
        %v4784 = vshrl.u32 %v4783, 7
        %v4785 = vsub.s32 0, %v4784
        %v4786 = vrot.slane %v4743, %v4785
        %v4788 = vadd.f32 %v4781, %v4786
        %v4789 = vpack.c.bf16 %v4788, %v4788
        %v4791 = vlaneseq
        %v4792 = vshrl.u32 %v4791, 7
        %v4793 = vsub.s32 0, %v4792
        %v4794 = vrot.slane %v4750, %v4793
        %v4800 = vunpack.c.l.b16 %v4745
        %v4801 = vunpack.c.l.b16 %v4746
        %v4802 = vunpack.c.l.b16 %v4747
        %v4803 = vunpack.c.l.b16 %v4748
        %v4804 = vpack.c.b16 %v4801, %v4800
        %v4805 = vpack.c.b16 %v4803, %v4802
        %v4809 = vsel %vm806, %v4789, 0
        %4811 = vmatprep.subr.bf16.mxu0 0
        %4812 = vmatpush1.bf16.msra.mxu0 0
        %4813 = vmatprep.subr.bf16.mxu0 0
        %4814 = vmatpush1.bf16.msra.mxu0 0
        %4815 = vmatprep.subr.bf16.mxu0 0
        %4816 = vmatpush1.bf16.msra.mxu0 0
        %4817 = vmatprep.subr.bf16.mxu0 0
        %4818 = vmatpush1.bf16.msra.mxu0 0
        %4819 = vmatprep.subr.bf16.mxu0 0
        %4820 = vmatpush1.bf16.msra.mxu0 0
        %4821 = vmatprep.subr.bf16.mxu0 0
        %4822 = vmatpush1.bf16.msra.mxu0 0
        %4823 = vmatprep.subr.bf16.mxu0 0
        %4824 = vmatpush1.bf16.msra.mxu0 %v4805
        %4825 = vmatprep.subr.bf16.mxu0 0
        %4826 = vmatpush1.bf16.msra.mxu0 %v4804
        %4827 = vmatprep.subr.bf16.mxu0 0
        %4828 = vmatpush2.bf16.msra.mxu0 0
        %4829 = vmatprep.subr.bf16.mxu0 0
        %4830 = vmatpush2.bf16.msra.mxu0 0
        %4831 = vmatprep.subr.bf16.mxu0 0
        %4832 = vmatpush2.bf16.msra.mxu0 0
        %4833 = vmatprep.subr.bf16.mxu0 0
        %4834 = vmatpush2.bf16.msra.mxu0 0
        %4835 = vmatprep.subr.bf16.mxu0 0
        %4836 = vmatpush2.bf16.msra.mxu0 0
        %4837 = vmatprep.subr.bf16.mxu0 0
        %4838 = vmatpush2.bf16.msra.mxu0 0
        %4839 = vmatprep.subr.bf16.mxu0 0
        %4840 = vmatpush2.bf16.msra.mxu0 0
        %4841 = vmatprep.subr.bf16.mxu0 0
        %4842 = vmatpush2.bf16.msra.mxu0 0
        %4843 = vmatprep.mubr.bf16.mxu0 0
        %4844 = vmatmul.mubr.bf16.gmra.mxu0 %v4809
        %v4845 = vpop.f32.mrf.mxu0
        %v4846 = vadd.f32 %v4794, %v4845
        %v4847 = vpop.f32.mrf.mxu0
        %v4848 = vpop.f32.mrf.mxu0
        %v4849 = vpop.f32.mrf.mxu0
        %4850 = vdwg.mxu0
        %v4851 = vmax.f32 %v4846, 0.0
        %v4852 = vpack.c.bf16 %v4851, %v4851
        %v4854 = vlaneseq
        %v4855 = vshrl.u32 %v4854, 7
        %v4856 = vsub.s32 0, %v4855
        %v4857 = vrot.slane %v4761, %v4856
        %v4867 = vunpack.c.l.b16 %v4752
        %v4868 = vunpack.c.l.b16 %v4753
        %v4869 = vunpack.c.l.b16 %v4754
        %v4870 = vunpack.c.l.b16 %v4755
        %v4871 = vunpack.c.l.b16 %v4756
        %v4872 = vunpack.c.l.b16 %v4757
        %v4873 = vunpack.c.l.b16 %v4758
        %v4874 = vunpack.c.l.b16 %v4759
        %v4875 = vpack.c.b16 %v4868, %v4867
        %v4876 = vpack.c.b16 %v4870, %v4869
        %v4877 = vpack.c.b16 %v4872, %v4871
        %v4878 = vpack.c.b16 %v4874, %v4873
        %v4884 = vsel %vm2811, %v4852, 0
        %4886 = vmatprep.subr.bf16.mxu0 0
        %4887 = vmatpush1.bf16.msra.mxu0 0
        %4888 = vmatprep.subr.bf16.mxu0 0
        %4889 = vmatpush1.bf16.msra.mxu0 0
        %4890 = vmatprep.subr.bf16.mxu0 0
        %4891 = vmatpush1.bf16.msra.mxu0 0
        %4892 = vmatprep.subr.bf16.mxu0 0
        %4893 = vmatpush1.bf16.msra.mxu0 0
        %4894 = vmatprep.subr.bf16.mxu0 0
        %4895 = vmatpush1.bf16.msra.mxu0 %v4878
        %4896 = vmatprep.subr.bf16.mxu0 0
        %4897 = vmatpush1.bf16.msra.mxu0 %v4877
        %4898 = vmatprep.subr.bf16.mxu0 0
        %4899 = vmatpush1.bf16.msra.mxu0 %v4876
        %4900 = vmatprep.subr.bf16.mxu0 0
        %4901 = vmatpush1.bf16.msra.mxu0 %v4875
        %4902 = vmatprep.subr.bf16.mxu0 0
        %4903 = vmatpush2.bf16.msra.mxu0 0
        %4904 = vmatprep.subr.bf16.mxu0 0
        %4905 = vmatpush2.bf16.msra.mxu0 0
        %4906 = vmatprep.subr.bf16.mxu0 0
        %4907 = vmatpush2.bf16.msra.mxu0 0
        %4908 = vmatprep.subr.bf16.mxu0 0
        %4909 = vmatpush2.bf16.msra.mxu0 0
        %4910 = vmatprep.subr.bf16.mxu0 0
        %4911 = vmatpush2.bf16.msra.mxu0 0
        %4912 = vmatprep.subr.bf16.mxu0 0
        %4913 = vmatpush2.bf16.msra.mxu0 0
        %4914 = vmatprep.subr.bf16.mxu0 0
        %4915 = vmatpush2.bf16.msra.mxu0 0
        %4916 = vmatprep.subr.bf16.mxu0 0
        %4917 = vmatpush2.bf16.msra.mxu0 0
        %4918 = vmatprep.mubr.bf16.mxu0 0
        %4919 = vmatmul.mubr.bf16.gmra.mxu0 %v4884
        %v4920 = vpop.f32.mrf.mxu0
        %v4921 = vadd.f32 %v4857, %v4920
        %v4922 = vpop.f32.mrf.mxu0
        %v4923 = vpop.f32.mrf.mxu0
        %v4924 = vpop.f32.mrf.mxu0
        %4925 = vdwg.mxu0
        %v4926 = vadd.f32 %v4921, %v4735
        %v4927 = vld [vmem:[%s22] sm:$0x1]
        %v4928 = vld [vmem:[%s23] sm:$0x1]
        %v4929 = vsel %vm806, %v4926, 0.0
        %4930 = vadd.xlane.f32.xlu0 %v4929
        %v4931 = vpop.xlane.xlu0 %4930
        %v4932 = vmul.f32 %v4931, %v810
        %v4933 = vsub.f32 %v4926, %v4932
        %v4934 = vmul.f32 %v4933, %v4933
        %v4935 = vsel %vm806, %v4934, 0.0
        %4936 = vadd.xlane.f32.xlu0 %v4935
        %v4937 = vpop.xlane.xlu0 %4936
        %v4938 = vmul.f32 %v4937, %v810
        %v4939 = vadd.f32 %v4938, 1e-06
        %v4940 = vrsqrt.pop %v4939
        %v4941 = vmul.f32 %v4933, %v4940
        %v4943 = vlaneseq
        %v4944 = vshrl.u32 %v4943, 7
        %v4945 = vsub.s32 0, %v4944
        %v4946 = vrot.slane %v4927, %v4945
        %v4948 = vmul.f32 %v4941, %v4946
        %v4950 = vlaneseq
        %v4951 = vshrl.u32 %v4950, 7
        %v4952 = vsub.s32 0, %v4951
        %v4953 = vrot.slane %v4928, %v4952
        %v4955 = vadd.f32 %v4948, %v4953
        %4956 = vst.msk [vmem:[%s765] sm:$0xff] %vm806, %v4955
        %s4957 = sand.u32 %s570, 1
        %s4958 = scalar_lea.sflag [#allocation4], %s4957
        %s4959 = sand.u32 %s570, 1
        %s4960 = smul.addr %s4959, 8
        %s4961 = scalar_lea.vmem [#allocation3], %s4960
        // Predicated region
        $region117: #{decoder_forward.1} parent=115 // pred_check
          %p4962 = pneg %p580
        $region118: #{decoder_forward.1} parent=115 // pred_check_branch
          %4964 = sbr.rel (%p4962) target = $region120
        $region119: #{decoder_forward.1} parent=115 // pred_region
          %s4966 = ssub.s32 128, 128
          %4967 = vsyncadd %s4958, %s4966
          %s4968 = smul.addr %s38, 128
          %s4969 = scalar_lea.hbm %s24, %s4968
          %s4971 = sshll.u32 %s4961, 4
          %s4972 = int_to_ptr.vmem [resolvable:$true] %s4971
          %4974 = dma.vmem_to_hbm [thread:$0]  %s4972, 128, %s4969, %s4958
        $region120: #{decoder_forward.1} parent=115 // pred_fallthru
          _
      $region116: #{decoder_forward.1} parent=5 // pred_fallthru
        _
      %p4975 = scmp.le.s32.totalorder 2, %s33
      // Predicated region
      $region121: #{decoder_forward.1} parent=5 // pred_check
        %p4976 = pneg %p4975
      $region122: #{decoder_forward.1} parent=5 // pred_check_branch
        %4978 = sbr.rel (%p4976) target = $region124
      $region123: #{decoder_forward.1} parent=5 // pred_region
        %s4979 = ssub.s32 %s33, 2
        // Predicated region
        $region125: #{decoder_forward.1} parent=123 // pred_check
          %p4980 = pneg %p586
        $region126: #{decoder_forward.1} parent=123 // pred_check_branch
          %4982 = sbr.rel (%p4980) target = $region128
        $region127: #{decoder_forward.1} parent=123 // pred_region
          %s4983 = sand.u32 %s571, 1
          %s4984 = scalar_lea.sflag [#allocation4], %s4983
          %s4985 = sand.u32 %s571, 1
          %s4986 = smul.addr %s4985, 8
          %s4987 = scalar_lea.vmem [#allocation3], %s4986
          %4988 = dma.done %s4984, 128
        $region128: #{decoder_forward.1} parent=123 // pred_fallthru
          _
      $region124: #{decoder_forward.1} parent=5 // pred_fallthru
        _
    $region6: #{decoder_forward.1} parent=1 // loop_footer
      %s37 = sadd.s32 1, %s33
    $region7: #{decoder_forward.1} parent=1 // loop_footer_branch
      %32 = sbr.rel target = $region3
    $region8: #{decoder_forward.1} parent=1 // loop_exit
      _
    %4989 = vsyncpa [#allocation4], 1
    %s4990 = scalar_lea.sflag [#allocation4], 1
    %4991 = vsyncpa %s4990, 1

</llo_original>
